<compile_context>
chip_gen: v6e
topology: v6e:2x2x1
jax: 0.10.0
libtpu: 0.0.40
codegen_flags: <defaults>
</compile_context>

<pallas_src>
import jax
import jax.numpy as jnp
import numpy as np
from jax.experimental import pallas as pl
from jax.experimental.pallas import tpu as pltpu

EPS = 1e-5
LANE = 128
VMEM_LIMIT = 32 * 1024 * 1024


def _round_up(v, m):
    return (v + m - 1) // m * m


def _pick_row_tile(m, cap=512):
    """Largest multiple of 8 that divides m and is <= cap (falls back to m)."""
    best = None
    t = 8
    while t <= min(m, cap):
        if m % t == 0:
            best = t
        t += 8
    return best if best is not None else m


def _prep_conv_weight(w_oihw, cin_pad, cout_pad):
    """PyTorch OIHW (Cout, Cin, 3, 3) -> (9, cin_pad, cout_pad) bf16, tap t = ky*3+kx."""
    cout, cin, kh, kw = w_oihw.shape
    wt = jnp.transpose(w_oihw, (2, 3, 1, 0)).reshape(kh * kw, cin, cout)
    wt = jnp.pad(wt, ((0, 0), (0, cin_pad - cin), (0, cout_pad - cout)))
    return wt.astype(jnp.bfloat16)


def _fold_bn(s, q, gamma_pad, beta_pad, count):
    """Per-channel sum / sum-of-squares -> (scale, shift) so bn(y) = y*scale + shift."""
    mean = s / count
    var = jnp.maximum(q / count - mean * mean, 0.0)
    scale = gamma_pad * jax.lax.rsqrt(var + EPS)
    shift = beta_pad - mean * scale
    return scale, shift


def res_block_forward(x_nchw, params):
    # b1 / b2 are accepted for interface parity with nn.Conv2d(bias=True) but are not
    # used: a per-channel bias before training-mode BatchNorm is cancelled exactly by
    # the mean subtraction.
    w1, _b1, g1, be1, w2, _b2, g2, be2 = params

    N, C, H, W = x_nchw.shape
    Cb = w1.shape[0]
    CP = _round_up(C, LANE)              # padded in/out channel lanes
    CBP = _round_up(Cb, LANE)            # padded bottleneck channel lanes
    Wp = W + 2                           # padded width == row stride of flattened layout
    L = H * Wp                           # rows of one image's conv output (padded width)
    R = _round_up((H + 2) * Wp + 2, 8)   # rows of one image's padded input (+ slack)
    M_valid = N * H * W                  # BatchNorm population size

    # ---------------- wrapper-side layout prep (cheap pads / free reshapes) ----------
    x_nhwc = jnp.transpose(x_nchw, (0, 2, 3, 1)).astype(jnp.float32)      # (N,H,W,C)
    x_cp = jnp.pad(x_nhwc, ((0, 0), (0, 0), (0, 0), (0, CP - C)))         # (N,H,W,CP)

    xp = jnp.pad(x_cp, ((0, 0), (1, 1), (1, 1), (0, 0)))                  # (N,H+2,Wp,CP)
    xp = xp.reshape(N, (H + 2) * Wp, CP)
    xp = jnp.pad(xp, ((0, 0), (0, R - (H + 2) * Wp), (0, 0)))             # (N,R,CP)

    # residual stream in the same flattened padded-width row layout as y2
    xres = jnp.pad(x_cp, ((0, 0), (0, 0), (0, Wp - W), (0, 0)))           # (N,H,Wp,CP)
    xres = xres.reshape(N * L, CP)

    w1m = _prep_conv_weight(w1, CP, CBP)      # (9, CP, CBP) bf16
    w2m = _prep_conv_weight(w2, CBP, CP)      # (9, CBP, CP) bf16

    g1p = jnp.pad(g1, (0, CBP - Cb)).reshape(1, CBP)
    be1p = jnp.pad(be1, (0, CBP - Cb)).reshape(1, CBP)
    g2p = jnp.pad(g2, (0, CP - C)).reshape(1, CP)
    be2p = jnp.pad(be2, (0, CP - C)).reshape(1, CP)

    # mask of valid width positions (w < W) in the flattened padded-width row layout
    rowmask = jnp.tile(jnp.arange(Wp) < W, H).astype(jnp.float32)[:, None]  # (L, 1)
    mask_cb = jnp.broadcast_to(rowmask, (L, CBP))
    mask_c = jnp.broadcast_to(rowmask, (L, CP))

    # --------------------------- pass 1: conv1 + BN1 stats ---------------------------
    def conv1_kernel(xp_ref, w_ref, mask_ref, y_ref, s_ref, q_ref):
        # xp_ref: (R, CP) f32 flattened padded image; tap (ky,kx) == row offset ky*Wp+kx
        acc = jnp.zeros((L, CBP), jnp.float32)
        for t in range(9):
            ky, kx = divmod(t, 3)
            start = ky * Wp + kx
            lhs = xp_ref[start:start + L, :].astype(jnp.bfloat16)
            acc = acc + jnp.dot(lhs, w_ref[t], preferred_element_type=jnp.float32)
        y_ref[...] = acc                               # raw conv1 output (pre-BN)
        acc_v = acc * mask_ref[...]                    # drop junk width columns for stats

        @pl.when(pl.program_id(0) == 0)
        def _():
            s_ref[...] = jnp.zeros_like(s_ref)
            q_ref[...] = jnp.zeros_like(q_ref)

        s_ref[...] += jnp.sum(acc_v, axis=0, keepdims=True)
        q_ref[...] += jnp.sum(acc_v * acc_v, axis=0, keepdims=True)

    y1, s1, q1 = pl.pallas_call(
        conv1_kernel,
        grid=(N,),
        in_specs=[
            pl.BlockSpec((None, R, CP), lambda n: (n, 0, 0)),
            pl.BlockSpec((9, CP, CBP), lambda n: (0, 0, 0)),   # resident weights
            pl.BlockSpec((L, CBP), lambda n: (0, 0)),          # resident mask
        ],
        out_specs=(
            pl.BlockSpec((None, L, CBP), lambda n: (n, 0, 0)),
            pl.BlockSpec((1, CBP), lambda n: (0, 0)),          # accumulated across grid
            pl.BlockSpec((1, CBP), lambda n: (0, 0)),
        ),
        out_shape=(
            jax.ShapeDtypeStruct((N, L, CBP), jnp.float32),
            jax.ShapeDtypeStruct((1, CBP), jnp.float32),
            jax.ShapeDtypeStruct((1, CBP), jnp.float32),
        ),
        compiler_params=pltpu.CompilerParams(
            dimension_semantics=("arbitrary",),    # stats accumulate across the grid
            vmem_limit_bytes=VMEM_LIMIT),
    )(xp, w1m, mask_cb)

    scale1, shift1 = _fold_bn(s1, q1, g1p, be1p, M_valid)

    # -------- pass 2: fused bn1+relu -> conv2 (+ BN2 stats); a1 stays in VMEM --------
    def conv2_kernel(y1_ref, sc1_ref, sh1_ref, w_ref, mask_b_ref, mask_c_ref,
                     y2_ref, s_ref, q_ref, a1_scr):
        @pl.when(pl.program_id(0) == 0)
        def _():
            a1_scr[...] = jnp.zeros_like(a1_scr)   # zero halo rows/cols once; they persist
            s_ref[...] = jnp.zeros_like(s_ref)
            q_ref[...] = jnp.zeros_like(q_ref)

        # normalize + relu, zero the junk width columns, then place into the padded
        # scratch at offset Wp+1 (one top halo row + one left halo column).
        a1 = jnp.maximum(y1_ref[...] * sc1_ref[...] + sh1_ref[...], 0.0) * mask_b_ref[...]
        a1_scr[Wp + 1:Wp + 1 + L, :] = a1

        acc = jnp.zeros((L, CP), jnp.float32)
        for t in range(9):
            ky, kx = divmod(t, 3)
            start = ky * Wp + kx
            lhs = a1_scr[start:start + L, :].astype(jnp.bfloat16)
            acc = acc + jnp.dot(lhs, w_ref[t], preferred_element_type=jnp.float32)
        y2_ref[...] = acc                              # raw conv2 output (pre-BN)
        acc_v = acc * mask_c_ref[...]
        s_ref[...] += jnp.sum(acc_v, axis=0, keepdims=True)
        q_ref[...] += jnp.sum(acc_v * acc_v, axis=0, keepdims=True)

    y2, s2, q2 = pl.pallas_call(
        conv2_kernel,
        grid=(N,),
        in_specs=[
            pl.BlockSpec((None, L, CBP), lambda n: (n, 0, 0)),
            pl.BlockSpec((1, CBP), lambda n: (0, 0)),
            pl.BlockSpec((1, CBP), lambda n: (0, 0)),
            pl.BlockSpec((9, CBP, CP), lambda n: (0, 0, 0)),
            pl.BlockSpec((L, CBP), lambda n: (0, 0)),
            pl.BlockSpec((L, CP), lambda n: (0, 0)),
        ],
        out_specs=(
            pl.BlockSpec((None, L, CP), lambda n: (n, 0, 0)),
            pl.BlockSpec((1, CP), lambda n: (0, 0)),
            pl.BlockSpec((1, CP), lambda n: (0, 0)),
        ),
        out_shape=(
            jax.ShapeDtypeStruct((N, L, CP), jnp.float32),
            jax.ShapeDtypeStruct((1, CP), jnp.float32),
            jax.ShapeDtypeStruct((1, CP), jnp.float32),
        ),
        scratch_shapes=[pltpu.VMEM((R, CBP), jnp.float32)],
        compiler_params=pltpu.CompilerParams(
            dimension_semantics=("arbitrary",),
            vmem_limit_bytes=VMEM_LIMIT),
    )(y1, scale1, shift1, w2m, mask_cb, mask_c)

    scale2, shift2 = _fold_bn(s2, q2, g2p, be2p, M_valid)

    # --------------------- pass 3: bn2 + residual + relu (row-tiled) -----------------
    def bn_add_relu_kernel(y2_ref, r_ref, sc_ref, sh_ref, o_ref):
        o_ref[...] = jnp.maximum(
            y2_ref[...] * sc_ref[...] + sh_ref[...] + r_ref[...], 0.0)

    Mrows = N * L
    tm = _pick_row_tile(Mrows)
    out_rows = pl.pallas_call(
        bn_add_relu_kernel,
        grid=(Mrows // tm,),
        in_specs=[
            pl.BlockSpec((tm, CP), lambda i: (i, 0)),
            pl.BlockSpec((tm, CP), lambda i: (i, 0)),
            pl.BlockSpec((1, CP), lambda i: (0, 0)),
            pl.BlockSpec((1, CP), lambda i: (0, 0)),
        ],
        out_specs=pl.BlockSpec((tm, CP), lambda i: (i, 0)),
        out_shape=jax.ShapeDtypeStruct((Mrows, CP), jnp.float32),
        compiler_params=pltpu.CompilerParams(
            dimension_semantics=("parallel",),       # megacore-shardable on v7x
            vmem_limit_bytes=VMEM_LIMIT),
    )(y2.reshape(Mrows, CP), xres, scale2, shift2)

    out = out_rows.reshape(N, H, Wp, CP)[:, :, :W, :C]   # drop width junk + channel pad
    return jnp.transpose(out, (0, 3, 1, 2))              # back to NCHW


def ref_forward(x_nchw, params):
    """Pure-JAX f32 reference matching the PyTorch module (training-mode BN)."""
    w1, b1, g1, be1, w2, b2, g2, be2 = params

    def conv(x, w, b):
        y = jax.lax.conv_general_dilated(
            x, w, window_strides=(1, 1), padding="SAME",
            dimension_numbers=("NCHW", "OIHW", "NCHW"))
        return y + b[None, :, None, None]

    def bn(y, g, be):
        m = jnp.mean(y, axis=(0, 2, 3), keepdims=True)
        v = jnp.mean((y - m) ** 2, axis=(0, 2, 3), keepdims=True)
        return (y - m) * jax.lax.rsqrt(v + EPS) * g[None, :, None, None] \
            + be[None, :, None, None]

    a1 = jax.nn.relu(bn(conv(x_nchw, w1, b1), g1, be1))
    a2 = bn(conv(a1, w2, b2), g2, be2)
    return jax.nn.relu(a2 + x_nchw)


if __name__ == "__main__":
    N, C_in, Cb, H, W = 2, 4, 8, 16, 16

    key = jax.random.PRNGKey(0)
    keys = jax.random.split(key, 9)

    x = jax.random.normal(keys[0], (N, C_in, H, W), dtype=jnp.float32)

    # PyTorch layouts: conv weight OIHW; BN gamma/beta per channel.
    w1 = 0.1 * jax.random.normal(keys[1], (Cb, C_in, 3, 3), dtype=jnp.float32)
    b1 = 0.1 * jax.random.normal(keys[2], (Cb,), dtype=jnp.float32)
    g1 = 1.0 + 0.1 * jax.random.normal(keys[3], (Cb,), dtype=jnp.float32)
    be1 = 0.1 * jax.random.normal(keys[4], (Cb,), dtype=jnp.float32)
    w2 = 0.1 * jax.random.normal(keys[5], (C_in, Cb, 3, 3), dtype=jnp.float32)
    b2 = 0.1 * jax.random.normal(keys[6], (C_in,), dtype=jnp.float32)
    g2 = 1.0 + 0.1 * jax.random.normal(keys[7], (C_in,), dtype=jnp.float32)
    be2 = 0.1 * jax.random.normal(keys[8], (C_in,), dtype=jnp.float32)

    params = (w1, b1, g1, be1, w2, b2, g2, be2)

    out = jax.block_until_ready(jax.jit(res_block_forward)(x, params))
    ref = jax.block_until_ready(ref_forward(x, params))

    assert out.shape == (N, C_in, H, W)
    # bf16 MXU operands (per perf guidance) vs f32 reference: tolerance covers bf16
    # rounding; any structural/indexing bug would produce O(1) errors, far above this.
    assert np.allclose(np.asarray(out), np.asarray(ref), atol=3e-2, rtol=3e-2), \
        "Pallas ResBlock mismatch vs reference"

    print("KERNEL_OK")
</pallas_src>

<mosaic_0001>
module attributes {stable_mosaic.version = 11 : i64} {
  func.func @conv1_kernel(%arg0: i32, %arg1: memref<1x328x128xf32, #tpu.memory_space<vmem>>, %arg2: memref<9x128x128xbf16, #tpu.memory_space<vmem>>, %arg3: memref<288x128xf32, #tpu.memory_space<vmem>>, %arg4: memref<1x288x128xf32, #tpu.memory_space<vmem>>, %arg5: memref<1x128xf32, #tpu.memory_space<vmem>>, %arg6: memref<1x128xf32, #tpu.memory_space<vmem>>) attributes {dimension_semantics = [#tpu.dimension_semantics<arbitrary>], iteration_bounds = array<i64: 2>, scalar_prefetch = 0 : i64, scratch_operands = 0 : i64, tpu.core_type = #tpu.core_type<tc>, window_params = [{transform_indices = @transform_0, window_bounds = array<i64: 1, 328, 128>}, {pipeline_mode = #tpu.pipeline_mode<synchronous>, transform_indices = @transform_1, window_bounds = array<i64: 9, 128, 128>}, {pipeline_mode = #tpu.pipeline_mode<synchronous>, transform_indices = @transform_2, window_bounds = array<i64: 288, 128>}, {transform_indices = @transform_3, window_bounds = array<i64: 1, 288, 128>}, {pipeline_mode = #tpu.pipeline_mode<synchronous>, transform_indices = @transform_4, window_bounds = array<i64: 1, 128>}, {pipeline_mode = #tpu.pipeline_mode<synchronous>, transform_indices = @transform_5, window_bounds = array<i64: 1, 128>}]} {
    %cst = arith.constant 0.000000e+00 : f32
    %0 = vector.broadcast %cst : f32 to vector<288x128xf32>
    %c0 = arith.constant 0 : index
    %c0_0 = arith.constant 0 : index
    %c0_1 = arith.constant 0 : index
    %1 = vector.load %arg1[%c0, %c0_0, %c0_1] : memref<1x328x128xf32, #tpu.memory_space<vmem>>, vector<1x288x128xf32>
    %2 = vector.shape_cast %1 : vector<1x288x128xf32> to vector<288x128xf32>
    %3 = arith.truncf %2 : vector<288x128xf32> to vector<288x128xbf16>
    %c0_2 = arith.constant 0 : index
    %c0_3 = arith.constant 0 : index
    %c0_4 = arith.constant 0 : index
    %4 = vector.load %arg2[%c0_2, %c0_3, %c0_4] : memref<9x128x128xbf16, #tpu.memory_space<vmem>>, vector<1x128x128xbf16>
    %5 = vector.shape_cast %4 : vector<1x128x128xbf16> to vector<128x128xbf16>
    %cst_5 = arith.constant dense<0.000000e+00> : vector<288x128xf32>
    %6 = tpu.matmul %3, %5, %cst_5 {dimension_numbers = #tpu.dot_dimension_numbers<[1], [0], [0], [1], [0, 0, 1, 1], [], []>} : vector<288x128xbf16>, vector<128x128xbf16>, vector<288x128xf32> -> vector<288x128xf32>
    %7 = arith.addf %0, %6 : vector<288x128xf32>
    %c0_6 = arith.constant 0 : index
    %c1 = arith.constant 1 : index
    %c0_7 = arith.constant 0 : index
    %8 = vector.load %arg1[%c0_6, %c1, %c0_7] : memref<1x328x128xf32, #tpu.memory_space<vmem>>, vector<1x288x128xf32>
    %9 = vector.shape_cast %8 : vector<1x288x128xf32> to vector<288x128xf32>
    %10 = arith.truncf %9 : vector<288x128xf32> to vector<288x128xbf16>
    %c1_8 = arith.constant 1 : index
    %c0_9 = arith.constant 0 : index
    %c0_10 = arith.constant 0 : index
    %11 = vector.load %arg2[%c1_8, %c0_9, %c0_10] : memref<9x128x128xbf16, #tpu.memory_space<vmem>>, vector<1x128x128xbf16>
    %12 = vector.shape_cast %11 : vector<1x128x128xbf16> to vector<128x128xbf16>
    %cst_11 = arith.constant dense<0.000000e+00> : vector<288x128xf32>
    %13 = tpu.matmul %10, %12, %cst_11 {dimension_numbers = #tpu.dot_dimension_numbers<[1], [0], [0], [1], [0, 0, 1, 1], [], []>} : vector<288x128xbf16>, vector<128x128xbf16>, vector<288x128xf32> -> vector<288x128xf32>
    %14 = arith.addf %7, %13 : vector<288x128xf32>
    %c0_12 = arith.constant 0 : index
    %c2 = arith.constant 2 : index
    %c0_13 = arith.constant 0 : index
    %15 = vector.load %arg1[%c0_12, %c2, %c0_13] : memref<1x328x128xf32, #tpu.memory_space<vmem>>, vector<1x288x128xf32>
    %16 = vector.shape_cast %15 : vector<1x288x128xf32> to vector<288x128xf32>
    %17 = arith.truncf %16 : vector<288x128xf32> to vector<288x128xbf16>
    %c2_14 = arith.constant 2 : index
    %c0_15 = arith.constant 0 : index
    %c0_16 = arith.constant 0 : index
    %18 = vector.load %arg2[%c2_14, %c0_15, %c0_16] : memref<9x128x128xbf16, #tpu.memory_space<vmem>>, vector<1x128x128xbf16>
    %19 = vector.shape_cast %18 : vector<1x128x128xbf16> to vector<128x128xbf16>
    %cst_17 = arith.constant dense<0.000000e+00> : vector<288x128xf32>
    %20 = tpu.matmul %17, %19, %cst_17 {dimension_numbers = #tpu.dot_dimension_numbers<[1], [0], [0], [1], [0, 0, 1, 1], [], []>} : vector<288x128xbf16>, vector<128x128xbf16>, vector<288x128xf32> -> vector<288x128xf32>
    %21 = arith.addf %14, %20 : vector<288x128xf32>
    %c0_18 = arith.constant 0 : index
    %c18 = arith.constant 18 : index
    %c0_19 = arith.constant 0 : index
    %22 = vector.load %arg1[%c0_18, %c18, %c0_19] : memref<1x328x128xf32, #tpu.memory_space<vmem>>, vector<1x288x128xf32>
    %23 = vector.shape_cast %22 : vector<1x288x128xf32> to vector<288x128xf32>
    %24 = arith.truncf %23 : vector<288x128xf32> to vector<288x128xbf16>
    %c3 = arith.constant 3 : index
    %c0_20 = arith.constant 0 : index
    %c0_21 = arith.constant 0 : index
    %25 = vector.load %arg2[%c3, %c0_20, %c0_21] : memref<9x128x128xbf16, #tpu.memory_space<vmem>>, vector<1x128x128xbf16>
    %26 = vector.shape_cast %25 : vector<1x128x128xbf16> to vector<128x128xbf16>
    %cst_22 = arith.constant dense<0.000000e+00> : vector<288x128xf32>
    %27 = tpu.matmul %24, %26, %cst_22 {dimension_numbers = #tpu.dot_dimension_numbers<[1], [0], [0], [1], [0, 0, 1, 1], [], []>} : vector<288x128xbf16>, vector<128x128xbf16>, vector<288x128xf32> -> vector<288x128xf32>
    %28 = arith.addf %21, %27 : vector<288x128xf32>
    %c0_23 = arith.constant 0 : index
    %c19 = arith.constant 19 : index
    %c0_24 = arith.constant 0 : index
    %29 = vector.load %arg1[%c0_23, %c19, %c0_24] : memref<1x328x128xf32, #tpu.memory_space<vmem>>, vector<1x288x128xf32>
    %30 = vector.shape_cast %29 : vector<1x288x128xf32> to vector<288x128xf32>
    %31 = arith.truncf %30 : vector<288x128xf32> to vector<288x128xbf16>
    %c4 = arith.constant 4 : index
    %c0_25 = arith.constant 0 : index
    %c0_26 = arith.constant 0 : index
    %32 = vector.load %arg2[%c4, %c0_25, %c0_26] : memref<9x128x128xbf16, #tpu.memory_space<vmem>>, vector<1x128x128xbf16>
    %33 = vector.shape_cast %32 : vector<1x128x128xbf16> to vector<128x128xbf16>
    %cst_27 = arith.constant dense<0.000000e+00> : vector<288x128xf32>
    %34 = tpu.matmul %31, %33, %cst_27 {dimension_numbers = #tpu.dot_dimension_numbers<[1], [0], [0], [1], [0, 0, 1, 1], [], []>} : vector<288x128xbf16>, vector<128x128xbf16>, vector<288x128xf32> -> vector<288x128xf32>
    %35 = arith.addf %28, %34 : vector<288x128xf32>
    %c0_28 = arith.constant 0 : index
    %c20 = arith.constant 20 : index
    %c0_29 = arith.constant 0 : index
    %36 = vector.load %arg1[%c0_28, %c20, %c0_29] : memref<1x328x128xf32, #tpu.memory_space<vmem>>, vector<1x288x128xf32>
    %37 = vector.shape_cast %36 : vector<1x288x128xf32> to vector<288x128xf32>
    %38 = arith.truncf %37 : vector<288x128xf32> to vector<288x128xbf16>
    %c5 = arith.constant 5 : index
    %c0_30 = arith.constant 0 : index
    %c0_31 = arith.constant 0 : index
    %39 = vector.load %arg2[%c5, %c0_30, %c0_31] : memref<9x128x128xbf16, #tpu.memory_space<vmem>>, vector<1x128x128xbf16>
    %40 = vector.shape_cast %39 : vector<1x128x128xbf16> to vector<128x128xbf16>
    %cst_32 = arith.constant dense<0.000000e+00> : vector<288x128xf32>
    %41 = tpu.matmul %38, %40, %cst_32 {dimension_numbers = #tpu.dot_dimension_numbers<[1], [0], [0], [1], [0, 0, 1, 1], [], []>} : vector<288x128xbf16>, vector<128x128xbf16>, vector<288x128xf32> -> vector<288x128xf32>
    %42 = arith.addf %35, %41 : vector<288x128xf32>
    %c0_33 = arith.constant 0 : index
    %c36 = arith.constant 36 : index
    %c0_34 = arith.constant 0 : index
    %43 = vector.load %arg1[%c0_33, %c36, %c0_34] : memref<1x328x128xf32, #tpu.memory_space<vmem>>, vector<1x288x128xf32>
    %44 = vector.shape_cast %43 : vector<1x288x128xf32> to vector<288x128xf32>
    %45 = arith.truncf %44 : vector<288x128xf32> to vector<288x128xbf16>
    %c6 = arith.constant 6 : index
    %c0_35 = arith.constant 0 : index
    %c0_36 = arith.constant 0 : index
    %46 = vector.load %arg2[%c6, %c0_35, %c0_36] : memref<9x128x128xbf16, #tpu.memory_space<vmem>>, vector<1x128x128xbf16>
    %47 = vector.shape_cast %46 : vector<1x128x128xbf16> to vector<128x128xbf16>
    %cst_37 = arith.constant dense<0.000000e+00> : vector<288x128xf32>
    %48 = tpu.matmul %45, %47, %cst_37 {dimension_numbers = #tpu.dot_dimension_numbers<[1], [0], [0], [1], [0, 0, 1, 1], [], []>} : vector<288x128xbf16>, vector<128x128xbf16>, vector<288x128xf32> -> vector<288x128xf32>
    %49 = arith.addf %42, %48 : vector<288x128xf32>
    %c0_38 = arith.constant 0 : index
    %c37 = arith.constant 37 : index
    %c0_39 = arith.constant 0 : index
    %50 = vector.load %arg1[%c0_38, %c37, %c0_39] : memref<1x328x128xf32, #tpu.memory_space<vmem>>, vector<1x288x128xf32>
    %51 = vector.shape_cast %50 : vector<1x288x128xf32> to vector<288x128xf32>
    %52 = arith.truncf %51 : vector<288x128xf32> to vector<288x128xbf16>
    %c7 = arith.constant 7 : index
    %c0_40 = arith.constant 0 : index
    %c0_41 = arith.constant 0 : index
    %53 = vector.load %arg2[%c7, %c0_40, %c0_41] : memref<9x128x128xbf16, #tpu.memory_space<vmem>>, vector<1x128x128xbf16>
    %54 = vector.shape_cast %53 : vector<1x128x128xbf16> to vector<128x128xbf16>
    %cst_42 = arith.constant dense<0.000000e+00> : vector<288x128xf32>
    %55 = tpu.matmul %52, %54, %cst_42 {dimension_numbers = #tpu.dot_dimension_numbers<[1], [0], [0], [1], [0, 0, 1, 1], [], []>} : vector<288x128xbf16>, vector<128x128xbf16>, vector<288x128xf32> -> vector<288x128xf32>
    %56 = arith.addf %49, %55 : vector<288x128xf32>
    %c0_43 = arith.constant 0 : index
    %c38 = arith.constant 38 : index
    %c0_44 = arith.constant 0 : index
    %57 = vector.load %arg1[%c0_43, %c38, %c0_44] : memref<1x328x128xf32, #tpu.memory_space<vmem>>, vector<1x288x128xf32>
    %58 = vector.shape_cast %57 : vector<1x288x128xf32> to vector<288x128xf32>
    %59 = arith.truncf %58 : vector<288x128xf32> to vector<288x128xbf16>
    %c8 = arith.constant 8 : index
    %c0_45 = arith.constant 0 : index
    %c0_46 = arith.constant 0 : index
    %60 = vector.load %arg2[%c8, %c0_45, %c0_46] : memref<9x128x128xbf16, #tpu.memory_space<vmem>>, vector<1x128x128xbf16>
    %61 = vector.shape_cast %60 : vector<1x128x128xbf16> to vector<128x128xbf16>
    %cst_47 = arith.constant dense<0.000000e+00> : vector<288x128xf32>
    %62 = tpu.matmul %59, %61, %cst_47 {dimension_numbers = #tpu.dot_dimension_numbers<[1], [0], [0], [1], [0, 0, 1, 1], [], []>} : vector<288x128xbf16>, vector<128x128xbf16>, vector<288x128xf32> -> vector<288x128xf32>
    %63 = arith.addf %56, %62 : vector<288x128xf32>
    %c0_48 = arith.constant 0 : index
    %c0_49 = arith.constant 0 : index
    %c0_50 = arith.constant 0 : index
    %64 = vector.load %arg4[%c0_48, %c0_49, %c0_50] : memref<1x288x128xf32, #tpu.memory_space<vmem>>, vector<1x288x128xf32>
    %65 = vector.shape_cast %64 : vector<1x288x128xf32> to vector<288x128xf32>
    %66 = vector.shape_cast %63 : vector<288x128xf32> to vector<1x288x128xf32>
    tpu.vector_store %arg4[%c0_48, %c0_49, %c0_50], %66 {strides = array<i32>} : memref<1x288x128xf32, #tpu.memory_space<vmem>>, vector<1x288x128xf32>,
    %c0_51 = arith.constant 0 : index
    %c0_52 = arith.constant 0 : index
    %67 = vector.load %arg3[%c0_51, %c0_52] : memref<288x128xf32, #tpu.memory_space<vmem>>, vector<288x128xf32>
    %68 = arith.mulf %63, %67 : vector<288x128xf32>
    %c0_i32 = arith.constant 0 : i32
    %69 = arith.cmpi eq, %arg0, %c0_i32 : i32
    %70 = arith.extui %69 : i1 to i32
    %c0_i32_53 = arith.constant 0 : i32
    %71 = arith.cmpi ne, %70, %c0_i32_53 : i32
    scf.if %71 {
      %cst_64 = arith.constant 0.000000e+00 : f32
      %83 = vector.broadcast %cst_64 : f32 to vector<1x128xf32>
      %c0_65 = arith.constant 0 : index
      %c0_66 = arith.constant 0 : index
      %84 = vector.load %arg5[%c0_65, %c0_66] : memref<1x128xf32, #tpu.memory_space<vmem>>, vector<1x128xf32>
      tpu.vector_store %arg5[%c0_65, %c0_66], %83 {strides = array<i32>} : memref<1x128xf32, #tpu.memory_space<vmem>>, vector<1x128xf32>,
      %cst_67 = arith.constant 0.000000e+00 : f32
      %85 = vector.broadcast %cst_67 : f32 to vector<1x128xf32>
      %c0_68 = arith.constant 0 : index
      %c0_69 = arith.constant 0 : index
      %86 = vector.load %arg6[%c0_68, %c0_69] : memref<1x128xf32, #tpu.memory_space<vmem>>, vector<1x128xf32>
      tpu.vector_store %arg6[%c0_68, %c0_69], %85 {strides = array<i32>} : memref<1x128xf32, #tpu.memory_space<vmem>>, vector<1x128xf32>,
    } else {
    }
    %c0_54 = arith.constant 0 : index
    %c0_55 = arith.constant 0 : index
    %72 = vector.load %arg5[%c0_54, %c0_55] : memref<1x128xf32, #tpu.memory_space<vmem>>, vector<1x128xf32>
    %cst_56 = arith.constant dense<0.000000e+00> : vector<128xf32>
    %73 = vector.multi_reduction <add>, %68, %cst_56 [0] : vector<288x128xf32> to vector<128xf32>
    %74 = vector.shape_cast %73 : vector<128xf32> to vector<1x128xf32>
    %75 = arith.addf %72, %74 : vector<1x128xf32>
    %c0_57 = arith.constant 0 : index
    %c0_58 = arith.constant 0 : index
    %76 = vector.load %arg5[%c0_57, %c0_58] : memref<1x128xf32, #tpu.memory_space<vmem>>, vector<1x128xf32>
    tpu.vector_store %arg5[%c0_57, %c0_58], %75 {strides = array<i32>} : memref<1x128xf32, #tpu.memory_space<vmem>>, vector<1x128xf32>,
    %c0_59 = arith.constant 0 : index
    %c0_60 = arith.constant 0 : index
    %77 = vector.load %arg6[%c0_59, %c0_60] : memref<1x128xf32, #tpu.memory_space<vmem>>, vector<1x128xf32>
    %78 = arith.mulf %68, %68 : vector<288x128xf32>
    %cst_61 = arith.constant dense<0.000000e+00> : vector<128xf32>
    %79 = vector.multi_reduction <add>, %78, %cst_61 [0] : vector<288x128xf32> to vector<128xf32>
    %80 = vector.shape_cast %79 : vector<128xf32> to vector<1x128xf32>
    %81 = arith.addf %77, %80 : vector<1x128xf32>
    %c0_62 = arith.constant 0 : index
    %c0_63 = arith.constant 0 : index
    %82 = vector.load %arg6[%c0_62, %c0_63] : memref<1x128xf32, #tpu.memory_space<vmem>>, vector<1x128xf32>
    tpu.vector_store %arg6[%c0_62, %c0_63], %81 {strides = array<i32>} : memref<1x128xf32, #tpu.memory_space<vmem>>, vector<1x128xf32>,
    return
  }
  func.func @transform_0(%arg0: i32) -> (i32, i32, i32) {
    %c0_i32 = arith.constant 0 : i32
    %c0_i32_0 = arith.constant 0 : i32
    %c0_i32_1 = arith.constant 0 : i32
    return %arg0, %c0_i32, %c0_i32_0 : i32, i32, i32
  }
  func.func @transform_1(%arg0: i32) -> (i32, i32, i32) {
    %c0_i32 = arith.constant 0 : i32
    %c0_i32_0 = arith.constant 0 : i32
    %c0_i32_1 = arith.constant 0 : i32
    %c0_i32_2 = arith.constant 0 : i32
    return %c0_i32, %c0_i32_0, %c0_i32_1 : i32, i32, i32
  }
  func.func @transform_2(%arg0: i32) -> (i32, i32) {
    %c0_i32 = arith.constant 0 : i32
    %c0_i32_0 = arith.constant 0 : i32
    %c0_i32_1 = arith.constant 0 : i32
    return %c0_i32, %c0_i32_0 : i32, i32
  }
  func.func @transform_3(%arg0: i32) -> (i32, i32, i32) {
    %c0_i32 = arith.constant 0 : i32
    %c0_i32_0 = arith.constant 0 : i32
    %c0_i32_1 = arith.constant 0 : i32
    return %arg0, %c0_i32, %c0_i32_0 : i32, i32, i32
  }
  func.func @transform_4(%arg0: i32) -> (i32, i32) {
    %c0_i32 = arith.constant 0 : i32
    %c0_i32_0 = arith.constant 0 : i32
    %c0_i32_1 = arith.constant 0 : i32
    return %c0_i32, %c0_i32_0 : i32, i32
  }
  func.func @transform_5(%arg0: i32) -> (i32, i32) {
    %c0_i32 = arith.constant 0 : i32
    %c0_i32_0 = arith.constant 0 : i32
    %c0_i32_1 = arith.constant 0 : i32
    return %c0_i32, %c0_i32_0 : i32, i32
  }
}

module attributes {stable_mosaic.version = 11 : i64} {
  func.func @conv2_kernel(%arg0: i32, %arg1: memref<1x288x128xf32, #tpu.memory_space<vmem>>, %arg2: memref<1x128xf32, #tpu.memory_space<vmem>>, %arg3: memref<1x128xf32, #tpu.memory_space<vmem>>, %arg4: memref<9x128x128xbf16, #tpu.memory_space<vmem>>, %arg5: memref<288x128xf32, #tpu.memory_space<vmem>>, %arg6: memref<288x128xf32, #tpu.memory_space<vmem>>, %arg7: memref<1x288x128xf32, #tpu.memory_space<vmem>>, %arg8: memref<1x128xf32, #tpu.memory_space<vmem>>, %arg9: memref<1x128xf32, #tpu.memory_space<vmem>>, %arg10: memref<328x128xf32, #tpu.memory_space<vmem>>) attributes {dimension_semantics = [#tpu.dimension_semantics<arbitrary>], iteration_bounds = array<i64: 2>, scalar_prefetch = 0 : i64, scratch_operands = 1 : i64, tpu.core_type = #tpu.core_type<tc>, window_params = [{transform_indices = @transform_0, window_bounds = array<i64: 1, 288, 128>}, {pipeline_mode = #tpu.pipeline_mode<synchronous>, transform_indices = @transform_1, window_bounds = array<i64: 1, 128>}, {pipeline_mode = #tpu.pipeline_mode<synchronous>, transform_indices = @transform_2, window_bounds = array<i64: 1, 128>}, {pipeline_mode = #tpu.pipeline_mode<synchronous>, transform_indices = @transform_3, window_bounds = array<i64: 9, 128, 128>}, {pipeline_mode = #tpu.pipeline_mode<synchronous>, transform_indices = @transform_4, window_bounds = array<i64: 288, 128>}, {pipeline_mode = #tpu.pipeline_mode<synchronous>, transform_indices = @transform_5, window_bounds = array<i64: 288, 128>}, {transform_indices = @transform_6, window_bounds = array<i64: 1, 288, 128>}, {pipeline_mode = #tpu.pipeline_mode<synchronous>, transform_indices = @transform_7, window_bounds = array<i64: 1, 128>}, {pipeline_mode = #tpu.pipeline_mode<synchronous>, transform_indices = @transform_8, window_bounds = array<i64: 1, 128>}]} {
    %c0_i32 = arith.constant 0 : i32
    %0 = arith.cmpi eq, %arg0, %c0_i32 : i32
    %1 = arith.extui %0 : i1 to i32
    %c0_i32_0 = arith.constant 0 : i32
    %2 = arith.cmpi ne, %1, %c0_i32_0 : i32
    scf.if %2 {
      %cst_67 = arith.constant 0.000000e+00 : f32
      %87 = vector.broadcast %cst_67 : f32 to vector<328x128xf32>
      %c0_68 = arith.constant 0 : index
      %c0_69 = arith.constant 0 : index
      %88 = vector.load %arg10[%c0_68, %c0_69] : memref<328x128xf32, #tpu.memory_space<vmem>>, vector<328x128xf32>
      tpu.vector_store %arg10[%c0_68, %c0_69], %87 {strides = array<i32>} : memref<328x128xf32, #tpu.memory_space<vmem>>, vector<328x128xf32>,
      %cst_70 = arith.constant 0.000000e+00 : f32
      %89 = vector.broadcast %cst_70 : f32 to vector<1x128xf32>
      %c0_71 = arith.constant 0 : index
      %c0_72 = arith.constant 0 : index
      %90 = vector.load %arg8[%c0_71, %c0_72] : memref<1x128xf32, #tpu.memory_space<vmem>>, vector<1x128xf32>
      tpu.vector_store %arg8[%c0_71, %c0_72], %89 {strides = array<i32>} : memref<1x128xf32, #tpu.memory_space<vmem>>, vector<1x128xf32>,
      %cst_73 = arith.constant 0.000000e+00 : f32
      %91 = vector.broadcast %cst_73 : f32 to vector<1x128xf32>
      %c0_74 = arith.constant 0 : index
      %c0_75 = arith.constant 0 : index
      %92 = vector.load %arg9[%c0_74, %c0_75] : memref<1x128xf32, #tpu.memory_space<vmem>>, vector<1x128xf32>
      tpu.vector_store %arg9[%c0_74, %c0_75], %91 {strides = array<i32>} : memref<1x128xf32, #tpu.memory_space<vmem>>, vector<1x128xf32>,
    } else {
    }
    %c0 = arith.constant 0 : index
    %c0_1 = arith.constant 0 : index
    %c0_2 = arith.constant 0 : index
    %3 = vector.load %arg1[%c0, %c0_1, %c0_2] : memref<1x288x128xf32, #tpu.memory_space<vmem>>, vector<1x288x128xf32>
    %4 = vector.shape_cast %3 : vector<1x288x128xf32> to vector<288x128xf32>
    %c0_3 = arith.constant 0 : index
    %c0_4 = arith.constant 0 : index
    %5 = vector.load %arg2[%c0_3, %c0_4] : memref<1x128xf32, #tpu.memory_space<vmem>>, vector<1x128xf32>
    %6 = vector.broadcast %5 : vector<1x128xf32> to vector<288x128xf32>
    %7 = arith.mulf %4, %6 : vector<288x128xf32>
    %c0_5 = arith.constant 0 : index
    %c0_6 = arith.constant 0 : index
    %8 = vector.load %arg3[%c0_5, %c0_6] : memref<1x128xf32, #tpu.memory_space<vmem>>, vector<1x128xf32>
    %9 = vector.broadcast %8 : vector<1x128xf32> to vector<288x128xf32>
    %10 = arith.addf %7, %9 : vector<288x128xf32>
    %cst = arith.constant 0.000000e+00 : f32
    %11 = vector.broadcast %cst : f32 to vector<288x128xf32>
    %12 = arith.maximumf %10, %11 : vector<288x128xf32>
    %c0_7 = arith.constant 0 : index
    %c0_8 = arith.constant 0 : index
    %13 = vector.load %arg5[%c0_7, %c0_8] : memref<288x128xf32, #tpu.memory_space<vmem>>, vector<288x128xf32>
    %14 = arith.mulf %12, %13 : vector<288x128xf32>
    %c19 = arith.constant 19 : index
    %c0_9 = arith.constant 0 : index
    %15 = vector.load %arg10[%c19, %c0_9] : memref<328x128xf32, #tpu.memory_space<vmem>>, vector<288x128xf32>
    tpu.vector_store %arg10[%c19, %c0_9], %14 {strides = array<i32>} : memref<328x128xf32, #tpu.memory_space<vmem>>, vector<288x128xf32>,
    %cst_10 = arith.constant 0.000000e+00 : f32
    %16 = vector.broadcast %cst_10 : f32 to vector<288x128xf32>
    %c0_11 = arith.constant 0 : index
    %c0_12 = arith.constant 0 : index
    %17 = vector.load %arg10[%c0_11, %c0_12] : memref<328x128xf32, #tpu.memory_space<vmem>>, vector<288x128xf32>
    %18 = arith.truncf %17 : vector<288x128xf32> to vector<288x128xbf16>
    %c0_13 = arith.constant 0 : index
    %c0_14 = arith.constant 0 : index
    %c0_15 = arith.constant 0 : index
    %19 = vector.load %arg4[%c0_13, %c0_14, %c0_15] : memref<9x128x128xbf16, #tpu.memory_space<vmem>>, vector<1x128x128xbf16>
    %20 = vector.shape_cast %19 : vector<1x128x128xbf16> to vector<128x128xbf16>
    %cst_16 = arith.constant dense<0.000000e+00> : vector<288x128xf32>
    %21 = tpu.matmul %18, %20, %cst_16 {dimension_numbers = #tpu.dot_dimension_numbers<[1], [0], [0], [1], [0, 0, 1, 1], [], []>} : vector<288x128xbf16>, vector<128x128xbf16>, vector<288x128xf32> -> vector<288x128xf32>
    %22 = arith.addf %16, %21 : vector<288x128xf32>
    %c1 = arith.constant 1 : index
    %c0_17 = arith.constant 0 : index
    %23 = vector.load %arg10[%c1, %c0_17] : memref<328x128xf32, #tpu.memory_space<vmem>>, vector<288x128xf32>
    %24 = arith.truncf %23 : vector<288x128xf32> to vector<288x128xbf16>
    %c1_18 = arith.constant 1 : index
    %c0_19 = arith.constant 0 : index
    %c0_20 = arith.constant 0 : index
    %25 = vector.load %arg4[%c1_18, %c0_19, %c0_20] : memref<9x128x128xbf16, #tpu.memory_space<vmem>>, vector<1x128x128xbf16>
    %26 = vector.shape_cast %25 : vector<1x128x128xbf16> to vector<128x128xbf16>
    %cst_21 = arith.constant dense<0.000000e+00> : vector<288x128xf32>
    %27 = tpu.matmul %24, %26, %cst_21 {dimension_numbers = #tpu.dot_dimension_numbers<[1], [0], [0], [1], [0, 0, 1, 1], [], []>} : vector<288x128xbf16>, vector<128x128xbf16>, vector<288x128xf32> -> vector<288x128xf32>
    %28 = arith.addf %22, %27 : vector<288x128xf32>
    %c2 = arith.constant 2 : index
    %c0_22 = arith.constant 0 : index
    %29 = vector.load %arg10[%c2, %c0_22] : memref<328x128xf32, #tpu.memory_space<vmem>>, vector<288x128xf32>
    %30 = arith.truncf %29 : vector<288x128xf32> to vector<288x128xbf16>
    %c2_23 = arith.constant 2 : index
    %c0_24 = arith.constant 0 : index
    %c0_25 = arith.constant 0 : index
    %31 = vector.load %arg4[%c2_23, %c0_24, %c0_25] : memref<9x128x128xbf16, #tpu.memory_space<vmem>>, vector<1x128x128xbf16>
    %32 = vector.shape_cast %31 : vector<1x128x128xbf16> to vector<128x128xbf16>
    %cst_26 = arith.constant dense<0.000000e+00> : vector<288x128xf32>
    %33 = tpu.matmul %30, %32, %cst_26 {dimension_numbers = #tpu.dot_dimension_numbers<[1], [0], [0], [1], [0, 0, 1, 1], [], []>} : vector<288x128xbf16>, vector<128x128xbf16>, vector<288x128xf32> -> vector<288x128xf32>
    %34 = arith.addf %28, %33 : vector<288x128xf32>
    %c18 = arith.constant 18 : index
    %c0_27 = arith.constant 0 : index
    %35 = vector.load %arg10[%c18, %c0_27] : memref<328x128xf32, #tpu.memory_space<vmem>>, vector<288x128xf32>
    %36 = arith.truncf %35 : vector<288x128xf32> to vector<288x128xbf16>
    %c3 = arith.constant 3 : index
    %c0_28 = arith.constant 0 : index
    %c0_29 = arith.constant 0 : index
    %37 = vector.load %arg4[%c3, %c0_28, %c0_29] : memref<9x128x128xbf16, #tpu.memory_space<vmem>>, vector<1x128x128xbf16>
    %38 = vector.shape_cast %37 : vector<1x128x128xbf16> to vector<128x128xbf16>
    %cst_30 = arith.constant dense<0.000000e+00> : vector<288x128xf32>
    %39 = tpu.matmul %36, %38, %cst_30 {dimension_numbers = #tpu.dot_dimension_numbers<[1], [0], [0], [1], [0, 0, 1, 1], [], []>} : vector<288x128xbf16>, vector<128x128xbf16>, vector<288x128xf32> -> vector<288x128xf32>
    %40 = arith.addf %34, %39 : vector<288x128xf32>
    %c19_31 = arith.constant 19 : index
    %c0_32 = arith.constant 0 : index
    %41 = vector.load %arg10[%c19_31, %c0_32] : memref<328x128xf32, #tpu.memory_space<vmem>>, vector<288x128xf32>
    %42 = arith.truncf %41 : vector<288x128xf32> to vector<288x128xbf16>
    %c4 = arith.constant 4 : index
    %c0_33 = arith.constant 0 : index
    %c0_34 = arith.constant 0 : index
    %43 = vector.load %arg4[%c4, %c0_33, %c0_34] : memref<9x128x128xbf16, #tpu.memory_space<vmem>>, vector<1x128x128xbf16>
    %44 = vector.shape_cast %43 : vector<1x128x128xbf16> to vector<128x128xbf16>
    %cst_35 = arith.constant dense<0.000000e+00> : vector<288x128xf32>
    %45 = tpu.matmul %42, %44, %cst_35 {dimension_numbers = #tpu.dot_dimension_numbers<[1], [0], [0], [1], [0, 0, 1, 1], [], []>} : vector<288x128xbf16>, vector<128x128xbf16>, vector<288x128xf32> -> vector<288x128xf32>
    %46 = arith.addf %40, %45 : vector<288x128xf32>
    %c20 = arith.constant 20 : index
    %c0_36 = arith.constant 0 : index
    %47 = vector.load %arg10[%c20, %c0_36] : memref<328x128xf32, #tpu.memory_space<vmem>>, vector<288x128xf32>
    %48 = arith.truncf %47 : vector<288x128xf32> to vector<288x128xbf16>
    %c5 = arith.constant 5 : index
    %c0_37 = arith.constant 0 : index
    %c0_38 = arith.constant 0 : index
    %49 = vector.load %arg4[%c5, %c0_37, %c0_38] : memref<9x128x128xbf16, #tpu.memory_space<vmem>>, vector<1x128x128xbf16>
    %50 = vector.shape_cast %49 : vector<1x128x128xbf16> to vector<128x128xbf16>
    %cst_39 = arith.constant dense<0.000000e+00> : vector<288x128xf32>
    %51 = tpu.matmul %48, %50, %cst_39 {dimension_numbers = #tpu.dot_dimension_numbers<[1], [0], [0], [1], [0, 0, 1, 1], [], []>} : vector<288x128xbf16>, vector<128x128xbf16>, vector<288x128xf32> -> vector<288x128xf32>
    %52 = arith.addf %46, %51 : vector<288x128xf32>
    %c36 = arith.constant 36 : index
    %c0_40 = arith.constant 0 : index
    %53 = vector.load %arg10[%c36, %c0_40] : memref<328x128xf32, #tpu.memory_space<vmem>>, vector<288x128xf32>
    %54 = arith.truncf %53 : vector<288x128xf32> to vector<288x128xbf16>
    %c6 = arith.constant 6 : index
    %c0_41 = arith.constant 0 : index
    %c0_42 = arith.constant 0 : index
    %55 = vector.load %arg4[%c6, %c0_41, %c0_42] : memref<9x128x128xbf16, #tpu.memory_space<vmem>>, vector<1x128x128xbf16>
    %56 = vector.shape_cast %55 : vector<1x128x128xbf16> to vector<128x128xbf16>
    %cst_43 = arith.constant dense<0.000000e+00> : vector<288x128xf32>
    %57 = tpu.matmul %54, %56, %cst_43 {dimension_numbers = #tpu.dot_dimension_numbers<[1], [0], [0], [1], [0, 0, 1, 1], [], []>} : vector<288x128xbf16>, vector<128x128xbf16>, vector<288x128xf32> -> vector<288x128xf32>
    %58 = arith.addf %52, %57 : vector<288x128xf32>
    %c37 = arith.constant 37 : index
    %c0_44 = arith.constant 0 : index
    %59 = vector.load %arg10[%c37, %c0_44] : memref<328x128xf32, #tpu.memory_space<vmem>>, vector<288x128xf32>
    %60 = arith.truncf %59 : vector<288x128xf32> to vector<288x128xbf16>
    %c7 = arith.constant 7 : index
    %c0_45 = arith.constant 0 : index
    %c0_46 = arith.constant 0 : index
    %61 = vector.load %arg4[%c7, %c0_45, %c0_46] : memref<9x128x128xbf16, #tpu.memory_space<vmem>>, vector<1x128x128xbf16>
    %62 = vector.shape_cast %61 : vector<1x128x128xbf16> to vector<128x128xbf16>
    %cst_47 = arith.constant dense<0.000000e+00> : vector<288x128xf32>
    %63 = tpu.matmul %60, %62, %cst_47 {dimension_numbers = #tpu.dot_dimension_numbers<[1], [0], [0], [1], [0, 0, 1, 1], [], []>} : vector<288x128xbf16>, vector<128x128xbf16>, vector<288x128xf32> -> vector<288x128xf32>
    %64 = arith.addf %58, %63 : vector<288x128xf32>
    %c38 = arith.constant 38 : index
    %c0_48 = arith.constant 0 : index
    %65 = vector.load %arg10[%c38, %c0_48] : memref<328x128xf32, #tpu.memory_space<vmem>>, vector<288x128xf32>
    %66 = arith.truncf %65 : vector<288x128xf32> to vector<288x128xbf16>
    %c8 = arith.constant 8 : index
    %c0_49 = arith.constant 0 : index
    %c0_50 = arith.constant 0 : index
    %67 = vector.load %arg4[%c8, %c0_49, %c0_50] : memref<9x128x128xbf16, #tpu.memory_space<vmem>>, vector<1x128x128xbf16>
    %68 = vector.shape_cast %67 : vector<1x128x128xbf16> to vector<128x128xbf16>
    %cst_51 = arith.constant dense<0.000000e+00> : vector<288x128xf32>
    %69 = tpu.matmul %66, %68, %cst_51 {dimension_numbers = #tpu.dot_dimension_numbers<[1], [0], [0], [1], [0, 0, 1, 1], [], []>} : vector<288x128xbf16>, vector<128x128xbf16>, vector<288x128xf32> -> vector<288x128xf32>
    %70 = arith.addf %64, %69 : vector<288x128xf32>
    %c0_52 = arith.constant 0 : index
    %c0_53 = arith.constant 0 : index
    %c0_54 = arith.constant 0 : index
    %71 = vector.load %arg7[%c0_52, %c0_53, %c0_54] : memref<1x288x128xf32, #tpu.memory_space<vmem>>, vector<1x288x128xf32>
    %72 = vector.shape_cast %71 : vector<1x288x128xf32> to vector<288x128xf32>
    %73 = vector.shape_cast %70 : vector<288x128xf32> to vector<1x288x128xf32>
    tpu.vector_store %arg7[%c0_52, %c0_53, %c0_54], %73 {strides = array<i32>} : memref<1x288x128xf32, #tpu.memory_space<vmem>>, vector<1x288x128xf32>,
    %c0_55 = arith.constant 0 : index
    %c0_56 = arith.constant 0 : index
    %74 = vector.load %arg6[%c0_55, %c0_56] : memref<288x128xf32, #tpu.memory_space<vmem>>, vector<288x128xf32>
    %75 = arith.mulf %70, %74 : vector<288x128xf32>
    %c0_57 = arith.constant 0 : index
    %c0_58 = arith.constant 0 : index
    %76 = vector.load %arg8[%c0_57, %c0_58] : memref<1x128xf32, #tpu.memory_space<vmem>>, vector<1x128xf32>
    %cst_59 = arith.constant dense<0.000000e+00> : vector<128xf32>
    %77 = vector.multi_reduction <add>, %75, %cst_59 [0] : vector<288x128xf32> to vector<128xf32>
    %78 = vector.shape_cast %77 : vector<128xf32> to vector<1x128xf32>
    %79 = arith.addf %76, %78 : vector<1x128xf32>
    %c0_60 = arith.constant 0 : index
    %c0_61 = arith.constant 0 : index
    %80 = vector.load %arg8[%c0_60, %c0_61] : memref<1x128xf32, #tpu.memory_space<vmem>>, vector<1x128xf32>
    tpu.vector_store %arg8[%c0_60, %c0_61], %79 {strides = array<i32>} : memref<1x128xf32, #tpu.memory_space<vmem>>, vector<1x128xf32>,
    %c0_62 = arith.constant 0 : index
    %c0_63 = arith.constant 0 : index
    %81 = vector.load %arg9[%c0_62, %c0_63] : memref<1x128xf32, #tpu.memory_space<vmem>>, vector<1x128xf32>
    %82 = arith.mulf %75, %75 : vector<288x128xf32>
    %cst_64 = arith.constant dense<0.000000e+00> : vector<128xf32>
    %83 = vector.multi_reduction <add>, %82, %cst_64 [0] : vector<288x128xf32> to vector<128xf32>
    %84 = vector.shape_cast %83 : vector<128xf32> to vector<1x128xf32>
    %85 = arith.addf %81, %84 : vector<1x128xf32>
    %c0_65 = arith.constant 0 : index
    %c0_66 = arith.constant 0 : index
    %86 = vector.load %arg9[%c0_65, %c0_66] : memref<1x128xf32, #tpu.memory_space<vmem>>, vector<1x128xf32>
    tpu.vector_store %arg9[%c0_65, %c0_66], %85 {strides = array<i32>} : memref<1x128xf32, #tpu.memory_space<vmem>>, vector<1x128xf32>,
    return
  }
  func.func @transform_0(%arg0: i32) -> (i32, i32, i32) {
    %c0_i32 = arith.constant 0 : i32
    %c0_i32_0 = arith.constant 0 : i32
    %c0_i32_1 = arith.constant 0 : i32
    return %arg0, %c0_i32, %c0_i32_0 : i32, i32, i32
  }
  func.func @transform_1(%arg0: i32) -> (i32, i32) {
    %c0_i32 = arith.constant 0 : i32
    %c0_i32_0 = arith.constant 0 : i32
    %c0_i32_1 = arith.constant 0 : i32
    return %c0_i32, %c0_i32_0 : i32, i32
  }
  func.func @transform_2(%arg0: i32) -> (i32, i32) {
    %c0_i32 = arith.constant 0 : i32
    %c0_i32_0 = arith.constant 0 : i32
    %c0_i32_1 = arith.constant 0 : i32
    return %c0_i32, %c0_i32_0 : i32, i32
  }
  func.func @transform_3(%arg0: i32) -> (i32, i32, i32) {
    %c0_i32 = arith.constant 0 : i32
    %c0_i32_0 = arith.constant 0 : i32
    %c0_i32_1 = arith.constant 0 : i32
    %c0_i32_2 = arith.constant 0 : i32
    return %c0_i32, %c0_i32_0, %c0_i32_1 : i32, i32, i32
  }
  func.func @transform_4(%arg0: i32) -> (i32, i32) {
    %c0_i32 = arith.constant 0 : i32
    %c0_i32_0 = arith.constant 0 : i32
    %c0_i32_1 = arith.constant 0 : i32
    return %c0_i32, %c0_i32_0 : i32, i32
  }
  func.func @transform_5(%arg0: i32) -> (i32, i32) {
    %c0_i32 = arith.constant 0 : i32
    %c0_i32_0 = arith.constant 0 : i32
    %c0_i32_1 = arith.constant 0 : i32
    return %c0_i32, %c0_i32_0 : i32, i32
  }
  func.func @transform_6(%arg0: i32) -> (i32, i32, i32) {
    %c0_i32 = arith.constant 0 : i32
    %c0_i32_0 = arith.constant 0 : i32
    %c0_i32_1 = arith.constant 0 : i32
    return %arg0, %c0_i32, %c0_i32_0 : i32, i32, i32
  }
  func.func @transform_7(%arg0: i32) -> (i32, i32) {
    %c0_i32 = arith.constant 0 : i32
    %c0_i32_0 = arith.constant 0 : i32
    %c0_i32_1 = arith.constant 0 : i32
    return %c0_i32, %c0_i32_0 : i32, i32
  }
  func.func @transform_8(%arg0: i32) -> (i32, i32) {
    %c0_i32 = arith.constant 0 : i32
    %c0_i32_0 = arith.constant 0 : i32
    %c0_i32_1 = arith.constant 0 : i32
    return %c0_i32, %c0_i32_0 : i32, i32
  }
}

module attributes {stable_mosaic.version = 11 : i64} {
  func.func @bn_add_relu_kernel(%arg0: i32, %arg1: memref<288x128xf32, #tpu.memory_space<vmem>>, %arg2: memref<288x128xf32, #tpu.memory_space<vmem>>, %arg3: memref<1x128xf32, #tpu.memory_space<vmem>>, %arg4: memref<1x128xf32, #tpu.memory_space<vmem>>, %arg5: memref<288x128xf32, #tpu.memory_space<vmem>>) attributes {dimension_semantics = [#tpu.dimension_semantics<parallel>], iteration_bounds = array<i64: 2>, scalar_prefetch = 0 : i64, scratch_operands = 0 : i64, tpu.core_type = #tpu.core_type<tc>, window_params = [{transform_indices = @transform_0, window_bounds = array<i64: 288, 128>}, {transform_indices = @transform_1, window_bounds = array<i64: 288, 128>}, {pipeline_mode = #tpu.pipeline_mode<synchronous>, transform_indices = @transform_2, window_bounds = array<i64: 1, 128>}, {pipeline_mode = #tpu.pipeline_mode<synchronous>, transform_indices = @transform_3, window_bounds = array<i64: 1, 128>}, {transform_indices = @transform_4, window_bounds = array<i64: 288, 128>}]} {
    %c0 = arith.constant 0 : index
    %c0_0 = arith.constant 0 : index
    %0 = vector.load %arg1[%c0, %c0_0] : memref<288x128xf32, #tpu.memory_space<vmem>>, vector<288x128xf32>
    %c0_1 = arith.constant 0 : index
    %c0_2 = arith.constant 0 : index
    %1 = vector.load %arg3[%c0_1, %c0_2] : memref<1x128xf32, #tpu.memory_space<vmem>>, vector<1x128xf32>
    %2 = vector.broadcast %1 : vector<1x128xf32> to vector<288x128xf32>
    %3 = arith.mulf %0, %2 : vector<288x128xf32>
    %c0_3 = arith.constant 0 : index
    %c0_4 = arith.constant 0 : index
    %4 = vector.load %arg4[%c0_3, %c0_4] : memref<1x128xf32, #tpu.memory_space<vmem>>, vector<1x128xf32>
    %5 = vector.broadcast %4 : vector<1x128xf32> to vector<288x128xf32>
    %6 = arith.addf %3, %5 : vector<288x128xf32>
    %c0_5 = arith.constant 0 : index
    %c0_6 = arith.constant 0 : index
    %7 = vector.load %arg2[%c0_5, %c0_6] : memref<288x128xf32, #tpu.memory_space<vmem>>, vector<288x128xf32>
    %8 = arith.addf %6, %7 : vector<288x128xf32>
    %cst = arith.constant 0.000000e+00 : f32
    %9 = vector.broadcast %cst : f32 to vector<288x128xf32>
    %10 = arith.maximumf %8, %9 : vector<288x128xf32>
    %c0_7 = arith.constant 0 : index
    %c0_8 = arith.constant 0 : index
    %11 = vector.load %arg5[%c0_7, %c0_8] : memref<288x128xf32, #tpu.memory_space<vmem>>, vector<288x128xf32>
    tpu.vector_store %arg5[%c0_7, %c0_8], %10 {strides = array<i32>} : memref<288x128xf32, #tpu.memory_space<vmem>>, vector<288x128xf32>,
    return
  }
  func.func @transform_0(%arg0: i32) -> (i32, i32) {
    %c0_i32 = arith.constant 0 : i32
    %c0_i32_0 = arith.constant 0 : i32
    return %arg0, %c0_i32 : i32, i32
  }
  func.func @transform_1(%arg0: i32) -> (i32, i32) {
    %c0_i32 = arith.constant 0 : i32
    %c0_i32_0 = arith.constant 0 : i32
    return %arg0, %c0_i32 : i32, i32
  }
  func.func @transform_2(%arg0: i32) -> (i32, i32) {
    %c0_i32 = arith.constant 0 : i32
    %c0_i32_0 = arith.constant 0 : i32
    %c0_i32_1 = arith.constant 0 : i32
    return %c0_i32, %c0_i32_0 : i32, i32
  }
  func.func @transform_3(%arg0: i32) -> (i32, i32) {
    %c0_i32 = arith.constant 0 : i32
    %c0_i32_0 = arith.constant 0 : i32
    %c0_i32_1 = arith.constant 0 : i32
    return %c0_i32, %c0_i32_0 : i32, i32
  }
  func.func @transform_4(%arg0: i32) -> (i32, i32) {
    %c0_i32 = arith.constant 0 : i32
    %c0_i32_0 = arith.constant 0 : i32
    return %arg0, %c0_i32 : i32, i32
  }
}

</mosaic_0001>

<llo_original>
// kernel: res_block_forward.4
$region0: #{res_block_forward.4}
  #allocation0 [shape = 'u32[]', space=smem, size = 0x4, offset = 0x4, fixed_abs, tag = 'smem constant byte address 0x4 - core index']
  #allocation1 [shape = 'u32[144,128]{1,0:T(1,128)}', space=vmem, size = 0x12000, scoped, tag = 'internal scratch']
  #allocation2 [shape = 'f32[328,128]{1,0:T(8,128)}', space=vmem, size = 0x29000, scoped, tag = 'scratch operand']
  %s0 = inlined_call_operand.vmem [shape: f32[2,288,128], index: 0, kind: input, shape index: {}]
  %s1 = inlined_call_operand.vmem [shape: f32[1,128], index: 1, kind: input, shape index: {}]
  %s2 = inlined_call_operand.vmem [shape: f32[1,128], index: 2, kind: input, shape index: {}]
  %s3 = inlined_call_operand.vmem [shape: bf16[9,128,128], index: 3, kind: input, shape index: {}]
  %s4 = inlined_call_operand.vmem [shape: f32[288,128], index: 4, kind: input, shape index: {}, may-alias: {4,5}]
  %s5 = inlined_call_operand.vmem [shape: f32[288,128], index: 5, kind: input, shape index: {}, may-alias: {4,5}]
  %s6 = inlined_call_operand.vmem [shape: f32[2,288,128], index: 6, kind: output, shape index: {0}]
  %s7 = inlined_call_operand.vmem [shape: f32[1,128], index: 7, kind: output, shape index: {1}]
  %s8 = inlined_call_operand.vmem [shape: f32[1,128], index: 8, kind: output, shape index: {2}]
  %9 = xla_tuple %s6, %s7, %s8
  %s10 = sld [smem:[#allocation0]]
  $region77: #{res_block_forward.4} parent=0
    _
  %s12 = ssub.s32 1, %s10
  %s13 = scalar_select 0, %s12, %s10
  loop: start=0, step=1, limit=4
  $region2: #{res_block_forward.4} parent=0 // loop_pre_header
    _
  $region3: #{res_block_forward.4} parent=0 // loop_header
    %s15 = sphi 0, %s19
    %p16 = scmp.ge.s32.totalorder %s15, 4
    %s25 = sphi 0, %s27
    %s28 = sphi 0, %s25
    %s29 = sphi 0, %s28
    %s45 = sphi 0, %s29
    %s49 = sphi 0, %s49
    %s51 = sphi 0, %s49
    %s52 = sphi 0, %s51
    %s66 = sphi 0, %s52
    %s70 = sphi 0, %s70
    %s72 = sphi 0, %s70
    %s73 = sphi 0, %s72
    %s87 = sphi 0, %s73
    %s91 = sphi 0, %s91
    %s93 = sphi 0, %s91
    %s94 = sphi 0, %s93
    %s108 = sphi 0, %s94
    %s112 = sphi 0, %s112
    %s114 = sphi 0, %s112
    %s115 = sphi 0, %s114
    %s129 = sphi 0, %s115
    %s133 = sphi 0, %s133
    %s135 = sphi 0, %s133
    %s136 = sphi 0, %s135
    %s150 = sphi 0, %s136
    %s156 = sphi 0, %s158
    %s159 = sphi 0, %s156
    %s160 = sphi 0, %s159
    %s176 = sphi 0, %s160
    %s180 = sphi 0, %s180
    %s182 = sphi 0, %s180
    %s183 = sphi 0, %s182
    %s197 = sphi 0, %s183
    %s201 = sphi 0, %s201
    %s203 = sphi 0, %s201
    %s204 = sphi 0, %s203
    %s218 = sphi 0, %s204
  $region4: #{res_block_forward.4} parent=0 // loop_header_branch
    %18 = sbr.rel (%p16) target = $region8
  $region5: #{res_block_forward.4} parent=0 // loop_body
    %s20 = ssub.s32 %s15, 1
    %s21 = ssub.s32 %s15, 2
    %s22 = sadd.s32 %s15, 1
    %s23 = ssub.s32 %s15, %s22
    %p24 = scmp.eq.s32.totalorder %s23, 0
    %s26 = sadd.s32 %s25, 1
    %s27 = scalar_select %p24, %s25, %s26
    %p30 = pneg %p24
    %p31 = scmp.eq.s32.totalorder %s15, 1
    %p32 = por %p30, %p31
    %p33 = scmp.ne.s32.totalorder %s25, %s28
    %p34 = scmp.eq.s32.totalorder %s15, 0
    %p35 = por %p33, %p34
    %p36 = scmp.ne.s32.totalorder %s25, %s28
    %p37 = scmp.eq.s32.totalorder %s20, 1
    %p38 = por %p36, %p37
    %p39 = scmp.ne.s32.totalorder %s28, %s29
    %p40 = scmp.eq.s32.totalorder %s20, 0
    %p41 = por %p39, %p40
    %p42 = scmp.ne.s32.totalorder %s28, %s29
    %p43 = scmp.eq.s32.totalorder %s21, 1
    %p44 = por %p42, %p43
    %p46 = scmp.ne.s32.totalorder %s29, %s45
    %p47 = scmp.eq.s32.totalorder %s21, 0
    %p48 = por %p46, %p47
    %s50 = sadd.s32 %s49, 1
    %p53 = scmp.eq.s32.totalorder %s15, 1
    %p54 = scmp.ne.s32.totalorder %s49, %s51
    %p55 = scmp.eq.s32.totalorder %s15, 0
    %p56 = por %p54, %p55
    %p57 = scmp.ne.s32.totalorder %s49, %s51
    %p58 = scmp.eq.s32.totalorder %s20, 1
    %p59 = por %p57, %p58
    %p60 = scmp.ne.s32.totalorder %s51, %s52
    %p61 = scmp.eq.s32.totalorder %s20, 0
    %p62 = por %p60, %p61
    %p63 = scmp.ne.s32.totalorder %s51, %s52
    %p64 = scmp.eq.s32.totalorder %s21, 1
    %p65 = por %p63, %p64
    %p67 = scmp.ne.s32.totalorder %s52, %s66
    %p68 = scmp.eq.s32.totalorder %s21, 0
    %p69 = por %p67, %p68
    %s71 = sadd.s32 %s70, 1
    %p74 = scmp.eq.s32.totalorder %s15, 1
    %p75 = scmp.ne.s32.totalorder %s70, %s72
    %p76 = scmp.eq.s32.totalorder %s15, 0
    %p77 = por %p75, %p76
    %p78 = scmp.ne.s32.totalorder %s70, %s72
    %p79 = scmp.eq.s32.totalorder %s20, 1
    %p80 = por %p78, %p79
    %p81 = scmp.ne.s32.totalorder %s72, %s73
    %p82 = scmp.eq.s32.totalorder %s20, 0
    %p83 = por %p81, %p82
    %p84 = scmp.ne.s32.totalorder %s72, %s73
    %p85 = scmp.eq.s32.totalorder %s21, 1
    %p86 = por %p84, %p85
    %p88 = scmp.ne.s32.totalorder %s73, %s87
    %p89 = scmp.eq.s32.totalorder %s21, 0
    %p90 = por %p88, %p89
    %s92 = sadd.s32 %s91, 1
    %p95 = scmp.eq.s32.totalorder %s15, 1
    %p96 = scmp.ne.s32.totalorder %s91, %s93
    %p97 = scmp.eq.s32.totalorder %s15, 0
    %p98 = por %p96, %p97
    %p99 = scmp.ne.s32.totalorder %s91, %s93
    %p100 = scmp.eq.s32.totalorder %s20, 1
    %p101 = por %p99, %p100
    %p102 = scmp.ne.s32.totalorder %s93, %s94
    %p103 = scmp.eq.s32.totalorder %s20, 0
    %p104 = por %p102, %p103
    %p105 = scmp.ne.s32.totalorder %s93, %s94
    %p106 = scmp.eq.s32.totalorder %s21, 1
    %p107 = por %p105, %p106
    %p109 = scmp.ne.s32.totalorder %s94, %s108
    %p110 = scmp.eq.s32.totalorder %s21, 0
    %p111 = por %p109, %p110
    %s113 = sadd.s32 %s112, 1
    %p116 = scmp.eq.s32.totalorder %s15, 1
    %p117 = scmp.ne.s32.totalorder %s112, %s114
    %p118 = scmp.eq.s32.totalorder %s15, 0
    %p119 = por %p117, %p118
    %p120 = scmp.ne.s32.totalorder %s112, %s114
    %p121 = scmp.eq.s32.totalorder %s20, 1
    %p122 = por %p120, %p121
    %p123 = scmp.ne.s32.totalorder %s114, %s115
    %p124 = scmp.eq.s32.totalorder %s20, 0
    %p125 = por %p123, %p124
    %p126 = scmp.ne.s32.totalorder %s114, %s115
    %p127 = scmp.eq.s32.totalorder %s21, 1
    %p128 = por %p126, %p127
    %p130 = scmp.ne.s32.totalorder %s115, %s129
    %p131 = scmp.eq.s32.totalorder %s21, 0
    %p132 = por %p130, %p131
    %s134 = sadd.s32 %s133, 1
    %p137 = scmp.eq.s32.totalorder %s15, 1
    %p138 = scmp.ne.s32.totalorder %s133, %s135
    %p139 = scmp.eq.s32.totalorder %s15, 0
    %p140 = por %p138, %p139
    %p141 = scmp.ne.s32.totalorder %s133, %s135
    %p142 = scmp.eq.s32.totalorder %s20, 1
    %p143 = por %p141, %p142
    %p144 = scmp.ne.s32.totalorder %s135, %s136
    %p145 = scmp.eq.s32.totalorder %s20, 0
    %p146 = por %p144, %p145
    %p147 = scmp.ne.s32.totalorder %s135, %s136
    %p148 = scmp.eq.s32.totalorder %s21, 1
    %p149 = por %p147, %p148
    %p151 = scmp.ne.s32.totalorder %s136, %s150
    %p152 = scmp.eq.s32.totalorder %s21, 0
    %p153 = por %p151, %p152
    %s154 = ssub.s32 %s15, %s22
    %p155 = scmp.eq.s32.totalorder %s154, 0
    %s157 = sadd.s32 %s156, 1
    %s158 = scalar_select %p155, %s156, %s157
    %p161 = pneg %p155
    %p162 = scmp.eq.s32.totalorder %s15, 1
    %p163 = por %p161, %p162
    %p164 = scmp.ne.s32.totalorder %s156, %s159
    %p165 = scmp.eq.s32.totalorder %s15, 0
    %p166 = por %p164, %p165
    %p167 = scmp.ne.s32.totalorder %s156, %s159
    %p168 = scmp.eq.s32.totalorder %s20, 1
    %p169 = por %p167, %p168
    %p170 = scmp.ne.s32.totalorder %s159, %s160
    %p171 = scmp.eq.s32.totalorder %s20, 0
    %p172 = por %p170, %p171
    %p173 = scmp.ne.s32.totalorder %s159, %s160
    %p174 = scmp.eq.s32.totalorder %s21, 1
    %p175 = por %p173, %p174
    %p177 = scmp.ne.s32.totalorder %s160, %s176
    %p178 = scmp.eq.s32.totalorder %s21, 0
    %p179 = por %p177, %p178
    %s181 = sadd.s32 %s180, 1
    %p184 = scmp.eq.s32.totalorder %s15, 1
    %p185 = scmp.ne.s32.totalorder %s180, %s182
    %p186 = scmp.eq.s32.totalorder %s15, 0
    %p187 = por %p185, %p186
    %p188 = scmp.ne.s32.totalorder %s180, %s182
    %p189 = scmp.eq.s32.totalorder %s20, 1
    %p190 = por %p188, %p189
    %p191 = scmp.ne.s32.totalorder %s182, %s183
    %p192 = scmp.eq.s32.totalorder %s20, 0
    %p193 = por %p191, %p192
    %p194 = scmp.ne.s32.totalorder %s182, %s183
    %p195 = scmp.eq.s32.totalorder %s21, 1
    %p196 = por %p194, %p195
    %p198 = scmp.ne.s32.totalorder %s183, %s197
    %p199 = scmp.eq.s32.totalorder %s21, 0
    %p200 = por %p198, %p199
    %s202 = sadd.s32 %s201, 1
    %p205 = scmp.eq.s32.totalorder %s15, 1
    %p206 = scmp.ne.s32.totalorder %s201, %s203
    %p207 = scmp.eq.s32.totalorder %s15, 0
    %p208 = por %p206, %p207
    %p209 = scmp.ne.s32.totalorder %s201, %s203
    %p210 = scmp.eq.s32.totalorder %s20, 1
    %p211 = por %p209, %p210
    %p212 = scmp.ne.s32.totalorder %s203, %s204
    %p213 = scmp.eq.s32.totalorder %s20, 0
    %p214 = por %p212, %p213
    %p215 = scmp.ne.s32.totalorder %s203, %s204
    %p216 = scmp.eq.s32.totalorder %s21, 1
    %p217 = por %p215, %p216
    %p219 = scmp.ne.s32.totalorder %s204, %s218
    %p220 = scmp.eq.s32.totalorder %s21, 0
    %p221 = por %p219, %p220
    %p222 = scmp.le.s32.totalorder 1, %s15
    %p223 = scmp.lt.s32.totalorder %s15, 3
    %p224 = pnand %p222, %p223
    %p225 = pneg %p224
    // Predicated region
    $region9: #{res_block_forward.4} parent=5 // pred_check
      _
    $region10: #{res_block_forward.4} parent=5 // pred_check_branch
      %227 = sbr.rel (%p224) target = $region12
    $region11: #{res_block_forward.4} parent=5 // pred_region
      %s228 = ssub.s32 %s15, 1
      // Predicated region
      $region13: #{res_block_forward.4} parent=11 // pred_check
        %p229 = pneg %p62
      $region14: #{res_block_forward.4} parent=11 // pred_check_branch
        %231 = sbr.rel (%p229) target = $region16
      $region15: #{res_block_forward.4} parent=11 // pred_region
        _
      $region16: #{res_block_forward.4} parent=11 // pred_fallthru
        _
      // Predicated region
      $region17: #{res_block_forward.4} parent=11 // pred_check
        %p232 = pneg %p83
      $region18: #{res_block_forward.4} parent=11 // pred_check_branch
        %234 = sbr.rel (%p232) target = $region20
      $region19: #{res_block_forward.4} parent=11 // pred_region
        _
      $region20: #{res_block_forward.4} parent=11 // pred_fallthru
        _
      // Predicated region
      $region21: #{res_block_forward.4} parent=11 // pred_check
        %p235 = pneg %p104
      $region22: #{res_block_forward.4} parent=11 // pred_check_branch
        %237 = sbr.rel (%p235) target = $region24
      $region23: #{res_block_forward.4} parent=11 // pred_region
        _
      $region24: #{res_block_forward.4} parent=11 // pred_fallthru
        _
      // Predicated region
      $region25: #{res_block_forward.4} parent=11 // pred_check
        %p238 = pneg %p125
      $region26: #{res_block_forward.4} parent=11 // pred_check_branch
        %240 = sbr.rel (%p238) target = $region28
      $region27: #{res_block_forward.4} parent=11 // pred_region
        _
      $region28: #{res_block_forward.4} parent=11 // pred_fallthru
        _
      // Predicated region
      $region29: #{res_block_forward.4} parent=11 // pred_check
        %p241 = pneg %p146
      $region30: #{res_block_forward.4} parent=11 // pred_check_branch
        %243 = sbr.rel (%p241) target = $region32
      $region31: #{res_block_forward.4} parent=11 // pred_region
        _
      $region32: #{res_block_forward.4} parent=11 // pred_fallthru
        _
    $region12: #{res_block_forward.4} parent=5 // pred_fallthru
      _
    %p244 = scmp.lt.s32.totalorder %s15, 2
    // Predicated region
    $region33: #{res_block_forward.4} parent=5 // pred_check
      %p245 = pneg %p244
    $region34: #{res_block_forward.4} parent=5 // pred_check_branch
      %247 = sbr.rel (%p245) target = $region36
    $region35: #{res_block_forward.4} parent=5 // pred_region
      // Predicated region
      $region37: #{res_block_forward.4} parent=35 // pred_check
        %p248 = pneg %p35
      $region38: #{res_block_forward.4} parent=35 // pred_check_branch
        %250 = sbr.rel (%p248) target = $region40
      $region39: #{res_block_forward.4} parent=35 // pred_region
        %p251 = scmp.lt.s32.totalorder %s15, 1
        %s252 = scalar_select %p251, %s15, 1
        %s253 = smul.addr %s252, 36
        %s254 = smul.addr %s253, 8
        %s255 = scalar_lea.vmem %s0, %s254
      $region40: #{res_block_forward.4} parent=35 // pred_fallthru
        _
    $region36: #{res_block_forward.4} parent=5 // pred_fallthru
      _
    %p256 = scmp.le.s32.totalorder 1, %s15
    %p257 = scmp.lt.s32.totalorder %s15, 3
    %p258 = pnand %p256, %p257
    %p259 = pneg %p258
    // Predicated region
    $region41: #{res_block_forward.4} parent=5 // pred_check
      _
    $region42: #{res_block_forward.4} parent=5 // pred_check_branch
      %261 = sbr.rel (%p258) target = $region44
    $region43: #{res_block_forward.4} parent=5 // pred_region
      %s262 = ssub.s32 %s15, 1
      %p263 = scmp.lt.s32.totalorder %s20, 1
      %s264 = scalar_select %p263, %s20, 1
      %s265 = smul.addr %s264, 36
      %s266 = smul.addr %s265, 8
      %s267 = scalar_lea.vmem %s0, %s266
      %p268 = pneg %p41
      %p269 = pneg %p38
      %p270 = pneg %p62
      %p271 = pneg %p59
      %p272 = pneg %p83
      %p273 = pneg %p80
      %p274 = pneg %p104
      %p275 = pneg %p101
      %p276 = pneg %p125
      %p277 = pneg %p122
      %p278 = pneg %p146
      %p279 = pneg %p143
      %p280 = pneg %p172
      %p281 = pneg %p169
      %p282 = scmp.lt.s32.totalorder %s20, 1
      %s283 = scalar_select %p282, %s20, 1
      %s284 = smul.addr %s283, 36
      %s285 = smul.addr %s284, 8
      %s286 = scalar_lea.vmem %s6, %s285
      %p287 = pneg %p193
      %p288 = pneg %p190
      %p289 = pneg %p214
      %p290 = pneg %p211
      %p291 = scmp.lt.s32.totalorder %s20, 1
      %s292 = scalar_select %p291, %s20, 1
      %s293 = smul.addr %s292, 36
      %s294 = smul.addr %s293, 8
      %s295 = scalar_lea.vmem %s0, %s294
      %p296 = scmp.lt.s32.totalorder %s20, 1
      %s297 = scalar_select %p296, %s20, 1
      %s298 = smul.addr %s297, 36
      %s299 = smul.addr %s298, 8
      %s300 = scalar_lea.vmem %s6, %s299
      %p302 = scmp.eq.s32.totalorder %s20, 0
      // Predicated region
      $region45: #{res_block_forward.4} parent=43 // pred_check
        %p303 = pneg %p302
      $region46: #{res_block_forward.4} parent=43 // pred_check_branch
        %305 = sbr.rel (%p303) target = $region48
      $region47: #{res_block_forward.4} parent=43 // pred_region
        %306 = vst [vmem:[#allocation2] sm:$0xff] 0.0
        %307 = vst [vmem:[#allocation2 + $0x8] sm:$0xff] 0.0
        %308 = vst [vmem:[#allocation2 + $0x10] sm:$0xff] 0.0
        %309 = vst [vmem:[#allocation2 + $0x18] sm:$0xff] 0.0
        %310 = vst [vmem:[#allocation2 + $0x20] sm:$0xff] 0.0
        %311 = vst [vmem:[#allocation2 + $0x28] sm:$0xff] 0.0
        %312 = vst [vmem:[#allocation2 + $0x30] sm:$0xff] 0.0
        %313 = vst [vmem:[#allocation2 + $0x38] sm:$0xff] 0.0
        %314 = vst [vmem:[#allocation2 + $0x40] sm:$0xff] 0.0
        %315 = vst [vmem:[#allocation2 + $0x48] sm:$0xff] 0.0
        %316 = vst [vmem:[#allocation2 + $0x50] sm:$0xff] 0.0
        %317 = vst [vmem:[#allocation2 + $0x58] sm:$0xff] 0.0
        %318 = vst [vmem:[#allocation2 + $0x60] sm:$0xff] 0.0
        %319 = vst [vmem:[#allocation2 + $0x68] sm:$0xff] 0.0
        %320 = vst [vmem:[#allocation2 + $0x70] sm:$0xff] 0.0
        %321 = vst [vmem:[#allocation2 + $0x78] sm:$0xff] 0.0
        %322 = vst [vmem:[#allocation2 + $0x80] sm:$0xff] 0.0
        %323 = vst [vmem:[#allocation2 + $0x88] sm:$0xff] 0.0
        %324 = vst [vmem:[#allocation2 + $0x90] sm:$0xff] 0.0
        %325 = vst [vmem:[#allocation2 + $0x98] sm:$0xff] 0.0
        %326 = vst [vmem:[#allocation2 + $0xa0] sm:$0xff] 0.0
        %327 = vst [vmem:[#allocation2 + $0xa8] sm:$0xff] 0.0
        %328 = vst [vmem:[#allocation2 + $0xb0] sm:$0xff] 0.0
        %329 = vst [vmem:[#allocation2 + $0xb8] sm:$0xff] 0.0
        %330 = vst [vmem:[#allocation2 + $0xc0] sm:$0xff] 0.0
        %331 = vst [vmem:[#allocation2 + $0xc8] sm:$0xff] 0.0
        %332 = vst [vmem:[#allocation2 + $0xd0] sm:$0xff] 0.0
        %333 = vst [vmem:[#allocation2 + $0xd8] sm:$0xff] 0.0
        %334 = vst [vmem:[#allocation2 + $0xe0] sm:$0xff] 0.0
        %335 = vst [vmem:[#allocation2 + $0xe8] sm:$0xff] 0.0
        %336 = vst [vmem:[#allocation2 + $0xf0] sm:$0xff] 0.0
        %337 = vst [vmem:[#allocation2 + $0xf8] sm:$0xff] 0.0
        %338 = vst [vmem:[#allocation2 + $0x100] sm:$0xff] 0.0
        %339 = vst [vmem:[#allocation2 + $0x108] sm:$0xff] 0.0
        %340 = vst [vmem:[#allocation2 + $0x110] sm:$0xff] 0.0
        %341 = vst [vmem:[#allocation2 + $0x118] sm:$0xff] 0.0
        %342 = vst [vmem:[#allocation2 + $0x120] sm:$0xff] 0.0
        %343 = vst [vmem:[#allocation2 + $0x128] sm:$0xff] 0.0
        %344 = vst [vmem:[#allocation2 + $0x130] sm:$0xff] 0.0
        %345 = vst [vmem:[#allocation2 + $0x138] sm:$0xff] 0.0
        %346 = vst [vmem:[#allocation2 + $0x140] sm:$0xff] 0.0
        %347 = vst [vmem:[%s7] sm:$0x1] 0.0
        %348 = vst [vmem:[%s8] sm:$0x1] 0.0
      $region48: #{res_block_forward.4} parent=43 // pred_fallthru
        _
      %v349 = vld [vmem:[%s295] sm:$0xff]
      %v350 = vld [vmem:[%s295 + $0x8] sm:$0xff]
      %v351 = vld [vmem:[%s295 + $0x10] sm:$0xff]
      %v352 = vld [vmem:[%s295 + $0x18] sm:$0xff]
      %v353 = vld [vmem:[%s295 + $0x20] sm:$0xff]
      %v354 = vld [vmem:[%s295 + $0x28] sm:$0xff]
      %v355 = vld [vmem:[%s295 + $0x30] sm:$0xff]
      %v356 = vld [vmem:[%s295 + $0x38] sm:$0xff]
      %v357 = vld [vmem:[%s295 + $0x40] sm:$0xff]
      %v358 = vld [vmem:[%s295 + $0x48] sm:$0xff]
      %v359 = vld [vmem:[%s295 + $0x50] sm:$0xff]
      %v360 = vld [vmem:[%s295 + $0x58] sm:$0xff]
      %v361 = vld [vmem:[%s295 + $0x60] sm:$0xff]
      %v362 = vld [vmem:[%s295 + $0x68] sm:$0xff]
      %v363 = vld [vmem:[%s295 + $0x70] sm:$0xff]
      %v364 = vld [vmem:[%s295 + $0x78] sm:$0xff]
      %v365 = vld [vmem:[%s295 + $0x80] sm:$0xff]
      %v366 = vld [vmem:[%s295 + $0x88] sm:$0xff]
      %v367 = vld [vmem:[%s295 + $0x90] sm:$0xff]
      %v368 = vld [vmem:[%s295 + $0x98] sm:$0xff]
      %v369 = vld [vmem:[%s295 + $0xa0] sm:$0xff]
      %v370 = vld [vmem:[%s295 + $0xa8] sm:$0xff]
      %v371 = vld [vmem:[%s295 + $0xb0] sm:$0xff]
      %v372 = vld [vmem:[%s295 + $0xb8] sm:$0xff]
      %v373 = vld [vmem:[%s295 + $0xc0] sm:$0xff]
      %v374 = vld [vmem:[%s295 + $0xc8] sm:$0xff]
      %v375 = vld [vmem:[%s295 + $0xd0] sm:$0xff]
      %v376 = vld [vmem:[%s295 + $0xd8] sm:$0xff]
      %v377 = vld [vmem:[%s295 + $0xe0] sm:$0xff]
      %v378 = vld [vmem:[%s295 + $0xe8] sm:$0xff]
      %v379 = vld [vmem:[%s295 + $0xf0] sm:$0xff]
      %v380 = vld [vmem:[%s295 + $0xf8] sm:$0xff]
      %v381 = vld [vmem:[%s295 + $0x100] sm:$0xff]
      %v382 = vld [vmem:[%s295 + $0x108] sm:$0xff]
      %v383 = vld [vmem:[%s295 + $0x110] sm:$0xff]
      %v384 = vld [vmem:[%s295 + $0x118] sm:$0xff]
      %v385 = vld [vmem:[%s1] sm:$0x1]
      %v387 = vlaneseq
      %v388 = vshrl.u32 %v387, 7
      %v389 = vsub.s32 0, %v388
      %v390 = vrot.slane %v385, %v389
      %v392 = vmul.f32 %v349, %v390
      %v393 = vmul.f32 %v350, %v390
      %v394 = vmul.f32 %v351, %v390
      %v395 = vmul.f32 %v352, %v390
      %v396 = vmul.f32 %v353, %v390
      %v397 = vmul.f32 %v354, %v390
      %v398 = vmul.f32 %v355, %v390
      %v399 = vmul.f32 %v356, %v390
      %v400 = vmul.f32 %v357, %v390
      %v401 = vmul.f32 %v358, %v390
      %v402 = vmul.f32 %v359, %v390
      %v403 = vmul.f32 %v360, %v390
      %v404 = vmul.f32 %v361, %v390
      %v405 = vmul.f32 %v362, %v390
      %v406 = vmul.f32 %v363, %v390
      %v407 = vmul.f32 %v364, %v390
      %v408 = vmul.f32 %v365, %v390
      %v409 = vmul.f32 %v366, %v390
      %v410 = vmul.f32 %v367, %v390
      %v411 = vmul.f32 %v368, %v390
      %v412 = vmul.f32 %v369, %v390
      %v413 = vmul.f32 %v370, %v390
      %v414 = vmul.f32 %v371, %v390
      %v415 = vmul.f32 %v372, %v390
      %v416 = vmul.f32 %v373, %v390
      %v417 = vmul.f32 %v374, %v390
      %v418 = vmul.f32 %v375, %v390
      %v419 = vmul.f32 %v376, %v390
      %v420 = vmul.f32 %v377, %v390
      %v421 = vmul.f32 %v378, %v390
      %v422 = vmul.f32 %v379, %v390
      %v423 = vmul.f32 %v380, %v390
      %v424 = vmul.f32 %v381, %v390
      %v425 = vmul.f32 %v382, %v390
      %v426 = vmul.f32 %v383, %v390
      %v427 = vmul.f32 %v384, %v390
      %v428 = vld [vmem:[%s2] sm:$0x1]
      %v430 = vlaneseq
      %v431 = vshrl.u32 %v430, 7
      %v432 = vsub.s32 0, %v431
      %v433 = vrot.slane %v428, %v432
      %v435 = vadd.f32 %v392, %v433
      %v436 = vadd.f32 %v393, %v433
      %v437 = vadd.f32 %v394, %v433
      %v438 = vadd.f32 %v395, %v433
      %v439 = vadd.f32 %v396, %v433
      %v440 = vadd.f32 %v397, %v433
      %v441 = vadd.f32 %v398, %v433
      %v442 = vadd.f32 %v399, %v433
      %v443 = vadd.f32 %v400, %v433
      %v444 = vadd.f32 %v401, %v433
      %v445 = vadd.f32 %v402, %v433
      %v446 = vadd.f32 %v403, %v433
      %v447 = vadd.f32 %v404, %v433
      %v448 = vadd.f32 %v405, %v433
      %v449 = vadd.f32 %v406, %v433
      %v450 = vadd.f32 %v407, %v433
      %v451 = vadd.f32 %v408, %v433
      %v452 = vadd.f32 %v409, %v433
      %v453 = vadd.f32 %v410, %v433
      %v454 = vadd.f32 %v411, %v433
      %v455 = vadd.f32 %v412, %v433
      %v456 = vadd.f32 %v413, %v433
      %v457 = vadd.f32 %v414, %v433
      %v458 = vadd.f32 %v415, %v433
      %v459 = vadd.f32 %v416, %v433
      %v460 = vadd.f32 %v417, %v433
      %v461 = vadd.f32 %v418, %v433
      %v462 = vadd.f32 %v419, %v433
      %v463 = vadd.f32 %v420, %v433
      %v464 = vadd.f32 %v421, %v433
      %v465 = vadd.f32 %v422, %v433
      %v466 = vadd.f32 %v423, %v433
      %v467 = vadd.f32 %v424, %v433
      %v468 = vadd.f32 %v425, %v433
      %v469 = vadd.f32 %v426, %v433
      %v470 = vadd.f32 %v427, %v433
      %v471 = vmax.f32 %v435, 0.0
      %v472 = vmax.f32 %v436, 0.0
      %v473 = vmax.f32 %v437, 0.0
      %v474 = vmax.f32 %v438, 0.0
      %v475 = vmax.f32 %v439, 0.0
      %v476 = vmax.f32 %v440, 0.0
      %v477 = vmax.f32 %v441, 0.0
      %v478 = vmax.f32 %v442, 0.0
      %v479 = vmax.f32 %v443, 0.0
      %v480 = vmax.f32 %v444, 0.0
      %v481 = vmax.f32 %v445, 0.0
      %v482 = vmax.f32 %v446, 0.0
      %v483 = vmax.f32 %v447, 0.0
      %v484 = vmax.f32 %v448, 0.0
      %v485 = vmax.f32 %v449, 0.0
      %v486 = vmax.f32 %v450, 0.0
      %v487 = vmax.f32 %v451, 0.0
      %v488 = vmax.f32 %v452, 0.0
      %v489 = vmax.f32 %v453, 0.0
      %v490 = vmax.f32 %v454, 0.0
      %v491 = vmax.f32 %v455, 0.0
      %v492 = vmax.f32 %v456, 0.0
      %v493 = vmax.f32 %v457, 0.0
      %v494 = vmax.f32 %v458, 0.0
      %v495 = vmax.f32 %v459, 0.0
      %v496 = vmax.f32 %v460, 0.0
      %v497 = vmax.f32 %v461, 0.0
      %v498 = vmax.f32 %v462, 0.0
      %v499 = vmax.f32 %v463, 0.0
      %v500 = vmax.f32 %v464, 0.0
      %v501 = vmax.f32 %v465, 0.0
      %v502 = vmax.f32 %v466, 0.0
      %v503 = vmax.f32 %v467, 0.0
      %v504 = vmax.f32 %v468, 0.0
      %v505 = vmax.f32 %v469, 0.0
      %v506 = vmax.f32 %v470, 0.0
      %v507 = vld [vmem:[%s4] sm:$0xff]
      %v508 = vld [vmem:[%s4 + $0x8] sm:$0xff]
      %v509 = vld [vmem:[%s4 + $0x10] sm:$0xff]
      %v510 = vld [vmem:[%s4 + $0x18] sm:$0xff]
      %v511 = vld [vmem:[%s4 + $0x20] sm:$0xff]
      %v512 = vld [vmem:[%s4 + $0x28] sm:$0xff]
      %v513 = vld [vmem:[%s4 + $0x30] sm:$0xff]
      %v514 = vld [vmem:[%s4 + $0x38] sm:$0xff]
      %v515 = vld [vmem:[%s4 + $0x40] sm:$0xff]
      %v516 = vld [vmem:[%s4 + $0x48] sm:$0xff]
      %v517 = vld [vmem:[%s4 + $0x50] sm:$0xff]
      %v518 = vld [vmem:[%s4 + $0x58] sm:$0xff]
      %v519 = vld [vmem:[%s4 + $0x60] sm:$0xff]
      %v520 = vld [vmem:[%s4 + $0x68] sm:$0xff]
      %v521 = vld [vmem:[%s4 + $0x70] sm:$0xff]
      %v522 = vld [vmem:[%s4 + $0x78] sm:$0xff]
      %v523 = vld [vmem:[%s4 + $0x80] sm:$0xff]
      %v524 = vld [vmem:[%s4 + $0x88] sm:$0xff]
      %v525 = vld [vmem:[%s4 + $0x90] sm:$0xff]
      %v526 = vld [vmem:[%s4 + $0x98] sm:$0xff]
      %v527 = vld [vmem:[%s4 + $0xa0] sm:$0xff]
      %v528 = vld [vmem:[%s4 + $0xa8] sm:$0xff]
      %v529 = vld [vmem:[%s4 + $0xb0] sm:$0xff]
      %v530 = vld [vmem:[%s4 + $0xb8] sm:$0xff]
      %v531 = vld [vmem:[%s4 + $0xc0] sm:$0xff]
      %v532 = vld [vmem:[%s4 + $0xc8] sm:$0xff]
      %v533 = vld [vmem:[%s4 + $0xd0] sm:$0xff]
      %v534 = vld [vmem:[%s4 + $0xd8] sm:$0xff]
      %v535 = vld [vmem:[%s4 + $0xe0] sm:$0xff]
      %v536 = vld [vmem:[%s4 + $0xe8] sm:$0xff]
      %v537 = vld [vmem:[%s4 + $0xf0] sm:$0xff]
      %v538 = vld [vmem:[%s4 + $0xf8] sm:$0xff]
      %v539 = vld [vmem:[%s4 + $0x100] sm:$0xff]
      %v540 = vld [vmem:[%s4 + $0x108] sm:$0xff]
      %v541 = vld [vmem:[%s4 + $0x110] sm:$0xff]
      %v542 = vld [vmem:[%s4 + $0x118] sm:$0xff]
      %v543 = vmul.f32 %v471, %v507
      %v544 = vmul.f32 %v472, %v508
      %v545 = vmul.f32 %v473, %v509
      %v546 = vmul.f32 %v474, %v510
      %v547 = vmul.f32 %v475, %v511
      %v548 = vmul.f32 %v476, %v512
      %v549 = vmul.f32 %v477, %v513
      %v550 = vmul.f32 %v478, %v514
      %v551 = vmul.f32 %v479, %v515
      %v552 = vmul.f32 %v480, %v516
      %v553 = vmul.f32 %v481, %v517
      %v554 = vmul.f32 %v482, %v518
      %v555 = vmul.f32 %v483, %v519
      %v556 = vmul.f32 %v484, %v520
      %v557 = vmul.f32 %v485, %v521
      %v558 = vmul.f32 %v486, %v522
      %v559 = vmul.f32 %v487, %v523
      %v560 = vmul.f32 %v488, %v524
      %v561 = vmul.f32 %v489, %v525
      %v562 = vmul.f32 %v490, %v526
      %v563 = vmul.f32 %v491, %v527
      %v564 = vmul.f32 %v492, %v528
      %v565 = vmul.f32 %v493, %v529
      %v566 = vmul.f32 %v494, %v530
      %v567 = vmul.f32 %v495, %v531
      %v568 = vmul.f32 %v496, %v532
      %v569 = vmul.f32 %v497, %v533
      %v570 = vmul.f32 %v498, %v534
      %v571 = vmul.f32 %v499, %v535
      %v572 = vmul.f32 %v500, %v536
      %v573 = vmul.f32 %v501, %v537
      %v574 = vmul.f32 %v502, %v538
      %v575 = vmul.f32 %v503, %v539
      %v576 = vmul.f32 %v504, %v540
      %v577 = vmul.f32 %v505, %v541
      %v578 = vmul.f32 %v506, %v542
      %579 = vst [vmem:[#allocation2 + $0x13] sm:$0xff] %v543
      %580 = vst [vmem:[#allocation2 + $0x1b] sm:$0xff] %v544
      %581 = vst [vmem:[#allocation2 + $0x23] sm:$0xff] %v545
      %582 = vst [vmem:[#allocation2 + $0x2b] sm:$0xff] %v546
      %583 = vst [vmem:[#allocation2 + $0x33] sm:$0xff] %v547
      %584 = vst [vmem:[#allocation2 + $0x3b] sm:$0xff] %v548
      %585 = vst [vmem:[#allocation2 + $0x43] sm:$0xff] %v549
      %586 = vst [vmem:[#allocation2 + $0x4b] sm:$0xff] %v550
      %587 = vst [vmem:[#allocation2 + $0x53] sm:$0xff] %v551
      %588 = vst [vmem:[#allocation2 + $0x5b] sm:$0xff] %v552
      %589 = vst [vmem:[#allocation2 + $0x63] sm:$0xff] %v553
      %590 = vst [vmem:[#allocation2 + $0x6b] sm:$0xff] %v554
      %591 = vst [vmem:[#allocation2 + $0x73] sm:$0xff] %v555
      %592 = vst [vmem:[#allocation2 + $0x7b] sm:$0xff] %v556
      %593 = vst [vmem:[#allocation2 + $0x83] sm:$0xff] %v557
      %594 = vst [vmem:[#allocation2 + $0x8b] sm:$0xff] %v558
      %595 = vst [vmem:[#allocation2 + $0x93] sm:$0xff] %v559
      %596 = vst [vmem:[#allocation2 + $0x9b] sm:$0xff] %v560
      %597 = vst [vmem:[#allocation2 + $0xa3] sm:$0xff] %v561
      %598 = vst [vmem:[#allocation2 + $0xab] sm:$0xff] %v562
      %599 = vst [vmem:[#allocation2 + $0xb3] sm:$0xff] %v563
      %600 = vst [vmem:[#allocation2 + $0xbb] sm:$0xff] %v564
      %601 = vst [vmem:[#allocation2 + $0xc3] sm:$0xff] %v565
      %602 = vst [vmem:[#allocation2 + $0xcb] sm:$0xff] %v566
      %603 = vst [vmem:[#allocation2 + $0xd3] sm:$0xff] %v567
      %604 = vst [vmem:[#allocation2 + $0xdb] sm:$0xff] %v568
      %605 = vst [vmem:[#allocation2 + $0xe3] sm:$0xff] %v569
      %606 = vst [vmem:[#allocation2 + $0xeb] sm:$0xff] %v570
      %607 = vst [vmem:[#allocation2 + $0xf3] sm:$0xff] %v571
      %608 = vst [vmem:[#allocation2 + $0xfb] sm:$0xff] %v572
      %609 = vst [vmem:[#allocation2 + $0x103] sm:$0xff] %v573
      %610 = vst [vmem:[#allocation2 + $0x10b] sm:$0xff] %v574
      %611 = vst [vmem:[#allocation2 + $0x113] sm:$0xff] %v575
      %612 = vst [vmem:[#allocation2 + $0x11b] sm:$0xff] %v576
      %613 = vst [vmem:[#allocation2 + $0x123] sm:$0xff] %v577
      %614 = vst [vmem:[#allocation2 + $0x12b] sm:$0xff] %v578
      %v615 = vld [vmem:[#allocation2] sm:$0xff]
      %v616 = vld [vmem:[#allocation2 + $0x8] sm:$0xff]
      %v617 = vld [vmem:[#allocation2 + $0x10] sm:$0xff]
      %v618 = vld [vmem:[#allocation2 + $0x18] sm:$0xff]
      %v619 = vld [vmem:[#allocation2 + $0x20] sm:$0xff]
      %v620 = vld [vmem:[#allocation2 + $0x28] sm:$0xff]
      %v621 = vld [vmem:[#allocation2 + $0x30] sm:$0xff]
      %v622 = vld [vmem:[#allocation2 + $0x38] sm:$0xff]
      %v623 = vld [vmem:[#allocation2 + $0x40] sm:$0xff]
      %v624 = vld [vmem:[#allocation2 + $0x48] sm:$0xff]
      %v625 = vld [vmem:[#allocation2 + $0x50] sm:$0xff]
      %v626 = vld [vmem:[#allocation2 + $0x58] sm:$0xff]
      %v627 = vld [vmem:[#allocation2 + $0x60] sm:$0xff]
      %v628 = vld [vmem:[#allocation2 + $0x68] sm:$0xff]
      %v629 = vld [vmem:[#allocation2 + $0x70] sm:$0xff]
      %v630 = vld [vmem:[#allocation2 + $0x78] sm:$0xff]
      %v631 = vld [vmem:[#allocation2 + $0x80] sm:$0xff]
      %v632 = vld [vmem:[#allocation2 + $0x88] sm:$0xff]
      %v633 = vld [vmem:[#allocation2 + $0x90] sm:$0xff]
      %v634 = vld [vmem:[#allocation2 + $0x98] sm:$0xff]
      %v635 = vld [vmem:[#allocation2 + $0xa0] sm:$0xff]
      %v636 = vld [vmem:[#allocation2 + $0xa8] sm:$0xff]
      %v637 = vld [vmem:[#allocation2 + $0xb0] sm:$0xff]
      %v638 = vld [vmem:[#allocation2 + $0xb8] sm:$0xff]
      %v639 = vld [vmem:[#allocation2 + $0xc0] sm:$0xff]
      %v640 = vld [vmem:[#allocation2 + $0xc8] sm:$0xff]
      %v641 = vld [vmem:[#allocation2 + $0xd0] sm:$0xff]
      %v642 = vld [vmem:[#allocation2 + $0xd8] sm:$0xff]
      %v643 = vld [vmem:[#allocation2 + $0xe0] sm:$0xff]
      %v644 = vld [vmem:[#allocation2 + $0xe8] sm:$0xff]
      %v645 = vld [vmem:[#allocation2 + $0xf0] sm:$0xff]
      %v646 = vld [vmem:[#allocation2 + $0xf8] sm:$0xff]
      %v647 = vld [vmem:[#allocation2 + $0x100] sm:$0xff]
      %v648 = vld [vmem:[#allocation2 + $0x108] sm:$0xff]
      %v649 = vld [vmem:[#allocation2 + $0x110] sm:$0xff]
      %v650 = vld [vmem:[#allocation2 + $0x118] sm:$0xff]
      %v651 = vpack.c.bf16 %v616, %v615
      %v652 = vpack.c.bf16 %v618, %v617
      %v653 = vpack.c.bf16 %v620, %v619
      %v654 = vpack.c.bf16 %v622, %v621
      %v655 = vpack.c.bf16 %v624, %v623
      %v656 = vpack.c.bf16 %v626, %v625
      %v657 = vpack.c.bf16 %v628, %v627
      %v658 = vpack.c.bf16 %v630, %v629
      %v659 = vpack.c.bf16 %v632, %v631
      %v660 = vpack.c.bf16 %v634, %v633
      %v661 = vpack.c.bf16 %v636, %v635
      %v662 = vpack.c.bf16 %v638, %v637
      %v663 = vpack.c.bf16 %v640, %v639
      %v664 = vpack.c.bf16 %v642, %v641
      %v665 = vpack.c.bf16 %v644, %v643
      %v666 = vpack.c.bf16 %v646, %v645
      %v667 = vpack.c.bf16 %v648, %v647
      %v668 = vpack.c.bf16 %v650, %v649
      %v669 = vld [vmem:[%s3] sm:$0xf]
      %v670 = vld [vmem:[%s3 + $0x4] sm:$0xf]
      %v671 = vld [vmem:[%s3 + $0x8] sm:$0xf]
      %v672 = vld [vmem:[%s3 + $0xc] sm:$0xf]
      %v673 = vld [vmem:[%s3 + $0x10] sm:$0xf]
      %v674 = vld [vmem:[%s3 + $0x14] sm:$0xf]
      %v675 = vld [vmem:[%s3 + $0x18] sm:$0xf]
      %v676 = vld [vmem:[%s3 + $0x1c] sm:$0xf]
      %v677 = vld [vmem:[%s3 + $0x20] sm:$0xf]
      %v678 = vld [vmem:[%s3 + $0x24] sm:$0xf]
      %v679 = vld [vmem:[%s3 + $0x28] sm:$0xf]
      %v680 = vld [vmem:[%s3 + $0x2c] sm:$0xf]
      %v681 = vld [vmem:[%s3 + $0x30] sm:$0xf]
      %v682 = vld [vmem:[%s3 + $0x34] sm:$0xf]
      %v683 = vld [vmem:[%s3 + $0x38] sm:$0xf]
      %v684 = vld [vmem:[%s3 + $0x3c] sm:$0xf]
      %v685 = vld [vmem:[#allocation2 + $0x1] sm:$0xff]
      %v686 = vld [vmem:[#allocation2 + $0x9] sm:$0xff]
      %v687 = vld [vmem:[#allocation2 + $0x11] sm:$0xff]
      %v688 = vld [vmem:[#allocation2 + $0x19] sm:$0xff]
      %v689 = vld [vmem:[#allocation2 + $0x21] sm:$0xff]
      %v690 = vld [vmem:[#allocation2 + $0x29] sm:$0xff]
      %v691 = vld [vmem:[#allocation2 + $0x31] sm:$0xff]
      %v692 = vld [vmem:[#allocation2 + $0x39] sm:$0xff]
      %v693 = vld [vmem:[#allocation2 + $0x41] sm:$0xff]
      %v694 = vld [vmem:[#allocation2 + $0x49] sm:$0xff]
      %v695 = vld [vmem:[#allocation2 + $0x51] sm:$0xff]
      %v696 = vld [vmem:[#allocation2 + $0x59] sm:$0xff]
      %v697 = vld [vmem:[#allocation2 + $0x61] sm:$0xff]
      %v698 = vld [vmem:[#allocation2 + $0x69] sm:$0xff]
      %v699 = vld [vmem:[#allocation2 + $0x71] sm:$0xff]
      %v700 = vld [vmem:[#allocation2 + $0x79] sm:$0xff]
      %v701 = vld [vmem:[#allocation2 + $0x81] sm:$0xff]
      %v702 = vld [vmem:[#allocation2 + $0x89] sm:$0xff]
      %v703 = vld [vmem:[#allocation2 + $0x91] sm:$0xff]
      %v704 = vld [vmem:[#allocation2 + $0x99] sm:$0xff]
      %v705 = vld [vmem:[#allocation2 + $0xa1] sm:$0xff]
      %v706 = vld [vmem:[#allocation2 + $0xa9] sm:$0xff]
      %v707 = vld [vmem:[#allocation2 + $0xb1] sm:$0xff]
      %v708 = vld [vmem:[#allocation2 + $0xb9] sm:$0xff]
      %v709 = vld [vmem:[#allocation2 + $0xc1] sm:$0xff]
      %v710 = vld [vmem:[#allocation2 + $0xc9] sm:$0xff]
      %v711 = vld [vmem:[#allocation2 + $0xd1] sm:$0xff]
      %v712 = vld [vmem:[#allocation2 + $0xd9] sm:$0xff]
      %v713 = vld [vmem:[#allocation2 + $0xe1] sm:$0xff]
      %v714 = vld [vmem:[#allocation2 + $0xe9] sm:$0xff]
      %v715 = vld [vmem:[#allocation2 + $0xf1] sm:$0xff]
      %v716 = vld [vmem:[#allocation2 + $0xf9] sm:$0xff]
      %v717 = vld [vmem:[#allocation2 + $0x101] sm:$0xff]
      %v718 = vld [vmem:[#allocation2 + $0x109] sm:$0xff]
      %v719 = vld [vmem:[#allocation2 + $0x111] sm:$0xff]
      %v720 = vld [vmem:[#allocation2 + $0x119] sm:$0xff]
      %v721 = vpack.c.bf16 %v686, %v685
      %v722 = vpack.c.bf16 %v688, %v687
      %v723 = vpack.c.bf16 %v690, %v689
      %v724 = vpack.c.bf16 %v692, %v691
      %v725 = vpack.c.bf16 %v694, %v693
      %v726 = vpack.c.bf16 %v696, %v695
      %v727 = vpack.c.bf16 %v698, %v697
      %v728 = vpack.c.bf16 %v700, %v699
      %v729 = vpack.c.bf16 %v702, %v701
      %v730 = vpack.c.bf16 %v704, %v703
      %v731 = vpack.c.bf16 %v706, %v705
      %v732 = vpack.c.bf16 %v708, %v707
      %v733 = vpack.c.bf16 %v710, %v709
      %v734 = vpack.c.bf16 %v712, %v711
      %v735 = vpack.c.bf16 %v714, %v713
      %v736 = vpack.c.bf16 %v716, %v715
      %v737 = vpack.c.bf16 %v718, %v717
      %v738 = vpack.c.bf16 %v720, %v719
      %s739 = scalar_lea.vmem %s3, 64
      %v740 = vld [vmem:[%s739] sm:$0xf]
      %v741 = vld [vmem:[%s739 + $0x4] sm:$0xf]
      %v742 = vld [vmem:[%s739 + $0x8] sm:$0xf]
      %v743 = vld [vmem:[%s739 + $0xc] sm:$0xf]
      %v744 = vld [vmem:[%s739 + $0x10] sm:$0xf]
      %v745 = vld [vmem:[%s739 + $0x14] sm:$0xf]
      %v746 = vld [vmem:[%s739 + $0x18] sm:$0xf]
      %v747 = vld [vmem:[%s739 + $0x1c] sm:$0xf]
      %v748 = vld [vmem:[%s739 + $0x20] sm:$0xf]
      %v749 = vld [vmem:[%s739 + $0x24] sm:$0xf]
      %v750 = vld [vmem:[%s739 + $0x28] sm:$0xf]
      %v751 = vld [vmem:[%s739 + $0x2c] sm:$0xf]
      %v752 = vld [vmem:[%s739 + $0x30] sm:$0xf]
      %v753 = vld [vmem:[%s739 + $0x34] sm:$0xf]
      %v754 = vld [vmem:[%s739 + $0x38] sm:$0xf]
      %v755 = vld [vmem:[%s739 + $0x3c] sm:$0xf]
      %v772 = vunpack.c.l.b16 %v740
      %v773 = vunpack.c.l.b16 %v741
      %v774 = vunpack.c.l.b16 %v742
      %v775 = vunpack.c.l.b16 %v743
      %v776 = vunpack.c.l.b16 %v744
      %v777 = vunpack.c.l.b16 %v745
      %v778 = vunpack.c.l.b16 %v746
      %v779 = vunpack.c.l.b16 %v747
      %v780 = vunpack.c.l.b16 %v748
      %v781 = vunpack.c.l.b16 %v749
      %v782 = vunpack.c.l.b16 %v750
      %v783 = vunpack.c.l.b16 %v751
      %v784 = vunpack.c.l.b16 %v752
      %v785 = vunpack.c.l.b16 %v753
      %v786 = vunpack.c.l.b16 %v754
      %v787 = vunpack.c.l.b16 %v755
      %v788 = vpack.c.b16 %v773, %v772
      %v789 = vpack.c.b16 %v775, %v774
      %v790 = vpack.c.b16 %v777, %v776
      %v791 = vpack.c.b16 %v779, %v778
      %v792 = vpack.c.b16 %v781, %v780
      %v793 = vpack.c.b16 %v783, %v782
      %v794 = vpack.c.b16 %v785, %v784
      %v795 = vpack.c.b16 %v787, %v786
      %804 = vmatprep.subr.bf16.mxu0 0
      %805 = vmatpush1.bf16.msra.mxu0 %v795
      %806 = vmatprep.subr.bf16.mxu0 0
      %807 = vmatpush1.bf16.msra.mxu0 %v794
      %808 = vmatprep.subr.bf16.mxu0 0
      %809 = vmatpush1.bf16.msra.mxu0 %v793
      %810 = vmatprep.subr.bf16.mxu0 0
      %811 = vmatpush1.bf16.msra.mxu0 %v792
      %812 = vmatprep.subr.bf16.mxu0 0
      %813 = vmatpush1.bf16.msra.mxu0 %v791
      %814 = vmatprep.subr.bf16.mxu0 0
      %815 = vmatpush1.bf16.msra.mxu0 %v790
      %816 = vmatprep.subr.bf16.mxu0 0
      %817 = vmatpush1.bf16.msra.mxu0 %v789
      %818 = vmatprep.subr.bf16.mxu0 0
      %819 = vmatpush1.bf16.msra.mxu0 %v788
      %820 = vmatprep.subr.bf16.mxu0 0
      %821 = vmatpush2.bf16.msra.mxu0 0
      %822 = vmatprep.subr.bf16.mxu0 0
      %823 = vmatpush2.bf16.msra.mxu0 0
      %824 = vmatprep.subr.bf16.mxu0 0
      %825 = vmatpush2.bf16.msra.mxu0 0
      %826 = vmatprep.subr.bf16.mxu0 0
      %827 = vmatpush2.bf16.msra.mxu0 0
      %828 = vmatprep.subr.bf16.mxu0 0
      %829 = vmatpush2.bf16.msra.mxu0 0
      %830 = vmatprep.subr.bf16.mxu0 0
      %831 = vmatpush2.bf16.msra.mxu0 0
      %832 = vmatprep.subr.bf16.mxu0 0
      %833 = vmatpush2.bf16.msra.mxu0 0
      %834 = vmatprep.subr.bf16.mxu0 0
      %835 = vmatpush2.bf16.msra.mxu0 0
      %836 = vmatprep.mubr.bf16.mxu0 0
      %837 = vmatmul.mubr.bf16.gmra.mxu0 %v721
      %v838 = vpop.f32.mrf.mxu0
      %v839 = vadd.f32 0.0, %v838
      %v840 = vpop.f32.mrf.mxu0
      %v841 = vpop.f32.mrf.mxu0
      %v842 = vadd.f32 0.0, %v841
      %v843 = vpop.f32.mrf.mxu0
      %844 = vmatprep.mubr.bf16.mxu0 0
      %845 = vmatmul.mubr.bf16.gmra.mxu0 %v722
      %v846 = vpop.f32.mrf.mxu0
      %v847 = vadd.f32 0.0, %v846
      %v848 = vpop.f32.mrf.mxu0
      %v849 = vpop.f32.mrf.mxu0
      %v850 = vadd.f32 0.0, %v849
      %v851 = vpop.f32.mrf.mxu0
      %852 = vmatprep.mubr.bf16.mxu0 0
      %853 = vmatmul.mubr.bf16.gmra.mxu0 %v723
      %v854 = vpop.f32.mrf.mxu0
      %v855 = vadd.f32 0.0, %v854
      %v856 = vpop.f32.mrf.mxu0
      %v857 = vpop.f32.mrf.mxu0
      %v858 = vadd.f32 0.0, %v857
      %v859 = vpop.f32.mrf.mxu0
      %860 = vmatprep.mubr.bf16.mxu0 0
      %861 = vmatmul.mubr.bf16.gmra.mxu0 %v724
      %v862 = vpop.f32.mrf.mxu0
      %v863 = vadd.f32 0.0, %v862
      %v864 = vpop.f32.mrf.mxu0
      %v865 = vpop.f32.mrf.mxu0
      %v866 = vadd.f32 0.0, %v865
      %v867 = vpop.f32.mrf.mxu0
      %868 = vmatprep.mubr.bf16.mxu0 0
      %869 = vmatmul.mubr.bf16.gmra.mxu0 %v725
      %v870 = vpop.f32.mrf.mxu0
      %v871 = vadd.f32 0.0, %v870
      %v872 = vpop.f32.mrf.mxu0
      %v873 = vpop.f32.mrf.mxu0
      %v874 = vadd.f32 0.0, %v873
      %v875 = vpop.f32.mrf.mxu0
      %876 = vmatprep.mubr.bf16.mxu0 0
      %877 = vmatmul.mubr.bf16.gmra.mxu0 %v726
      %v878 = vpop.f32.mrf.mxu0
      %v879 = vadd.f32 0.0, %v878
      %v880 = vpop.f32.mrf.mxu0
      %v881 = vpop.f32.mrf.mxu0
      %v882 = vadd.f32 0.0, %v881
      %v883 = vpop.f32.mrf.mxu0
      %884 = vmatprep.mubr.bf16.mxu0 0
      %885 = vmatmul.mubr.bf16.gmra.mxu0 %v727
      %v886 = vpop.f32.mrf.mxu0
      %v887 = vadd.f32 0.0, %v886
      %v888 = vpop.f32.mrf.mxu0
      %v889 = vpop.f32.mrf.mxu0
      %v890 = vadd.f32 0.0, %v889
      %v891 = vpop.f32.mrf.mxu0
      %892 = vmatprep.mubr.bf16.mxu0 0
      %893 = vmatmul.mubr.bf16.gmra.mxu0 %v728
      %v894 = vpop.f32.mrf.mxu0
      %v895 = vadd.f32 0.0, %v894
      %v896 = vpop.f32.mrf.mxu0
      %v897 = vpop.f32.mrf.mxu0
      %v898 = vadd.f32 0.0, %v897
      %v899 = vpop.f32.mrf.mxu0
      %900 = vmatprep.mubr.bf16.mxu0 0
      %901 = vmatmul.mubr.bf16.gmra.mxu0 %v729
      %v902 = vpop.f32.mrf.mxu0
      %v903 = vadd.f32 0.0, %v902
      %v904 = vpop.f32.mrf.mxu0
      %v905 = vpop.f32.mrf.mxu0
      %v906 = vadd.f32 0.0, %v905
      %v907 = vpop.f32.mrf.mxu0
      %908 = vmatprep.mubr.bf16.mxu0 0
      %909 = vmatmul.mubr.bf16.gmra.mxu0 %v730
      %v910 = vpop.f32.mrf.mxu0
      %v911 = vadd.f32 0.0, %v910
      %v912 = vpop.f32.mrf.mxu0
      %v913 = vpop.f32.mrf.mxu0
      %v914 = vadd.f32 0.0, %v913
      %v915 = vpop.f32.mrf.mxu0
      %916 = vmatprep.mubr.bf16.mxu0 0
      %917 = vmatmul.mubr.bf16.gmra.mxu0 %v731
      %v918 = vpop.f32.mrf.mxu0
      %v919 = vadd.f32 0.0, %v918
      %v920 = vpop.f32.mrf.mxu0
      %v921 = vpop.f32.mrf.mxu0
      %v922 = vadd.f32 0.0, %v921
      %v923 = vpop.f32.mrf.mxu0
      %924 = vmatprep.mubr.bf16.mxu0 0
      %925 = vmatmul.mubr.bf16.gmra.mxu0 %v732
      %v926 = vpop.f32.mrf.mxu0
      %v927 = vadd.f32 0.0, %v926
      %v928 = vpop.f32.mrf.mxu0
      %v929 = vpop.f32.mrf.mxu0
      %v930 = vadd.f32 0.0, %v929
      %v931 = vpop.f32.mrf.mxu0
      %932 = vmatprep.mubr.bf16.mxu0 0
      %933 = vmatmul.mubr.bf16.gmra.mxu0 %v733
      %v934 = vpop.f32.mrf.mxu0
      %v935 = vadd.f32 0.0, %v934
      %v936 = vpop.f32.mrf.mxu0
      %v937 = vpop.f32.mrf.mxu0
      %v938 = vadd.f32 0.0, %v937
      %v939 = vpop.f32.mrf.mxu0
      %940 = vmatprep.mubr.bf16.mxu0 0
      %941 = vmatmul.mubr.bf16.gmra.mxu0 %v734
      %v942 = vpop.f32.mrf.mxu0
      %v943 = vadd.f32 0.0, %v942
      %v944 = vpop.f32.mrf.mxu0
      %v945 = vpop.f32.mrf.mxu0
      %v946 = vadd.f32 0.0, %v945
      %v947 = vpop.f32.mrf.mxu0
      %948 = vmatprep.mubr.bf16.mxu0 0
      %949 = vmatmul.mubr.bf16.gmra.mxu0 %v735
      %v950 = vpop.f32.mrf.mxu0
      %v951 = vadd.f32 0.0, %v950
      %v952 = vpop.f32.mrf.mxu0
      %v953 = vpop.f32.mrf.mxu0
      %v954 = vadd.f32 0.0, %v953
      %v955 = vpop.f32.mrf.mxu0
      %956 = vmatprep.mubr.bf16.mxu0 0
      %957 = vmatmul.mubr.bf16.gmra.mxu0 %v736
      %v958 = vpop.f32.mrf.mxu0
      %v959 = vadd.f32 0.0, %v958
      %v960 = vpop.f32.mrf.mxu0
      %v961 = vpop.f32.mrf.mxu0
      %v962 = vadd.f32 0.0, %v961
      %v963 = vpop.f32.mrf.mxu0
      %964 = vmatprep.mubr.bf16.mxu0 0
      %965 = vmatmul.mubr.bf16.gmra.mxu0 %v737
      %v966 = vpop.f32.mrf.mxu0
      %v967 = vadd.f32 0.0, %v966
      %v968 = vpop.f32.mrf.mxu0
      %v969 = vpop.f32.mrf.mxu0
      %v970 = vadd.f32 0.0, %v969
      %v971 = vpop.f32.mrf.mxu0
      %972 = vmatprep.mubr.bf16.mxu0 0
      %973 = vmatmul.mubr.bf16.gmra.mxu0 %v738
      %v974 = vpop.f32.mrf.mxu0
      %v975 = vadd.f32 0.0, %v974
      %v976 = vpop.f32.mrf.mxu0
      %v977 = vpop.f32.mrf.mxu0
      %v978 = vadd.f32 0.0, %v977
      %v979 = vpop.f32.mrf.mxu0
      %980 = vdwg.mxu0
      %v997 = vunpack.c.l.b16 %v669
      %v998 = vunpack.c.l.b16 %v670
      %v999 = vunpack.c.l.b16 %v671
      %v1000 = vunpack.c.l.b16 %v672
      %v1001 = vunpack.c.l.b16 %v673
      %v1002 = vunpack.c.l.b16 %v674
      %v1003 = vunpack.c.l.b16 %v675
      %v1004 = vunpack.c.l.b16 %v676
      %v1005 = vunpack.c.l.b16 %v677
      %v1006 = vunpack.c.l.b16 %v678
      %v1007 = vunpack.c.l.b16 %v679
      %v1008 = vunpack.c.l.b16 %v680
      %v1009 = vunpack.c.l.b16 %v681
      %v1010 = vunpack.c.l.b16 %v682
      %v1011 = vunpack.c.l.b16 %v683
      %v1012 = vunpack.c.l.b16 %v684
      %v1013 = vpack.c.b16 %v998, %v997
      %v1014 = vpack.c.b16 %v1000, %v999
      %v1015 = vpack.c.b16 %v1002, %v1001
      %v1016 = vpack.c.b16 %v1004, %v1003
      %v1017 = vpack.c.b16 %v1006, %v1005
      %v1018 = vpack.c.b16 %v1008, %v1007
      %v1019 = vpack.c.b16 %v1010, %v1009
      %v1020 = vpack.c.b16 %v1012, %v1011
      %1029 = vmatprep.subr.bf16.mxu0 0
      %1030 = vmatpush1.bf16.msra.mxu0 %v1020
      %1031 = vmatprep.subr.bf16.mxu0 0
      %1032 = vmatpush1.bf16.msra.mxu0 %v1019
      %1033 = vmatprep.subr.bf16.mxu0 0
      %1034 = vmatpush1.bf16.msra.mxu0 %v1018
      %1035 = vmatprep.subr.bf16.mxu0 0
      %1036 = vmatpush1.bf16.msra.mxu0 %v1017
      %1037 = vmatprep.subr.bf16.mxu0 0
      %1038 = vmatpush1.bf16.msra.mxu0 %v1016
      %1039 = vmatprep.subr.bf16.mxu0 0
      %1040 = vmatpush1.bf16.msra.mxu0 %v1015
      %1041 = vmatprep.subr.bf16.mxu0 0
      %1042 = vmatpush1.bf16.msra.mxu0 %v1014
      %1043 = vmatprep.subr.bf16.mxu0 0
      %1044 = vmatpush1.bf16.msra.mxu0 %v1013
      %1045 = vmatprep.subr.bf16.mxu0 0
      %1046 = vmatpush2.bf16.msra.mxu0 0
      %1047 = vmatprep.subr.bf16.mxu0 0
      %1048 = vmatpush2.bf16.msra.mxu0 0
      %1049 = vmatprep.subr.bf16.mxu0 0
      %1050 = vmatpush2.bf16.msra.mxu0 0
      %1051 = vmatprep.subr.bf16.mxu0 0
      %1052 = vmatpush2.bf16.msra.mxu0 0
      %1053 = vmatprep.subr.bf16.mxu0 0
      %1054 = vmatpush2.bf16.msra.mxu0 0
      %1055 = vmatprep.subr.bf16.mxu0 0
      %1056 = vmatpush2.bf16.msra.mxu0 0
      %1057 = vmatprep.subr.bf16.mxu0 0
      %1058 = vmatpush2.bf16.msra.mxu0 0
      %1059 = vmatprep.subr.bf16.mxu0 0
      %1060 = vmatpush2.bf16.msra.mxu0 0
      %1061 = vmatprep.mubr.bf16.mxu0 0
      %1062 = vmatmul.mubr.bf16.gmra.mxu0 %v651
      %v1063 = vpop.f32.mrf.mxu0
      %v1064 = vadd.f32 %v839, %v1063
      %v1065 = vpop.f32.mrf.mxu0
      %v1066 = vpop.f32.mrf.mxu0
      %v1067 = vadd.f32 %v842, %v1066
      %v1068 = vpop.f32.mrf.mxu0
      %1069 = vmatprep.mubr.bf16.mxu0 0
      %1070 = vmatmul.mubr.bf16.gmra.mxu0 %v652
      %v1071 = vpop.f32.mrf.mxu0
      %v1072 = vadd.f32 %v847, %v1071
      %v1073 = vpop.f32.mrf.mxu0
      %v1074 = vpop.f32.mrf.mxu0
      %v1075 = vadd.f32 %v850, %v1074
      %v1076 = vpop.f32.mrf.mxu0
      %1077 = vmatprep.mubr.bf16.mxu0 0
      %1078 = vmatmul.mubr.bf16.gmra.mxu0 %v653
      %v1079 = vpop.f32.mrf.mxu0
      %v1080 = vadd.f32 %v855, %v1079
      %v1081 = vpop.f32.mrf.mxu0
      %v1082 = vpop.f32.mrf.mxu0
      %v1083 = vadd.f32 %v858, %v1082
      %v1084 = vpop.f32.mrf.mxu0
      %1085 = vmatprep.mubr.bf16.mxu0 0
      %1086 = vmatmul.mubr.bf16.gmra.mxu0 %v654
      %v1087 = vpop.f32.mrf.mxu0
      %v1088 = vadd.f32 %v863, %v1087
      %v1089 = vpop.f32.mrf.mxu0
      %v1090 = vpop.f32.mrf.mxu0
      %v1091 = vadd.f32 %v866, %v1090
      %v1092 = vpop.f32.mrf.mxu0
      %1093 = vmatprep.mubr.bf16.mxu0 0
      %1094 = vmatmul.mubr.bf16.gmra.mxu0 %v655
      %v1095 = vpop.f32.mrf.mxu0
      %v1096 = vadd.f32 %v871, %v1095
      %v1097 = vpop.f32.mrf.mxu0
      %v1098 = vpop.f32.mrf.mxu0
      %v1099 = vadd.f32 %v874, %v1098
      %v1100 = vpop.f32.mrf.mxu0
      %1101 = vmatprep.mubr.bf16.mxu0 0
      %1102 = vmatmul.mubr.bf16.gmra.mxu0 %v656
      %v1103 = vpop.f32.mrf.mxu0
      %v1104 = vadd.f32 %v879, %v1103
      %v1105 = vpop.f32.mrf.mxu0
      %v1106 = vpop.f32.mrf.mxu0
      %v1107 = vadd.f32 %v882, %v1106
      %v1108 = vpop.f32.mrf.mxu0
      %1109 = vmatprep.mubr.bf16.mxu0 0
      %1110 = vmatmul.mubr.bf16.gmra.mxu0 %v657
      %v1111 = vpop.f32.mrf.mxu0
      %v1112 = vadd.f32 %v887, %v1111
      %v1113 = vpop.f32.mrf.mxu0
      %v1114 = vpop.f32.mrf.mxu0
      %v1115 = vadd.f32 %v890, %v1114
      %v1116 = vpop.f32.mrf.mxu0
      %1117 = vmatprep.mubr.bf16.mxu0 0
      %1118 = vmatmul.mubr.bf16.gmra.mxu0 %v658
      %v1119 = vpop.f32.mrf.mxu0
      %v1120 = vadd.f32 %v895, %v1119
      %v1121 = vpop.f32.mrf.mxu0
      %v1122 = vpop.f32.mrf.mxu0
      %v1123 = vadd.f32 %v898, %v1122
      %v1124 = vpop.f32.mrf.mxu0
      %1125 = vmatprep.mubr.bf16.mxu0 0
      %1126 = vmatmul.mubr.bf16.gmra.mxu0 %v659
      %v1127 = vpop.f32.mrf.mxu0
      %v1128 = vadd.f32 %v903, %v1127
      %v1129 = vpop.f32.mrf.mxu0
      %v1130 = vpop.f32.mrf.mxu0
      %v1131 = vadd.f32 %v906, %v1130
      %v1132 = vpop.f32.mrf.mxu0
      %1133 = vmatprep.mubr.bf16.mxu0 0
      %1134 = vmatmul.mubr.bf16.gmra.mxu0 %v660
      %v1135 = vpop.f32.mrf.mxu0
      %v1136 = vadd.f32 %v911, %v1135
      %v1137 = vpop.f32.mrf.mxu0
      %v1138 = vpop.f32.mrf.mxu0
      %v1139 = vadd.f32 %v914, %v1138
      %v1140 = vpop.f32.mrf.mxu0
      %1141 = vmatprep.mubr.bf16.mxu0 0
      %1142 = vmatmul.mubr.bf16.gmra.mxu0 %v661
      %v1143 = vpop.f32.mrf.mxu0
      %v1144 = vadd.f32 %v919, %v1143
      %v1145 = vpop.f32.mrf.mxu0
      %v1146 = vpop.f32.mrf.mxu0
      %v1147 = vadd.f32 %v922, %v1146
      %v1148 = vpop.f32.mrf.mxu0
      %1149 = vmatprep.mubr.bf16.mxu0 0
      %1150 = vmatmul.mubr.bf16.gmra.mxu0 %v662
      %v1151 = vpop.f32.mrf.mxu0
      %v1152 = vadd.f32 %v927, %v1151
      %v1153 = vpop.f32.mrf.mxu0
      %v1154 = vpop.f32.mrf.mxu0
      %v1155 = vadd.f32 %v930, %v1154
      %v1156 = vpop.f32.mrf.mxu0
      %1157 = vmatprep.mubr.bf16.mxu0 0
      %1158 = vmatmul.mubr.bf16.gmra.mxu0 %v663
      %v1159 = vpop.f32.mrf.mxu0
      %v1160 = vadd.f32 %v935, %v1159
      %v1161 = vpop.f32.mrf.mxu0
      %v1162 = vpop.f32.mrf.mxu0
      %v1163 = vadd.f32 %v938, %v1162
      %v1164 = vpop.f32.mrf.mxu0
      %1165 = vmatprep.mubr.bf16.mxu0 0
      %1166 = vmatmul.mubr.bf16.gmra.mxu0 %v664
      %v1167 = vpop.f32.mrf.mxu0
      %v1168 = vadd.f32 %v943, %v1167
      %v1169 = vpop.f32.mrf.mxu0
      %v1170 = vpop.f32.mrf.mxu0
      %v1171 = vadd.f32 %v946, %v1170
      %v1172 = vpop.f32.mrf.mxu0
      %1173 = vmatprep.mubr.bf16.mxu0 0
      %1174 = vmatmul.mubr.bf16.gmra.mxu0 %v665
      %v1175 = vpop.f32.mrf.mxu0
      %v1176 = vadd.f32 %v951, %v1175
      %v1177 = vpop.f32.mrf.mxu0
      %v1178 = vpop.f32.mrf.mxu0
      %v1179 = vadd.f32 %v954, %v1178
      %v1180 = vpop.f32.mrf.mxu0
      %1181 = vmatprep.mubr.bf16.mxu0 0
      %1182 = vmatmul.mubr.bf16.gmra.mxu0 %v666
      %v1183 = vpop.f32.mrf.mxu0
      %v1184 = vadd.f32 %v959, %v1183
      %v1185 = vpop.f32.mrf.mxu0
      %v1186 = vpop.f32.mrf.mxu0
      %v1187 = vadd.f32 %v962, %v1186
      %v1188 = vpop.f32.mrf.mxu0
      %1189 = vmatprep.mubr.bf16.mxu0 0
      %1190 = vmatmul.mubr.bf16.gmra.mxu0 %v667
      %v1191 = vpop.f32.mrf.mxu0
      %v1192 = vadd.f32 %v967, %v1191
      %v1193 = vpop.f32.mrf.mxu0
      %v1194 = vpop.f32.mrf.mxu0
      %v1195 = vadd.f32 %v970, %v1194
      %v1196 = vpop.f32.mrf.mxu0
      %1197 = vmatprep.mubr.bf16.mxu0 0
      %1198 = vmatmul.mubr.bf16.gmra.mxu0 %v668
      %v1199 = vpop.f32.mrf.mxu0
      %v1200 = vadd.f32 %v975, %v1199
      %v1201 = vpop.f32.mrf.mxu0
      %v1202 = vpop.f32.mrf.mxu0
      %v1203 = vadd.f32 %v978, %v1202
      %v1204 = vpop.f32.mrf.mxu0
      %1205 = vdwg.mxu0
      %v1206 = vld [vmem:[#allocation2 + $0x2] sm:$0xff]
      %v1207 = vld [vmem:[#allocation2 + $0xa] sm:$0xff]
      %v1208 = vld [vmem:[#allocation2 + $0x12] sm:$0xff]
      %v1209 = vld [vmem:[#allocation2 + $0x1a] sm:$0xff]
      %v1210 = vld [vmem:[#allocation2 + $0x22] sm:$0xff]
      %v1211 = vld [vmem:[#allocation2 + $0x2a] sm:$0xff]
      %v1212 = vld [vmem:[#allocation2 + $0x32] sm:$0xff]
      %v1213 = vld [vmem:[#allocation2 + $0x3a] sm:$0xff]
      %v1214 = vld [vmem:[#allocation2 + $0x42] sm:$0xff]
      %v1215 = vld [vmem:[#allocation2 + $0x4a] sm:$0xff]
      %v1216 = vld [vmem:[#allocation2 + $0x52] sm:$0xff]
      %v1217 = vld [vmem:[#allocation2 + $0x5a] sm:$0xff]
      %v1218 = vld [vmem:[#allocation2 + $0x62] sm:$0xff]
      %v1219 = vld [vmem:[#allocation2 + $0x6a] sm:$0xff]
      %v1220 = vld [vmem:[#allocation2 + $0x72] sm:$0xff]
      %v1221 = vld [vmem:[#allocation2 + $0x7a] sm:$0xff]
      %v1222 = vld [vmem:[#allocation2 + $0x82] sm:$0xff]
      %v1223 = vld [vmem:[#allocation2 + $0x8a] sm:$0xff]
      %v1224 = vld [vmem:[#allocation2 + $0x92] sm:$0xff]
      %v1225 = vld [vmem:[#allocation2 + $0x9a] sm:$0xff]
      %v1226 = vld [vmem:[#allocation2 + $0xa2] sm:$0xff]
      %v1227 = vld [vmem:[#allocation2 + $0xaa] sm:$0xff]
      %v1228 = vld [vmem:[#allocation2 + $0xb2] sm:$0xff]
      %v1229 = vld [vmem:[#allocation2 + $0xba] sm:$0xff]
      %v1230 = vld [vmem:[#allocation2 + $0xc2] sm:$0xff]
      %v1231 = vld [vmem:[#allocation2 + $0xca] sm:$0xff]
      %v1232 = vld [vmem:[#allocation2 + $0xd2] sm:$0xff]
      %v1233 = vld [vmem:[#allocation2 + $0xda] sm:$0xff]
      %v1234 = vld [vmem:[#allocation2 + $0xe2] sm:$0xff]
      %v1235 = vld [vmem:[#allocation2 + $0xea] sm:$0xff]
      %v1236 = vld [vmem:[#allocation2 + $0xf2] sm:$0xff]
      %v1237 = vld [vmem:[#allocation2 + $0xfa] sm:$0xff]
      %v1238 = vld [vmem:[#allocation2 + $0x102] sm:$0xff]
      %v1239 = vld [vmem:[#allocation2 + $0x10a] sm:$0xff]
      %v1240 = vld [vmem:[#allocation2 + $0x112] sm:$0xff]
      %v1241 = vld [vmem:[#allocation2 + $0x11a] sm:$0xff]
      %v1242 = vpack.c.bf16 %v1207, %v1206
      %v1243 = vpack.c.bf16 %v1209, %v1208
      %v1244 = vpack.c.bf16 %v1211, %v1210
      %v1245 = vpack.c.bf16 %v1213, %v1212
      %v1246 = vpack.c.bf16 %v1215, %v1214
      %v1247 = vpack.c.bf16 %v1217, %v1216
      %v1248 = vpack.c.bf16 %v1219, %v1218
      %v1249 = vpack.c.bf16 %v1221, %v1220
      %v1250 = vpack.c.bf16 %v1223, %v1222
      %v1251 = vpack.c.bf16 %v1225, %v1224
      %v1252 = vpack.c.bf16 %v1227, %v1226
      %v1253 = vpack.c.bf16 %v1229, %v1228
      %v1254 = vpack.c.bf16 %v1231, %v1230
      %v1255 = vpack.c.bf16 %v1233, %v1232
      %v1256 = vpack.c.bf16 %v1235, %v1234
      %v1257 = vpack.c.bf16 %v1237, %v1236
      %v1258 = vpack.c.bf16 %v1239, %v1238
      %v1259 = vpack.c.bf16 %v1241, %v1240
      %s1260 = scalar_lea.vmem %s3, 128
      %v1261 = vld [vmem:[%s1260] sm:$0xf]
      %v1262 = vld [vmem:[%s1260 + $0x4] sm:$0xf]
      %v1263 = vld [vmem:[%s1260 + $0x8] sm:$0xf]
      %v1264 = vld [vmem:[%s1260 + $0xc] sm:$0xf]
      %v1265 = vld [vmem:[%s1260 + $0x10] sm:$0xf]
      %v1266 = vld [vmem:[%s1260 + $0x14] sm:$0xf]
      %v1267 = vld [vmem:[%s1260 + $0x18] sm:$0xf]
      %v1268 = vld [vmem:[%s1260 + $0x1c] sm:$0xf]
      %v1269 = vld [vmem:[%s1260 + $0x20] sm:$0xf]
      %v1270 = vld [vmem:[%s1260 + $0x24] sm:$0xf]
      %v1271 = vld [vmem:[%s1260 + $0x28] sm:$0xf]
      %v1272 = vld [vmem:[%s1260 + $0x2c] sm:$0xf]
      %v1273 = vld [vmem:[%s1260 + $0x30] sm:$0xf]
      %v1274 = vld [vmem:[%s1260 + $0x34] sm:$0xf]
      %v1275 = vld [vmem:[%s1260 + $0x38] sm:$0xf]
      %v1276 = vld [vmem:[%s1260 + $0x3c] sm:$0xf]
      %v1293 = vunpack.c.l.b16 %v1261
      %v1294 = vunpack.c.l.b16 %v1262
      %v1295 = vunpack.c.l.b16 %v1263
      %v1296 = vunpack.c.l.b16 %v1264
      %v1297 = vunpack.c.l.b16 %v1265
      %v1298 = vunpack.c.l.b16 %v1266
      %v1299 = vunpack.c.l.b16 %v1267
      %v1300 = vunpack.c.l.b16 %v1268
      %v1301 = vunpack.c.l.b16 %v1269
      %v1302 = vunpack.c.l.b16 %v1270
      %v1303 = vunpack.c.l.b16 %v1271
      %v1304 = vunpack.c.l.b16 %v1272
      %v1305 = vunpack.c.l.b16 %v1273
      %v1306 = vunpack.c.l.b16 %v1274
      %v1307 = vunpack.c.l.b16 %v1275
      %v1308 = vunpack.c.l.b16 %v1276
      %v1309 = vpack.c.b16 %v1294, %v1293
      %v1310 = vpack.c.b16 %v1296, %v1295
      %v1311 = vpack.c.b16 %v1298, %v1297
      %v1312 = vpack.c.b16 %v1300, %v1299
      %v1313 = vpack.c.b16 %v1302, %v1301
      %v1314 = vpack.c.b16 %v1304, %v1303
      %v1315 = vpack.c.b16 %v1306, %v1305
      %v1316 = vpack.c.b16 %v1308, %v1307
      %1325 = vmatprep.subr.bf16.mxu0 0
      %1326 = vmatpush1.bf16.msra.mxu0 %v1316
      %1327 = vmatprep.subr.bf16.mxu0 0
      %1328 = vmatpush1.bf16.msra.mxu0 %v1315
      %1329 = vmatprep.subr.bf16.mxu0 0
      %1330 = vmatpush1.bf16.msra.mxu0 %v1314
      %1331 = vmatprep.subr.bf16.mxu0 0
      %1332 = vmatpush1.bf16.msra.mxu0 %v1313
      %1333 = vmatprep.subr.bf16.mxu0 0
      %1334 = vmatpush1.bf16.msra.mxu0 %v1312
      %1335 = vmatprep.subr.bf16.mxu0 0
      %1336 = vmatpush1.bf16.msra.mxu0 %v1311
      %1337 = vmatprep.subr.bf16.mxu0 0
      %1338 = vmatpush1.bf16.msra.mxu0 %v1310
      %1339 = vmatprep.subr.bf16.mxu0 0
      %1340 = vmatpush1.bf16.msra.mxu0 %v1309
      %1341 = vmatprep.subr.bf16.mxu0 0
      %1342 = vmatpush2.bf16.msra.mxu0 0
      %1343 = vmatprep.subr.bf16.mxu0 0
      %1344 = vmatpush2.bf16.msra.mxu0 0
      %1345 = vmatprep.subr.bf16.mxu0 0
      %1346 = vmatpush2.bf16.msra.mxu0 0
      %1347 = vmatprep.subr.bf16.mxu0 0
      %1348 = vmatpush2.bf16.msra.mxu0 0
      %1349 = vmatprep.subr.bf16.mxu0 0
      %1350 = vmatpush2.bf16.msra.mxu0 0
      %1351 = vmatprep.subr.bf16.mxu0 0
      %1352 = vmatpush2.bf16.msra.mxu0 0
      %1353 = vmatprep.subr.bf16.mxu0 0
      %1354 = vmatpush2.bf16.msra.mxu0 0
      %1355 = vmatprep.subr.bf16.mxu0 0
      %1356 = vmatpush2.bf16.msra.mxu0 0
      %1357 = vmatprep.mubr.bf16.mxu0 0
      %1358 = vmatmul.mubr.bf16.gmra.mxu0 %v1242
      %v1359 = vpop.f32.mrf.mxu0
      %v1360 = vadd.f32 0.0, %v1359
      %v1361 = vpop.f32.mrf.mxu0
      %v1362 = vpop.f32.mrf.mxu0
      %v1363 = vadd.f32 0.0, %v1362
      %v1364 = vpop.f32.mrf.mxu0
      %1365 = vmatprep.mubr.bf16.mxu0 0
      %1366 = vmatmul.mubr.bf16.gmra.mxu0 %v1243
      %v1367 = vpop.f32.mrf.mxu0
      %v1368 = vadd.f32 0.0, %v1367
      %v1369 = vpop.f32.mrf.mxu0
      %v1370 = vpop.f32.mrf.mxu0
      %v1371 = vadd.f32 0.0, %v1370
      %v1372 = vpop.f32.mrf.mxu0
      %1373 = vmatprep.mubr.bf16.mxu0 0
      %1374 = vmatmul.mubr.bf16.gmra.mxu0 %v1244
      %v1375 = vpop.f32.mrf.mxu0
      %v1376 = vadd.f32 0.0, %v1375
      %v1377 = vpop.f32.mrf.mxu0
      %v1378 = vpop.f32.mrf.mxu0
      %v1379 = vadd.f32 0.0, %v1378
      %v1380 = vpop.f32.mrf.mxu0
      %1381 = vmatprep.mubr.bf16.mxu0 0
      %1382 = vmatmul.mubr.bf16.gmra.mxu0 %v1245
      %v1383 = vpop.f32.mrf.mxu0
      %v1384 = vadd.f32 0.0, %v1383
      %v1385 = vpop.f32.mrf.mxu0
      %v1386 = vpop.f32.mrf.mxu0
      %v1387 = vadd.f32 0.0, %v1386
      %v1388 = vpop.f32.mrf.mxu0
      %1389 = vmatprep.mubr.bf16.mxu0 0
      %1390 = vmatmul.mubr.bf16.gmra.mxu0 %v1246
      %v1391 = vpop.f32.mrf.mxu0
      %v1392 = vadd.f32 0.0, %v1391
      %v1393 = vpop.f32.mrf.mxu0
      %v1394 = vpop.f32.mrf.mxu0
      %v1395 = vadd.f32 0.0, %v1394
      %v1396 = vpop.f32.mrf.mxu0
      %1397 = vmatprep.mubr.bf16.mxu0 0
      %1398 = vmatmul.mubr.bf16.gmra.mxu0 %v1247
      %v1399 = vpop.f32.mrf.mxu0
      %v1400 = vadd.f32 0.0, %v1399
      %v1401 = vpop.f32.mrf.mxu0
      %v1402 = vpop.f32.mrf.mxu0
      %v1403 = vadd.f32 0.0, %v1402
      %v1404 = vpop.f32.mrf.mxu0
      %1405 = vmatprep.mubr.bf16.mxu0 0
      %1406 = vmatmul.mubr.bf16.gmra.mxu0 %v1248
      %v1407 = vpop.f32.mrf.mxu0
      %v1408 = vadd.f32 0.0, %v1407
      %v1409 = vpop.f32.mrf.mxu0
      %v1410 = vpop.f32.mrf.mxu0
      %v1411 = vadd.f32 0.0, %v1410
      %v1412 = vpop.f32.mrf.mxu0
      %1413 = vmatprep.mubr.bf16.mxu0 0
      %1414 = vmatmul.mubr.bf16.gmra.mxu0 %v1249
      %v1415 = vpop.f32.mrf.mxu0
      %v1416 = vadd.f32 0.0, %v1415
      %v1417 = vpop.f32.mrf.mxu0
      %v1418 = vpop.f32.mrf.mxu0
      %v1419 = vadd.f32 0.0, %v1418
      %v1420 = vpop.f32.mrf.mxu0
      %1421 = vmatprep.mubr.bf16.mxu0 0
      %1422 = vmatmul.mubr.bf16.gmra.mxu0 %v1250
      %v1423 = vpop.f32.mrf.mxu0
      %v1424 = vadd.f32 0.0, %v1423
      %v1425 = vpop.f32.mrf.mxu0
      %v1426 = vpop.f32.mrf.mxu0
      %v1427 = vadd.f32 0.0, %v1426
      %v1428 = vpop.f32.mrf.mxu0
      %1429 = vmatprep.mubr.bf16.mxu0 0
      %1430 = vmatmul.mubr.bf16.gmra.mxu0 %v1251
      %v1431 = vpop.f32.mrf.mxu0
      %v1432 = vadd.f32 0.0, %v1431
      %v1433 = vpop.f32.mrf.mxu0
      %v1434 = vpop.f32.mrf.mxu0
      %v1435 = vadd.f32 0.0, %v1434
      %v1436 = vpop.f32.mrf.mxu0
      %1437 = vmatprep.mubr.bf16.mxu0 0
      %1438 = vmatmul.mubr.bf16.gmra.mxu0 %v1252
      %v1439 = vpop.f32.mrf.mxu0
      %v1440 = vadd.f32 0.0, %v1439
      %v1441 = vpop.f32.mrf.mxu0
      %v1442 = vpop.f32.mrf.mxu0
      %v1443 = vadd.f32 0.0, %v1442
      %v1444 = vpop.f32.mrf.mxu0
      %1445 = vmatprep.mubr.bf16.mxu0 0
      %1446 = vmatmul.mubr.bf16.gmra.mxu0 %v1253
      %v1447 = vpop.f32.mrf.mxu0
      %v1448 = vadd.f32 0.0, %v1447
      %v1449 = vpop.f32.mrf.mxu0
      %v1450 = vpop.f32.mrf.mxu0
      %v1451 = vadd.f32 0.0, %v1450
      %v1452 = vpop.f32.mrf.mxu0
      %1453 = vmatprep.mubr.bf16.mxu0 0
      %1454 = vmatmul.mubr.bf16.gmra.mxu0 %v1254
      %v1455 = vpop.f32.mrf.mxu0
      %v1456 = vadd.f32 0.0, %v1455
      %v1457 = vpop.f32.mrf.mxu0
      %v1458 = vpop.f32.mrf.mxu0
      %v1459 = vadd.f32 0.0, %v1458
      %v1460 = vpop.f32.mrf.mxu0
      %1461 = vmatprep.mubr.bf16.mxu0 0
      %1462 = vmatmul.mubr.bf16.gmra.mxu0 %v1255
      %v1463 = vpop.f32.mrf.mxu0
      %v1464 = vadd.f32 0.0, %v1463
      %v1465 = vpop.f32.mrf.mxu0
      %v1466 = vpop.f32.mrf.mxu0
      %v1467 = vadd.f32 0.0, %v1466
      %v1468 = vpop.f32.mrf.mxu0
      %1469 = vmatprep.mubr.bf16.mxu0 0
      %1470 = vmatmul.mubr.bf16.gmra.mxu0 %v1256
      %v1471 = vpop.f32.mrf.mxu0
      %v1472 = vadd.f32 0.0, %v1471
      %v1473 = vpop.f32.mrf.mxu0
      %v1474 = vpop.f32.mrf.mxu0
      %v1475 = vadd.f32 0.0, %v1474
      %v1476 = vpop.f32.mrf.mxu0
      %1477 = vmatprep.mubr.bf16.mxu0 0
      %1478 = vmatmul.mubr.bf16.gmra.mxu0 %v1257
      %v1479 = vpop.f32.mrf.mxu0
      %v1480 = vadd.f32 0.0, %v1479
      %v1481 = vpop.f32.mrf.mxu0
      %v1482 = vpop.f32.mrf.mxu0
      %v1483 = vadd.f32 0.0, %v1482
      %v1484 = vpop.f32.mrf.mxu0
      %1485 = vmatprep.mubr.bf16.mxu0 0
      %1486 = vmatmul.mubr.bf16.gmra.mxu0 %v1258
      %v1487 = vpop.f32.mrf.mxu0
      %v1488 = vadd.f32 0.0, %v1487
      %v1489 = vpop.f32.mrf.mxu0
      %v1490 = vpop.f32.mrf.mxu0
      %v1491 = vadd.f32 0.0, %v1490
      %v1492 = vpop.f32.mrf.mxu0
      %1493 = vmatprep.mubr.bf16.mxu0 0
      %1494 = vmatmul.mubr.bf16.gmra.mxu0 %v1259
      %v1495 = vpop.f32.mrf.mxu0
      %v1496 = vadd.f32 0.0, %v1495
      %v1497 = vpop.f32.mrf.mxu0
      %v1498 = vpop.f32.mrf.mxu0
      %v1499 = vadd.f32 0.0, %v1498
      %v1500 = vpop.f32.mrf.mxu0
      %1501 = vdwg.mxu0
      %v1502 = vadd.f32 %v1064, %v1360
      %v1503 = vadd.f32 %v1067, %v1363
      %v1504 = vadd.f32 %v1072, %v1368
      %v1505 = vadd.f32 %v1075, %v1371
      %v1506 = vadd.f32 %v1080, %v1376
      %v1507 = vadd.f32 %v1083, %v1379
      %v1508 = vadd.f32 %v1088, %v1384
      %v1509 = vadd.f32 %v1091, %v1387
      %v1510 = vadd.f32 %v1096, %v1392
      %v1511 = vadd.f32 %v1099, %v1395
      %v1512 = vadd.f32 %v1104, %v1400
      %v1513 = vadd.f32 %v1107, %v1403
      %v1514 = vadd.f32 %v1112, %v1408
      %v1515 = vadd.f32 %v1115, %v1411
      %v1516 = vadd.f32 %v1120, %v1416
      %v1517 = vadd.f32 %v1123, %v1419
      %v1518 = vadd.f32 %v1128, %v1424
      %v1519 = vadd.f32 %v1131, %v1427
      %v1520 = vadd.f32 %v1136, %v1432
      %v1521 = vadd.f32 %v1139, %v1435
      %v1522 = vadd.f32 %v1144, %v1440
      %v1523 = vadd.f32 %v1147, %v1443
      %v1524 = vadd.f32 %v1152, %v1448
      %v1525 = vadd.f32 %v1155, %v1451
      %v1526 = vadd.f32 %v1160, %v1456
      %v1527 = vadd.f32 %v1163, %v1459
      %v1528 = vadd.f32 %v1168, %v1464
      %v1529 = vadd.f32 %v1171, %v1467
      %v1530 = vadd.f32 %v1176, %v1472
      %v1531 = vadd.f32 %v1179, %v1475
      %v1532 = vadd.f32 %v1184, %v1480
      %v1533 = vadd.f32 %v1187, %v1483
      %v1534 = vadd.f32 %v1192, %v1488
      %v1535 = vadd.f32 %v1195, %v1491
      %v1536 = vadd.f32 %v1200, %v1496
      %v1537 = vadd.f32 %v1203, %v1499
      %v1538 = vld [vmem:[#allocation2 + $0x12] sm:$0xff]
      %v1539 = vld [vmem:[#allocation2 + $0x1a] sm:$0xff]
      %v1540 = vld [vmem:[#allocation2 + $0x22] sm:$0xff]
      %v1541 = vld [vmem:[#allocation2 + $0x2a] sm:$0xff]
      %v1542 = vld [vmem:[#allocation2 + $0x32] sm:$0xff]
      %v1543 = vld [vmem:[#allocation2 + $0x3a] sm:$0xff]
      %v1544 = vld [vmem:[#allocation2 + $0x42] sm:$0xff]
      %v1545 = vld [vmem:[#allocation2 + $0x4a] sm:$0xff]
      %v1546 = vld [vmem:[#allocation2 + $0x52] sm:$0xff]
      %v1547 = vld [vmem:[#allocation2 + $0x5a] sm:$0xff]
      %v1548 = vld [vmem:[#allocation2 + $0x62] sm:$0xff]
      %v1549 = vld [vmem:[#allocation2 + $0x6a] sm:$0xff]
      %v1550 = vld [vmem:[#allocation2 + $0x72] sm:$0xff]
      %v1551 = vld [vmem:[#allocation2 + $0x7a] sm:$0xff]
      %v1552 = vld [vmem:[#allocation2 + $0x82] sm:$0xff]
      %v1553 = vld [vmem:[#allocation2 + $0x8a] sm:$0xff]
      %v1554 = vld [vmem:[#allocation2 + $0x92] sm:$0xff]
      %v1555 = vld [vmem:[#allocation2 + $0x9a] sm:$0xff]
      %v1556 = vld [vmem:[#allocation2 + $0xa2] sm:$0xff]
      %v1557 = vld [vmem:[#allocation2 + $0xaa] sm:$0xff]
      %v1558 = vld [vmem:[#allocation2 + $0xb2] sm:$0xff]
      %v1559 = vld [vmem:[#allocation2 + $0xba] sm:$0xff]
      %v1560 = vld [vmem:[#allocation2 + $0xc2] sm:$0xff]
      %v1561 = vld [vmem:[#allocation2 + $0xca] sm:$0xff]
      %v1562 = vld [vmem:[#allocation2 + $0xd2] sm:$0xff]
      %v1563 = vld [vmem:[#allocation2 + $0xda] sm:$0xff]
      %v1564 = vld [vmem:[#allocation2 + $0xe2] sm:$0xff]
      %v1565 = vld [vmem:[#allocation2 + $0xea] sm:$0xff]
      %v1566 = vld [vmem:[#allocation2 + $0xf2] sm:$0xff]
      %v1567 = vld [vmem:[#allocation2 + $0xfa] sm:$0xff]
      %v1568 = vld [vmem:[#allocation2 + $0x102] sm:$0xff]
      %v1569 = vld [vmem:[#allocation2 + $0x10a] sm:$0xff]
      %v1570 = vld [vmem:[#allocation2 + $0x112] sm:$0xff]
      %v1571 = vld [vmem:[#allocation2 + $0x11a] sm:$0xff]
      %v1572 = vld [vmem:[#allocation2 + $0x122] sm:$0xff]
      %v1573 = vld [vmem:[#allocation2 + $0x12a] sm:$0xff]
      %v1574 = vpack.c.bf16 %v1539, %v1538
      %v1575 = vpack.c.bf16 %v1541, %v1540
      %v1576 = vpack.c.bf16 %v1543, %v1542
      %v1577 = vpack.c.bf16 %v1545, %v1544
      %v1578 = vpack.c.bf16 %v1547, %v1546
      %v1579 = vpack.c.bf16 %v1549, %v1548
      %v1580 = vpack.c.bf16 %v1551, %v1550
      %v1581 = vpack.c.bf16 %v1553, %v1552
      %v1582 = vpack.c.bf16 %v1555, %v1554
      %v1583 = vpack.c.bf16 %v1557, %v1556
      %v1584 = vpack.c.bf16 %v1559, %v1558
      %v1585 = vpack.c.bf16 %v1561, %v1560
      %v1586 = vpack.c.bf16 %v1563, %v1562
      %v1587 = vpack.c.bf16 %v1565, %v1564
      %v1588 = vpack.c.bf16 %v1567, %v1566
      %v1589 = vpack.c.bf16 %v1569, %v1568
      %v1590 = vpack.c.bf16 %v1571, %v1570
      %v1591 = vpack.c.bf16 %v1573, %v1572
      %s1592 = scalar_lea.vmem %s3, 192
      %v1593 = vld [vmem:[%s1592] sm:$0xf]
      %v1594 = vld [vmem:[%s1592 + $0x4] sm:$0xf]
      %v1595 = vld [vmem:[%s1592 + $0x8] sm:$0xf]
      %v1596 = vld [vmem:[%s1592 + $0xc] sm:$0xf]
      %v1597 = vld [vmem:[%s1592 + $0x10] sm:$0xf]
      %v1598 = vld [vmem:[%s1592 + $0x14] sm:$0xf]
      %v1599 = vld [vmem:[%s1592 + $0x18] sm:$0xf]
      %v1600 = vld [vmem:[%s1592 + $0x1c] sm:$0xf]
      %v1601 = vld [vmem:[%s1592 + $0x20] sm:$0xf]
      %v1602 = vld [vmem:[%s1592 + $0x24] sm:$0xf]
      %v1603 = vld [vmem:[%s1592 + $0x28] sm:$0xf]
      %v1604 = vld [vmem:[%s1592 + $0x2c] sm:$0xf]
      %v1605 = vld [vmem:[%s1592 + $0x30] sm:$0xf]
      %v1606 = vld [vmem:[%s1592 + $0x34] sm:$0xf]
      %v1607 = vld [vmem:[%s1592 + $0x38] sm:$0xf]
      %v1608 = vld [vmem:[%s1592 + $0x3c] sm:$0xf]
      %v1625 = vunpack.c.l.b16 %v1593
      %v1626 = vunpack.c.l.b16 %v1594
      %v1627 = vunpack.c.l.b16 %v1595
      %v1628 = vunpack.c.l.b16 %v1596
      %v1629 = vunpack.c.l.b16 %v1597
      %v1630 = vunpack.c.l.b16 %v1598
      %v1631 = vunpack.c.l.b16 %v1599
      %v1632 = vunpack.c.l.b16 %v1600
      %v1633 = vunpack.c.l.b16 %v1601
      %v1634 = vunpack.c.l.b16 %v1602
      %v1635 = vunpack.c.l.b16 %v1603
      %v1636 = vunpack.c.l.b16 %v1604
      %v1637 = vunpack.c.l.b16 %v1605
      %v1638 = vunpack.c.l.b16 %v1606
      %v1639 = vunpack.c.l.b16 %v1607
      %v1640 = vunpack.c.l.b16 %v1608
      %v1641 = vpack.c.b16 %v1626, %v1625
      %v1642 = vpack.c.b16 %v1628, %v1627
      %v1643 = vpack.c.b16 %v1630, %v1629
      %v1644 = vpack.c.b16 %v1632, %v1631
      %v1645 = vpack.c.b16 %v1634, %v1633
      %v1646 = vpack.c.b16 %v1636, %v1635
      %v1647 = vpack.c.b16 %v1638, %v1637
      %v1648 = vpack.c.b16 %v1640, %v1639
      %1657 = vmatprep.subr.bf16.mxu0 0
      %1658 = vmatpush1.bf16.msra.mxu0 %v1648
      %1659 = vmatprep.subr.bf16.mxu0 0
      %1660 = vmatpush1.bf16.msra.mxu0 %v1647
      %1661 = vmatprep.subr.bf16.mxu0 0
      %1662 = vmatpush1.bf16.msra.mxu0 %v1646
      %1663 = vmatprep.subr.bf16.mxu0 0
      %1664 = vmatpush1.bf16.msra.mxu0 %v1645
      %1665 = vmatprep.subr.bf16.mxu0 0
      %1666 = vmatpush1.bf16.msra.mxu0 %v1644
      %1667 = vmatprep.subr.bf16.mxu0 0
      %1668 = vmatpush1.bf16.msra.mxu0 %v1643
      %1669 = vmatprep.subr.bf16.mxu0 0
      %1670 = vmatpush1.bf16.msra.mxu0 %v1642
      %1671 = vmatprep.subr.bf16.mxu0 0
      %1672 = vmatpush1.bf16.msra.mxu0 %v1641
      %1673 = vmatprep.subr.bf16.mxu0 0
      %1674 = vmatpush2.bf16.msra.mxu0 0
      %1675 = vmatprep.subr.bf16.mxu0 0
      %1676 = vmatpush2.bf16.msra.mxu0 0
      %1677 = vmatprep.subr.bf16.mxu0 0
      %1678 = vmatpush2.bf16.msra.mxu0 0
      %1679 = vmatprep.subr.bf16.mxu0 0
      %1680 = vmatpush2.bf16.msra.mxu0 0
      %1681 = vmatprep.subr.bf16.mxu0 0
      %1682 = vmatpush2.bf16.msra.mxu0 0
      %1683 = vmatprep.subr.bf16.mxu0 0
      %1684 = vmatpush2.bf16.msra.mxu0 0
      %1685 = vmatprep.subr.bf16.mxu0 0
      %1686 = vmatpush2.bf16.msra.mxu0 0
      %1687 = vmatprep.subr.bf16.mxu0 0
      %1688 = vmatpush2.bf16.msra.mxu0 0
      %1689 = vmatprep.mubr.bf16.mxu0 0
      %1690 = vmatmul.mubr.bf16.gmra.mxu0 %v1574
      %v1691 = vpop.f32.mrf.mxu0
      %v1692 = vadd.f32 0.0, %v1691
      %v1693 = vpop.f32.mrf.mxu0
      %v1694 = vpop.f32.mrf.mxu0
      %v1695 = vadd.f32 0.0, %v1694
      %v1696 = vpop.f32.mrf.mxu0
      %1697 = vmatprep.mubr.bf16.mxu0 0
      %1698 = vmatmul.mubr.bf16.gmra.mxu0 %v1575
      %v1699 = vpop.f32.mrf.mxu0
      %v1700 = vadd.f32 0.0, %v1699
      %v1701 = vpop.f32.mrf.mxu0
      %v1702 = vpop.f32.mrf.mxu0
      %v1703 = vadd.f32 0.0, %v1702
      %v1704 = vpop.f32.mrf.mxu0
      %1705 = vmatprep.mubr.bf16.mxu0 0
      %1706 = vmatmul.mubr.bf16.gmra.mxu0 %v1576
      %v1707 = vpop.f32.mrf.mxu0
      %v1708 = vadd.f32 0.0, %v1707
      %v1709 = vpop.f32.mrf.mxu0
      %v1710 = vpop.f32.mrf.mxu0
      %v1711 = vadd.f32 0.0, %v1710
      %v1712 = vpop.f32.mrf.mxu0
      %1713 = vmatprep.mubr.bf16.mxu0 0
      %1714 = vmatmul.mubr.bf16.gmra.mxu0 %v1577
      %v1715 = vpop.f32.mrf.mxu0
      %v1716 = vadd.f32 0.0, %v1715
      %v1717 = vpop.f32.mrf.mxu0
      %v1718 = vpop.f32.mrf.mxu0
      %v1719 = vadd.f32 0.0, %v1718
      %v1720 = vpop.f32.mrf.mxu0
      %1721 = vmatprep.mubr.bf16.mxu0 0
      %1722 = vmatmul.mubr.bf16.gmra.mxu0 %v1578
      %v1723 = vpop.f32.mrf.mxu0
      %v1724 = vadd.f32 0.0, %v1723
      %v1725 = vpop.f32.mrf.mxu0
      %v1726 = vpop.f32.mrf.mxu0
      %v1727 = vadd.f32 0.0, %v1726
      %v1728 = vpop.f32.mrf.mxu0
      %1729 = vmatprep.mubr.bf16.mxu0 0
      %1730 = vmatmul.mubr.bf16.gmra.mxu0 %v1579
      %v1731 = vpop.f32.mrf.mxu0
      %v1732 = vadd.f32 0.0, %v1731
      %v1733 = vpop.f32.mrf.mxu0
      %v1734 = vpop.f32.mrf.mxu0
      %v1735 = vadd.f32 0.0, %v1734
      %v1736 = vpop.f32.mrf.mxu0
      %1737 = vmatprep.mubr.bf16.mxu0 0
      %1738 = vmatmul.mubr.bf16.gmra.mxu0 %v1580
      %v1739 = vpop.f32.mrf.mxu0
      %v1740 = vadd.f32 0.0, %v1739
      %v1741 = vpop.f32.mrf.mxu0
      %v1742 = vpop.f32.mrf.mxu0
      %v1743 = vadd.f32 0.0, %v1742
      %v1744 = vpop.f32.mrf.mxu0
      %1745 = vmatprep.mubr.bf16.mxu0 0
      %1746 = vmatmul.mubr.bf16.gmra.mxu0 %v1581
      %v1747 = vpop.f32.mrf.mxu0
      %v1748 = vadd.f32 0.0, %v1747
      %v1749 = vpop.f32.mrf.mxu0
      %v1750 = vpop.f32.mrf.mxu0
      %v1751 = vadd.f32 0.0, %v1750
      %v1752 = vpop.f32.mrf.mxu0
      %1753 = vmatprep.mubr.bf16.mxu0 0
      %1754 = vmatmul.mubr.bf16.gmra.mxu0 %v1582
      %v1755 = vpop.f32.mrf.mxu0
      %v1756 = vadd.f32 0.0, %v1755
      %v1757 = vpop.f32.mrf.mxu0
      %v1758 = vpop.f32.mrf.mxu0
      %v1759 = vadd.f32 0.0, %v1758
      %v1760 = vpop.f32.mrf.mxu0
      %1761 = vmatprep.mubr.bf16.mxu0 0
      %1762 = vmatmul.mubr.bf16.gmra.mxu0 %v1583
      %v1763 = vpop.f32.mrf.mxu0
      %v1764 = vadd.f32 0.0, %v1763
      %v1765 = vpop.f32.mrf.mxu0
      %v1766 = vpop.f32.mrf.mxu0
      %v1767 = vadd.f32 0.0, %v1766
      %v1768 = vpop.f32.mrf.mxu0
      %1769 = vmatprep.mubr.bf16.mxu0 0
      %1770 = vmatmul.mubr.bf16.gmra.mxu0 %v1584
      %v1771 = vpop.f32.mrf.mxu0
      %v1772 = vadd.f32 0.0, %v1771
      %v1773 = vpop.f32.mrf.mxu0
      %v1774 = vpop.f32.mrf.mxu0
      %v1775 = vadd.f32 0.0, %v1774
      %v1776 = vpop.f32.mrf.mxu0
      %1777 = vmatprep.mubr.bf16.mxu0 0
      %1778 = vmatmul.mubr.bf16.gmra.mxu0 %v1585
      %v1779 = vpop.f32.mrf.mxu0
      %v1780 = vadd.f32 0.0, %v1779
      %v1781 = vpop.f32.mrf.mxu0
      %v1782 = vpop.f32.mrf.mxu0
      %v1783 = vadd.f32 0.0, %v1782
      %v1784 = vpop.f32.mrf.mxu0
      %1785 = vmatprep.mubr.bf16.mxu0 0
      %1786 = vmatmul.mubr.bf16.gmra.mxu0 %v1586
      %v1787 = vpop.f32.mrf.mxu0
      %v1788 = vadd.f32 0.0, %v1787
      %v1789 = vpop.f32.mrf.mxu0
      %v1790 = vpop.f32.mrf.mxu0
      %v1791 = vadd.f32 0.0, %v1790
      %v1792 = vpop.f32.mrf.mxu0
      %1793 = vmatprep.mubr.bf16.mxu0 0
      %1794 = vmatmul.mubr.bf16.gmra.mxu0 %v1587
      %v1795 = vpop.f32.mrf.mxu0
      %v1796 = vadd.f32 0.0, %v1795
      %v1797 = vpop.f32.mrf.mxu0
      %v1798 = vpop.f32.mrf.mxu0
      %v1799 = vadd.f32 0.0, %v1798
      %v1800 = vpop.f32.mrf.mxu0
      %1801 = vmatprep.mubr.bf16.mxu0 0
      %1802 = vmatmul.mubr.bf16.gmra.mxu0 %v1588
      %v1803 = vpop.f32.mrf.mxu0
      %v1804 = vadd.f32 0.0, %v1803
      %v1805 = vpop.f32.mrf.mxu0
      %v1806 = vpop.f32.mrf.mxu0
      %v1807 = vadd.f32 0.0, %v1806
      %v1808 = vpop.f32.mrf.mxu0
      %1809 = vmatprep.mubr.bf16.mxu0 0
      %1810 = vmatmul.mubr.bf16.gmra.mxu0 %v1589
      %v1811 = vpop.f32.mrf.mxu0
      %v1812 = vadd.f32 0.0, %v1811
      %v1813 = vpop.f32.mrf.mxu0
      %v1814 = vpop.f32.mrf.mxu0
      %v1815 = vadd.f32 0.0, %v1814
      %v1816 = vpop.f32.mrf.mxu0
      %1817 = vmatprep.mubr.bf16.mxu0 0
      %1818 = vmatmul.mubr.bf16.gmra.mxu0 %v1590
      %v1819 = vpop.f32.mrf.mxu0
      %v1820 = vadd.f32 0.0, %v1819
      %v1821 = vpop.f32.mrf.mxu0
      %v1822 = vpop.f32.mrf.mxu0
      %v1823 = vadd.f32 0.0, %v1822
      %v1824 = vpop.f32.mrf.mxu0
      %1825 = vmatprep.mubr.bf16.mxu0 0
      %1826 = vmatmul.mubr.bf16.gmra.mxu0 %v1591
      %v1827 = vpop.f32.mrf.mxu0
      %v1828 = vadd.f32 0.0, %v1827
      %v1829 = vpop.f32.mrf.mxu0
      %v1830 = vpop.f32.mrf.mxu0
      %v1831 = vadd.f32 0.0, %v1830
      %v1832 = vpop.f32.mrf.mxu0
      %1833 = vdwg.mxu0
      %v1834 = vadd.f32 %v1502, %v1692
      %v1835 = vadd.f32 %v1503, %v1695
      %v1836 = vadd.f32 %v1504, %v1700
      %v1837 = vadd.f32 %v1505, %v1703
      %v1838 = vadd.f32 %v1506, %v1708
      %v1839 = vadd.f32 %v1507, %v1711
      %v1840 = vadd.f32 %v1508, %v1716
      %v1841 = vadd.f32 %v1509, %v1719
      %v1842 = vadd.f32 %v1510, %v1724
      %v1843 = vadd.f32 %v1511, %v1727
      %v1844 = vadd.f32 %v1512, %v1732
      %v1845 = vadd.f32 %v1513, %v1735
      %v1846 = vadd.f32 %v1514, %v1740
      %v1847 = vadd.f32 %v1515, %v1743
      %v1848 = vadd.f32 %v1516, %v1748
      %v1849 = vadd.f32 %v1517, %v1751
      %v1850 = vadd.f32 %v1518, %v1756
      %v1851 = vadd.f32 %v1519, %v1759
      %v1852 = vadd.f32 %v1520, %v1764
      %v1853 = vadd.f32 %v1521, %v1767
      %v1854 = vadd.f32 %v1522, %v1772
      %v1855 = vadd.f32 %v1523, %v1775
      %v1856 = vadd.f32 %v1524, %v1780
      %v1857 = vadd.f32 %v1525, %v1783
      %v1858 = vadd.f32 %v1526, %v1788
      %v1859 = vadd.f32 %v1527, %v1791
      %v1860 = vadd.f32 %v1528, %v1796
      %v1861 = vadd.f32 %v1529, %v1799
      %v1862 = vadd.f32 %v1530, %v1804
      %v1863 = vadd.f32 %v1531, %v1807
      %v1864 = vadd.f32 %v1532, %v1812
      %v1865 = vadd.f32 %v1533, %v1815
      %v1866 = vadd.f32 %v1534, %v1820
      %v1867 = vadd.f32 %v1535, %v1823
      %v1868 = vadd.f32 %v1536, %v1828
      %v1869 = vadd.f32 %v1537, %v1831
      %v1870 = vld [vmem:[#allocation2 + $0x13] sm:$0xff]
      %v1871 = vld [vmem:[#allocation2 + $0x1b] sm:$0xff]
      %v1872 = vld [vmem:[#allocation2 + $0x23] sm:$0xff]
      %v1873 = vld [vmem:[#allocation2 + $0x2b] sm:$0xff]
      %v1874 = vld [vmem:[#allocation2 + $0x33] sm:$0xff]
      %v1875 = vld [vmem:[#allocation2 + $0x3b] sm:$0xff]
      %v1876 = vld [vmem:[#allocation2 + $0x43] sm:$0xff]
      %v1877 = vld [vmem:[#allocation2 + $0x4b] sm:$0xff]
      %v1878 = vld [vmem:[#allocation2 + $0x53] sm:$0xff]
      %v1879 = vld [vmem:[#allocation2 + $0x5b] sm:$0xff]
      %v1880 = vld [vmem:[#allocation2 + $0x63] sm:$0xff]
      %v1881 = vld [vmem:[#allocation2 + $0x6b] sm:$0xff]
      %v1882 = vld [vmem:[#allocation2 + $0x73] sm:$0xff]
      %v1883 = vld [vmem:[#allocation2 + $0x7b] sm:$0xff]
      %v1884 = vld [vmem:[#allocation2 + $0x83] sm:$0xff]
      %v1885 = vld [vmem:[#allocation2 + $0x8b] sm:$0xff]
      %v1886 = vld [vmem:[#allocation2 + $0x93] sm:$0xff]
      %v1887 = vld [vmem:[#allocation2 + $0x9b] sm:$0xff]
      %v1888 = vld [vmem:[#allocation2 + $0xa3] sm:$0xff]
      %v1889 = vld [vmem:[#allocation2 + $0xab] sm:$0xff]
      %v1890 = vld [vmem:[#allocation2 + $0xb3] sm:$0xff]
      %v1891 = vld [vmem:[#allocation2 + $0xbb] sm:$0xff]
      %v1892 = vld [vmem:[#allocation2 + $0xc3] sm:$0xff]
      %v1893 = vld [vmem:[#allocation2 + $0xcb] sm:$0xff]
      %v1894 = vld [vmem:[#allocation2 + $0xd3] sm:$0xff]
      %v1895 = vld [vmem:[#allocation2 + $0xdb] sm:$0xff]
      %v1896 = vld [vmem:[#allocation2 + $0xe3] sm:$0xff]
      %v1897 = vld [vmem:[#allocation2 + $0xeb] sm:$0xff]
      %v1898 = vld [vmem:[#allocation2 + $0xf3] sm:$0xff]
      %v1899 = vld [vmem:[#allocation2 + $0xfb] sm:$0xff]
      %v1900 = vld [vmem:[#allocation2 + $0x103] sm:$0xff]
      %v1901 = vld [vmem:[#allocation2 + $0x10b] sm:$0xff]
      %v1902 = vld [vmem:[#allocation2 + $0x113] sm:$0xff]
      %v1903 = vld [vmem:[#allocation2 + $0x11b] sm:$0xff]
      %v1904 = vld [vmem:[#allocation2 + $0x123] sm:$0xff]
      %v1905 = vld [vmem:[#allocation2 + $0x12b] sm:$0xff]
      %v1906 = vpack.c.bf16 %v1871, %v1870
      %v1907 = vpack.c.bf16 %v1873, %v1872
      %v1908 = vpack.c.bf16 %v1875, %v1874
      %v1909 = vpack.c.bf16 %v1877, %v1876
      %v1910 = vpack.c.bf16 %v1879, %v1878
      %v1911 = vpack.c.bf16 %v1881, %v1880
      %v1912 = vpack.c.bf16 %v1883, %v1882
      %v1913 = vpack.c.bf16 %v1885, %v1884
      %v1914 = vpack.c.bf16 %v1887, %v1886
      %v1915 = vpack.c.bf16 %v1889, %v1888
      %v1916 = vpack.c.bf16 %v1891, %v1890
      %v1917 = vpack.c.bf16 %v1893, %v1892
      %v1918 = vpack.c.bf16 %v1895, %v1894
      %v1919 = vpack.c.bf16 %v1897, %v1896
      %v1920 = vpack.c.bf16 %v1899, %v1898
      %v1921 = vpack.c.bf16 %v1901, %v1900
      %v1922 = vpack.c.bf16 %v1903, %v1902
      %v1923 = vpack.c.bf16 %v1905, %v1904
      %s1924 = scalar_lea.vmem %s3, 256
      %v1925 = vld [vmem:[%s1924] sm:$0xf]
      %v1926 = vld [vmem:[%s1924 + $0x4] sm:$0xf]
      %v1927 = vld [vmem:[%s1924 + $0x8] sm:$0xf]
      %v1928 = vld [vmem:[%s1924 + $0xc] sm:$0xf]
      %v1929 = vld [vmem:[%s1924 + $0x10] sm:$0xf]
      %v1930 = vld [vmem:[%s1924 + $0x14] sm:$0xf]
      %v1931 = vld [vmem:[%s1924 + $0x18] sm:$0xf]
      %v1932 = vld [vmem:[%s1924 + $0x1c] sm:$0xf]
      %v1933 = vld [vmem:[%s1924 + $0x20] sm:$0xf]
      %v1934 = vld [vmem:[%s1924 + $0x24] sm:$0xf]
      %v1935 = vld [vmem:[%s1924 + $0x28] sm:$0xf]
      %v1936 = vld [vmem:[%s1924 + $0x2c] sm:$0xf]
      %v1937 = vld [vmem:[%s1924 + $0x30] sm:$0xf]
      %v1938 = vld [vmem:[%s1924 + $0x34] sm:$0xf]
      %v1939 = vld [vmem:[%s1924 + $0x38] sm:$0xf]
      %v1940 = vld [vmem:[%s1924 + $0x3c] sm:$0xf]
      %v1957 = vunpack.c.l.b16 %v1925
      %v1958 = vunpack.c.l.b16 %v1926
      %v1959 = vunpack.c.l.b16 %v1927
      %v1960 = vunpack.c.l.b16 %v1928
      %v1961 = vunpack.c.l.b16 %v1929
      %v1962 = vunpack.c.l.b16 %v1930
      %v1963 = vunpack.c.l.b16 %v1931
      %v1964 = vunpack.c.l.b16 %v1932
      %v1965 = vunpack.c.l.b16 %v1933
      %v1966 = vunpack.c.l.b16 %v1934
      %v1967 = vunpack.c.l.b16 %v1935
      %v1968 = vunpack.c.l.b16 %v1936
      %v1969 = vunpack.c.l.b16 %v1937
      %v1970 = vunpack.c.l.b16 %v1938
      %v1971 = vunpack.c.l.b16 %v1939
      %v1972 = vunpack.c.l.b16 %v1940
      %v1973 = vpack.c.b16 %v1958, %v1957
      %v1974 = vpack.c.b16 %v1960, %v1959
      %v1975 = vpack.c.b16 %v1962, %v1961
      %v1976 = vpack.c.b16 %v1964, %v1963
      %v1977 = vpack.c.b16 %v1966, %v1965
      %v1978 = vpack.c.b16 %v1968, %v1967
      %v1979 = vpack.c.b16 %v1970, %v1969
      %v1980 = vpack.c.b16 %v1972, %v1971
      %1989 = vmatprep.subr.bf16.mxu0 0
      %1990 = vmatpush1.bf16.msra.mxu0 %v1980
      %1991 = vmatprep.subr.bf16.mxu0 0
      %1992 = vmatpush1.bf16.msra.mxu0 %v1979
      %1993 = vmatprep.subr.bf16.mxu0 0
      %1994 = vmatpush1.bf16.msra.mxu0 %v1978
      %1995 = vmatprep.subr.bf16.mxu0 0
      %1996 = vmatpush1.bf16.msra.mxu0 %v1977
      %1997 = vmatprep.subr.bf16.mxu0 0
      %1998 = vmatpush1.bf16.msra.mxu0 %v1976
      %1999 = vmatprep.subr.bf16.mxu0 0
      %2000 = vmatpush1.bf16.msra.mxu0 %v1975
      %2001 = vmatprep.subr.bf16.mxu0 0
      %2002 = vmatpush1.bf16.msra.mxu0 %v1974
      %2003 = vmatprep.subr.bf16.mxu0 0
      %2004 = vmatpush1.bf16.msra.mxu0 %v1973
      %2005 = vmatprep.subr.bf16.mxu0 0
      %2006 = vmatpush2.bf16.msra.mxu0 0
      %2007 = vmatprep.subr.bf16.mxu0 0
      %2008 = vmatpush2.bf16.msra.mxu0 0
      %2009 = vmatprep.subr.bf16.mxu0 0
      %2010 = vmatpush2.bf16.msra.mxu0 0
      %2011 = vmatprep.subr.bf16.mxu0 0
      %2012 = vmatpush2.bf16.msra.mxu0 0
      %2013 = vmatprep.subr.bf16.mxu0 0
      %2014 = vmatpush2.bf16.msra.mxu0 0
      %2015 = vmatprep.subr.bf16.mxu0 0
      %2016 = vmatpush2.bf16.msra.mxu0 0
      %2017 = vmatprep.subr.bf16.mxu0 0
      %2018 = vmatpush2.bf16.msra.mxu0 0
      %2019 = vmatprep.subr.bf16.mxu0 0
      %2020 = vmatpush2.bf16.msra.mxu0 0
      %2021 = vmatprep.mubr.bf16.mxu0 0
      %2022 = vmatmul.mubr.bf16.gmra.mxu0 %v1906
      %v2023 = vpop.f32.mrf.mxu0
      %v2024 = vadd.f32 0.0, %v2023
      %v2025 = vpop.f32.mrf.mxu0
      %v2026 = vpop.f32.mrf.mxu0
      %v2027 = vadd.f32 0.0, %v2026
      %v2028 = vpop.f32.mrf.mxu0
      %2029 = vmatprep.mubr.bf16.mxu0 0
      %2030 = vmatmul.mubr.bf16.gmra.mxu0 %v1907
      %v2031 = vpop.f32.mrf.mxu0
      %v2032 = vadd.f32 0.0, %v2031
      %v2033 = vpop.f32.mrf.mxu0
      %v2034 = vpop.f32.mrf.mxu0
      %v2035 = vadd.f32 0.0, %v2034
      %v2036 = vpop.f32.mrf.mxu0
      %2037 = vmatprep.mubr.bf16.mxu0 0
      %2038 = vmatmul.mubr.bf16.gmra.mxu0 %v1908
      %v2039 = vpop.f32.mrf.mxu0
      %v2040 = vadd.f32 0.0, %v2039
      %v2041 = vpop.f32.mrf.mxu0
      %v2042 = vpop.f32.mrf.mxu0
      %v2043 = vadd.f32 0.0, %v2042
      %v2044 = vpop.f32.mrf.mxu0
      %2045 = vmatprep.mubr.bf16.mxu0 0
      %2046 = vmatmul.mubr.bf16.gmra.mxu0 %v1909
      %v2047 = vpop.f32.mrf.mxu0
      %v2048 = vadd.f32 0.0, %v2047
      %v2049 = vpop.f32.mrf.mxu0
      %v2050 = vpop.f32.mrf.mxu0
      %v2051 = vadd.f32 0.0, %v2050
      %v2052 = vpop.f32.mrf.mxu0
      %2053 = vmatprep.mubr.bf16.mxu0 0
      %2054 = vmatmul.mubr.bf16.gmra.mxu0 %v1910
      %v2055 = vpop.f32.mrf.mxu0
      %v2056 = vadd.f32 0.0, %v2055
      %v2057 = vpop.f32.mrf.mxu0
      %v2058 = vpop.f32.mrf.mxu0
      %v2059 = vadd.f32 0.0, %v2058
      %v2060 = vpop.f32.mrf.mxu0
      %2061 = vmatprep.mubr.bf16.mxu0 0
      %2062 = vmatmul.mubr.bf16.gmra.mxu0 %v1911
      %v2063 = vpop.f32.mrf.mxu0
      %v2064 = vadd.f32 0.0, %v2063
      %v2065 = vpop.f32.mrf.mxu0
      %v2066 = vpop.f32.mrf.mxu0
      %v2067 = vadd.f32 0.0, %v2066
      %v2068 = vpop.f32.mrf.mxu0
      %2069 = vmatprep.mubr.bf16.mxu0 0
      %2070 = vmatmul.mubr.bf16.gmra.mxu0 %v1912
      %v2071 = vpop.f32.mrf.mxu0
      %v2072 = vadd.f32 0.0, %v2071
      %v2073 = vpop.f32.mrf.mxu0
      %v2074 = vpop.f32.mrf.mxu0
      %v2075 = vadd.f32 0.0, %v2074
      %v2076 = vpop.f32.mrf.mxu0
      %2077 = vmatprep.mubr.bf16.mxu0 0
      %2078 = vmatmul.mubr.bf16.gmra.mxu0 %v1913
      %v2079 = vpop.f32.mrf.mxu0
      %v2080 = vadd.f32 0.0, %v2079
      %v2081 = vpop.f32.mrf.mxu0
      %v2082 = vpop.f32.mrf.mxu0
      %v2083 = vadd.f32 0.0, %v2082
      %v2084 = vpop.f32.mrf.mxu0
      %2085 = vmatprep.mubr.bf16.mxu0 0
      %2086 = vmatmul.mubr.bf16.gmra.mxu0 %v1914
      %v2087 = vpop.f32.mrf.mxu0
      %v2088 = vadd.f32 0.0, %v2087
      %v2089 = vpop.f32.mrf.mxu0
      %v2090 = vpop.f32.mrf.mxu0
      %v2091 = vadd.f32 0.0, %v2090
      %v2092 = vpop.f32.mrf.mxu0
      %2093 = vmatprep.mubr.bf16.mxu0 0
      %2094 = vmatmul.mubr.bf16.gmra.mxu0 %v1915
      %v2095 = vpop.f32.mrf.mxu0
      %v2096 = vadd.f32 0.0, %v2095
      %v2097 = vpop.f32.mrf.mxu0
      %v2098 = vpop.f32.mrf.mxu0
      %v2099 = vadd.f32 0.0, %v2098
      %v2100 = vpop.f32.mrf.mxu0
      %2101 = vmatprep.mubr.bf16.mxu0 0
      %2102 = vmatmul.mubr.bf16.gmra.mxu0 %v1916
      %v2103 = vpop.f32.mrf.mxu0
      %v2104 = vadd.f32 0.0, %v2103
      %v2105 = vpop.f32.mrf.mxu0
      %v2106 = vpop.f32.mrf.mxu0
      %v2107 = vadd.f32 0.0, %v2106
      %v2108 = vpop.f32.mrf.mxu0
      %2109 = vmatprep.mubr.bf16.mxu0 0
      %2110 = vmatmul.mubr.bf16.gmra.mxu0 %v1917
      %v2111 = vpop.f32.mrf.mxu0
      %v2112 = vadd.f32 0.0, %v2111
      %v2113 = vpop.f32.mrf.mxu0
      %v2114 = vpop.f32.mrf.mxu0
      %v2115 = vadd.f32 0.0, %v2114
      %v2116 = vpop.f32.mrf.mxu0
      %2117 = vmatprep.mubr.bf16.mxu0 0
      %2118 = vmatmul.mubr.bf16.gmra.mxu0 %v1918
      %v2119 = vpop.f32.mrf.mxu0
      %v2120 = vadd.f32 0.0, %v2119
      %v2121 = vpop.f32.mrf.mxu0
      %v2122 = vpop.f32.mrf.mxu0
      %v2123 = vadd.f32 0.0, %v2122
      %v2124 = vpop.f32.mrf.mxu0
      %2125 = vmatprep.mubr.bf16.mxu0 0
      %2126 = vmatmul.mubr.bf16.gmra.mxu0 %v1919
      %v2127 = vpop.f32.mrf.mxu0
      %v2128 = vadd.f32 0.0, %v2127
      %v2129 = vpop.f32.mrf.mxu0
      %v2130 = vpop.f32.mrf.mxu0
      %v2131 = vadd.f32 0.0, %v2130
      %v2132 = vpop.f32.mrf.mxu0
      %2133 = vmatprep.mubr.bf16.mxu0 0
      %2134 = vmatmul.mubr.bf16.gmra.mxu0 %v1920
      %v2135 = vpop.f32.mrf.mxu0
      %v2136 = vadd.f32 0.0, %v2135
      %v2137 = vpop.f32.mrf.mxu0
      %v2138 = vpop.f32.mrf.mxu0
      %v2139 = vadd.f32 0.0, %v2138
      %v2140 = vpop.f32.mrf.mxu0
      %2141 = vmatprep.mubr.bf16.mxu0 0
      %2142 = vmatmul.mubr.bf16.gmra.mxu0 %v1921
      %v2143 = vpop.f32.mrf.mxu0
      %v2144 = vadd.f32 0.0, %v2143
      %v2145 = vpop.f32.mrf.mxu0
      %v2146 = vpop.f32.mrf.mxu0
      %v2147 = vadd.f32 0.0, %v2146
      %v2148 = vpop.f32.mrf.mxu0
      %2149 = vmatprep.mubr.bf16.mxu0 0
      %2150 = vmatmul.mubr.bf16.gmra.mxu0 %v1922
      %v2151 = vpop.f32.mrf.mxu0
      %v2152 = vadd.f32 0.0, %v2151
      %v2153 = vpop.f32.mrf.mxu0
      %v2154 = vpop.f32.mrf.mxu0
      %v2155 = vadd.f32 0.0, %v2154
      %v2156 = vpop.f32.mrf.mxu0
      %2157 = vmatprep.mubr.bf16.mxu0 0
      %2158 = vmatmul.mubr.bf16.gmra.mxu0 %v1923
      %v2159 = vpop.f32.mrf.mxu0
      %v2160 = vadd.f32 0.0, %v2159
      %v2161 = vpop.f32.mrf.mxu0
      %v2162 = vpop.f32.mrf.mxu0
      %v2163 = vadd.f32 0.0, %v2162
      %v2164 = vpop.f32.mrf.mxu0
      %2165 = vdwg.mxu0
      %v2166 = vadd.f32 %v1834, %v2024
      %v2167 = vadd.f32 %v1835, %v2027
      %v2168 = vadd.f32 %v1836, %v2032
      %v2169 = vadd.f32 %v1837, %v2035
      %v2170 = vadd.f32 %v1838, %v2040
      %v2171 = vadd.f32 %v1839, %v2043
      %v2172 = vadd.f32 %v1840, %v2048
      %v2173 = vadd.f32 %v1841, %v2051
      %v2174 = vadd.f32 %v1842, %v2056
      %v2175 = vadd.f32 %v1843, %v2059
      %v2176 = vadd.f32 %v1844, %v2064
      %v2177 = vadd.f32 %v1845, %v2067
      %v2178 = vadd.f32 %v1846, %v2072
      %v2179 = vadd.f32 %v1847, %v2075
      %v2180 = vadd.f32 %v1848, %v2080
      %v2181 = vadd.f32 %v1849, %v2083
      %v2182 = vadd.f32 %v1850, %v2088
      %v2183 = vadd.f32 %v1851, %v2091
      %v2184 = vadd.f32 %v1852, %v2096
      %v2185 = vadd.f32 %v1853, %v2099
      %v2186 = vadd.f32 %v1854, %v2104
      %v2187 = vadd.f32 %v1855, %v2107
      %v2188 = vadd.f32 %v1856, %v2112
      %v2189 = vadd.f32 %v1857, %v2115
      %v2190 = vadd.f32 %v1858, %v2120
      %v2191 = vadd.f32 %v1859, %v2123
      %v2192 = vadd.f32 %v1860, %v2128
      %v2193 = vadd.f32 %v1861, %v2131
      %v2194 = vadd.f32 %v1862, %v2136
      %v2195 = vadd.f32 %v1863, %v2139
      %v2196 = vadd.f32 %v1864, %v2144
      %v2197 = vadd.f32 %v1865, %v2147
      %v2198 = vadd.f32 %v1866, %v2152
      %v2199 = vadd.f32 %v1867, %v2155
      %v2200 = vadd.f32 %v1868, %v2160
      %v2201 = vadd.f32 %v1869, %v2163
      %v2202 = vld [vmem:[#allocation2 + $0x14] sm:$0xff]
      %v2203 = vld [vmem:[#allocation2 + $0x1c] sm:$0xff]
      %v2204 = vld [vmem:[#allocation2 + $0x24] sm:$0xff]
      %v2205 = vld [vmem:[#allocation2 + $0x2c] sm:$0xff]
      %v2206 = vld [vmem:[#allocation2 + $0x34] sm:$0xff]
      %v2207 = vld [vmem:[#allocation2 + $0x3c] sm:$0xff]
      %v2208 = vld [vmem:[#allocation2 + $0x44] sm:$0xff]
      %v2209 = vld [vmem:[#allocation2 + $0x4c] sm:$0xff]
      %v2210 = vld [vmem:[#allocation2 + $0x54] sm:$0xff]
      %v2211 = vld [vmem:[#allocation2 + $0x5c] sm:$0xff]
      %v2212 = vld [vmem:[#allocation2 + $0x64] sm:$0xff]
      %v2213 = vld [vmem:[#allocation2 + $0x6c] sm:$0xff]
      %v2214 = vld [vmem:[#allocation2 + $0x74] sm:$0xff]
      %v2215 = vld [vmem:[#allocation2 + $0x7c] sm:$0xff]
      %v2216 = vld [vmem:[#allocation2 + $0x84] sm:$0xff]
      %v2217 = vld [vmem:[#allocation2 + $0x8c] sm:$0xff]
      %v2218 = vld [vmem:[#allocation2 + $0x94] sm:$0xff]
      %v2219 = vld [vmem:[#allocation2 + $0x9c] sm:$0xff]
      %v2220 = vld [vmem:[#allocation2 + $0xa4] sm:$0xff]
      %v2221 = vld [vmem:[#allocation2 + $0xac] sm:$0xff]
      %v2222 = vld [vmem:[#allocation2 + $0xb4] sm:$0xff]
      %v2223 = vld [vmem:[#allocation2 + $0xbc] sm:$0xff]
      %v2224 = vld [vmem:[#allocation2 + $0xc4] sm:$0xff]
      %v2225 = vld [vmem:[#allocation2 + $0xcc] sm:$0xff]
      %v2226 = vld [vmem:[#allocation2 + $0xd4] sm:$0xff]
      %v2227 = vld [vmem:[#allocation2 + $0xdc] sm:$0xff]
      %v2228 = vld [vmem:[#allocation2 + $0xe4] sm:$0xff]
      %v2229 = vld [vmem:[#allocation2 + $0xec] sm:$0xff]
      %v2230 = vld [vmem:[#allocation2 + $0xf4] sm:$0xff]
      %v2231 = vld [vmem:[#allocation2 + $0xfc] sm:$0xff]
      %v2232 = vld [vmem:[#allocation2 + $0x104] sm:$0xff]
      %v2233 = vld [vmem:[#allocation2 + $0x10c] sm:$0xff]
      %v2234 = vld [vmem:[#allocation2 + $0x114] sm:$0xff]
      %v2235 = vld [vmem:[#allocation2 + $0x11c] sm:$0xff]
      %v2236 = vld [vmem:[#allocation2 + $0x124] sm:$0xff]
      %v2237 = vld [vmem:[#allocation2 + $0x12c] sm:$0xff]
      %v2238 = vpack.c.bf16 %v2203, %v2202
      %v2239 = vpack.c.bf16 %v2205, %v2204
      %v2240 = vpack.c.bf16 %v2207, %v2206
      %v2241 = vpack.c.bf16 %v2209, %v2208
      %v2242 = vpack.c.bf16 %v2211, %v2210
      %v2243 = vpack.c.bf16 %v2213, %v2212
      %v2244 = vpack.c.bf16 %v2215, %v2214
      %v2245 = vpack.c.bf16 %v2217, %v2216
      %v2246 = vpack.c.bf16 %v2219, %v2218
      %v2247 = vpack.c.bf16 %v2221, %v2220
      %v2248 = vpack.c.bf16 %v2223, %v2222
      %v2249 = vpack.c.bf16 %v2225, %v2224
      %v2250 = vpack.c.bf16 %v2227, %v2226
      %v2251 = vpack.c.bf16 %v2229, %v2228
      %v2252 = vpack.c.bf16 %v2231, %v2230
      %v2253 = vpack.c.bf16 %v2233, %v2232
      %v2254 = vpack.c.bf16 %v2235, %v2234
      %v2255 = vpack.c.bf16 %v2237, %v2236
      %s2256 = scalar_lea.vmem %s3, 320
      %v2257 = vld [vmem:[%s2256] sm:$0xf]
      %v2258 = vld [vmem:[%s2256 + $0x4] sm:$0xf]
      %v2259 = vld [vmem:[%s2256 + $0x8] sm:$0xf]
      %v2260 = vld [vmem:[%s2256 + $0xc] sm:$0xf]
      %v2261 = vld [vmem:[%s2256 + $0x10] sm:$0xf]
      %v2262 = vld [vmem:[%s2256 + $0x14] sm:$0xf]
      %v2263 = vld [vmem:[%s2256 + $0x18] sm:$0xf]
      %v2264 = vld [vmem:[%s2256 + $0x1c] sm:$0xf]
      %v2265 = vld [vmem:[%s2256 + $0x20] sm:$0xf]
      %v2266 = vld [vmem:[%s2256 + $0x24] sm:$0xf]
      %v2267 = vld [vmem:[%s2256 + $0x28] sm:$0xf]
      %v2268 = vld [vmem:[%s2256 + $0x2c] sm:$0xf]
      %v2269 = vld [vmem:[%s2256 + $0x30] sm:$0xf]
      %v2270 = vld [vmem:[%s2256 + $0x34] sm:$0xf]
      %v2271 = vld [vmem:[%s2256 + $0x38] sm:$0xf]
      %v2272 = vld [vmem:[%s2256 + $0x3c] sm:$0xf]
      %v2289 = vunpack.c.l.b16 %v2257
      %v2290 = vunpack.c.l.b16 %v2258
      %v2291 = vunpack.c.l.b16 %v2259
      %v2292 = vunpack.c.l.b16 %v2260
      %v2293 = vunpack.c.l.b16 %v2261
      %v2294 = vunpack.c.l.b16 %v2262
      %v2295 = vunpack.c.l.b16 %v2263
      %v2296 = vunpack.c.l.b16 %v2264
      %v2297 = vunpack.c.l.b16 %v2265
      %v2298 = vunpack.c.l.b16 %v2266
      %v2299 = vunpack.c.l.b16 %v2267
      %v2300 = vunpack.c.l.b16 %v2268
      %v2301 = vunpack.c.l.b16 %v2269
      %v2302 = vunpack.c.l.b16 %v2270
      %v2303 = vunpack.c.l.b16 %v2271
      %v2304 = vunpack.c.l.b16 %v2272
      %v2305 = vpack.c.b16 %v2290, %v2289
      %v2306 = vpack.c.b16 %v2292, %v2291
      %v2307 = vpack.c.b16 %v2294, %v2293
      %v2308 = vpack.c.b16 %v2296, %v2295
      %v2309 = vpack.c.b16 %v2298, %v2297
      %v2310 = vpack.c.b16 %v2300, %v2299
      %v2311 = vpack.c.b16 %v2302, %v2301
      %v2312 = vpack.c.b16 %v2304, %v2303
      %2321 = vmatprep.subr.bf16.mxu0 0
      %2322 = vmatpush1.bf16.msra.mxu0 %v2312
      %2323 = vmatprep.subr.bf16.mxu0 0
      %2324 = vmatpush1.bf16.msra.mxu0 %v2311
      %2325 = vmatprep.subr.bf16.mxu0 0
      %2326 = vmatpush1.bf16.msra.mxu0 %v2310
      %2327 = vmatprep.subr.bf16.mxu0 0
      %2328 = vmatpush1.bf16.msra.mxu0 %v2309
      %2329 = vmatprep.subr.bf16.mxu0 0
      %2330 = vmatpush1.bf16.msra.mxu0 %v2308
      %2331 = vmatprep.subr.bf16.mxu0 0
      %2332 = vmatpush1.bf16.msra.mxu0 %v2307
      %2333 = vmatprep.subr.bf16.mxu0 0
      %2334 = vmatpush1.bf16.msra.mxu0 %v2306
      %2335 = vmatprep.subr.bf16.mxu0 0
      %2336 = vmatpush1.bf16.msra.mxu0 %v2305
      %2337 = vmatprep.subr.bf16.mxu0 0
      %2338 = vmatpush2.bf16.msra.mxu0 0
      %2339 = vmatprep.subr.bf16.mxu0 0
      %2340 = vmatpush2.bf16.msra.mxu0 0
      %2341 = vmatprep.subr.bf16.mxu0 0
      %2342 = vmatpush2.bf16.msra.mxu0 0
      %2343 = vmatprep.subr.bf16.mxu0 0
      %2344 = vmatpush2.bf16.msra.mxu0 0
      %2345 = vmatprep.subr.bf16.mxu0 0
      %2346 = vmatpush2.bf16.msra.mxu0 0
      %2347 = vmatprep.subr.bf16.mxu0 0
      %2348 = vmatpush2.bf16.msra.mxu0 0
      %2349 = vmatprep.subr.bf16.mxu0 0
      %2350 = vmatpush2.bf16.msra.mxu0 0
      %2351 = vmatprep.subr.bf16.mxu0 0
      %2352 = vmatpush2.bf16.msra.mxu0 0
      %2353 = vmatprep.mubr.bf16.mxu0 0
      %2354 = vmatmul.mubr.bf16.gmra.mxu0 %v2238
      %v2355 = vpop.f32.mrf.mxu0
      %v2356 = vadd.f32 0.0, %v2355
      %v2357 = vpop.f32.mrf.mxu0
      %v2358 = vpop.f32.mrf.mxu0
      %v2359 = vadd.f32 0.0, %v2358
      %v2360 = vpop.f32.mrf.mxu0
      %2361 = vmatprep.mubr.bf16.mxu0 0
      %2362 = vmatmul.mubr.bf16.gmra.mxu0 %v2239
      %v2363 = vpop.f32.mrf.mxu0
      %v2364 = vadd.f32 0.0, %v2363
      %v2365 = vpop.f32.mrf.mxu0
      %v2366 = vpop.f32.mrf.mxu0
      %v2367 = vadd.f32 0.0, %v2366
      %v2368 = vpop.f32.mrf.mxu0
      %2369 = vmatprep.mubr.bf16.mxu0 0
      %2370 = vmatmul.mubr.bf16.gmra.mxu0 %v2240
      %v2371 = vpop.f32.mrf.mxu0
      %v2372 = vadd.f32 0.0, %v2371
      %v2373 = vpop.f32.mrf.mxu0
      %v2374 = vpop.f32.mrf.mxu0
      %v2375 = vadd.f32 0.0, %v2374
      %v2376 = vpop.f32.mrf.mxu0
      %2377 = vmatprep.mubr.bf16.mxu0 0
      %2378 = vmatmul.mubr.bf16.gmra.mxu0 %v2241
      %v2379 = vpop.f32.mrf.mxu0
      %v2380 = vadd.f32 0.0, %v2379
      %v2381 = vpop.f32.mrf.mxu0
      %v2382 = vpop.f32.mrf.mxu0
      %v2383 = vadd.f32 0.0, %v2382
      %v2384 = vpop.f32.mrf.mxu0
      %2385 = vmatprep.mubr.bf16.mxu0 0
      %2386 = vmatmul.mubr.bf16.gmra.mxu0 %v2242
      %v2387 = vpop.f32.mrf.mxu0
      %v2388 = vadd.f32 0.0, %v2387
      %v2389 = vpop.f32.mrf.mxu0
      %v2390 = vpop.f32.mrf.mxu0
      %v2391 = vadd.f32 0.0, %v2390
      %v2392 = vpop.f32.mrf.mxu0
      %2393 = vmatprep.mubr.bf16.mxu0 0
      %2394 = vmatmul.mubr.bf16.gmra.mxu0 %v2243
      %v2395 = vpop.f32.mrf.mxu0
      %v2396 = vadd.f32 0.0, %v2395
      %v2397 = vpop.f32.mrf.mxu0
      %v2398 = vpop.f32.mrf.mxu0
      %v2399 = vadd.f32 0.0, %v2398
      %v2400 = vpop.f32.mrf.mxu0
      %2401 = vmatprep.mubr.bf16.mxu0 0
      %2402 = vmatmul.mubr.bf16.gmra.mxu0 %v2244
      %v2403 = vpop.f32.mrf.mxu0
      %v2404 = vadd.f32 0.0, %v2403
      %v2405 = vpop.f32.mrf.mxu0
      %v2406 = vpop.f32.mrf.mxu0
      %v2407 = vadd.f32 0.0, %v2406
      %v2408 = vpop.f32.mrf.mxu0
      %2409 = vmatprep.mubr.bf16.mxu0 0
      %2410 = vmatmul.mubr.bf16.gmra.mxu0 %v2245
      %v2411 = vpop.f32.mrf.mxu0
      %v2412 = vadd.f32 0.0, %v2411
      %v2413 = vpop.f32.mrf.mxu0
      %v2414 = vpop.f32.mrf.mxu0
      %v2415 = vadd.f32 0.0, %v2414
      %v2416 = vpop.f32.mrf.mxu0
      %2417 = vmatprep.mubr.bf16.mxu0 0
      %2418 = vmatmul.mubr.bf16.gmra.mxu0 %v2246
      %v2419 = vpop.f32.mrf.mxu0
      %v2420 = vadd.f32 0.0, %v2419
      %v2421 = vpop.f32.mrf.mxu0
      %v2422 = vpop.f32.mrf.mxu0
      %v2423 = vadd.f32 0.0, %v2422
      %v2424 = vpop.f32.mrf.mxu0
      %2425 = vmatprep.mubr.bf16.mxu0 0
      %2426 = vmatmul.mubr.bf16.gmra.mxu0 %v2247
      %v2427 = vpop.f32.mrf.mxu0
      %v2428 = vadd.f32 0.0, %v2427
      %v2429 = vpop.f32.mrf.mxu0
      %v2430 = vpop.f32.mrf.mxu0
      %v2431 = vadd.f32 0.0, %v2430
      %v2432 = vpop.f32.mrf.mxu0
      %2433 = vmatprep.mubr.bf16.mxu0 0
      %2434 = vmatmul.mubr.bf16.gmra.mxu0 %v2248
      %v2435 = vpop.f32.mrf.mxu0
      %v2436 = vadd.f32 0.0, %v2435
      %v2437 = vpop.f32.mrf.mxu0
      %v2438 = vpop.f32.mrf.mxu0
      %v2439 = vadd.f32 0.0, %v2438
      %v2440 = vpop.f32.mrf.mxu0
      %2441 = vmatprep.mubr.bf16.mxu0 0
      %2442 = vmatmul.mubr.bf16.gmra.mxu0 %v2249
      %v2443 = vpop.f32.mrf.mxu0
      %v2444 = vadd.f32 0.0, %v2443
      %v2445 = vpop.f32.mrf.mxu0
      %v2446 = vpop.f32.mrf.mxu0
      %v2447 = vadd.f32 0.0, %v2446
      %v2448 = vpop.f32.mrf.mxu0
      %2449 = vmatprep.mubr.bf16.mxu0 0
      %2450 = vmatmul.mubr.bf16.gmra.mxu0 %v2250
      %v2451 = vpop.f32.mrf.mxu0
      %v2452 = vadd.f32 0.0, %v2451
      %v2453 = vpop.f32.mrf.mxu0
      %v2454 = vpop.f32.mrf.mxu0
      %v2455 = vadd.f32 0.0, %v2454
      %v2456 = vpop.f32.mrf.mxu0
      %2457 = vmatprep.mubr.bf16.mxu0 0
      %2458 = vmatmul.mubr.bf16.gmra.mxu0 %v2251
      %v2459 = vpop.f32.mrf.mxu0
      %v2460 = vadd.f32 0.0, %v2459
      %v2461 = vpop.f32.mrf.mxu0
      %v2462 = vpop.f32.mrf.mxu0
      %v2463 = vadd.f32 0.0, %v2462
      %v2464 = vpop.f32.mrf.mxu0
      %2465 = vmatprep.mubr.bf16.mxu0 0
      %2466 = vmatmul.mubr.bf16.gmra.mxu0 %v2252
      %v2467 = vpop.f32.mrf.mxu0
      %v2468 = vadd.f32 0.0, %v2467
      %v2469 = vpop.f32.mrf.mxu0
      %v2470 = vpop.f32.mrf.mxu0
      %v2471 = vadd.f32 0.0, %v2470
      %v2472 = vpop.f32.mrf.mxu0
      %2473 = vmatprep.mubr.bf16.mxu0 0
      %2474 = vmatmul.mubr.bf16.gmra.mxu0 %v2253
      %v2475 = vpop.f32.mrf.mxu0
      %v2476 = vadd.f32 0.0, %v2475
      %v2477 = vpop.f32.mrf.mxu0
      %v2478 = vpop.f32.mrf.mxu0
      %v2479 = vadd.f32 0.0, %v2478
      %v2480 = vpop.f32.mrf.mxu0
      %2481 = vmatprep.mubr.bf16.mxu0 0
      %2482 = vmatmul.mubr.bf16.gmra.mxu0 %v2254
      %v2483 = vpop.f32.mrf.mxu0
      %v2484 = vadd.f32 0.0, %v2483
      %v2485 = vpop.f32.mrf.mxu0
      %v2486 = vpop.f32.mrf.mxu0
      %v2487 = vadd.f32 0.0, %v2486
      %v2488 = vpop.f32.mrf.mxu0
      %2489 = vmatprep.mubr.bf16.mxu0 0
      %2490 = vmatmul.mubr.bf16.gmra.mxu0 %v2255
      %v2491 = vpop.f32.mrf.mxu0
      %v2492 = vadd.f32 0.0, %v2491
      %v2493 = vpop.f32.mrf.mxu0
      %v2494 = vpop.f32.mrf.mxu0
      %v2495 = vadd.f32 0.0, %v2494
      %v2496 = vpop.f32.mrf.mxu0
      %2497 = vdwg.mxu0
      %v2498 = vadd.f32 %v2166, %v2356
      %v2499 = vadd.f32 %v2167, %v2359
      %v2500 = vadd.f32 %v2168, %v2364
      %v2501 = vadd.f32 %v2169, %v2367
      %v2502 = vadd.f32 %v2170, %v2372
      %v2503 = vadd.f32 %v2171, %v2375
      %v2504 = vadd.f32 %v2172, %v2380
      %v2505 = vadd.f32 %v2173, %v2383
      %v2506 = vadd.f32 %v2174, %v2388
      %v2507 = vadd.f32 %v2175, %v2391
      %v2508 = vadd.f32 %v2176, %v2396
      %v2509 = vadd.f32 %v2177, %v2399
      %v2510 = vadd.f32 %v2178, %v2404
      %v2511 = vadd.f32 %v2179, %v2407
      %v2512 = vadd.f32 %v2180, %v2412
      %v2513 = vadd.f32 %v2181, %v2415
      %v2514 = vadd.f32 %v2182, %v2420
      %v2515 = vadd.f32 %v2183, %v2423
      %v2516 = vadd.f32 %v2184, %v2428
      %v2517 = vadd.f32 %v2185, %v2431
      %v2518 = vadd.f32 %v2186, %v2436
      %v2519 = vadd.f32 %v2187, %v2439
      %v2520 = vadd.f32 %v2188, %v2444
      %v2521 = vadd.f32 %v2189, %v2447
      %v2522 = vadd.f32 %v2190, %v2452
      %v2523 = vadd.f32 %v2191, %v2455
      %v2524 = vadd.f32 %v2192, %v2460
      %v2525 = vadd.f32 %v2193, %v2463
      %v2526 = vadd.f32 %v2194, %v2468
      %v2527 = vadd.f32 %v2195, %v2471
      %v2528 = vadd.f32 %v2196, %v2476
      %v2529 = vadd.f32 %v2197, %v2479
      %v2530 = vadd.f32 %v2198, %v2484
      %v2531 = vadd.f32 %v2199, %v2487
      %v2532 = vadd.f32 %v2200, %v2492
      %v2533 = vadd.f32 %v2201, %v2495
      %v2534 = vld [vmem:[#allocation2 + $0x24] sm:$0xff]
      %v2535 = vld [vmem:[#allocation2 + $0x2c] sm:$0xff]
      %v2536 = vld [vmem:[#allocation2 + $0x34] sm:$0xff]
      %v2537 = vld [vmem:[#allocation2 + $0x3c] sm:$0xff]
      %v2538 = vld [vmem:[#allocation2 + $0x44] sm:$0xff]
      %v2539 = vld [vmem:[#allocation2 + $0x4c] sm:$0xff]
      %v2540 = vld [vmem:[#allocation2 + $0x54] sm:$0xff]
      %v2541 = vld [vmem:[#allocation2 + $0x5c] sm:$0xff]
      %v2542 = vld [vmem:[#allocation2 + $0x64] sm:$0xff]
      %v2543 = vld [vmem:[#allocation2 + $0x6c] sm:$0xff]
      %v2544 = vld [vmem:[#allocation2 + $0x74] sm:$0xff]
      %v2545 = vld [vmem:[#allocation2 + $0x7c] sm:$0xff]
      %v2546 = vld [vmem:[#allocation2 + $0x84] sm:$0xff]
      %v2547 = vld [vmem:[#allocation2 + $0x8c] sm:$0xff]
      %v2548 = vld [vmem:[#allocation2 + $0x94] sm:$0xff]
      %v2549 = vld [vmem:[#allocation2 + $0x9c] sm:$0xff]
      %v2550 = vld [vmem:[#allocation2 + $0xa4] sm:$0xff]
      %v2551 = vld [vmem:[#allocation2 + $0xac] sm:$0xff]
      %v2552 = vld [vmem:[#allocation2 + $0xb4] sm:$0xff]
      %v2553 = vld [vmem:[#allocation2 + $0xbc] sm:$0xff]
      %v2554 = vld [vmem:[#allocation2 + $0xc4] sm:$0xff]
      %v2555 = vld [vmem:[#allocation2 + $0xcc] sm:$0xff]
      %v2556 = vld [vmem:[#allocation2 + $0xd4] sm:$0xff]
      %v2557 = vld [vmem:[#allocation2 + $0xdc] sm:$0xff]
      %v2558 = vld [vmem:[#allocation2 + $0xe4] sm:$0xff]
      %v2559 = vld [vmem:[#allocation2 + $0xec] sm:$0xff]
      %v2560 = vld [vmem:[#allocation2 + $0xf4] sm:$0xff]
      %v2561 = vld [vmem:[#allocation2 + $0xfc] sm:$0xff]
      %v2562 = vld [vmem:[#allocation2 + $0x104] sm:$0xff]
      %v2563 = vld [vmem:[#allocation2 + $0x10c] sm:$0xff]
      %v2564 = vld [vmem:[#allocation2 + $0x114] sm:$0xff]
      %v2565 = vld [vmem:[#allocation2 + $0x11c] sm:$0xff]
      %v2566 = vld [vmem:[#allocation2 + $0x124] sm:$0xff]
      %v2567 = vld [vmem:[#allocation2 + $0x12c] sm:$0xff]
      %v2568 = vld [vmem:[#allocation2 + $0x134] sm:$0xff]
      %v2569 = vld [vmem:[#allocation2 + $0x13c] sm:$0xff]
      %v2570 = vpack.c.bf16 %v2535, %v2534
      %v2571 = vpack.c.bf16 %v2537, %v2536
      %v2572 = vpack.c.bf16 %v2539, %v2538
      %v2573 = vpack.c.bf16 %v2541, %v2540
      %v2574 = vpack.c.bf16 %v2543, %v2542
      %v2575 = vpack.c.bf16 %v2545, %v2544
      %v2576 = vpack.c.bf16 %v2547, %v2546
      %v2577 = vpack.c.bf16 %v2549, %v2548
      %v2578 = vpack.c.bf16 %v2551, %v2550
      %v2579 = vpack.c.bf16 %v2553, %v2552
      %v2580 = vpack.c.bf16 %v2555, %v2554
      %v2581 = vpack.c.bf16 %v2557, %v2556
      %v2582 = vpack.c.bf16 %v2559, %v2558
      %v2583 = vpack.c.bf16 %v2561, %v2560
      %v2584 = vpack.c.bf16 %v2563, %v2562
      %v2585 = vpack.c.bf16 %v2565, %v2564
      %v2586 = vpack.c.bf16 %v2567, %v2566
      %v2587 = vpack.c.bf16 %v2569, %v2568
      %s2588 = scalar_lea.vmem %s3, 384
      %v2589 = vld [vmem:[%s2588] sm:$0xf]
      %v2590 = vld [vmem:[%s2588 + $0x4] sm:$0xf]
      %v2591 = vld [vmem:[%s2588 + $0x8] sm:$0xf]
      %v2592 = vld [vmem:[%s2588 + $0xc] sm:$0xf]
      %v2593 = vld [vmem:[%s2588 + $0x10] sm:$0xf]
      %v2594 = vld [vmem:[%s2588 + $0x14] sm:$0xf]
      %v2595 = vld [vmem:[%s2588 + $0x18] sm:$0xf]
      %v2596 = vld [vmem:[%s2588 + $0x1c] sm:$0xf]
      %v2597 = vld [vmem:[%s2588 + $0x20] sm:$0xf]
      %v2598 = vld [vmem:[%s2588 + $0x24] sm:$0xf]
      %v2599 = vld [vmem:[%s2588 + $0x28] sm:$0xf]
      %v2600 = vld [vmem:[%s2588 + $0x2c] sm:$0xf]
      %v2601 = vld [vmem:[%s2588 + $0x30] sm:$0xf]
      %v2602 = vld [vmem:[%s2588 + $0x34] sm:$0xf]
      %v2603 = vld [vmem:[%s2588 + $0x38] sm:$0xf]
      %v2604 = vld [vmem:[%s2588 + $0x3c] sm:$0xf]
      %v2621 = vunpack.c.l.b16 %v2589
      %v2622 = vunpack.c.l.b16 %v2590
      %v2623 = vunpack.c.l.b16 %v2591
      %v2624 = vunpack.c.l.b16 %v2592
      %v2625 = vunpack.c.l.b16 %v2593
      %v2626 = vunpack.c.l.b16 %v2594
      %v2627 = vunpack.c.l.b16 %v2595
      %v2628 = vunpack.c.l.b16 %v2596
      %v2629 = vunpack.c.l.b16 %v2597
      %v2630 = vunpack.c.l.b16 %v2598
      %v2631 = vunpack.c.l.b16 %v2599
      %v2632 = vunpack.c.l.b16 %v2600
      %v2633 = vunpack.c.l.b16 %v2601
      %v2634 = vunpack.c.l.b16 %v2602
      %v2635 = vunpack.c.l.b16 %v2603
      %v2636 = vunpack.c.l.b16 %v2604
      %v2637 = vpack.c.b16 %v2622, %v2621
      %v2638 = vpack.c.b16 %v2624, %v2623
      %v2639 = vpack.c.b16 %v2626, %v2625
      %v2640 = vpack.c.b16 %v2628, %v2627
      %v2641 = vpack.c.b16 %v2630, %v2629
      %v2642 = vpack.c.b16 %v2632, %v2631
      %v2643 = vpack.c.b16 %v2634, %v2633
      %v2644 = vpack.c.b16 %v2636, %v2635
      %2653 = vmatprep.subr.bf16.mxu0 0
      %2654 = vmatpush1.bf16.msra.mxu0 %v2644
      %2655 = vmatprep.subr.bf16.mxu0 0
      %2656 = vmatpush1.bf16.msra.mxu0 %v2643
      %2657 = vmatprep.subr.bf16.mxu0 0
      %2658 = vmatpush1.bf16.msra.mxu0 %v2642
      %2659 = vmatprep.subr.bf16.mxu0 0
      %2660 = vmatpush1.bf16.msra.mxu0 %v2641
      %2661 = vmatprep.subr.bf16.mxu0 0
      %2662 = vmatpush1.bf16.msra.mxu0 %v2640
      %2663 = vmatprep.subr.bf16.mxu0 0
      %2664 = vmatpush1.bf16.msra.mxu0 %v2639
      %2665 = vmatprep.subr.bf16.mxu0 0
      %2666 = vmatpush1.bf16.msra.mxu0 %v2638
      %2667 = vmatprep.subr.bf16.mxu0 0
      %2668 = vmatpush1.bf16.msra.mxu0 %v2637
      %2669 = vmatprep.subr.bf16.mxu0 0
      %2670 = vmatpush2.bf16.msra.mxu0 0
      %2671 = vmatprep.subr.bf16.mxu0 0
      %2672 = vmatpush2.bf16.msra.mxu0 0
      %2673 = vmatprep.subr.bf16.mxu0 0
      %2674 = vmatpush2.bf16.msra.mxu0 0
      %2675 = vmatprep.subr.bf16.mxu0 0
      %2676 = vmatpush2.bf16.msra.mxu0 0
      %2677 = vmatprep.subr.bf16.mxu0 0
      %2678 = vmatpush2.bf16.msra.mxu0 0
      %2679 = vmatprep.subr.bf16.mxu0 0
      %2680 = vmatpush2.bf16.msra.mxu0 0
      %2681 = vmatprep.subr.bf16.mxu0 0
      %2682 = vmatpush2.bf16.msra.mxu0 0
      %2683 = vmatprep.subr.bf16.mxu0 0
      %2684 = vmatpush2.bf16.msra.mxu0 0
      %2685 = vmatprep.mubr.bf16.mxu0 0
      %2686 = vmatmul.mubr.bf16.gmra.mxu0 %v2570
      %v2687 = vpop.f32.mrf.mxu0
      %v2688 = vadd.f32 0.0, %v2687
      %v2689 = vpop.f32.mrf.mxu0
      %v2690 = vpop.f32.mrf.mxu0
      %v2691 = vadd.f32 0.0, %v2690
      %v2692 = vpop.f32.mrf.mxu0
      %2693 = vmatprep.mubr.bf16.mxu0 0
      %2694 = vmatmul.mubr.bf16.gmra.mxu0 %v2571
      %v2695 = vpop.f32.mrf.mxu0
      %v2696 = vadd.f32 0.0, %v2695
      %v2697 = vpop.f32.mrf.mxu0
      %v2698 = vpop.f32.mrf.mxu0
      %v2699 = vadd.f32 0.0, %v2698
      %v2700 = vpop.f32.mrf.mxu0
      %2701 = vmatprep.mubr.bf16.mxu0 0
      %2702 = vmatmul.mubr.bf16.gmra.mxu0 %v2572
      %v2703 = vpop.f32.mrf.mxu0
      %v2704 = vadd.f32 0.0, %v2703
      %v2705 = vpop.f32.mrf.mxu0
      %v2706 = vpop.f32.mrf.mxu0
      %v2707 = vadd.f32 0.0, %v2706
      %v2708 = vpop.f32.mrf.mxu0
      %2709 = vmatprep.mubr.bf16.mxu0 0
      %2710 = vmatmul.mubr.bf16.gmra.mxu0 %v2573
      %v2711 = vpop.f32.mrf.mxu0
      %v2712 = vadd.f32 0.0, %v2711
      %v2713 = vpop.f32.mrf.mxu0
      %v2714 = vpop.f32.mrf.mxu0
      %v2715 = vadd.f32 0.0, %v2714
      %v2716 = vpop.f32.mrf.mxu0
      %2717 = vmatprep.mubr.bf16.mxu0 0
      %2718 = vmatmul.mubr.bf16.gmra.mxu0 %v2574
      %v2719 = vpop.f32.mrf.mxu0
      %v2720 = vadd.f32 0.0, %v2719
      %v2721 = vpop.f32.mrf.mxu0
      %v2722 = vpop.f32.mrf.mxu0
      %v2723 = vadd.f32 0.0, %v2722
      %v2724 = vpop.f32.mrf.mxu0
      %2725 = vmatprep.mubr.bf16.mxu0 0
      %2726 = vmatmul.mubr.bf16.gmra.mxu0 %v2575
      %v2727 = vpop.f32.mrf.mxu0
      %v2728 = vadd.f32 0.0, %v2727
      %v2729 = vpop.f32.mrf.mxu0
      %v2730 = vpop.f32.mrf.mxu0
      %v2731 = vadd.f32 0.0, %v2730
      %v2732 = vpop.f32.mrf.mxu0
      %2733 = vmatprep.mubr.bf16.mxu0 0
      %2734 = vmatmul.mubr.bf16.gmra.mxu0 %v2576
      %v2735 = vpop.f32.mrf.mxu0
      %v2736 = vadd.f32 0.0, %v2735
      %v2737 = vpop.f32.mrf.mxu0
      %v2738 = vpop.f32.mrf.mxu0
      %v2739 = vadd.f32 0.0, %v2738
      %v2740 = vpop.f32.mrf.mxu0
      %2741 = vmatprep.mubr.bf16.mxu0 0
      %2742 = vmatmul.mubr.bf16.gmra.mxu0 %v2577
      %v2743 = vpop.f32.mrf.mxu0
      %v2744 = vadd.f32 0.0, %v2743
      %v2745 = vpop.f32.mrf.mxu0
      %v2746 = vpop.f32.mrf.mxu0
      %v2747 = vadd.f32 0.0, %v2746
      %v2748 = vpop.f32.mrf.mxu0
      %2749 = vmatprep.mubr.bf16.mxu0 0
      %2750 = vmatmul.mubr.bf16.gmra.mxu0 %v2578
      %v2751 = vpop.f32.mrf.mxu0
      %v2752 = vadd.f32 0.0, %v2751
      %v2753 = vpop.f32.mrf.mxu0
      %v2754 = vpop.f32.mrf.mxu0
      %v2755 = vadd.f32 0.0, %v2754
      %v2756 = vpop.f32.mrf.mxu0
      %2757 = vmatprep.mubr.bf16.mxu0 0
      %2758 = vmatmul.mubr.bf16.gmra.mxu0 %v2579
      %v2759 = vpop.f32.mrf.mxu0
      %v2760 = vadd.f32 0.0, %v2759
      %v2761 = vpop.f32.mrf.mxu0
      %v2762 = vpop.f32.mrf.mxu0
      %v2763 = vadd.f32 0.0, %v2762
      %v2764 = vpop.f32.mrf.mxu0
      %2765 = vmatprep.mubr.bf16.mxu0 0
      %2766 = vmatmul.mubr.bf16.gmra.mxu0 %v2580
      %v2767 = vpop.f32.mrf.mxu0
      %v2768 = vadd.f32 0.0, %v2767
      %v2769 = vpop.f32.mrf.mxu0
      %v2770 = vpop.f32.mrf.mxu0
      %v2771 = vadd.f32 0.0, %v2770
      %v2772 = vpop.f32.mrf.mxu0
      %2773 = vmatprep.mubr.bf16.mxu0 0
      %2774 = vmatmul.mubr.bf16.gmra.mxu0 %v2581
      %v2775 = vpop.f32.mrf.mxu0
      %v2776 = vadd.f32 0.0, %v2775
      %v2777 = vpop.f32.mrf.mxu0
      %v2778 = vpop.f32.mrf.mxu0
      %v2779 = vadd.f32 0.0, %v2778
      %v2780 = vpop.f32.mrf.mxu0
      %2781 = vmatprep.mubr.bf16.mxu0 0
      %2782 = vmatmul.mubr.bf16.gmra.mxu0 %v2582
      %v2783 = vpop.f32.mrf.mxu0
      %v2784 = vadd.f32 0.0, %v2783
      %v2785 = vpop.f32.mrf.mxu0
      %v2786 = vpop.f32.mrf.mxu0
      %v2787 = vadd.f32 0.0, %v2786
      %v2788 = vpop.f32.mrf.mxu0
      %2789 = vmatprep.mubr.bf16.mxu0 0
      %2790 = vmatmul.mubr.bf16.gmra.mxu0 %v2583
      %v2791 = vpop.f32.mrf.mxu0
      %v2792 = vadd.f32 0.0, %v2791
      %v2793 = vpop.f32.mrf.mxu0
      %v2794 = vpop.f32.mrf.mxu0
      %v2795 = vadd.f32 0.0, %v2794
      %v2796 = vpop.f32.mrf.mxu0
      %2797 = vmatprep.mubr.bf16.mxu0 0
      %2798 = vmatmul.mubr.bf16.gmra.mxu0 %v2584
      %v2799 = vpop.f32.mrf.mxu0
      %v2800 = vadd.f32 0.0, %v2799
      %v2801 = vpop.f32.mrf.mxu0
      %v2802 = vpop.f32.mrf.mxu0
      %v2803 = vadd.f32 0.0, %v2802
      %v2804 = vpop.f32.mrf.mxu0
      %2805 = vmatprep.mubr.bf16.mxu0 0
      %2806 = vmatmul.mubr.bf16.gmra.mxu0 %v2585
      %v2807 = vpop.f32.mrf.mxu0
      %v2808 = vadd.f32 0.0, %v2807
      %v2809 = vpop.f32.mrf.mxu0
      %v2810 = vpop.f32.mrf.mxu0
      %v2811 = vadd.f32 0.0, %v2810
      %v2812 = vpop.f32.mrf.mxu0
      %2813 = vmatprep.mubr.bf16.mxu0 0
      %2814 = vmatmul.mubr.bf16.gmra.mxu0 %v2586
      %v2815 = vpop.f32.mrf.mxu0
      %v2816 = vadd.f32 0.0, %v2815
      %v2817 = vpop.f32.mrf.mxu0
      %v2818 = vpop.f32.mrf.mxu0
      %v2819 = vadd.f32 0.0, %v2818
      %v2820 = vpop.f32.mrf.mxu0
      %2821 = vmatprep.mubr.bf16.mxu0 0
      %2822 = vmatmul.mubr.bf16.gmra.mxu0 %v2587
      %v2823 = vpop.f32.mrf.mxu0
      %v2824 = vadd.f32 0.0, %v2823
      %v2825 = vpop.f32.mrf.mxu0
      %v2826 = vpop.f32.mrf.mxu0
      %v2827 = vadd.f32 0.0, %v2826
      %v2828 = vpop.f32.mrf.mxu0
      %2829 = vdwg.mxu0
      %v2830 = vadd.f32 %v2498, %v2688
      %v2831 = vadd.f32 %v2499, %v2691
      %v2832 = vadd.f32 %v2500, %v2696
      %v2833 = vadd.f32 %v2501, %v2699
      %v2834 = vadd.f32 %v2502, %v2704
      %v2835 = vadd.f32 %v2503, %v2707
      %v2836 = vadd.f32 %v2504, %v2712
      %v2837 = vadd.f32 %v2505, %v2715
      %v2838 = vadd.f32 %v2506, %v2720
      %v2839 = vadd.f32 %v2507, %v2723
      %v2840 = vadd.f32 %v2508, %v2728
      %v2841 = vadd.f32 %v2509, %v2731
      %v2842 = vadd.f32 %v2510, %v2736
      %v2843 = vadd.f32 %v2511, %v2739
      %v2844 = vadd.f32 %v2512, %v2744
      %v2845 = vadd.f32 %v2513, %v2747
      %v2846 = vadd.f32 %v2514, %v2752
      %v2847 = vadd.f32 %v2515, %v2755
      %v2848 = vadd.f32 %v2516, %v2760
      %v2849 = vadd.f32 %v2517, %v2763
      %v2850 = vadd.f32 %v2518, %v2768
      %v2851 = vadd.f32 %v2519, %v2771
      %v2852 = vadd.f32 %v2520, %v2776
      %v2853 = vadd.f32 %v2521, %v2779
      %v2854 = vadd.f32 %v2522, %v2784
      %v2855 = vadd.f32 %v2523, %v2787
      %v2856 = vadd.f32 %v2524, %v2792
      %v2857 = vadd.f32 %v2525, %v2795
      %v2858 = vadd.f32 %v2526, %v2800
      %v2859 = vadd.f32 %v2527, %v2803
      %v2860 = vadd.f32 %v2528, %v2808
      %v2861 = vadd.f32 %v2529, %v2811
      %v2862 = vadd.f32 %v2530, %v2816
      %v2863 = vadd.f32 %v2531, %v2819
      %v2864 = vadd.f32 %v2532, %v2824
      %v2865 = vadd.f32 %v2533, %v2827
      %v2866 = vld [vmem:[#allocation2 + $0x25] sm:$0xff]
      %v2867 = vld [vmem:[#allocation2 + $0x2d] sm:$0xff]
      %v2868 = vld [vmem:[#allocation2 + $0x35] sm:$0xff]
      %v2869 = vld [vmem:[#allocation2 + $0x3d] sm:$0xff]
      %v2870 = vld [vmem:[#allocation2 + $0x45] sm:$0xff]
      %v2871 = vld [vmem:[#allocation2 + $0x4d] sm:$0xff]
      %v2872 = vld [vmem:[#allocation2 + $0x55] sm:$0xff]
      %v2873 = vld [vmem:[#allocation2 + $0x5d] sm:$0xff]
      %v2874 = vld [vmem:[#allocation2 + $0x65] sm:$0xff]
      %v2875 = vld [vmem:[#allocation2 + $0x6d] sm:$0xff]
      %v2876 = vld [vmem:[#allocation2 + $0x75] sm:$0xff]
      %v2877 = vld [vmem:[#allocation2 + $0x7d] sm:$0xff]
      %v2878 = vld [vmem:[#allocation2 + $0x85] sm:$0xff]
      %v2879 = vld [vmem:[#allocation2 + $0x8d] sm:$0xff]
      %v2880 = vld [vmem:[#allocation2 + $0x95] sm:$0xff]
      %v2881 = vld [vmem:[#allocation2 + $0x9d] sm:$0xff]
      %v2882 = vld [vmem:[#allocation2 + $0xa5] sm:$0xff]
      %v2883 = vld [vmem:[#allocation2 + $0xad] sm:$0xff]
      %v2884 = vld [vmem:[#allocation2 + $0xb5] sm:$0xff]
      %v2885 = vld [vmem:[#allocation2 + $0xbd] sm:$0xff]
      %v2886 = vld [vmem:[#allocation2 + $0xc5] sm:$0xff]
      %v2887 = vld [vmem:[#allocation2 + $0xcd] sm:$0xff]
      %v2888 = vld [vmem:[#allocation2 + $0xd5] sm:$0xff]
      %v2889 = vld [vmem:[#allocation2 + $0xdd] sm:$0xff]
      %v2890 = vld [vmem:[#allocation2 + $0xe5] sm:$0xff]
      %v2891 = vld [vmem:[#allocation2 + $0xed] sm:$0xff]
      %v2892 = vld [vmem:[#allocation2 + $0xf5] sm:$0xff]
      %v2893 = vld [vmem:[#allocation2 + $0xfd] sm:$0xff]
      %v2894 = vld [vmem:[#allocation2 + $0x105] sm:$0xff]
      %v2895 = vld [vmem:[#allocation2 + $0x10d] sm:$0xff]
      %v2896 = vld [vmem:[#allocation2 + $0x115] sm:$0xff]
      %v2897 = vld [vmem:[#allocation2 + $0x11d] sm:$0xff]
      %v2898 = vld [vmem:[#allocation2 + $0x125] sm:$0xff]
      %v2899 = vld [vmem:[#allocation2 + $0x12d] sm:$0xff]
      %v2900 = vld [vmem:[#allocation2 + $0x135] sm:$0xff]
      %v2901 = vld [vmem:[#allocation2 + $0x13d] sm:$0xff]
      %v2902 = vpack.c.bf16 %v2867, %v2866
      %v2903 = vpack.c.bf16 %v2869, %v2868
      %v2904 = vpack.c.bf16 %v2871, %v2870
      %v2905 = vpack.c.bf16 %v2873, %v2872
      %v2906 = vpack.c.bf16 %v2875, %v2874
      %v2907 = vpack.c.bf16 %v2877, %v2876
      %v2908 = vpack.c.bf16 %v2879, %v2878
      %v2909 = vpack.c.bf16 %v2881, %v2880
      %v2910 = vpack.c.bf16 %v2883, %v2882
      %v2911 = vpack.c.bf16 %v2885, %v2884
      %v2912 = vpack.c.bf16 %v2887, %v2886
      %v2913 = vpack.c.bf16 %v2889, %v2888
      %v2914 = vpack.c.bf16 %v2891, %v2890
      %v2915 = vpack.c.bf16 %v2893, %v2892
      %v2916 = vpack.c.bf16 %v2895, %v2894
      %v2917 = vpack.c.bf16 %v2897, %v2896
      %v2918 = vpack.c.bf16 %v2899, %v2898
      %v2919 = vpack.c.bf16 %v2901, %v2900
      %s2920 = scalar_lea.vmem %s3, 448
      %v2921 = vld [vmem:[%s2920] sm:$0xf]
      %v2922 = vld [vmem:[%s2920 + $0x4] sm:$0xf]
      %v2923 = vld [vmem:[%s2920 + $0x8] sm:$0xf]
      %v2924 = vld [vmem:[%s2920 + $0xc] sm:$0xf]
      %v2925 = vld [vmem:[%s2920 + $0x10] sm:$0xf]
      %v2926 = vld [vmem:[%s2920 + $0x14] sm:$0xf]
      %v2927 = vld [vmem:[%s2920 + $0x18] sm:$0xf]
      %v2928 = vld [vmem:[%s2920 + $0x1c] sm:$0xf]
      %v2929 = vld [vmem:[%s2920 + $0x20] sm:$0xf]
      %v2930 = vld [vmem:[%s2920 + $0x24] sm:$0xf]
      %v2931 = vld [vmem:[%s2920 + $0x28] sm:$0xf]
      %v2932 = vld [vmem:[%s2920 + $0x2c] sm:$0xf]
      %v2933 = vld [vmem:[%s2920 + $0x30] sm:$0xf]
      %v2934 = vld [vmem:[%s2920 + $0x34] sm:$0xf]
      %v2935 = vld [vmem:[%s2920 + $0x38] sm:$0xf]
      %v2936 = vld [vmem:[%s2920 + $0x3c] sm:$0xf]
      %v2953 = vunpack.c.l.b16 %v2921
      %v2954 = vunpack.c.l.b16 %v2922
      %v2955 = vunpack.c.l.b16 %v2923
      %v2956 = vunpack.c.l.b16 %v2924
      %v2957 = vunpack.c.l.b16 %v2925
      %v2958 = vunpack.c.l.b16 %v2926
      %v2959 = vunpack.c.l.b16 %v2927
      %v2960 = vunpack.c.l.b16 %v2928
      %v2961 = vunpack.c.l.b16 %v2929
      %v2962 = vunpack.c.l.b16 %v2930
      %v2963 = vunpack.c.l.b16 %v2931
      %v2964 = vunpack.c.l.b16 %v2932
      %v2965 = vunpack.c.l.b16 %v2933
      %v2966 = vunpack.c.l.b16 %v2934
      %v2967 = vunpack.c.l.b16 %v2935
      %v2968 = vunpack.c.l.b16 %v2936
      %v2969 = vpack.c.b16 %v2954, %v2953
      %v2970 = vpack.c.b16 %v2956, %v2955
      %v2971 = vpack.c.b16 %v2958, %v2957
      %v2972 = vpack.c.b16 %v2960, %v2959
      %v2973 = vpack.c.b16 %v2962, %v2961
      %v2974 = vpack.c.b16 %v2964, %v2963
      %v2975 = vpack.c.b16 %v2966, %v2965
      %v2976 = vpack.c.b16 %v2968, %v2967
      %2985 = vmatprep.subr.bf16.mxu0 0
      %2986 = vmatpush1.bf16.msra.mxu0 %v2976
      %2987 = vmatprep.subr.bf16.mxu0 0
      %2988 = vmatpush1.bf16.msra.mxu0 %v2975
      %2989 = vmatprep.subr.bf16.mxu0 0
      %2990 = vmatpush1.bf16.msra.mxu0 %v2974
      %2991 = vmatprep.subr.bf16.mxu0 0
      %2992 = vmatpush1.bf16.msra.mxu0 %v2973
      %2993 = vmatprep.subr.bf16.mxu0 0
      %2994 = vmatpush1.bf16.msra.mxu0 %v2972
      %2995 = vmatprep.subr.bf16.mxu0 0
      %2996 = vmatpush1.bf16.msra.mxu0 %v2971
      %2997 = vmatprep.subr.bf16.mxu0 0
      %2998 = vmatpush1.bf16.msra.mxu0 %v2970
      %2999 = vmatprep.subr.bf16.mxu0 0
      %3000 = vmatpush1.bf16.msra.mxu0 %v2969
      %3001 = vmatprep.subr.bf16.mxu0 0
      %3002 = vmatpush2.bf16.msra.mxu0 0
      %3003 = vmatprep.subr.bf16.mxu0 0
      %3004 = vmatpush2.bf16.msra.mxu0 0
      %3005 = vmatprep.subr.bf16.mxu0 0
      %3006 = vmatpush2.bf16.msra.mxu0 0
      %3007 = vmatprep.subr.bf16.mxu0 0
      %3008 = vmatpush2.bf16.msra.mxu0 0
      %3009 = vmatprep.subr.bf16.mxu0 0
      %3010 = vmatpush2.bf16.msra.mxu0 0
      %3011 = vmatprep.subr.bf16.mxu0 0
      %3012 = vmatpush2.bf16.msra.mxu0 0
      %3013 = vmatprep.subr.bf16.mxu0 0
      %3014 = vmatpush2.bf16.msra.mxu0 0
      %3015 = vmatprep.subr.bf16.mxu0 0
      %3016 = vmatpush2.bf16.msra.mxu0 0
      %3017 = vmatprep.mubr.bf16.mxu0 0
      %3018 = vmatmul.mubr.bf16.gmra.mxu0 %v2902
      %v3019 = vpop.f32.mrf.mxu0
      %v3020 = vadd.f32 0.0, %v3019
      %v3021 = vpop.f32.mrf.mxu0
      %v3022 = vpop.f32.mrf.mxu0
      %v3023 = vadd.f32 0.0, %v3022
      %v3024 = vpop.f32.mrf.mxu0
      %3025 = vmatprep.mubr.bf16.mxu0 0
      %3026 = vmatmul.mubr.bf16.gmra.mxu0 %v2903
      %v3027 = vpop.f32.mrf.mxu0
      %v3028 = vadd.f32 0.0, %v3027
      %v3029 = vpop.f32.mrf.mxu0
      %v3030 = vpop.f32.mrf.mxu0
      %v3031 = vadd.f32 0.0, %v3030
      %v3032 = vpop.f32.mrf.mxu0
      %3033 = vmatprep.mubr.bf16.mxu0 0
      %3034 = vmatmul.mubr.bf16.gmra.mxu0 %v2904
      %v3035 = vpop.f32.mrf.mxu0
      %v3036 = vadd.f32 0.0, %v3035
      %v3037 = vpop.f32.mrf.mxu0
      %v3038 = vpop.f32.mrf.mxu0
      %v3039 = vadd.f32 0.0, %v3038
      %v3040 = vpop.f32.mrf.mxu0
      %3041 = vmatprep.mubr.bf16.mxu0 0
      %3042 = vmatmul.mubr.bf16.gmra.mxu0 %v2905
      %v3043 = vpop.f32.mrf.mxu0
      %v3044 = vadd.f32 0.0, %v3043
      %v3045 = vpop.f32.mrf.mxu0
      %v3046 = vpop.f32.mrf.mxu0
      %v3047 = vadd.f32 0.0, %v3046
      %v3048 = vpop.f32.mrf.mxu0
      %3049 = vmatprep.mubr.bf16.mxu0 0
      %3050 = vmatmul.mubr.bf16.gmra.mxu0 %v2906
      %v3051 = vpop.f32.mrf.mxu0
      %v3052 = vadd.f32 0.0, %v3051
      %v3053 = vpop.f32.mrf.mxu0
      %v3054 = vpop.f32.mrf.mxu0
      %v3055 = vadd.f32 0.0, %v3054
      %v3056 = vpop.f32.mrf.mxu0
      %3057 = vmatprep.mubr.bf16.mxu0 0
      %3058 = vmatmul.mubr.bf16.gmra.mxu0 %v2907
      %v3059 = vpop.f32.mrf.mxu0
      %v3060 = vadd.f32 0.0, %v3059
      %v3061 = vpop.f32.mrf.mxu0
      %v3062 = vpop.f32.mrf.mxu0
      %v3063 = vadd.f32 0.0, %v3062
      %v3064 = vpop.f32.mrf.mxu0
      %3065 = vmatprep.mubr.bf16.mxu0 0
      %3066 = vmatmul.mubr.bf16.gmra.mxu0 %v2908
      %v3067 = vpop.f32.mrf.mxu0
      %v3068 = vadd.f32 0.0, %v3067
      %v3069 = vpop.f32.mrf.mxu0
      %v3070 = vpop.f32.mrf.mxu0
      %v3071 = vadd.f32 0.0, %v3070
      %v3072 = vpop.f32.mrf.mxu0
      %3073 = vmatprep.mubr.bf16.mxu0 0
      %3074 = vmatmul.mubr.bf16.gmra.mxu0 %v2909
      %v3075 = vpop.f32.mrf.mxu0
      %v3076 = vadd.f32 0.0, %v3075
      %v3077 = vpop.f32.mrf.mxu0
      %v3078 = vpop.f32.mrf.mxu0
      %v3079 = vadd.f32 0.0, %v3078
      %v3080 = vpop.f32.mrf.mxu0
      %3081 = vmatprep.mubr.bf16.mxu0 0
      %3082 = vmatmul.mubr.bf16.gmra.mxu0 %v2910
      %v3083 = vpop.f32.mrf.mxu0
      %v3084 = vadd.f32 0.0, %v3083
      %v3085 = vpop.f32.mrf.mxu0
      %v3086 = vpop.f32.mrf.mxu0
      %v3087 = vadd.f32 0.0, %v3086
      %v3088 = vpop.f32.mrf.mxu0
      %3089 = vmatprep.mubr.bf16.mxu0 0
      %3090 = vmatmul.mubr.bf16.gmra.mxu0 %v2911
      %v3091 = vpop.f32.mrf.mxu0
      %v3092 = vadd.f32 0.0, %v3091
      %v3093 = vpop.f32.mrf.mxu0
      %v3094 = vpop.f32.mrf.mxu0
      %v3095 = vadd.f32 0.0, %v3094
      %v3096 = vpop.f32.mrf.mxu0
      %3097 = vmatprep.mubr.bf16.mxu0 0
      %3098 = vmatmul.mubr.bf16.gmra.mxu0 %v2912
      %v3099 = vpop.f32.mrf.mxu0
      %v3100 = vadd.f32 0.0, %v3099
      %v3101 = vpop.f32.mrf.mxu0
      %v3102 = vpop.f32.mrf.mxu0
      %v3103 = vadd.f32 0.0, %v3102
      %v3104 = vpop.f32.mrf.mxu0
      %3105 = vmatprep.mubr.bf16.mxu0 0
      %3106 = vmatmul.mubr.bf16.gmra.mxu0 %v2913
      %v3107 = vpop.f32.mrf.mxu0
      %v3108 = vadd.f32 0.0, %v3107
      %v3109 = vpop.f32.mrf.mxu0
      %v3110 = vpop.f32.mrf.mxu0
      %v3111 = vadd.f32 0.0, %v3110
      %v3112 = vpop.f32.mrf.mxu0
      %3113 = vmatprep.mubr.bf16.mxu0 0
      %3114 = vmatmul.mubr.bf16.gmra.mxu0 %v2914
      %v3115 = vpop.f32.mrf.mxu0
      %v3116 = vadd.f32 0.0, %v3115
      %v3117 = vpop.f32.mrf.mxu0
      %v3118 = vpop.f32.mrf.mxu0
      %v3119 = vadd.f32 0.0, %v3118
      %v3120 = vpop.f32.mrf.mxu0
      %3121 = vmatprep.mubr.bf16.mxu0 0
      %3122 = vmatmul.mubr.bf16.gmra.mxu0 %v2915
      %v3123 = vpop.f32.mrf.mxu0
      %v3124 = vadd.f32 0.0, %v3123
      %v3125 = vpop.f32.mrf.mxu0
      %v3126 = vpop.f32.mrf.mxu0
      %v3127 = vadd.f32 0.0, %v3126
      %v3128 = vpop.f32.mrf.mxu0
      %3129 = vmatprep.mubr.bf16.mxu0 0
      %3130 = vmatmul.mubr.bf16.gmra.mxu0 %v2916
      %v3131 = vpop.f32.mrf.mxu0
      %v3132 = vadd.f32 0.0, %v3131
      %v3133 = vpop.f32.mrf.mxu0
      %v3134 = vpop.f32.mrf.mxu0
      %v3135 = vadd.f32 0.0, %v3134
      %v3136 = vpop.f32.mrf.mxu0
      %3137 = vmatprep.mubr.bf16.mxu0 0
      %3138 = vmatmul.mubr.bf16.gmra.mxu0 %v2917
      %v3139 = vpop.f32.mrf.mxu0
      %v3140 = vadd.f32 0.0, %v3139
      %v3141 = vpop.f32.mrf.mxu0
      %v3142 = vpop.f32.mrf.mxu0
      %v3143 = vadd.f32 0.0, %v3142
      %v3144 = vpop.f32.mrf.mxu0
      %3145 = vmatprep.mubr.bf16.mxu0 0
      %3146 = vmatmul.mubr.bf16.gmra.mxu0 %v2918
      %v3147 = vpop.f32.mrf.mxu0
      %v3148 = vadd.f32 0.0, %v3147
      %v3149 = vpop.f32.mrf.mxu0
      %v3150 = vpop.f32.mrf.mxu0
      %v3151 = vadd.f32 0.0, %v3150
      %v3152 = vpop.f32.mrf.mxu0
      %3153 = vmatprep.mubr.bf16.mxu0 0
      %3154 = vmatmul.mubr.bf16.gmra.mxu0 %v2919
      %v3155 = vpop.f32.mrf.mxu0
      %v3156 = vadd.f32 0.0, %v3155
      %v3157 = vpop.f32.mrf.mxu0
      %v3158 = vpop.f32.mrf.mxu0
      %v3159 = vadd.f32 0.0, %v3158
      %v3160 = vpop.f32.mrf.mxu0
      %3161 = vdwg.mxu0
      %v3162 = vadd.f32 %v2830, %v3020
      %v3163 = vadd.f32 %v2831, %v3023
      %v3164 = vadd.f32 %v2832, %v3028
      %v3165 = vadd.f32 %v2833, %v3031
      %v3166 = vadd.f32 %v2834, %v3036
      %v3167 = vadd.f32 %v2835, %v3039
      %v3168 = vadd.f32 %v2836, %v3044
      %v3169 = vadd.f32 %v2837, %v3047
      %v3170 = vadd.f32 %v2838, %v3052
      %v3171 = vadd.f32 %v2839, %v3055
      %v3172 = vadd.f32 %v2840, %v3060
      %v3173 = vadd.f32 %v2841, %v3063
      %v3174 = vadd.f32 %v2842, %v3068
      %v3175 = vadd.f32 %v2843, %v3071
      %v3176 = vadd.f32 %v2844, %v3076
      %v3177 = vadd.f32 %v2845, %v3079
      %v3178 = vadd.f32 %v2846, %v3084
      %v3179 = vadd.f32 %v2847, %v3087
      %v3180 = vadd.f32 %v2848, %v3092
      %v3181 = vadd.f32 %v2849, %v3095
      %v3182 = vadd.f32 %v2850, %v3100
      %v3183 = vadd.f32 %v2851, %v3103
      %v3184 = vadd.f32 %v2852, %v3108
      %v3185 = vadd.f32 %v2853, %v3111
      %v3186 = vadd.f32 %v2854, %v3116
      %v3187 = vadd.f32 %v2855, %v3119
      %v3188 = vadd.f32 %v2856, %v3124
      %v3189 = vadd.f32 %v2857, %v3127
      %v3190 = vadd.f32 %v2858, %v3132
      %v3191 = vadd.f32 %v2859, %v3135
      %v3192 = vadd.f32 %v2860, %v3140
      %v3193 = vadd.f32 %v2861, %v3143
      %v3194 = vadd.f32 %v2862, %v3148
      %v3195 = vadd.f32 %v2863, %v3151
      %v3196 = vadd.f32 %v2864, %v3156
      %v3197 = vadd.f32 %v2865, %v3159
      %v3198 = vld [vmem:[#allocation2 + $0x26] sm:$0xff]
      %v3199 = vld [vmem:[#allocation2 + $0x2e] sm:$0xff]
      %v3200 = vld [vmem:[#allocation2 + $0x36] sm:$0xff]
      %v3201 = vld [vmem:[#allocation2 + $0x3e] sm:$0xff]
      %v3202 = vld [vmem:[#allocation2 + $0x46] sm:$0xff]
      %v3203 = vld [vmem:[#allocation2 + $0x4e] sm:$0xff]
      %v3204 = vld [vmem:[#allocation2 + $0x56] sm:$0xff]
      %v3205 = vld [vmem:[#allocation2 + $0x5e] sm:$0xff]
      %v3206 = vld [vmem:[#allocation2 + $0x66] sm:$0xff]
      %v3207 = vld [vmem:[#allocation2 + $0x6e] sm:$0xff]
      %v3208 = vld [vmem:[#allocation2 + $0x76] sm:$0xff]
      %v3209 = vld [vmem:[#allocation2 + $0x7e] sm:$0xff]
      %v3210 = vld [vmem:[#allocation2 + $0x86] sm:$0xff]
      %v3211 = vld [vmem:[#allocation2 + $0x8e] sm:$0xff]
      %v3212 = vld [vmem:[#allocation2 + $0x96] sm:$0xff]
      %v3213 = vld [vmem:[#allocation2 + $0x9e] sm:$0xff]
      %v3214 = vld [vmem:[#allocation2 + $0xa6] sm:$0xff]
      %v3215 = vld [vmem:[#allocation2 + $0xae] sm:$0xff]
      %v3216 = vld [vmem:[#allocation2 + $0xb6] sm:$0xff]
      %v3217 = vld [vmem:[#allocation2 + $0xbe] sm:$0xff]
      %v3218 = vld [vmem:[#allocation2 + $0xc6] sm:$0xff]
      %v3219 = vld [vmem:[#allocation2 + $0xce] sm:$0xff]
      %v3220 = vld [vmem:[#allocation2 + $0xd6] sm:$0xff]
      %v3221 = vld [vmem:[#allocation2 + $0xde] sm:$0xff]
      %v3222 = vld [vmem:[#allocation2 + $0xe6] sm:$0xff]
      %v3223 = vld [vmem:[#allocation2 + $0xee] sm:$0xff]
      %v3224 = vld [vmem:[#allocation2 + $0xf6] sm:$0xff]
      %v3225 = vld [vmem:[#allocation2 + $0xfe] sm:$0xff]
      %v3226 = vld [vmem:[#allocation2 + $0x106] sm:$0xff]
      %v3227 = vld [vmem:[#allocation2 + $0x10e] sm:$0xff]
      %v3228 = vld [vmem:[#allocation2 + $0x116] sm:$0xff]
      %v3229 = vld [vmem:[#allocation2 + $0x11e] sm:$0xff]
      %v3230 = vld [vmem:[#allocation2 + $0x126] sm:$0xff]
      %v3231 = vld [vmem:[#allocation2 + $0x12e] sm:$0xff]
      %v3232 = vld [vmem:[#allocation2 + $0x136] sm:$0xff]
      %v3233 = vld [vmem:[#allocation2 + $0x13e] sm:$0xff]
      %v3234 = vpack.c.bf16 %v3199, %v3198
      %v3235 = vpack.c.bf16 %v3201, %v3200
      %v3236 = vpack.c.bf16 %v3203, %v3202
      %v3237 = vpack.c.bf16 %v3205, %v3204
      %v3238 = vpack.c.bf16 %v3207, %v3206
      %v3239 = vpack.c.bf16 %v3209, %v3208
      %v3240 = vpack.c.bf16 %v3211, %v3210
      %v3241 = vpack.c.bf16 %v3213, %v3212
      %v3242 = vpack.c.bf16 %v3215, %v3214
      %v3243 = vpack.c.bf16 %v3217, %v3216
      %v3244 = vpack.c.bf16 %v3219, %v3218
      %v3245 = vpack.c.bf16 %v3221, %v3220
      %v3246 = vpack.c.bf16 %v3223, %v3222
      %v3247 = vpack.c.bf16 %v3225, %v3224
      %v3248 = vpack.c.bf16 %v3227, %v3226
      %v3249 = vpack.c.bf16 %v3229, %v3228
      %v3250 = vpack.c.bf16 %v3231, %v3230
      %v3251 = vpack.c.bf16 %v3233, %v3232
      %s3252 = scalar_lea.vmem %s3, 512
      %v3253 = vld [vmem:[%s3252] sm:$0xf]
      %v3254 = vld [vmem:[%s3252 + $0x4] sm:$0xf]
      %v3255 = vld [vmem:[%s3252 + $0x8] sm:$0xf]
      %v3256 = vld [vmem:[%s3252 + $0xc] sm:$0xf]
      %v3257 = vld [vmem:[%s3252 + $0x10] sm:$0xf]
      %v3258 = vld [vmem:[%s3252 + $0x14] sm:$0xf]
      %v3259 = vld [vmem:[%s3252 + $0x18] sm:$0xf]
      %v3260 = vld [vmem:[%s3252 + $0x1c] sm:$0xf]
      %v3261 = vld [vmem:[%s3252 + $0x20] sm:$0xf]
      %v3262 = vld [vmem:[%s3252 + $0x24] sm:$0xf]
      %v3263 = vld [vmem:[%s3252 + $0x28] sm:$0xf]
      %v3264 = vld [vmem:[%s3252 + $0x2c] sm:$0xf]
      %v3265 = vld [vmem:[%s3252 + $0x30] sm:$0xf]
      %v3266 = vld [vmem:[%s3252 + $0x34] sm:$0xf]
      %v3267 = vld [vmem:[%s3252 + $0x38] sm:$0xf]
      %v3268 = vld [vmem:[%s3252 + $0x3c] sm:$0xf]
      %v3285 = vunpack.c.l.b16 %v3253
      %v3286 = vunpack.c.l.b16 %v3254
      %v3287 = vunpack.c.l.b16 %v3255
      %v3288 = vunpack.c.l.b16 %v3256
      %v3289 = vunpack.c.l.b16 %v3257
      %v3290 = vunpack.c.l.b16 %v3258
      %v3291 = vunpack.c.l.b16 %v3259
      %v3292 = vunpack.c.l.b16 %v3260
      %v3293 = vunpack.c.l.b16 %v3261
      %v3294 = vunpack.c.l.b16 %v3262
      %v3295 = vunpack.c.l.b16 %v3263
      %v3296 = vunpack.c.l.b16 %v3264
      %v3297 = vunpack.c.l.b16 %v3265
      %v3298 = vunpack.c.l.b16 %v3266
      %v3299 = vunpack.c.l.b16 %v3267
      %v3300 = vunpack.c.l.b16 %v3268
      %v3301 = vpack.c.b16 %v3286, %v3285
      %v3302 = vpack.c.b16 %v3288, %v3287
      %v3303 = vpack.c.b16 %v3290, %v3289
      %v3304 = vpack.c.b16 %v3292, %v3291
      %v3305 = vpack.c.b16 %v3294, %v3293
      %v3306 = vpack.c.b16 %v3296, %v3295
      %v3307 = vpack.c.b16 %v3298, %v3297
      %v3308 = vpack.c.b16 %v3300, %v3299
      %3317 = vmatprep.subr.bf16.mxu0 0
      %3318 = vmatpush1.bf16.msra.mxu0 %v3308
      %3319 = vmatprep.subr.bf16.mxu0 0
      %3320 = vmatpush1.bf16.msra.mxu0 %v3307
      %3321 = vmatprep.subr.bf16.mxu0 0
      %3322 = vmatpush1.bf16.msra.mxu0 %v3306
      %3323 = vmatprep.subr.bf16.mxu0 0
      %3324 = vmatpush1.bf16.msra.mxu0 %v3305
      %3325 = vmatprep.subr.bf16.mxu0 0
      %3326 = vmatpush1.bf16.msra.mxu0 %v3304
      %3327 = vmatprep.subr.bf16.mxu0 0
      %3328 = vmatpush1.bf16.msra.mxu0 %v3303
      %3329 = vmatprep.subr.bf16.mxu0 0
      %3330 = vmatpush1.bf16.msra.mxu0 %v3302
      %3331 = vmatprep.subr.bf16.mxu0 0
      %3332 = vmatpush1.bf16.msra.mxu0 %v3301
      %3333 = vmatprep.subr.bf16.mxu0 0
      %3334 = vmatpush2.bf16.msra.mxu0 0
      %3335 = vmatprep.subr.bf16.mxu0 0
      %3336 = vmatpush2.bf16.msra.mxu0 0
      %3337 = vmatprep.subr.bf16.mxu0 0
      %3338 = vmatpush2.bf16.msra.mxu0 0
      %3339 = vmatprep.subr.bf16.mxu0 0
      %3340 = vmatpush2.bf16.msra.mxu0 0
      %3341 = vmatprep.subr.bf16.mxu0 0
      %3342 = vmatpush2.bf16.msra.mxu0 0
      %3343 = vmatprep.subr.bf16.mxu0 0
      %3344 = vmatpush2.bf16.msra.mxu0 0
      %3345 = vmatprep.subr.bf16.mxu0 0
      %3346 = vmatpush2.bf16.msra.mxu0 0
      %3347 = vmatprep.subr.bf16.mxu0 0
      %3348 = vmatpush2.bf16.msra.mxu0 0
      %3349 = vmatprep.mubr.bf16.mxu0 0
      %3350 = vmatmul.mubr.bf16.gmra.mxu0 %v3234
      %v3351 = vpop.f32.mrf.mxu0
      %v3352 = vadd.f32 0.0, %v3351
      %v3353 = vpop.f32.mrf.mxu0
      %v3354 = vpop.f32.mrf.mxu0
      %v3355 = vadd.f32 0.0, %v3354
      %v3356 = vpop.f32.mrf.mxu0
      %3357 = vmatprep.mubr.bf16.mxu0 0
      %3358 = vmatmul.mubr.bf16.gmra.mxu0 %v3235
      %v3359 = vpop.f32.mrf.mxu0
      %v3360 = vadd.f32 0.0, %v3359
      %v3361 = vpop.f32.mrf.mxu0
      %v3362 = vpop.f32.mrf.mxu0
      %v3363 = vadd.f32 0.0, %v3362
      %v3364 = vpop.f32.mrf.mxu0
      %3365 = vmatprep.mubr.bf16.mxu0 0
      %3366 = vmatmul.mubr.bf16.gmra.mxu0 %v3236
      %v3367 = vpop.f32.mrf.mxu0
      %v3368 = vadd.f32 0.0, %v3367
      %v3369 = vpop.f32.mrf.mxu0
      %v3370 = vpop.f32.mrf.mxu0
      %v3371 = vadd.f32 0.0, %v3370
      %v3372 = vpop.f32.mrf.mxu0
      %3373 = vmatprep.mubr.bf16.mxu0 0
      %3374 = vmatmul.mubr.bf16.gmra.mxu0 %v3237
      %v3375 = vpop.f32.mrf.mxu0
      %v3376 = vadd.f32 0.0, %v3375
      %v3377 = vpop.f32.mrf.mxu0
      %v3378 = vpop.f32.mrf.mxu0
      %v3379 = vadd.f32 0.0, %v3378
      %v3380 = vpop.f32.mrf.mxu0
      %3381 = vmatprep.mubr.bf16.mxu0 0
      %3382 = vmatmul.mubr.bf16.gmra.mxu0 %v3238
      %v3383 = vpop.f32.mrf.mxu0
      %v3384 = vadd.f32 0.0, %v3383
      %v3385 = vpop.f32.mrf.mxu0
      %v3386 = vpop.f32.mrf.mxu0
      %v3387 = vadd.f32 0.0, %v3386
      %v3388 = vpop.f32.mrf.mxu0
      %3389 = vmatprep.mubr.bf16.mxu0 0
      %3390 = vmatmul.mubr.bf16.gmra.mxu0 %v3239
      %v3391 = vpop.f32.mrf.mxu0
      %v3392 = vadd.f32 0.0, %v3391
      %v3393 = vpop.f32.mrf.mxu0
      %v3394 = vpop.f32.mrf.mxu0
      %v3395 = vadd.f32 0.0, %v3394
      %v3396 = vpop.f32.mrf.mxu0
      %3397 = vmatprep.mubr.bf16.mxu0 0
      %3398 = vmatmul.mubr.bf16.gmra.mxu0 %v3240
      %v3399 = vpop.f32.mrf.mxu0
      %v3400 = vadd.f32 0.0, %v3399
      %v3401 = vpop.f32.mrf.mxu0
      %v3402 = vpop.f32.mrf.mxu0
      %v3403 = vadd.f32 0.0, %v3402
      %v3404 = vpop.f32.mrf.mxu0
      %3405 = vmatprep.mubr.bf16.mxu0 0
      %3406 = vmatmul.mubr.bf16.gmra.mxu0 %v3241
      %v3407 = vpop.f32.mrf.mxu0
      %v3408 = vadd.f32 0.0, %v3407
      %v3409 = vpop.f32.mrf.mxu0
      %v3410 = vpop.f32.mrf.mxu0
      %v3411 = vadd.f32 0.0, %v3410
      %v3412 = vpop.f32.mrf.mxu0
      %3413 = vmatprep.mubr.bf16.mxu0 0
      %3414 = vmatmul.mubr.bf16.gmra.mxu0 %v3242
      %v3415 = vpop.f32.mrf.mxu0
      %v3416 = vadd.f32 0.0, %v3415
      %v3417 = vpop.f32.mrf.mxu0
      %v3418 = vpop.f32.mrf.mxu0
      %v3419 = vadd.f32 0.0, %v3418
      %v3420 = vpop.f32.mrf.mxu0
      %3421 = vmatprep.mubr.bf16.mxu0 0
      %3422 = vmatmul.mubr.bf16.gmra.mxu0 %v3243
      %v3423 = vpop.f32.mrf.mxu0
      %v3424 = vadd.f32 0.0, %v3423
      %v3425 = vpop.f32.mrf.mxu0
      %v3426 = vpop.f32.mrf.mxu0
      %v3427 = vadd.f32 0.0, %v3426
      %v3428 = vpop.f32.mrf.mxu0
      %3429 = vmatprep.mubr.bf16.mxu0 0
      %3430 = vmatmul.mubr.bf16.gmra.mxu0 %v3244
      %v3431 = vpop.f32.mrf.mxu0
      %v3432 = vadd.f32 0.0, %v3431
      %v3433 = vpop.f32.mrf.mxu0
      %v3434 = vpop.f32.mrf.mxu0
      %v3435 = vadd.f32 0.0, %v3434
      %v3436 = vpop.f32.mrf.mxu0
      %3437 = vmatprep.mubr.bf16.mxu0 0
      %3438 = vmatmul.mubr.bf16.gmra.mxu0 %v3245
      %v3439 = vpop.f32.mrf.mxu0
      %v3440 = vadd.f32 0.0, %v3439
      %v3441 = vpop.f32.mrf.mxu0
      %v3442 = vpop.f32.mrf.mxu0
      %v3443 = vadd.f32 0.0, %v3442
      %v3444 = vpop.f32.mrf.mxu0
      %3445 = vmatprep.mubr.bf16.mxu0 0
      %3446 = vmatmul.mubr.bf16.gmra.mxu0 %v3246
      %v3447 = vpop.f32.mrf.mxu0
      %v3448 = vadd.f32 0.0, %v3447
      %v3449 = vpop.f32.mrf.mxu0
      %v3450 = vpop.f32.mrf.mxu0
      %v3451 = vadd.f32 0.0, %v3450
      %v3452 = vpop.f32.mrf.mxu0
      %3453 = vmatprep.mubr.bf16.mxu0 0
      %3454 = vmatmul.mubr.bf16.gmra.mxu0 %v3247
      %v3455 = vpop.f32.mrf.mxu0
      %v3456 = vadd.f32 0.0, %v3455
      %v3457 = vpop.f32.mrf.mxu0
      %v3458 = vpop.f32.mrf.mxu0
      %v3459 = vadd.f32 0.0, %v3458
      %v3460 = vpop.f32.mrf.mxu0
      %3461 = vmatprep.mubr.bf16.mxu0 0
      %3462 = vmatmul.mubr.bf16.gmra.mxu0 %v3248
      %v3463 = vpop.f32.mrf.mxu0
      %v3464 = vadd.f32 0.0, %v3463
      %v3465 = vpop.f32.mrf.mxu0
      %v3466 = vpop.f32.mrf.mxu0
      %v3467 = vadd.f32 0.0, %v3466
      %v3468 = vpop.f32.mrf.mxu0
      %3469 = vmatprep.mubr.bf16.mxu0 0
      %3470 = vmatmul.mubr.bf16.gmra.mxu0 %v3249
      %v3471 = vpop.f32.mrf.mxu0
      %v3472 = vadd.f32 0.0, %v3471
      %v3473 = vpop.f32.mrf.mxu0
      %v3474 = vpop.f32.mrf.mxu0
      %v3475 = vadd.f32 0.0, %v3474
      %v3476 = vpop.f32.mrf.mxu0
      %3477 = vmatprep.mubr.bf16.mxu0 0
      %3478 = vmatmul.mubr.bf16.gmra.mxu0 %v3250
      %v3479 = vpop.f32.mrf.mxu0
      %v3480 = vadd.f32 0.0, %v3479
      %v3481 = vpop.f32.mrf.mxu0
      %v3482 = vpop.f32.mrf.mxu0
      %v3483 = vadd.f32 0.0, %v3482
      %v3484 = vpop.f32.mrf.mxu0
      %3485 = vmatprep.mubr.bf16.mxu0 0
      %3486 = vmatmul.mubr.bf16.gmra.mxu0 %v3251
      %v3487 = vpop.f32.mrf.mxu0
      %v3488 = vadd.f32 0.0, %v3487
      %v3489 = vpop.f32.mrf.mxu0
      %v3490 = vpop.f32.mrf.mxu0
      %v3491 = vadd.f32 0.0, %v3490
      %v3492 = vpop.f32.mrf.mxu0
      %3493 = vdwg.mxu0
      %v3494 = vadd.f32 %v3162, %v3352
      %v3495 = vadd.f32 %v3163, %v3355
      %v3496 = vadd.f32 %v3164, %v3360
      %v3497 = vadd.f32 %v3165, %v3363
      %v3498 = vadd.f32 %v3166, %v3368
      %v3499 = vadd.f32 %v3167, %v3371
      %v3500 = vadd.f32 %v3168, %v3376
      %v3501 = vadd.f32 %v3169, %v3379
      %v3502 = vadd.f32 %v3170, %v3384
      %v3503 = vadd.f32 %v3171, %v3387
      %v3504 = vadd.f32 %v3172, %v3392
      %v3505 = vadd.f32 %v3173, %v3395
      %v3506 = vadd.f32 %v3174, %v3400
      %v3507 = vadd.f32 %v3175, %v3403
      %v3508 = vadd.f32 %v3176, %v3408
      %v3509 = vadd.f32 %v3177, %v3411
      %v3510 = vadd.f32 %v3178, %v3416
      %v3511 = vadd.f32 %v3179, %v3419
      %v3512 = vadd.f32 %v3180, %v3424
      %v3513 = vadd.f32 %v3181, %v3427
      %v3514 = vadd.f32 %v3182, %v3432
      %v3515 = vadd.f32 %v3183, %v3435
      %v3516 = vadd.f32 %v3184, %v3440
      %v3517 = vadd.f32 %v3185, %v3443
      %v3518 = vadd.f32 %v3186, %v3448
      %v3519 = vadd.f32 %v3187, %v3451
      %v3520 = vadd.f32 %v3188, %v3456
      %v3521 = vadd.f32 %v3189, %v3459
      %v3522 = vadd.f32 %v3190, %v3464
      %v3523 = vadd.f32 %v3191, %v3467
      %v3524 = vadd.f32 %v3192, %v3472
      %v3525 = vadd.f32 %v3193, %v3475
      %v3526 = vadd.f32 %v3194, %v3480
      %v3527 = vadd.f32 %v3195, %v3483
      %v3528 = vadd.f32 %v3196, %v3488
      %v3529 = vadd.f32 %v3197, %v3491
      %3530 = vst [vmem:[%s300] sm:$0xff] %v3494
      %3531 = vst [vmem:[%s300 + $0x8] sm:$0xff] %v3495
      %3532 = vst [vmem:[%s300 + $0x10] sm:$0xff] %v3496
      %3533 = vst [vmem:[%s300 + $0x18] sm:$0xff] %v3497
      %3534 = vst [vmem:[%s300 + $0x20] sm:$0xff] %v3498
      %3535 = vst [vmem:[%s300 + $0x28] sm:$0xff] %v3499
      %3536 = vst [vmem:[%s300 + $0x30] sm:$0xff] %v3500
      %3537 = vst [vmem:[%s300 + $0x38] sm:$0xff] %v3501
      %3538 = vst [vmem:[%s300 + $0x40] sm:$0xff] %v3502
      %3539 = vst [vmem:[%s300 + $0x48] sm:$0xff] %v3503
      %3540 = vst [vmem:[%s300 + $0x50] sm:$0xff] %v3504
      %3541 = vst [vmem:[%s300 + $0x58] sm:$0xff] %v3505
      %3542 = vst [vmem:[%s300 + $0x60] sm:$0xff] %v3506
      %3543 = vst [vmem:[%s300 + $0x68] sm:$0xff] %v3507
      %3544 = vst [vmem:[%s300 + $0x70] sm:$0xff] %v3508
      %3545 = vst [vmem:[%s300 + $0x78] sm:$0xff] %v3509
      %3546 = vst [vmem:[%s300 + $0x80] sm:$0xff] %v3510
      %3547 = vst [vmem:[%s300 + $0x88] sm:$0xff] %v3511
      %3548 = vst [vmem:[%s300 + $0x90] sm:$0xff] %v3512
      %3549 = vst [vmem:[%s300 + $0x98] sm:$0xff] %v3513
      %3550 = vst [vmem:[%s300 + $0xa0] sm:$0xff] %v3514
      %3551 = vst [vmem:[%s300 + $0xa8] sm:$0xff] %v3515
      %3552 = vst [vmem:[%s300 + $0xb0] sm:$0xff] %v3516
      %3553 = vst [vmem:[%s300 + $0xb8] sm:$0xff] %v3517
      %3554 = vst [vmem:[%s300 + $0xc0] sm:$0xff] %v3518
      %3555 = vst [vmem:[%s300 + $0xc8] sm:$0xff] %v3519
      %3556 = vst [vmem:[%s300 + $0xd0] sm:$0xff] %v3520
      %3557 = vst [vmem:[%s300 + $0xd8] sm:$0xff] %v3521
      %3558 = vst [vmem:[%s300 + $0xe0] sm:$0xff] %v3522
      %3559 = vst [vmem:[%s300 + $0xe8] sm:$0xff] %v3523
      %3560 = vst [vmem:[%s300 + $0xf0] sm:$0xff] %v3524
      %3561 = vst [vmem:[%s300 + $0xf8] sm:$0xff] %v3525
      %3562 = vst [vmem:[%s300 + $0x100] sm:$0xff] %v3526
      %3563 = vst [vmem:[%s300 + $0x108] sm:$0xff] %v3527
      %3564 = vst [vmem:[%s300 + $0x110] sm:$0xff] %v3528
      %3565 = vst [vmem:[%s300 + $0x118] sm:$0xff] %v3529
      %v3566 = vld [vmem:[%s5] sm:$0xff]
      %v3567 = vld [vmem:[%s5 + $0x8] sm:$0xff]
      %v3568 = vld [vmem:[%s5 + $0x10] sm:$0xff]
      %v3569 = vld [vmem:[%s5 + $0x18] sm:$0xff]
      %v3570 = vld [vmem:[%s5 + $0x20] sm:$0xff]
      %v3571 = vld [vmem:[%s5 + $0x28] sm:$0xff]
      %v3572 = vld [vmem:[%s5 + $0x30] sm:$0xff]
      %v3573 = vld [vmem:[%s5 + $0x38] sm:$0xff]
      %v3574 = vld [vmem:[%s5 + $0x40] sm:$0xff]
      %v3575 = vld [vmem:[%s5 + $0x48] sm:$0xff]
      %v3576 = vld [vmem:[%s5 + $0x50] sm:$0xff]
      %v3577 = vld [vmem:[%s5 + $0x58] sm:$0xff]
      %v3578 = vld [vmem:[%s5 + $0x60] sm:$0xff]
      %v3579 = vld [vmem:[%s5 + $0x68] sm:$0xff]
      %v3580 = vld [vmem:[%s5 + $0x70] sm:$0xff]
      %v3581 = vld [vmem:[%s5 + $0x78] sm:$0xff]
      %v3582 = vld [vmem:[%s5 + $0x80] sm:$0xff]
      %v3583 = vld [vmem:[%s5 + $0x88] sm:$0xff]
      %v3584 = vld [vmem:[%s5 + $0x90] sm:$0xff]
      %v3585 = vld [vmem:[%s5 + $0x98] sm:$0xff]
      %v3586 = vld [vmem:[%s5 + $0xa0] sm:$0xff]
      %v3587 = vld [vmem:[%s5 + $0xa8] sm:$0xff]
      %v3588 = vld [vmem:[%s5 + $0xb0] sm:$0xff]
      %v3589 = vld [vmem:[%s5 + $0xb8] sm:$0xff]
      %v3590 = vld [vmem:[%s5 + $0xc0] sm:$0xff]
      %v3591 = vld [vmem:[%s5 + $0xc8] sm:$0xff]
      %v3592 = vld [vmem:[%s5 + $0xd0] sm:$0xff]
      %v3593 = vld [vmem:[%s5 + $0xd8] sm:$0xff]
      %v3594 = vld [vmem:[%s5 + $0xe0] sm:$0xff]
      %v3595 = vld [vmem:[%s5 + $0xe8] sm:$0xff]
      %v3596 = vld [vmem:[%s5 + $0xf0] sm:$0xff]
      %v3597 = vld [vmem:[%s5 + $0xf8] sm:$0xff]
      %v3598 = vld [vmem:[%s5 + $0x100] sm:$0xff]
      %v3599 = vld [vmem:[%s5 + $0x108] sm:$0xff]
      %v3600 = vld [vmem:[%s5 + $0x110] sm:$0xff]
      %v3601 = vld [vmem:[%s5 + $0x118] sm:$0xff]
      %v3602 = vmul.f32 %v3494, %v3566
      %v3603 = vmul.f32 %v3495, %v3567
      %v3604 = vmul.f32 %v3496, %v3568
      %v3605 = vmul.f32 %v3497, %v3569
      %v3606 = vmul.f32 %v3498, %v3570
      %v3607 = vmul.f32 %v3499, %v3571
      %v3608 = vmul.f32 %v3500, %v3572
      %v3609 = vmul.f32 %v3501, %v3573
      %v3610 = vmul.f32 %v3502, %v3574
      %v3611 = vmul.f32 %v3503, %v3575
      %v3612 = vmul.f32 %v3504, %v3576
      %v3613 = vmul.f32 %v3505, %v3577
      %v3614 = vmul.f32 %v3506, %v3578
      %v3615 = vmul.f32 %v3507, %v3579
      %v3616 = vmul.f32 %v3508, %v3580
      %v3617 = vmul.f32 %v3509, %v3581
      %v3618 = vmul.f32 %v3510, %v3582
      %v3619 = vmul.f32 %v3511, %v3583
      %v3620 = vmul.f32 %v3512, %v3584
      %v3621 = vmul.f32 %v3513, %v3585
      %v3622 = vmul.f32 %v3514, %v3586
      %v3623 = vmul.f32 %v3515, %v3587
      %v3624 = vmul.f32 %v3516, %v3588
      %v3625 = vmul.f32 %v3517, %v3589
      %v3626 = vmul.f32 %v3518, %v3590
      %v3627 = vmul.f32 %v3519, %v3591
      %v3628 = vmul.f32 %v3520, %v3592
      %v3629 = vmul.f32 %v3521, %v3593
      %v3630 = vmul.f32 %v3522, %v3594
      %v3631 = vmul.f32 %v3523, %v3595
      %v3632 = vmul.f32 %v3524, %v3596
      %v3633 = vmul.f32 %v3525, %v3597
      %v3634 = vmul.f32 %v3526, %v3598
      %v3635 = vmul.f32 %v3527, %v3599
      %v3636 = vmul.f32 %v3528, %v3600
      %v3637 = vmul.f32 %v3529, %v3601
      %v3638 = vld [vmem:[%s7] sm:$0x1]
      %v3639 = vadd.f32 %v3602, %v3603
      %v3640 = vadd.f32 %v3639, %v3604
      %v3641 = vadd.f32 %v3640, %v3605
      %v3642 = vadd.f32 %v3641, %v3606
      %v3643 = vadd.f32 %v3642, %v3607
      %v3644 = vadd.f32 %v3643, %v3608
      %v3645 = vadd.f32 %v3644, %v3609
      %v3646 = vadd.f32 %v3645, %v3610
      %v3647 = vadd.f32 %v3646, %v3611
      %v3648 = vadd.f32 %v3647, %v3612
      %v3649 = vadd.f32 %v3648, %v3613
      %v3650 = vadd.f32 %v3649, %v3614
      %v3651 = vadd.f32 %v3650, %v3615
      %v3652 = vadd.f32 %v3651, %v3616
      %v3653 = vadd.f32 %v3652, %v3617
      %v3654 = vadd.f32 %v3653, %v3618
      %v3655 = vadd.f32 %v3654, %v3619
      %v3656 = vadd.f32 %v3655, %v3620
      %v3657 = vadd.f32 %v3656, %v3621
      %v3658 = vadd.f32 %v3657, %v3622
      %v3659 = vadd.f32 %v3658, %v3623
      %v3660 = vadd.f32 %v3659, %v3624
      %v3661 = vadd.f32 %v3660, %v3625
      %v3662 = vadd.f32 %v3661, %v3626
      %v3663 = vadd.f32 %v3662, %v3627
      %v3664 = vadd.f32 %v3663, %v3628
      %v3665 = vadd.f32 %v3664, %v3629
      %v3666 = vadd.f32 %v3665, %v3630
      %v3667 = vadd.f32 %v3666, %v3631
      %v3668 = vadd.f32 %v3667, %v3632
      %v3669 = vadd.f32 %v3668, %v3633
      %v3670 = vadd.f32 %v3669, %v3634
      %v3671 = vadd.f32 %v3670, %v3635
      %v3672 = vadd.f32 %v3671, %v3636
      %v3673 = vadd.f32 %v3672, %v3637
      %v3674 = vrot.slane %v3673, 4
      %v3675 = vadd.f32 %v3673, %v3674
      %v3676 = vrot.slane %v3675, 2
      %v3677 = vadd.f32 %v3675, %v3676
      %v3678 = vrot.slane %v3677, 1
      %v3679 = vadd.f32 %v3677, %v3678
      %v3680 = vadd.f32 %v3638, %v3679
      %3681 = vst [vmem:[%s7] sm:$0x1] %v3680
      %v3682 = vld [vmem:[%s8] sm:$0x1]
      %v3683 = vmul.f32 %v3602, %v3602
      %v3684 = vmul.f32 %v3603, %v3603
      %v3685 = vmul.f32 %v3604, %v3604
      %v3686 = vmul.f32 %v3605, %v3605
      %v3687 = vmul.f32 %v3606, %v3606
      %v3688 = vmul.f32 %v3607, %v3607
      %v3689 = vmul.f32 %v3608, %v3608
      %v3690 = vmul.f32 %v3609, %v3609
      %v3691 = vmul.f32 %v3610, %v3610
      %v3692 = vmul.f32 %v3611, %v3611
      %v3693 = vmul.f32 %v3612, %v3612
      %v3694 = vmul.f32 %v3613, %v3613
      %v3695 = vmul.f32 %v3614, %v3614
      %v3696 = vmul.f32 %v3615, %v3615
      %v3697 = vmul.f32 %v3616, %v3616
      %v3698 = vmul.f32 %v3617, %v3617
      %v3699 = vmul.f32 %v3618, %v3618
      %v3700 = vmul.f32 %v3619, %v3619
      %v3701 = vmul.f32 %v3620, %v3620
      %v3702 = vmul.f32 %v3621, %v3621
      %v3703 = vmul.f32 %v3622, %v3622
      %v3704 = vmul.f32 %v3623, %v3623
      %v3705 = vmul.f32 %v3624, %v3624
      %v3706 = vmul.f32 %v3625, %v3625
      %v3707 = vmul.f32 %v3626, %v3626
      %v3708 = vmul.f32 %v3627, %v3627
      %v3709 = vmul.f32 %v3628, %v3628
      %v3710 = vmul.f32 %v3629, %v3629
      %v3711 = vmul.f32 %v3630, %v3630
      %v3712 = vmul.f32 %v3631, %v3631
      %v3713 = vmul.f32 %v3632, %v3632
      %v3714 = vmul.f32 %v3633, %v3633
      %v3715 = vmul.f32 %v3634, %v3634
      %v3716 = vmul.f32 %v3635, %v3635
      %v3717 = vmul.f32 %v3636, %v3636
      %v3718 = vmul.f32 %v3637, %v3637
      %v3719 = vadd.f32 %v3683, %v3684
      %v3720 = vadd.f32 %v3719, %v3685
      %v3721 = vadd.f32 %v3720, %v3686
      %v3722 = vadd.f32 %v3721, %v3687
      %v3723 = vadd.f32 %v3722, %v3688
      %v3724 = vadd.f32 %v3723, %v3689
      %v3725 = vadd.f32 %v3724, %v3690
      %v3726 = vadd.f32 %v3725, %v3691
      %v3727 = vadd.f32 %v3726, %v3692
      %v3728 = vadd.f32 %v3727, %v3693
      %v3729 = vadd.f32 %v3728, %v3694
      %v3730 = vadd.f32 %v3729, %v3695
      %v3731 = vadd.f32 %v3730, %v3696
      %v3732 = vadd.f32 %v3731, %v3697
      %v3733 = vadd.f32 %v3732, %v3698
      %v3734 = vadd.f32 %v3733, %v3699
      %v3735 = vadd.f32 %v3734, %v3700
      %v3736 = vadd.f32 %v3735, %v3701
      %v3737 = vadd.f32 %v3736, %v3702
      %v3738 = vadd.f32 %v3737, %v3703
      %v3739 = vadd.f32 %v3738, %v3704
      %v3740 = vadd.f32 %v3739, %v3705
      %v3741 = vadd.f32 %v3740, %v3706
      %v3742 = vadd.f32 %v3741, %v3707
      %v3743 = vadd.f32 %v3742, %v3708
      %v3744 = vadd.f32 %v3743, %v3709
      %v3745 = vadd.f32 %v3744, %v3710
      %v3746 = vadd.f32 %v3745, %v3711
      %v3747 = vadd.f32 %v3746, %v3712
      %v3748 = vadd.f32 %v3747, %v3713
      %v3749 = vadd.f32 %v3748, %v3714
      %v3750 = vadd.f32 %v3749, %v3715
      %v3751 = vadd.f32 %v3750, %v3716
      %v3752 = vadd.f32 %v3751, %v3717
      %v3753 = vadd.f32 %v3752, %v3718
      %v3754 = vrot.slane %v3753, 4
      %v3755 = vadd.f32 %v3753, %v3754
      %v3756 = vrot.slane %v3755, 2
      %v3757 = vadd.f32 %v3755, %v3756
      %v3758 = vrot.slane %v3757, 1
      %v3759 = vadd.f32 %v3757, %v3758
      %v3760 = vadd.f32 %v3682, %v3759
      %3761 = vst [vmem:[%s8] sm:$0x1] %v3760
      %p3762 = scmp.lt.s32.totalorder %s20, 1
      %s3763 = scalar_select %p3762, %s20, 1
      %s3764 = smul.addr %s3763, 36
      %s3765 = smul.addr %s3764, 8
      %s3766 = scalar_lea.vmem %s6, %s3765
      // Predicated region
      $region49: #{res_block_forward.4} parent=43 // pred_check
        %p3767 = pneg %p169
      $region50: #{res_block_forward.4} parent=43 // pred_check_branch
        %3769 = sbr.rel (%p3767) target = $region52
      $region51: #{res_block_forward.4} parent=43 // pred_region
        _
      $region52: #{res_block_forward.4} parent=43 // pred_fallthru
        _
      // Predicated region
      $region53: #{res_block_forward.4} parent=43 // pred_check
        %p3770 = pneg %p190
      $region54: #{res_block_forward.4} parent=43 // pred_check_branch
        %3772 = sbr.rel (%p3770) target = $region56
      $region55: #{res_block_forward.4} parent=43 // pred_region
        _
      $region56: #{res_block_forward.4} parent=43 // pred_fallthru
        _
      // Predicated region
      $region57: #{res_block_forward.4} parent=43 // pred_check
        %p3773 = pneg %p211
      $region58: #{res_block_forward.4} parent=43 // pred_check_branch
        %3775 = sbr.rel (%p3773) target = $region60
      $region59: #{res_block_forward.4} parent=43 // pred_region
        _
      $region60: #{res_block_forward.4} parent=43 // pred_fallthru
        _
      // Predicated region
      $region61: #{res_block_forward.4} parent=43 // pred_check
        %p3776 = pneg %p190
      $region62: #{res_block_forward.4} parent=43 // pred_check_branch
        %3778 = sbr.rel (%p3776) target = $region64
      $region63: #{res_block_forward.4} parent=43 // pred_region
        _
      $region64: #{res_block_forward.4} parent=43 // pred_fallthru
        _
      // Predicated region
      $region65: #{res_block_forward.4} parent=43 // pred_check
        %p3779 = pneg %p211
      $region66: #{res_block_forward.4} parent=43 // pred_check_branch
        %3781 = sbr.rel (%p3779) target = $region68
      $region67: #{res_block_forward.4} parent=43 // pred_region
        _
      $region68: #{res_block_forward.4} parent=43 // pred_fallthru
        _
    $region44: #{res_block_forward.4} parent=5 // pred_fallthru
      _
    %p3782 = scmp.le.s32.totalorder 2, %s15
    // Predicated region
    $region69: #{res_block_forward.4} parent=5 // pred_check
      %p3783 = pneg %p3782
    $region70: #{res_block_forward.4} parent=5 // pred_check_branch
      %3785 = sbr.rel (%p3783) target = $region72
    $region71: #{res_block_forward.4} parent=5 // pred_region
      %s3786 = ssub.s32 %s15, 2
      // Predicated region
      $region73: #{res_block_forward.4} parent=71 // pred_check
        %p3787 = pneg %p175
      $region74: #{res_block_forward.4} parent=71 // pred_check_branch
        %3789 = sbr.rel (%p3787) target = $region76
      $region75: #{res_block_forward.4} parent=71 // pred_region
        %p3790 = scmp.lt.s32.totalorder %s21, 1
        %s3791 = scalar_select %p3790, %s21, 1
        %s3792 = smul.addr %s3791, 36
        %s3793 = smul.addr %s3792, 8
        %s3794 = scalar_lea.vmem %s6, %s3793
      $region76: #{res_block_forward.4} parent=71 // pred_fallthru
        _
    $region72: #{res_block_forward.4} parent=5 // pred_fallthru
      _
  $region6: #{res_block_forward.4} parent=0 // loop_footer
    %s19 = sadd.s32 1, %s15
  $region7: #{res_block_forward.4} parent=0 // loop_footer_branch
    %14 = sbr.rel target = $region3
  $region8: #{res_block_forward.4} parent=0 // loop_exit
    _

// kernel: res_block_forward.3
$region0: #{res_block_forward.3}
  #allocation0 [shape = 'u32[]', space=smem, size = 0x4, offset = 0x4, fixed_abs, tag = 'smem constant byte address 0x4 - core index']
  #allocation1 [shape = 'u32[144,128]{1,0:T(1,128)}', space=vmem, size = 0x12000, scoped, tag = 'internal scratch']
  %s0 = inlined_call_operand.vmem [shape: f32[2,328,128], index: 0, kind: input, shape index: {}]
  %s1 = inlined_call_operand.vmem [shape: bf16[9,128,128], index: 1, kind: input, shape index: {}]
  %s2 = inlined_call_operand.vmem [shape: f32[288,128], index: 2, kind: input, shape index: {}]
  %s3 = inlined_call_operand.vmem [shape: f32[2,288,128], index: 3, kind: output, shape index: {0}]
  %s4 = inlined_call_operand.vmem [shape: f32[1,128], index: 4, kind: output, shape index: {1}]
  %s5 = inlined_call_operand.vmem [shape: f32[1,128], index: 5, kind: output, shape index: {2}]
  %6 = xla_tuple %s3, %s4, %s5
  %s7 = sld [smem:[#allocation0]]
  $region65: #{res_block_forward.3} parent=0
    _
  %s9 = ssub.s32 1, %s7
  %s10 = scalar_select 0, %s9, %s7
  loop: start=0, step=1, limit=4
  $region2: #{res_block_forward.3} parent=0 // loop_pre_header
    _
  $region3: #{res_block_forward.3} parent=0 // loop_header
    %s12 = sphi 0, %s16
    %p13 = scmp.ge.s32.totalorder %s12, 4
    %s22 = sphi 0, %s24
    %s25 = sphi 0, %s22
    %s26 = sphi 0, %s25
    %s42 = sphi 0, %s26
    %s46 = sphi 0, %s46
    %s48 = sphi 0, %s46
    %s49 = sphi 0, %s48
    %s63 = sphi 0, %s49
    %s67 = sphi 0, %s67
    %s69 = sphi 0, %s67
    %s70 = sphi 0, %s69
    %s84 = sphi 0, %s70
    %s90 = sphi 0, %s92
    %s93 = sphi 0, %s90
    %s94 = sphi 0, %s93
    %s110 = sphi 0, %s94
    %s114 = sphi 0, %s114
    %s116 = sphi 0, %s114
    %s117 = sphi 0, %s116
    %s131 = sphi 0, %s117
    %s135 = sphi 0, %s135
    %s137 = sphi 0, %s135
    %s138 = sphi 0, %s137
    %s152 = sphi 0, %s138
  $region4: #{res_block_forward.3} parent=0 // loop_header_branch
    %15 = sbr.rel (%p13) target = $region8
  $region5: #{res_block_forward.3} parent=0 // loop_body
    %s17 = ssub.s32 %s12, 1
    %s18 = ssub.s32 %s12, 2
    %s19 = sadd.s32 %s12, 1
    %s20 = ssub.s32 %s12, %s19
    %p21 = scmp.eq.s32.totalorder %s20, 0
    %s23 = sadd.s32 %s22, 1
    %s24 = scalar_select %p21, %s22, %s23
    %p27 = pneg %p21
    %p28 = scmp.eq.s32.totalorder %s12, 1
    %p29 = por %p27, %p28
    %p30 = scmp.ne.s32.totalorder %s22, %s25
    %p31 = scmp.eq.s32.totalorder %s12, 0
    %p32 = por %p30, %p31
    %p33 = scmp.ne.s32.totalorder %s22, %s25
    %p34 = scmp.eq.s32.totalorder %s17, 1
    %p35 = por %p33, %p34
    %p36 = scmp.ne.s32.totalorder %s25, %s26
    %p37 = scmp.eq.s32.totalorder %s17, 0
    %p38 = por %p36, %p37
    %p39 = scmp.ne.s32.totalorder %s25, %s26
    %p40 = scmp.eq.s32.totalorder %s18, 1
    %p41 = por %p39, %p40
    %p43 = scmp.ne.s32.totalorder %s26, %s42
    %p44 = scmp.eq.s32.totalorder %s18, 0
    %p45 = por %p43, %p44
    %s47 = sadd.s32 %s46, 1
    %p50 = scmp.eq.s32.totalorder %s12, 1
    %p51 = scmp.ne.s32.totalorder %s46, %s48
    %p52 = scmp.eq.s32.totalorder %s12, 0
    %p53 = por %p51, %p52
    %p54 = scmp.ne.s32.totalorder %s46, %s48
    %p55 = scmp.eq.s32.totalorder %s17, 1
    %p56 = por %p54, %p55
    %p57 = scmp.ne.s32.totalorder %s48, %s49
    %p58 = scmp.eq.s32.totalorder %s17, 0
    %p59 = por %p57, %p58
    %p60 = scmp.ne.s32.totalorder %s48, %s49
    %p61 = scmp.eq.s32.totalorder %s18, 1
    %p62 = por %p60, %p61
    %p64 = scmp.ne.s32.totalorder %s49, %s63
    %p65 = scmp.eq.s32.totalorder %s18, 0
    %p66 = por %p64, %p65
    %s68 = sadd.s32 %s67, 1
    %p71 = scmp.eq.s32.totalorder %s12, 1
    %p72 = scmp.ne.s32.totalorder %s67, %s69
    %p73 = scmp.eq.s32.totalorder %s12, 0
    %p74 = por %p72, %p73
    %p75 = scmp.ne.s32.totalorder %s67, %s69
    %p76 = scmp.eq.s32.totalorder %s17, 1
    %p77 = por %p75, %p76
    %p78 = scmp.ne.s32.totalorder %s69, %s70
    %p79 = scmp.eq.s32.totalorder %s17, 0
    %p80 = por %p78, %p79
    %p81 = scmp.ne.s32.totalorder %s69, %s70
    %p82 = scmp.eq.s32.totalorder %s18, 1
    %p83 = por %p81, %p82
    %p85 = scmp.ne.s32.totalorder %s70, %s84
    %p86 = scmp.eq.s32.totalorder %s18, 0
    %p87 = por %p85, %p86
    %s88 = ssub.s32 %s12, %s19
    %p89 = scmp.eq.s32.totalorder %s88, 0
    %s91 = sadd.s32 %s90, 1
    %s92 = scalar_select %p89, %s90, %s91
    %p95 = pneg %p89
    %p96 = scmp.eq.s32.totalorder %s12, 1
    %p97 = por %p95, %p96
    %p98 = scmp.ne.s32.totalorder %s90, %s93
    %p99 = scmp.eq.s32.totalorder %s12, 0
    %p100 = por %p98, %p99
    %p101 = scmp.ne.s32.totalorder %s90, %s93
    %p102 = scmp.eq.s32.totalorder %s17, 1
    %p103 = por %p101, %p102
    %p104 = scmp.ne.s32.totalorder %s93, %s94
    %p105 = scmp.eq.s32.totalorder %s17, 0
    %p106 = por %p104, %p105
    %p107 = scmp.ne.s32.totalorder %s93, %s94
    %p108 = scmp.eq.s32.totalorder %s18, 1
    %p109 = por %p107, %p108
    %p111 = scmp.ne.s32.totalorder %s94, %s110
    %p112 = scmp.eq.s32.totalorder %s18, 0
    %p113 = por %p111, %p112
    %s115 = sadd.s32 %s114, 1
    %p118 = scmp.eq.s32.totalorder %s12, 1
    %p119 = scmp.ne.s32.totalorder %s114, %s116
    %p120 = scmp.eq.s32.totalorder %s12, 0
    %p121 = por %p119, %p120
    %p122 = scmp.ne.s32.totalorder %s114, %s116
    %p123 = scmp.eq.s32.totalorder %s17, 1
    %p124 = por %p122, %p123
    %p125 = scmp.ne.s32.totalorder %s116, %s117
    %p126 = scmp.eq.s32.totalorder %s17, 0
    %p127 = por %p125, %p126
    %p128 = scmp.ne.s32.totalorder %s116, %s117
    %p129 = scmp.eq.s32.totalorder %s18, 1
    %p130 = por %p128, %p129
    %p132 = scmp.ne.s32.totalorder %s117, %s131
    %p133 = scmp.eq.s32.totalorder %s18, 0
    %p134 = por %p132, %p133
    %s136 = sadd.s32 %s135, 1
    %p139 = scmp.eq.s32.totalorder %s12, 1
    %p140 = scmp.ne.s32.totalorder %s135, %s137
    %p141 = scmp.eq.s32.totalorder %s12, 0
    %p142 = por %p140, %p141
    %p143 = scmp.ne.s32.totalorder %s135, %s137
    %p144 = scmp.eq.s32.totalorder %s17, 1
    %p145 = por %p143, %p144
    %p146 = scmp.ne.s32.totalorder %s137, %s138
    %p147 = scmp.eq.s32.totalorder %s17, 0
    %p148 = por %p146, %p147
    %p149 = scmp.ne.s32.totalorder %s137, %s138
    %p150 = scmp.eq.s32.totalorder %s18, 1
    %p151 = por %p149, %p150
    %p153 = scmp.ne.s32.totalorder %s138, %s152
    %p154 = scmp.eq.s32.totalorder %s18, 0
    %p155 = por %p153, %p154
    %p156 = scmp.le.s32.totalorder 1, %s12
    %p157 = scmp.lt.s32.totalorder %s12, 3
    %p158 = pnand %p156, %p157
    %p159 = pneg %p158
    // Predicated region
    $region9: #{res_block_forward.3} parent=5 // pred_check
      _
    $region10: #{res_block_forward.3} parent=5 // pred_check_branch
      %161 = sbr.rel (%p158) target = $region12
    $region11: #{res_block_forward.3} parent=5 // pred_region
      %s162 = ssub.s32 %s12, 1
      // Predicated region
      $region13: #{res_block_forward.3} parent=11 // pred_check
        %p163 = pneg %p59
      $region14: #{res_block_forward.3} parent=11 // pred_check_branch
        %165 = sbr.rel (%p163) target = $region16
      $region15: #{res_block_forward.3} parent=11 // pred_region
        _
      $region16: #{res_block_forward.3} parent=11 // pred_fallthru
        _
      // Predicated region
      $region17: #{res_block_forward.3} parent=11 // pred_check
        %p166 = pneg %p80
      $region18: #{res_block_forward.3} parent=11 // pred_check_branch
        %168 = sbr.rel (%p166) target = $region20
      $region19: #{res_block_forward.3} parent=11 // pred_region
        _
      $region20: #{res_block_forward.3} parent=11 // pred_fallthru
        _
    $region12: #{res_block_forward.3} parent=5 // pred_fallthru
      _
    %p169 = scmp.lt.s32.totalorder %s12, 2
    // Predicated region
    $region21: #{res_block_forward.3} parent=5 // pred_check
      %p170 = pneg %p169
    $region22: #{res_block_forward.3} parent=5 // pred_check_branch
      %172 = sbr.rel (%p170) target = $region24
    $region23: #{res_block_forward.3} parent=5 // pred_region
      // Predicated region
      $region25: #{res_block_forward.3} parent=23 // pred_check
        %p173 = pneg %p32
      $region26: #{res_block_forward.3} parent=23 // pred_check_branch
        %175 = sbr.rel (%p173) target = $region28
      $region27: #{res_block_forward.3} parent=23 // pred_region
        %p176 = scmp.lt.s32.totalorder %s12, 1
        %s177 = scalar_select %p176, %s12, 1
        %s178 = smul.addr %s177, 41
        %s179 = smul.addr %s178, 8
        %s180 = scalar_lea.vmem %s0, %s179
      $region28: #{res_block_forward.3} parent=23 // pred_fallthru
        _
    $region24: #{res_block_forward.3} parent=5 // pred_fallthru
      _
    %p181 = scmp.le.s32.totalorder 1, %s12
    %p182 = scmp.lt.s32.totalorder %s12, 3
    %p183 = pnand %p181, %p182
    %p184 = pneg %p183
    // Predicated region
    $region29: #{res_block_forward.3} parent=5 // pred_check
      _
    $region30: #{res_block_forward.3} parent=5 // pred_check_branch
      %186 = sbr.rel (%p183) target = $region32
    $region31: #{res_block_forward.3} parent=5 // pred_region
      %s187 = ssub.s32 %s12, 1
      %p188 = scmp.lt.s32.totalorder %s17, 1
      %s189 = scalar_select %p188, %s17, 1
      %s190 = smul.addr %s189, 41
      %s191 = smul.addr %s190, 8
      %s192 = scalar_lea.vmem %s0, %s191
      %p193 = pneg %p38
      %p194 = pneg %p35
      %p195 = pneg %p59
      %p196 = pneg %p56
      %p197 = pneg %p80
      %p198 = pneg %p77
      %p199 = pneg %p106
      %p200 = pneg %p103
      %p201 = scmp.lt.s32.totalorder %s17, 1
      %s202 = scalar_select %p201, %s17, 1
      %s203 = smul.addr %s202, 36
      %s204 = smul.addr %s203, 8
      %s205 = scalar_lea.vmem %s3, %s204
      %p206 = pneg %p127
      %p207 = pneg %p124
      %p208 = pneg %p148
      %p209 = pneg %p145
      %p210 = scmp.lt.s32.totalorder %s17, 1
      %s211 = scalar_select %p210, %s17, 1
      %s212 = smul.addr %s211, 41
      %s213 = smul.addr %s212, 8
      %s214 = scalar_lea.vmem %s0, %s213
      %p215 = scmp.lt.s32.totalorder %s17, 1
      %s216 = scalar_select %p215, %s17, 1
      %s217 = smul.addr %s216, 36
      %s218 = smul.addr %s217, 8
      %s219 = scalar_lea.vmem %s3, %s218
      %v221 = vld [vmem:[%s214] sm:$0xff]
      %v222 = vld [vmem:[%s214 + $0x8] sm:$0xff]
      %v223 = vld [vmem:[%s214 + $0x10] sm:$0xff]
      %v224 = vld [vmem:[%s214 + $0x18] sm:$0xff]
      %v225 = vld [vmem:[%s214 + $0x20] sm:$0xff]
      %v226 = vld [vmem:[%s214 + $0x28] sm:$0xff]
      %v227 = vld [vmem:[%s214 + $0x30] sm:$0xff]
      %v228 = vld [vmem:[%s214 + $0x38] sm:$0xff]
      %v229 = vld [vmem:[%s214 + $0x40] sm:$0xff]
      %v230 = vld [vmem:[%s214 + $0x48] sm:$0xff]
      %v231 = vld [vmem:[%s214 + $0x50] sm:$0xff]
      %v232 = vld [vmem:[%s214 + $0x58] sm:$0xff]
      %v233 = vld [vmem:[%s214 + $0x60] sm:$0xff]
      %v234 = vld [vmem:[%s214 + $0x68] sm:$0xff]
      %v235 = vld [vmem:[%s214 + $0x70] sm:$0xff]
      %v236 = vld [vmem:[%s214 + $0x78] sm:$0xff]
      %v237 = vld [vmem:[%s214 + $0x80] sm:$0xff]
      %v238 = vld [vmem:[%s214 + $0x88] sm:$0xff]
      %v239 = vld [vmem:[%s214 + $0x90] sm:$0xff]
      %v240 = vld [vmem:[%s214 + $0x98] sm:$0xff]
      %v241 = vld [vmem:[%s214 + $0xa0] sm:$0xff]
      %v242 = vld [vmem:[%s214 + $0xa8] sm:$0xff]
      %v243 = vld [vmem:[%s214 + $0xb0] sm:$0xff]
      %v244 = vld [vmem:[%s214 + $0xb8] sm:$0xff]
      %v245 = vld [vmem:[%s214 + $0xc0] sm:$0xff]
      %v246 = vld [vmem:[%s214 + $0xc8] sm:$0xff]
      %v247 = vld [vmem:[%s214 + $0xd0] sm:$0xff]
      %v248 = vld [vmem:[%s214 + $0xd8] sm:$0xff]
      %v249 = vld [vmem:[%s214 + $0xe0] sm:$0xff]
      %v250 = vld [vmem:[%s214 + $0xe8] sm:$0xff]
      %v251 = vld [vmem:[%s214 + $0xf0] sm:$0xff]
      %v252 = vld [vmem:[%s214 + $0xf8] sm:$0xff]
      %v253 = vld [vmem:[%s214 + $0x100] sm:$0xff]
      %v254 = vld [vmem:[%s214 + $0x108] sm:$0xff]
      %v255 = vld [vmem:[%s214 + $0x110] sm:$0xff]
      %v256 = vld [vmem:[%s214 + $0x118] sm:$0xff]
      %v257 = vpack.c.bf16 %v222, %v221
      %v258 = vpack.c.bf16 %v224, %v223
      %v259 = vpack.c.bf16 %v226, %v225
      %v260 = vpack.c.bf16 %v228, %v227
      %v261 = vpack.c.bf16 %v230, %v229
      %v262 = vpack.c.bf16 %v232, %v231
      %v263 = vpack.c.bf16 %v234, %v233
      %v264 = vpack.c.bf16 %v236, %v235
      %v265 = vpack.c.bf16 %v238, %v237
      %v266 = vpack.c.bf16 %v240, %v239
      %v267 = vpack.c.bf16 %v242, %v241
      %v268 = vpack.c.bf16 %v244, %v243
      %v269 = vpack.c.bf16 %v246, %v245
      %v270 = vpack.c.bf16 %v248, %v247
      %v271 = vpack.c.bf16 %v250, %v249
      %v272 = vpack.c.bf16 %v252, %v251
      %v273 = vpack.c.bf16 %v254, %v253
      %v274 = vpack.c.bf16 %v256, %v255
      %v275 = vld [vmem:[%s1] sm:$0xf]
      %v276 = vld [vmem:[%s1 + $0x4] sm:$0xf]
      %v277 = vld [vmem:[%s1 + $0x8] sm:$0xf]
      %v278 = vld [vmem:[%s1 + $0xc] sm:$0xf]
      %v279 = vld [vmem:[%s1 + $0x10] sm:$0xf]
      %v280 = vld [vmem:[%s1 + $0x14] sm:$0xf]
      %v281 = vld [vmem:[%s1 + $0x18] sm:$0xf]
      %v282 = vld [vmem:[%s1 + $0x1c] sm:$0xf]
      %v283 = vld [vmem:[%s1 + $0x20] sm:$0xf]
      %v284 = vld [vmem:[%s1 + $0x24] sm:$0xf]
      %v285 = vld [vmem:[%s1 + $0x28] sm:$0xf]
      %v286 = vld [vmem:[%s1 + $0x2c] sm:$0xf]
      %v287 = vld [vmem:[%s1 + $0x30] sm:$0xf]
      %v288 = vld [vmem:[%s1 + $0x34] sm:$0xf]
      %v289 = vld [vmem:[%s1 + $0x38] sm:$0xf]
      %v290 = vld [vmem:[%s1 + $0x3c] sm:$0xf]
      %v291 = vld [vmem:[%s214 + $0x1] sm:$0xff]
      %v292 = vld [vmem:[%s214 + $0x9] sm:$0xff]
      %v293 = vld [vmem:[%s214 + $0x11] sm:$0xff]
      %v294 = vld [vmem:[%s214 + $0x19] sm:$0xff]
      %v295 = vld [vmem:[%s214 + $0x21] sm:$0xff]
      %v296 = vld [vmem:[%s214 + $0x29] sm:$0xff]
      %v297 = vld [vmem:[%s214 + $0x31] sm:$0xff]
      %v298 = vld [vmem:[%s214 + $0x39] sm:$0xff]
      %v299 = vld [vmem:[%s214 + $0x41] sm:$0xff]
      %v300 = vld [vmem:[%s214 + $0x49] sm:$0xff]
      %v301 = vld [vmem:[%s214 + $0x51] sm:$0xff]
      %v302 = vld [vmem:[%s214 + $0x59] sm:$0xff]
      %v303 = vld [vmem:[%s214 + $0x61] sm:$0xff]
      %v304 = vld [vmem:[%s214 + $0x69] sm:$0xff]
      %v305 = vld [vmem:[%s214 + $0x71] sm:$0xff]
      %v306 = vld [vmem:[%s214 + $0x79] sm:$0xff]
      %v307 = vld [vmem:[%s214 + $0x81] sm:$0xff]
      %v308 = vld [vmem:[%s214 + $0x89] sm:$0xff]
      %v309 = vld [vmem:[%s214 + $0x91] sm:$0xff]
      %v310 = vld [vmem:[%s214 + $0x99] sm:$0xff]
      %v311 = vld [vmem:[%s214 + $0xa1] sm:$0xff]
      %v312 = vld [vmem:[%s214 + $0xa9] sm:$0xff]
      %v313 = vld [vmem:[%s214 + $0xb1] sm:$0xff]
      %v314 = vld [vmem:[%s214 + $0xb9] sm:$0xff]
      %v315 = vld [vmem:[%s214 + $0xc1] sm:$0xff]
      %v316 = vld [vmem:[%s214 + $0xc9] sm:$0xff]
      %v317 = vld [vmem:[%s214 + $0xd1] sm:$0xff]
      %v318 = vld [vmem:[%s214 + $0xd9] sm:$0xff]
      %v319 = vld [vmem:[%s214 + $0xe1] sm:$0xff]
      %v320 = vld [vmem:[%s214 + $0xe9] sm:$0xff]
      %v321 = vld [vmem:[%s214 + $0xf1] sm:$0xff]
      %v322 = vld [vmem:[%s214 + $0xf9] sm:$0xff]
      %v323 = vld [vmem:[%s214 + $0x101] sm:$0xff]
      %v324 = vld [vmem:[%s214 + $0x109] sm:$0xff]
      %v325 = vld [vmem:[%s214 + $0x111] sm:$0xff]
      %v326 = vld [vmem:[%s214 + $0x119] sm:$0xff]
      %v327 = vpack.c.bf16 %v292, %v291
      %v328 = vpack.c.bf16 %v294, %v293
      %v329 = vpack.c.bf16 %v296, %v295
      %v330 = vpack.c.bf16 %v298, %v297
      %v331 = vpack.c.bf16 %v300, %v299
      %v332 = vpack.c.bf16 %v302, %v301
      %v333 = vpack.c.bf16 %v304, %v303
      %v334 = vpack.c.bf16 %v306, %v305
      %v335 = vpack.c.bf16 %v308, %v307
      %v336 = vpack.c.bf16 %v310, %v309
      %v337 = vpack.c.bf16 %v312, %v311
      %v338 = vpack.c.bf16 %v314, %v313
      %v339 = vpack.c.bf16 %v316, %v315
      %v340 = vpack.c.bf16 %v318, %v317
      %v341 = vpack.c.bf16 %v320, %v319
      %v342 = vpack.c.bf16 %v322, %v321
      %v343 = vpack.c.bf16 %v324, %v323
      %v344 = vpack.c.bf16 %v326, %v325
      %s345 = scalar_lea.vmem %s1, 64
      %v346 = vld [vmem:[%s345] sm:$0xf]
      %v347 = vld [vmem:[%s345 + $0x4] sm:$0xf]
      %v348 = vld [vmem:[%s345 + $0x8] sm:$0xf]
      %v349 = vld [vmem:[%s345 + $0xc] sm:$0xf]
      %v350 = vld [vmem:[%s345 + $0x10] sm:$0xf]
      %v351 = vld [vmem:[%s345 + $0x14] sm:$0xf]
      %v352 = vld [vmem:[%s345 + $0x18] sm:$0xf]
      %v353 = vld [vmem:[%s345 + $0x1c] sm:$0xf]
      %v354 = vld [vmem:[%s345 + $0x20] sm:$0xf]
      %v355 = vld [vmem:[%s345 + $0x24] sm:$0xf]
      %v356 = vld [vmem:[%s345 + $0x28] sm:$0xf]
      %v357 = vld [vmem:[%s345 + $0x2c] sm:$0xf]
      %v358 = vld [vmem:[%s345 + $0x30] sm:$0xf]
      %v359 = vld [vmem:[%s345 + $0x34] sm:$0xf]
      %v360 = vld [vmem:[%s345 + $0x38] sm:$0xf]
      %v361 = vld [vmem:[%s345 + $0x3c] sm:$0xf]
      %v378 = vunpack.c.l.b16 %v346
      %v379 = vunpack.c.l.b16 %v347
      %v380 = vunpack.c.l.b16 %v348
      %v381 = vunpack.c.l.b16 %v349
      %v382 = vunpack.c.l.b16 %v350
      %v383 = vunpack.c.l.b16 %v351
      %v384 = vunpack.c.l.b16 %v352
      %v385 = vunpack.c.l.b16 %v353
      %v386 = vunpack.c.l.b16 %v354
      %v387 = vunpack.c.l.b16 %v355
      %v388 = vunpack.c.l.b16 %v356
      %v389 = vunpack.c.l.b16 %v357
      %v390 = vunpack.c.l.b16 %v358
      %v391 = vunpack.c.l.b16 %v359
      %v392 = vunpack.c.l.b16 %v360
      %v393 = vunpack.c.l.b16 %v361
      %v394 = vpack.c.b16 %v379, %v378
      %v395 = vpack.c.b16 %v381, %v380
      %v396 = vpack.c.b16 %v383, %v382
      %v397 = vpack.c.b16 %v385, %v384
      %v398 = vpack.c.b16 %v387, %v386
      %v399 = vpack.c.b16 %v389, %v388
      %v400 = vpack.c.b16 %v391, %v390
      %v401 = vpack.c.b16 %v393, %v392
      %410 = vmatprep.subr.bf16.mxu0 0
      %411 = vmatpush1.bf16.msra.mxu0 %v401
      %412 = vmatprep.subr.bf16.mxu0 0
      %413 = vmatpush1.bf16.msra.mxu0 %v400
      %414 = vmatprep.subr.bf16.mxu0 0
      %415 = vmatpush1.bf16.msra.mxu0 %v399
      %416 = vmatprep.subr.bf16.mxu0 0
      %417 = vmatpush1.bf16.msra.mxu0 %v398
      %418 = vmatprep.subr.bf16.mxu0 0
      %419 = vmatpush1.bf16.msra.mxu0 %v397
      %420 = vmatprep.subr.bf16.mxu0 0
      %421 = vmatpush1.bf16.msra.mxu0 %v396
      %422 = vmatprep.subr.bf16.mxu0 0
      %423 = vmatpush1.bf16.msra.mxu0 %v395
      %424 = vmatprep.subr.bf16.mxu0 0
      %425 = vmatpush1.bf16.msra.mxu0 %v394
      %426 = vmatprep.subr.bf16.mxu0 0
      %427 = vmatpush2.bf16.msra.mxu0 0
      %428 = vmatprep.subr.bf16.mxu0 0
      %429 = vmatpush2.bf16.msra.mxu0 0
      %430 = vmatprep.subr.bf16.mxu0 0
      %431 = vmatpush2.bf16.msra.mxu0 0
      %432 = vmatprep.subr.bf16.mxu0 0
      %433 = vmatpush2.bf16.msra.mxu0 0
      %434 = vmatprep.subr.bf16.mxu0 0
      %435 = vmatpush2.bf16.msra.mxu0 0
      %436 = vmatprep.subr.bf16.mxu0 0
      %437 = vmatpush2.bf16.msra.mxu0 0
      %438 = vmatprep.subr.bf16.mxu0 0
      %439 = vmatpush2.bf16.msra.mxu0 0
      %440 = vmatprep.subr.bf16.mxu0 0
      %441 = vmatpush2.bf16.msra.mxu0 0
      %442 = vmatprep.mubr.bf16.mxu0 0
      %443 = vmatmul.mubr.bf16.gmra.mxu0 %v327
      %v444 = vpop.f32.mrf.mxu0
      %v445 = vadd.f32 0.0, %v444
      %v446 = vpop.f32.mrf.mxu0
      %v447 = vpop.f32.mrf.mxu0
      %v448 = vadd.f32 0.0, %v447
      %v449 = vpop.f32.mrf.mxu0
      %450 = vmatprep.mubr.bf16.mxu0 0
      %451 = vmatmul.mubr.bf16.gmra.mxu0 %v328
      %v452 = vpop.f32.mrf.mxu0
      %v453 = vadd.f32 0.0, %v452
      %v454 = vpop.f32.mrf.mxu0
      %v455 = vpop.f32.mrf.mxu0
      %v456 = vadd.f32 0.0, %v455
      %v457 = vpop.f32.mrf.mxu0
      %458 = vmatprep.mubr.bf16.mxu0 0
      %459 = vmatmul.mubr.bf16.gmra.mxu0 %v329
      %v460 = vpop.f32.mrf.mxu0
      %v461 = vadd.f32 0.0, %v460
      %v462 = vpop.f32.mrf.mxu0
      %v463 = vpop.f32.mrf.mxu0
      %v464 = vadd.f32 0.0, %v463
      %v465 = vpop.f32.mrf.mxu0
      %466 = vmatprep.mubr.bf16.mxu0 0
      %467 = vmatmul.mubr.bf16.gmra.mxu0 %v330
      %v468 = vpop.f32.mrf.mxu0
      %v469 = vadd.f32 0.0, %v468
      %v470 = vpop.f32.mrf.mxu0
      %v471 = vpop.f32.mrf.mxu0
      %v472 = vadd.f32 0.0, %v471
      %v473 = vpop.f32.mrf.mxu0
      %474 = vmatprep.mubr.bf16.mxu0 0
      %475 = vmatmul.mubr.bf16.gmra.mxu0 %v331
      %v476 = vpop.f32.mrf.mxu0
      %v477 = vadd.f32 0.0, %v476
      %v478 = vpop.f32.mrf.mxu0
      %v479 = vpop.f32.mrf.mxu0
      %v480 = vadd.f32 0.0, %v479
      %v481 = vpop.f32.mrf.mxu0
      %482 = vmatprep.mubr.bf16.mxu0 0
      %483 = vmatmul.mubr.bf16.gmra.mxu0 %v332
      %v484 = vpop.f32.mrf.mxu0
      %v485 = vadd.f32 0.0, %v484
      %v486 = vpop.f32.mrf.mxu0
      %v487 = vpop.f32.mrf.mxu0
      %v488 = vadd.f32 0.0, %v487
      %v489 = vpop.f32.mrf.mxu0
      %490 = vmatprep.mubr.bf16.mxu0 0
      %491 = vmatmul.mubr.bf16.gmra.mxu0 %v333
      %v492 = vpop.f32.mrf.mxu0
      %v493 = vadd.f32 0.0, %v492
      %v494 = vpop.f32.mrf.mxu0
      %v495 = vpop.f32.mrf.mxu0
      %v496 = vadd.f32 0.0, %v495
      %v497 = vpop.f32.mrf.mxu0
      %498 = vmatprep.mubr.bf16.mxu0 0
      %499 = vmatmul.mubr.bf16.gmra.mxu0 %v334
      %v500 = vpop.f32.mrf.mxu0
      %v501 = vadd.f32 0.0, %v500
      %v502 = vpop.f32.mrf.mxu0
      %v503 = vpop.f32.mrf.mxu0
      %v504 = vadd.f32 0.0, %v503
      %v505 = vpop.f32.mrf.mxu0
      %506 = vmatprep.mubr.bf16.mxu0 0
      %507 = vmatmul.mubr.bf16.gmra.mxu0 %v335
      %v508 = vpop.f32.mrf.mxu0
      %v509 = vadd.f32 0.0, %v508
      %v510 = vpop.f32.mrf.mxu0
      %v511 = vpop.f32.mrf.mxu0
      %v512 = vadd.f32 0.0, %v511
      %v513 = vpop.f32.mrf.mxu0
      %514 = vmatprep.mubr.bf16.mxu0 0
      %515 = vmatmul.mubr.bf16.gmra.mxu0 %v336
      %v516 = vpop.f32.mrf.mxu0
      %v517 = vadd.f32 0.0, %v516
      %v518 = vpop.f32.mrf.mxu0
      %v519 = vpop.f32.mrf.mxu0
      %v520 = vadd.f32 0.0, %v519
      %v521 = vpop.f32.mrf.mxu0
      %522 = vmatprep.mubr.bf16.mxu0 0
      %523 = vmatmul.mubr.bf16.gmra.mxu0 %v337
      %v524 = vpop.f32.mrf.mxu0
      %v525 = vadd.f32 0.0, %v524
      %v526 = vpop.f32.mrf.mxu0
      %v527 = vpop.f32.mrf.mxu0
      %v528 = vadd.f32 0.0, %v527
      %v529 = vpop.f32.mrf.mxu0
      %530 = vmatprep.mubr.bf16.mxu0 0
      %531 = vmatmul.mubr.bf16.gmra.mxu0 %v338
      %v532 = vpop.f32.mrf.mxu0
      %v533 = vadd.f32 0.0, %v532
      %v534 = vpop.f32.mrf.mxu0
      %v535 = vpop.f32.mrf.mxu0
      %v536 = vadd.f32 0.0, %v535
      %v537 = vpop.f32.mrf.mxu0
      %538 = vmatprep.mubr.bf16.mxu0 0
      %539 = vmatmul.mubr.bf16.gmra.mxu0 %v339
      %v540 = vpop.f32.mrf.mxu0
      %v541 = vadd.f32 0.0, %v540
      %v542 = vpop.f32.mrf.mxu0
      %v543 = vpop.f32.mrf.mxu0
      %v544 = vadd.f32 0.0, %v543
      %v545 = vpop.f32.mrf.mxu0
      %546 = vmatprep.mubr.bf16.mxu0 0
      %547 = vmatmul.mubr.bf16.gmra.mxu0 %v340
      %v548 = vpop.f32.mrf.mxu0
      %v549 = vadd.f32 0.0, %v548
      %v550 = vpop.f32.mrf.mxu0
      %v551 = vpop.f32.mrf.mxu0
      %v552 = vadd.f32 0.0, %v551
      %v553 = vpop.f32.mrf.mxu0
      %554 = vmatprep.mubr.bf16.mxu0 0
      %555 = vmatmul.mubr.bf16.gmra.mxu0 %v341
      %v556 = vpop.f32.mrf.mxu0
      %v557 = vadd.f32 0.0, %v556
      %v558 = vpop.f32.mrf.mxu0
      %v559 = vpop.f32.mrf.mxu0
      %v560 = vadd.f32 0.0, %v559
      %v561 = vpop.f32.mrf.mxu0
      %562 = vmatprep.mubr.bf16.mxu0 0
      %563 = vmatmul.mubr.bf16.gmra.mxu0 %v342
      %v564 = vpop.f32.mrf.mxu0
      %v565 = vadd.f32 0.0, %v564
      %v566 = vpop.f32.mrf.mxu0
      %v567 = vpop.f32.mrf.mxu0
      %v568 = vadd.f32 0.0, %v567
      %v569 = vpop.f32.mrf.mxu0
      %570 = vmatprep.mubr.bf16.mxu0 0
      %571 = vmatmul.mubr.bf16.gmra.mxu0 %v343
      %v572 = vpop.f32.mrf.mxu0
      %v573 = vadd.f32 0.0, %v572
      %v574 = vpop.f32.mrf.mxu0
      %v575 = vpop.f32.mrf.mxu0
      %v576 = vadd.f32 0.0, %v575
      %v577 = vpop.f32.mrf.mxu0
      %578 = vmatprep.mubr.bf16.mxu0 0
      %579 = vmatmul.mubr.bf16.gmra.mxu0 %v344
      %v580 = vpop.f32.mrf.mxu0
      %v581 = vadd.f32 0.0, %v580
      %v582 = vpop.f32.mrf.mxu0
      %v583 = vpop.f32.mrf.mxu0
      %v584 = vadd.f32 0.0, %v583
      %v585 = vpop.f32.mrf.mxu0
      %586 = vdwg.mxu0
      %v603 = vunpack.c.l.b16 %v275
      %v604 = vunpack.c.l.b16 %v276
      %v605 = vunpack.c.l.b16 %v277
      %v606 = vunpack.c.l.b16 %v278
      %v607 = vunpack.c.l.b16 %v279
      %v608 = vunpack.c.l.b16 %v280
      %v609 = vunpack.c.l.b16 %v281
      %v610 = vunpack.c.l.b16 %v282
      %v611 = vunpack.c.l.b16 %v283
      %v612 = vunpack.c.l.b16 %v284
      %v613 = vunpack.c.l.b16 %v285
      %v614 = vunpack.c.l.b16 %v286
      %v615 = vunpack.c.l.b16 %v287
      %v616 = vunpack.c.l.b16 %v288
      %v617 = vunpack.c.l.b16 %v289
      %v618 = vunpack.c.l.b16 %v290
      %v619 = vpack.c.b16 %v604, %v603
      %v620 = vpack.c.b16 %v606, %v605
      %v621 = vpack.c.b16 %v608, %v607
      %v622 = vpack.c.b16 %v610, %v609
      %v623 = vpack.c.b16 %v612, %v611
      %v624 = vpack.c.b16 %v614, %v613
      %v625 = vpack.c.b16 %v616, %v615
      %v626 = vpack.c.b16 %v618, %v617
      %635 = vmatprep.subr.bf16.mxu0 0
      %636 = vmatpush1.bf16.msra.mxu0 %v626
      %637 = vmatprep.subr.bf16.mxu0 0
      %638 = vmatpush1.bf16.msra.mxu0 %v625
      %639 = vmatprep.subr.bf16.mxu0 0
      %640 = vmatpush1.bf16.msra.mxu0 %v624
      %641 = vmatprep.subr.bf16.mxu0 0
      %642 = vmatpush1.bf16.msra.mxu0 %v623
      %643 = vmatprep.subr.bf16.mxu0 0
      %644 = vmatpush1.bf16.msra.mxu0 %v622
      %645 = vmatprep.subr.bf16.mxu0 0
      %646 = vmatpush1.bf16.msra.mxu0 %v621
      %647 = vmatprep.subr.bf16.mxu0 0
      %648 = vmatpush1.bf16.msra.mxu0 %v620
      %649 = vmatprep.subr.bf16.mxu0 0
      %650 = vmatpush1.bf16.msra.mxu0 %v619
      %651 = vmatprep.subr.bf16.mxu0 0
      %652 = vmatpush2.bf16.msra.mxu0 0
      %653 = vmatprep.subr.bf16.mxu0 0
      %654 = vmatpush2.bf16.msra.mxu0 0
      %655 = vmatprep.subr.bf16.mxu0 0
      %656 = vmatpush2.bf16.msra.mxu0 0
      %657 = vmatprep.subr.bf16.mxu0 0
      %658 = vmatpush2.bf16.msra.mxu0 0
      %659 = vmatprep.subr.bf16.mxu0 0
      %660 = vmatpush2.bf16.msra.mxu0 0
      %661 = vmatprep.subr.bf16.mxu0 0
      %662 = vmatpush2.bf16.msra.mxu0 0
      %663 = vmatprep.subr.bf16.mxu0 0
      %664 = vmatpush2.bf16.msra.mxu0 0
      %665 = vmatprep.subr.bf16.mxu0 0
      %666 = vmatpush2.bf16.msra.mxu0 0
      %667 = vmatprep.mubr.bf16.mxu0 0
      %668 = vmatmul.mubr.bf16.gmra.mxu0 %v257
      %v669 = vpop.f32.mrf.mxu0
      %v670 = vadd.f32 %v445, %v669
      %v671 = vpop.f32.mrf.mxu0
      %v672 = vpop.f32.mrf.mxu0
      %v673 = vadd.f32 %v448, %v672
      %v674 = vpop.f32.mrf.mxu0
      %675 = vmatprep.mubr.bf16.mxu0 0
      %676 = vmatmul.mubr.bf16.gmra.mxu0 %v258
      %v677 = vpop.f32.mrf.mxu0
      %v678 = vadd.f32 %v453, %v677
      %v679 = vpop.f32.mrf.mxu0
      %v680 = vpop.f32.mrf.mxu0
      %v681 = vadd.f32 %v456, %v680
      %v682 = vpop.f32.mrf.mxu0
      %683 = vmatprep.mubr.bf16.mxu0 0
      %684 = vmatmul.mubr.bf16.gmra.mxu0 %v259
      %v685 = vpop.f32.mrf.mxu0
      %v686 = vadd.f32 %v461, %v685
      %v687 = vpop.f32.mrf.mxu0
      %v688 = vpop.f32.mrf.mxu0
      %v689 = vadd.f32 %v464, %v688
      %v690 = vpop.f32.mrf.mxu0
      %691 = vmatprep.mubr.bf16.mxu0 0
      %692 = vmatmul.mubr.bf16.gmra.mxu0 %v260
      %v693 = vpop.f32.mrf.mxu0
      %v694 = vadd.f32 %v469, %v693
      %v695 = vpop.f32.mrf.mxu0
      %v696 = vpop.f32.mrf.mxu0
      %v697 = vadd.f32 %v472, %v696
      %v698 = vpop.f32.mrf.mxu0
      %699 = vmatprep.mubr.bf16.mxu0 0
      %700 = vmatmul.mubr.bf16.gmra.mxu0 %v261
      %v701 = vpop.f32.mrf.mxu0
      %v702 = vadd.f32 %v477, %v701
      %v703 = vpop.f32.mrf.mxu0
      %v704 = vpop.f32.mrf.mxu0
      %v705 = vadd.f32 %v480, %v704
      %v706 = vpop.f32.mrf.mxu0
      %707 = vmatprep.mubr.bf16.mxu0 0
      %708 = vmatmul.mubr.bf16.gmra.mxu0 %v262
      %v709 = vpop.f32.mrf.mxu0
      %v710 = vadd.f32 %v485, %v709
      %v711 = vpop.f32.mrf.mxu0
      %v712 = vpop.f32.mrf.mxu0
      %v713 = vadd.f32 %v488, %v712
      %v714 = vpop.f32.mrf.mxu0
      %715 = vmatprep.mubr.bf16.mxu0 0
      %716 = vmatmul.mubr.bf16.gmra.mxu0 %v263
      %v717 = vpop.f32.mrf.mxu0
      %v718 = vadd.f32 %v493, %v717
      %v719 = vpop.f32.mrf.mxu0
      %v720 = vpop.f32.mrf.mxu0
      %v721 = vadd.f32 %v496, %v720
      %v722 = vpop.f32.mrf.mxu0
      %723 = vmatprep.mubr.bf16.mxu0 0
      %724 = vmatmul.mubr.bf16.gmra.mxu0 %v264
      %v725 = vpop.f32.mrf.mxu0
      %v726 = vadd.f32 %v501, %v725
      %v727 = vpop.f32.mrf.mxu0
      %v728 = vpop.f32.mrf.mxu0
      %v729 = vadd.f32 %v504, %v728
      %v730 = vpop.f32.mrf.mxu0
      %731 = vmatprep.mubr.bf16.mxu0 0
      %732 = vmatmul.mubr.bf16.gmra.mxu0 %v265
      %v733 = vpop.f32.mrf.mxu0
      %v734 = vadd.f32 %v509, %v733
      %v735 = vpop.f32.mrf.mxu0
      %v736 = vpop.f32.mrf.mxu0
      %v737 = vadd.f32 %v512, %v736
      %v738 = vpop.f32.mrf.mxu0
      %739 = vmatprep.mubr.bf16.mxu0 0
      %740 = vmatmul.mubr.bf16.gmra.mxu0 %v266
      %v741 = vpop.f32.mrf.mxu0
      %v742 = vadd.f32 %v517, %v741
      %v743 = vpop.f32.mrf.mxu0
      %v744 = vpop.f32.mrf.mxu0
      %v745 = vadd.f32 %v520, %v744
      %v746 = vpop.f32.mrf.mxu0
      %747 = vmatprep.mubr.bf16.mxu0 0
      %748 = vmatmul.mubr.bf16.gmra.mxu0 %v267
      %v749 = vpop.f32.mrf.mxu0
      %v750 = vadd.f32 %v525, %v749
      %v751 = vpop.f32.mrf.mxu0
      %v752 = vpop.f32.mrf.mxu0
      %v753 = vadd.f32 %v528, %v752
      %v754 = vpop.f32.mrf.mxu0
      %755 = vmatprep.mubr.bf16.mxu0 0
      %756 = vmatmul.mubr.bf16.gmra.mxu0 %v268
      %v757 = vpop.f32.mrf.mxu0
      %v758 = vadd.f32 %v533, %v757
      %v759 = vpop.f32.mrf.mxu0
      %v760 = vpop.f32.mrf.mxu0
      %v761 = vadd.f32 %v536, %v760
      %v762 = vpop.f32.mrf.mxu0
      %763 = vmatprep.mubr.bf16.mxu0 0
      %764 = vmatmul.mubr.bf16.gmra.mxu0 %v269
      %v765 = vpop.f32.mrf.mxu0
      %v766 = vadd.f32 %v541, %v765
      %v767 = vpop.f32.mrf.mxu0
      %v768 = vpop.f32.mrf.mxu0
      %v769 = vadd.f32 %v544, %v768
      %v770 = vpop.f32.mrf.mxu0
      %771 = vmatprep.mubr.bf16.mxu0 0
      %772 = vmatmul.mubr.bf16.gmra.mxu0 %v270
      %v773 = vpop.f32.mrf.mxu0
      %v774 = vadd.f32 %v549, %v773
      %v775 = vpop.f32.mrf.mxu0
      %v776 = vpop.f32.mrf.mxu0
      %v777 = vadd.f32 %v552, %v776
      %v778 = vpop.f32.mrf.mxu0
      %779 = vmatprep.mubr.bf16.mxu0 0
      %780 = vmatmul.mubr.bf16.gmra.mxu0 %v271
      %v781 = vpop.f32.mrf.mxu0
      %v782 = vadd.f32 %v557, %v781
      %v783 = vpop.f32.mrf.mxu0
      %v784 = vpop.f32.mrf.mxu0
      %v785 = vadd.f32 %v560, %v784
      %v786 = vpop.f32.mrf.mxu0
      %787 = vmatprep.mubr.bf16.mxu0 0
      %788 = vmatmul.mubr.bf16.gmra.mxu0 %v272
      %v789 = vpop.f32.mrf.mxu0
      %v790 = vadd.f32 %v565, %v789
      %v791 = vpop.f32.mrf.mxu0
      %v792 = vpop.f32.mrf.mxu0
      %v793 = vadd.f32 %v568, %v792
      %v794 = vpop.f32.mrf.mxu0
      %795 = vmatprep.mubr.bf16.mxu0 0
      %796 = vmatmul.mubr.bf16.gmra.mxu0 %v273
      %v797 = vpop.f32.mrf.mxu0
      %v798 = vadd.f32 %v573, %v797
      %v799 = vpop.f32.mrf.mxu0
      %v800 = vpop.f32.mrf.mxu0
      %v801 = vadd.f32 %v576, %v800
      %v802 = vpop.f32.mrf.mxu0
      %803 = vmatprep.mubr.bf16.mxu0 0
      %804 = vmatmul.mubr.bf16.gmra.mxu0 %v274
      %v805 = vpop.f32.mrf.mxu0
      %v806 = vadd.f32 %v581, %v805
      %v807 = vpop.f32.mrf.mxu0
      %v808 = vpop.f32.mrf.mxu0
      %v809 = vadd.f32 %v584, %v808
      %v810 = vpop.f32.mrf.mxu0
      %811 = vdwg.mxu0
      %v812 = vld [vmem:[%s214 + $0x2] sm:$0xff]
      %v813 = vld [vmem:[%s214 + $0xa] sm:$0xff]
      %v814 = vld [vmem:[%s214 + $0x12] sm:$0xff]
      %v815 = vld [vmem:[%s214 + $0x1a] sm:$0xff]
      %v816 = vld [vmem:[%s214 + $0x22] sm:$0xff]
      %v817 = vld [vmem:[%s214 + $0x2a] sm:$0xff]
      %v818 = vld [vmem:[%s214 + $0x32] sm:$0xff]
      %v819 = vld [vmem:[%s214 + $0x3a] sm:$0xff]
      %v820 = vld [vmem:[%s214 + $0x42] sm:$0xff]
      %v821 = vld [vmem:[%s214 + $0x4a] sm:$0xff]
      %v822 = vld [vmem:[%s214 + $0x52] sm:$0xff]
      %v823 = vld [vmem:[%s214 + $0x5a] sm:$0xff]
      %v824 = vld [vmem:[%s214 + $0x62] sm:$0xff]
      %v825 = vld [vmem:[%s214 + $0x6a] sm:$0xff]
      %v826 = vld [vmem:[%s214 + $0x72] sm:$0xff]
      %v827 = vld [vmem:[%s214 + $0x7a] sm:$0xff]
      %v828 = vld [vmem:[%s214 + $0x82] sm:$0xff]
      %v829 = vld [vmem:[%s214 + $0x8a] sm:$0xff]
      %v830 = vld [vmem:[%s214 + $0x92] sm:$0xff]
      %v831 = vld [vmem:[%s214 + $0x9a] sm:$0xff]
      %v832 = vld [vmem:[%s214 + $0xa2] sm:$0xff]
      %v833 = vld [vmem:[%s214 + $0xaa] sm:$0xff]
      %v834 = vld [vmem:[%s214 + $0xb2] sm:$0xff]
      %v835 = vld [vmem:[%s214 + $0xba] sm:$0xff]
      %v836 = vld [vmem:[%s214 + $0xc2] sm:$0xff]
      %v837 = vld [vmem:[%s214 + $0xca] sm:$0xff]
      %v838 = vld [vmem:[%s214 + $0xd2] sm:$0xff]
      %v839 = vld [vmem:[%s214 + $0xda] sm:$0xff]
      %v840 = vld [vmem:[%s214 + $0xe2] sm:$0xff]
      %v841 = vld [vmem:[%s214 + $0xea] sm:$0xff]
      %v842 = vld [vmem:[%s214 + $0xf2] sm:$0xff]
      %v843 = vld [vmem:[%s214 + $0xfa] sm:$0xff]
      %v844 = vld [vmem:[%s214 + $0x102] sm:$0xff]
      %v845 = vld [vmem:[%s214 + $0x10a] sm:$0xff]
      %v846 = vld [vmem:[%s214 + $0x112] sm:$0xff]
      %v847 = vld [vmem:[%s214 + $0x11a] sm:$0xff]
      %v848 = vpack.c.bf16 %v813, %v812
      %v849 = vpack.c.bf16 %v815, %v814
      %v850 = vpack.c.bf16 %v817, %v816
      %v851 = vpack.c.bf16 %v819, %v818
      %v852 = vpack.c.bf16 %v821, %v820
      %v853 = vpack.c.bf16 %v823, %v822
      %v854 = vpack.c.bf16 %v825, %v824
      %v855 = vpack.c.bf16 %v827, %v826
      %v856 = vpack.c.bf16 %v829, %v828
      %v857 = vpack.c.bf16 %v831, %v830
      %v858 = vpack.c.bf16 %v833, %v832
      %v859 = vpack.c.bf16 %v835, %v834
      %v860 = vpack.c.bf16 %v837, %v836
      %v861 = vpack.c.bf16 %v839, %v838
      %v862 = vpack.c.bf16 %v841, %v840
      %v863 = vpack.c.bf16 %v843, %v842
      %v864 = vpack.c.bf16 %v845, %v844
      %v865 = vpack.c.bf16 %v847, %v846
      %s866 = scalar_lea.vmem %s1, 128
      %v867 = vld [vmem:[%s866] sm:$0xf]
      %v868 = vld [vmem:[%s866 + $0x4] sm:$0xf]
      %v869 = vld [vmem:[%s866 + $0x8] sm:$0xf]
      %v870 = vld [vmem:[%s866 + $0xc] sm:$0xf]
      %v871 = vld [vmem:[%s866 + $0x10] sm:$0xf]
      %v872 = vld [vmem:[%s866 + $0x14] sm:$0xf]
      %v873 = vld [vmem:[%s866 + $0x18] sm:$0xf]
      %v874 = vld [vmem:[%s866 + $0x1c] sm:$0xf]
      %v875 = vld [vmem:[%s866 + $0x20] sm:$0xf]
      %v876 = vld [vmem:[%s866 + $0x24] sm:$0xf]
      %v877 = vld [vmem:[%s866 + $0x28] sm:$0xf]
      %v878 = vld [vmem:[%s866 + $0x2c] sm:$0xf]
      %v879 = vld [vmem:[%s866 + $0x30] sm:$0xf]
      %v880 = vld [vmem:[%s866 + $0x34] sm:$0xf]
      %v881 = vld [vmem:[%s866 + $0x38] sm:$0xf]
      %v882 = vld [vmem:[%s866 + $0x3c] sm:$0xf]
      %v899 = vunpack.c.l.b16 %v867
      %v900 = vunpack.c.l.b16 %v868
      %v901 = vunpack.c.l.b16 %v869
      %v902 = vunpack.c.l.b16 %v870
      %v903 = vunpack.c.l.b16 %v871
      %v904 = vunpack.c.l.b16 %v872
      %v905 = vunpack.c.l.b16 %v873
      %v906 = vunpack.c.l.b16 %v874
      %v907 = vunpack.c.l.b16 %v875
      %v908 = vunpack.c.l.b16 %v876
      %v909 = vunpack.c.l.b16 %v877
      %v910 = vunpack.c.l.b16 %v878
      %v911 = vunpack.c.l.b16 %v879
      %v912 = vunpack.c.l.b16 %v880
      %v913 = vunpack.c.l.b16 %v881
      %v914 = vunpack.c.l.b16 %v882
      %v915 = vpack.c.b16 %v900, %v899
      %v916 = vpack.c.b16 %v902, %v901
      %v917 = vpack.c.b16 %v904, %v903
      %v918 = vpack.c.b16 %v906, %v905
      %v919 = vpack.c.b16 %v908, %v907
      %v920 = vpack.c.b16 %v910, %v909
      %v921 = vpack.c.b16 %v912, %v911
      %v922 = vpack.c.b16 %v914, %v913
      %931 = vmatprep.subr.bf16.mxu0 0
      %932 = vmatpush1.bf16.msra.mxu0 %v922
      %933 = vmatprep.subr.bf16.mxu0 0
      %934 = vmatpush1.bf16.msra.mxu0 %v921
      %935 = vmatprep.subr.bf16.mxu0 0
      %936 = vmatpush1.bf16.msra.mxu0 %v920
      %937 = vmatprep.subr.bf16.mxu0 0
      %938 = vmatpush1.bf16.msra.mxu0 %v919
      %939 = vmatprep.subr.bf16.mxu0 0
      %940 = vmatpush1.bf16.msra.mxu0 %v918
      %941 = vmatprep.subr.bf16.mxu0 0
      %942 = vmatpush1.bf16.msra.mxu0 %v917
      %943 = vmatprep.subr.bf16.mxu0 0
      %944 = vmatpush1.bf16.msra.mxu0 %v916
      %945 = vmatprep.subr.bf16.mxu0 0
      %946 = vmatpush1.bf16.msra.mxu0 %v915
      %947 = vmatprep.subr.bf16.mxu0 0
      %948 = vmatpush2.bf16.msra.mxu0 0
      %949 = vmatprep.subr.bf16.mxu0 0
      %950 = vmatpush2.bf16.msra.mxu0 0
      %951 = vmatprep.subr.bf16.mxu0 0
      %952 = vmatpush2.bf16.msra.mxu0 0
      %953 = vmatprep.subr.bf16.mxu0 0
      %954 = vmatpush2.bf16.msra.mxu0 0
      %955 = vmatprep.subr.bf16.mxu0 0
      %956 = vmatpush2.bf16.msra.mxu0 0
      %957 = vmatprep.subr.bf16.mxu0 0
      %958 = vmatpush2.bf16.msra.mxu0 0
      %959 = vmatprep.subr.bf16.mxu0 0
      %960 = vmatpush2.bf16.msra.mxu0 0
      %961 = vmatprep.subr.bf16.mxu0 0
      %962 = vmatpush2.bf16.msra.mxu0 0
      %963 = vmatprep.mubr.bf16.mxu0 0
      %964 = vmatmul.mubr.bf16.gmra.mxu0 %v848
      %v965 = vpop.f32.mrf.mxu0
      %v966 = vadd.f32 0.0, %v965
      %v967 = vpop.f32.mrf.mxu0
      %v968 = vpop.f32.mrf.mxu0
      %v969 = vadd.f32 0.0, %v968
      %v970 = vpop.f32.mrf.mxu0
      %971 = vmatprep.mubr.bf16.mxu0 0
      %972 = vmatmul.mubr.bf16.gmra.mxu0 %v849
      %v973 = vpop.f32.mrf.mxu0
      %v974 = vadd.f32 0.0, %v973
      %v975 = vpop.f32.mrf.mxu0
      %v976 = vpop.f32.mrf.mxu0
      %v977 = vadd.f32 0.0, %v976
      %v978 = vpop.f32.mrf.mxu0
      %979 = vmatprep.mubr.bf16.mxu0 0
      %980 = vmatmul.mubr.bf16.gmra.mxu0 %v850
      %v981 = vpop.f32.mrf.mxu0
      %v982 = vadd.f32 0.0, %v981
      %v983 = vpop.f32.mrf.mxu0
      %v984 = vpop.f32.mrf.mxu0
      %v985 = vadd.f32 0.0, %v984
      %v986 = vpop.f32.mrf.mxu0
      %987 = vmatprep.mubr.bf16.mxu0 0
      %988 = vmatmul.mubr.bf16.gmra.mxu0 %v851
      %v989 = vpop.f32.mrf.mxu0
      %v990 = vadd.f32 0.0, %v989
      %v991 = vpop.f32.mrf.mxu0
      %v992 = vpop.f32.mrf.mxu0
      %v993 = vadd.f32 0.0, %v992
      %v994 = vpop.f32.mrf.mxu0
      %995 = vmatprep.mubr.bf16.mxu0 0
      %996 = vmatmul.mubr.bf16.gmra.mxu0 %v852
      %v997 = vpop.f32.mrf.mxu0
      %v998 = vadd.f32 0.0, %v997
      %v999 = vpop.f32.mrf.mxu0
      %v1000 = vpop.f32.mrf.mxu0
      %v1001 = vadd.f32 0.0, %v1000
      %v1002 = vpop.f32.mrf.mxu0
      %1003 = vmatprep.mubr.bf16.mxu0 0
      %1004 = vmatmul.mubr.bf16.gmra.mxu0 %v853
      %v1005 = vpop.f32.mrf.mxu0
      %v1006 = vadd.f32 0.0, %v1005
      %v1007 = vpop.f32.mrf.mxu0
      %v1008 = vpop.f32.mrf.mxu0
      %v1009 = vadd.f32 0.0, %v1008
      %v1010 = vpop.f32.mrf.mxu0
      %1011 = vmatprep.mubr.bf16.mxu0 0
      %1012 = vmatmul.mubr.bf16.gmra.mxu0 %v854
      %v1013 = vpop.f32.mrf.mxu0
      %v1014 = vadd.f32 0.0, %v1013
      %v1015 = vpop.f32.mrf.mxu0
      %v1016 = vpop.f32.mrf.mxu0
      %v1017 = vadd.f32 0.0, %v1016
      %v1018 = vpop.f32.mrf.mxu0
      %1019 = vmatprep.mubr.bf16.mxu0 0
      %1020 = vmatmul.mubr.bf16.gmra.mxu0 %v855
      %v1021 = vpop.f32.mrf.mxu0
      %v1022 = vadd.f32 0.0, %v1021
      %v1023 = vpop.f32.mrf.mxu0
      %v1024 = vpop.f32.mrf.mxu0
      %v1025 = vadd.f32 0.0, %v1024
      %v1026 = vpop.f32.mrf.mxu0
      %1027 = vmatprep.mubr.bf16.mxu0 0
      %1028 = vmatmul.mubr.bf16.gmra.mxu0 %v856
      %v1029 = vpop.f32.mrf.mxu0
      %v1030 = vadd.f32 0.0, %v1029
      %v1031 = vpop.f32.mrf.mxu0
      %v1032 = vpop.f32.mrf.mxu0
      %v1033 = vadd.f32 0.0, %v1032
      %v1034 = vpop.f32.mrf.mxu0
      %1035 = vmatprep.mubr.bf16.mxu0 0
      %1036 = vmatmul.mubr.bf16.gmra.mxu0 %v857
      %v1037 = vpop.f32.mrf.mxu0
      %v1038 = vadd.f32 0.0, %v1037
      %v1039 = vpop.f32.mrf.mxu0
      %v1040 = vpop.f32.mrf.mxu0
      %v1041 = vadd.f32 0.0, %v1040
      %v1042 = vpop.f32.mrf.mxu0
      %1043 = vmatprep.mubr.bf16.mxu0 0
      %1044 = vmatmul.mubr.bf16.gmra.mxu0 %v858
      %v1045 = vpop.f32.mrf.mxu0
      %v1046 = vadd.f32 0.0, %v1045
      %v1047 = vpop.f32.mrf.mxu0
      %v1048 = vpop.f32.mrf.mxu0
      %v1049 = vadd.f32 0.0, %v1048
      %v1050 = vpop.f32.mrf.mxu0
      %1051 = vmatprep.mubr.bf16.mxu0 0
      %1052 = vmatmul.mubr.bf16.gmra.mxu0 %v859
      %v1053 = vpop.f32.mrf.mxu0
      %v1054 = vadd.f32 0.0, %v1053
      %v1055 = vpop.f32.mrf.mxu0
      %v1056 = vpop.f32.mrf.mxu0
      %v1057 = vadd.f32 0.0, %v1056
      %v1058 = vpop.f32.mrf.mxu0
      %1059 = vmatprep.mubr.bf16.mxu0 0
      %1060 = vmatmul.mubr.bf16.gmra.mxu0 %v860
      %v1061 = vpop.f32.mrf.mxu0
      %v1062 = vadd.f32 0.0, %v1061
      %v1063 = vpop.f32.mrf.mxu0
      %v1064 = vpop.f32.mrf.mxu0
      %v1065 = vadd.f32 0.0, %v1064
      %v1066 = vpop.f32.mrf.mxu0
      %1067 = vmatprep.mubr.bf16.mxu0 0
      %1068 = vmatmul.mubr.bf16.gmra.mxu0 %v861
      %v1069 = vpop.f32.mrf.mxu0
      %v1070 = vadd.f32 0.0, %v1069
      %v1071 = vpop.f32.mrf.mxu0
      %v1072 = vpop.f32.mrf.mxu0
      %v1073 = vadd.f32 0.0, %v1072
      %v1074 = vpop.f32.mrf.mxu0
      %1075 = vmatprep.mubr.bf16.mxu0 0
      %1076 = vmatmul.mubr.bf16.gmra.mxu0 %v862
      %v1077 = vpop.f32.mrf.mxu0
      %v1078 = vadd.f32 0.0, %v1077
      %v1079 = vpop.f32.mrf.mxu0
      %v1080 = vpop.f32.mrf.mxu0
      %v1081 = vadd.f32 0.0, %v1080
      %v1082 = vpop.f32.mrf.mxu0
      %1083 = vmatprep.mubr.bf16.mxu0 0
      %1084 = vmatmul.mubr.bf16.gmra.mxu0 %v863
      %v1085 = vpop.f32.mrf.mxu0
      %v1086 = vadd.f32 0.0, %v1085
      %v1087 = vpop.f32.mrf.mxu0
      %v1088 = vpop.f32.mrf.mxu0
      %v1089 = vadd.f32 0.0, %v1088
      %v1090 = vpop.f32.mrf.mxu0
      %1091 = vmatprep.mubr.bf16.mxu0 0
      %1092 = vmatmul.mubr.bf16.gmra.mxu0 %v864
      %v1093 = vpop.f32.mrf.mxu0
      %v1094 = vadd.f32 0.0, %v1093
      %v1095 = vpop.f32.mrf.mxu0
      %v1096 = vpop.f32.mrf.mxu0
      %v1097 = vadd.f32 0.0, %v1096
      %v1098 = vpop.f32.mrf.mxu0
      %1099 = vmatprep.mubr.bf16.mxu0 0
      %1100 = vmatmul.mubr.bf16.gmra.mxu0 %v865
      %v1101 = vpop.f32.mrf.mxu0
      %v1102 = vadd.f32 0.0, %v1101
      %v1103 = vpop.f32.mrf.mxu0
      %v1104 = vpop.f32.mrf.mxu0
      %v1105 = vadd.f32 0.0, %v1104
      %v1106 = vpop.f32.mrf.mxu0
      %1107 = vdwg.mxu0
      %v1108 = vadd.f32 %v670, %v966
      %v1109 = vadd.f32 %v673, %v969
      %v1110 = vadd.f32 %v678, %v974
      %v1111 = vadd.f32 %v681, %v977
      %v1112 = vadd.f32 %v686, %v982
      %v1113 = vadd.f32 %v689, %v985
      %v1114 = vadd.f32 %v694, %v990
      %v1115 = vadd.f32 %v697, %v993
      %v1116 = vadd.f32 %v702, %v998
      %v1117 = vadd.f32 %v705, %v1001
      %v1118 = vadd.f32 %v710, %v1006
      %v1119 = vadd.f32 %v713, %v1009
      %v1120 = vadd.f32 %v718, %v1014
      %v1121 = vadd.f32 %v721, %v1017
      %v1122 = vadd.f32 %v726, %v1022
      %v1123 = vadd.f32 %v729, %v1025
      %v1124 = vadd.f32 %v734, %v1030
      %v1125 = vadd.f32 %v737, %v1033
      %v1126 = vadd.f32 %v742, %v1038
      %v1127 = vadd.f32 %v745, %v1041
      %v1128 = vadd.f32 %v750, %v1046
      %v1129 = vadd.f32 %v753, %v1049
      %v1130 = vadd.f32 %v758, %v1054
      %v1131 = vadd.f32 %v761, %v1057
      %v1132 = vadd.f32 %v766, %v1062
      %v1133 = vadd.f32 %v769, %v1065
      %v1134 = vadd.f32 %v774, %v1070
      %v1135 = vadd.f32 %v777, %v1073
      %v1136 = vadd.f32 %v782, %v1078
      %v1137 = vadd.f32 %v785, %v1081
      %v1138 = vadd.f32 %v790, %v1086
      %v1139 = vadd.f32 %v793, %v1089
      %v1140 = vadd.f32 %v798, %v1094
      %v1141 = vadd.f32 %v801, %v1097
      %v1142 = vadd.f32 %v806, %v1102
      %v1143 = vadd.f32 %v809, %v1105
      %v1144 = vld [vmem:[%s214 + $0x12] sm:$0xff]
      %v1145 = vld [vmem:[%s214 + $0x1a] sm:$0xff]
      %v1146 = vld [vmem:[%s214 + $0x22] sm:$0xff]
      %v1147 = vld [vmem:[%s214 + $0x2a] sm:$0xff]
      %v1148 = vld [vmem:[%s214 + $0x32] sm:$0xff]
      %v1149 = vld [vmem:[%s214 + $0x3a] sm:$0xff]
      %v1150 = vld [vmem:[%s214 + $0x42] sm:$0xff]
      %v1151 = vld [vmem:[%s214 + $0x4a] sm:$0xff]
      %v1152 = vld [vmem:[%s214 + $0x52] sm:$0xff]
      %v1153 = vld [vmem:[%s214 + $0x5a] sm:$0xff]
      %v1154 = vld [vmem:[%s214 + $0x62] sm:$0xff]
      %v1155 = vld [vmem:[%s214 + $0x6a] sm:$0xff]
      %v1156 = vld [vmem:[%s214 + $0x72] sm:$0xff]
      %v1157 = vld [vmem:[%s214 + $0x7a] sm:$0xff]
      %v1158 = vld [vmem:[%s214 + $0x82] sm:$0xff]
      %v1159 = vld [vmem:[%s214 + $0x8a] sm:$0xff]
      %v1160 = vld [vmem:[%s214 + $0x92] sm:$0xff]
      %v1161 = vld [vmem:[%s214 + $0x9a] sm:$0xff]
      %v1162 = vld [vmem:[%s214 + $0xa2] sm:$0xff]
      %v1163 = vld [vmem:[%s214 + $0xaa] sm:$0xff]
      %v1164 = vld [vmem:[%s214 + $0xb2] sm:$0xff]
      %v1165 = vld [vmem:[%s214 + $0xba] sm:$0xff]
      %v1166 = vld [vmem:[%s214 + $0xc2] sm:$0xff]
      %v1167 = vld [vmem:[%s214 + $0xca] sm:$0xff]
      %v1168 = vld [vmem:[%s214 + $0xd2] sm:$0xff]
      %v1169 = vld [vmem:[%s214 + $0xda] sm:$0xff]
      %v1170 = vld [vmem:[%s214 + $0xe2] sm:$0xff]
      %v1171 = vld [vmem:[%s214 + $0xea] sm:$0xff]
      %v1172 = vld [vmem:[%s214 + $0xf2] sm:$0xff]
      %v1173 = vld [vmem:[%s214 + $0xfa] sm:$0xff]
      %v1174 = vld [vmem:[%s214 + $0x102] sm:$0xff]
      %v1175 = vld [vmem:[%s214 + $0x10a] sm:$0xff]
      %v1176 = vld [vmem:[%s214 + $0x112] sm:$0xff]
      %v1177 = vld [vmem:[%s214 + $0x11a] sm:$0xff]
      %v1178 = vld [vmem:[%s214 + $0x122] sm:$0xff]
      %v1179 = vld [vmem:[%s214 + $0x12a] sm:$0xff]
      %v1180 = vpack.c.bf16 %v1145, %v1144
      %v1181 = vpack.c.bf16 %v1147, %v1146
      %v1182 = vpack.c.bf16 %v1149, %v1148
      %v1183 = vpack.c.bf16 %v1151, %v1150
      %v1184 = vpack.c.bf16 %v1153, %v1152
      %v1185 = vpack.c.bf16 %v1155, %v1154
      %v1186 = vpack.c.bf16 %v1157, %v1156
      %v1187 = vpack.c.bf16 %v1159, %v1158
      %v1188 = vpack.c.bf16 %v1161, %v1160
      %v1189 = vpack.c.bf16 %v1163, %v1162
      %v1190 = vpack.c.bf16 %v1165, %v1164
      %v1191 = vpack.c.bf16 %v1167, %v1166
      %v1192 = vpack.c.bf16 %v1169, %v1168
      %v1193 = vpack.c.bf16 %v1171, %v1170
      %v1194 = vpack.c.bf16 %v1173, %v1172
      %v1195 = vpack.c.bf16 %v1175, %v1174
      %v1196 = vpack.c.bf16 %v1177, %v1176
      %v1197 = vpack.c.bf16 %v1179, %v1178
      %s1198 = scalar_lea.vmem %s1, 192
      %v1199 = vld [vmem:[%s1198] sm:$0xf]
      %v1200 = vld [vmem:[%s1198 + $0x4] sm:$0xf]
      %v1201 = vld [vmem:[%s1198 + $0x8] sm:$0xf]
      %v1202 = vld [vmem:[%s1198 + $0xc] sm:$0xf]
      %v1203 = vld [vmem:[%s1198 + $0x10] sm:$0xf]
      %v1204 = vld [vmem:[%s1198 + $0x14] sm:$0xf]
      %v1205 = vld [vmem:[%s1198 + $0x18] sm:$0xf]
      %v1206 = vld [vmem:[%s1198 + $0x1c] sm:$0xf]
      %v1207 = vld [vmem:[%s1198 + $0x20] sm:$0xf]
      %v1208 = vld [vmem:[%s1198 + $0x24] sm:$0xf]
      %v1209 = vld [vmem:[%s1198 + $0x28] sm:$0xf]
      %v1210 = vld [vmem:[%s1198 + $0x2c] sm:$0xf]
      %v1211 = vld [vmem:[%s1198 + $0x30] sm:$0xf]
      %v1212 = vld [vmem:[%s1198 + $0x34] sm:$0xf]
      %v1213 = vld [vmem:[%s1198 + $0x38] sm:$0xf]
      %v1214 = vld [vmem:[%s1198 + $0x3c] sm:$0xf]
      %v1231 = vunpack.c.l.b16 %v1199
      %v1232 = vunpack.c.l.b16 %v1200
      %v1233 = vunpack.c.l.b16 %v1201
      %v1234 = vunpack.c.l.b16 %v1202
      %v1235 = vunpack.c.l.b16 %v1203
      %v1236 = vunpack.c.l.b16 %v1204
      %v1237 = vunpack.c.l.b16 %v1205
      %v1238 = vunpack.c.l.b16 %v1206
      %v1239 = vunpack.c.l.b16 %v1207
      %v1240 = vunpack.c.l.b16 %v1208
      %v1241 = vunpack.c.l.b16 %v1209
      %v1242 = vunpack.c.l.b16 %v1210
      %v1243 = vunpack.c.l.b16 %v1211
      %v1244 = vunpack.c.l.b16 %v1212
      %v1245 = vunpack.c.l.b16 %v1213
      %v1246 = vunpack.c.l.b16 %v1214
      %v1247 = vpack.c.b16 %v1232, %v1231
      %v1248 = vpack.c.b16 %v1234, %v1233
      %v1249 = vpack.c.b16 %v1236, %v1235
      %v1250 = vpack.c.b16 %v1238, %v1237
      %v1251 = vpack.c.b16 %v1240, %v1239
      %v1252 = vpack.c.b16 %v1242, %v1241
      %v1253 = vpack.c.b16 %v1244, %v1243
      %v1254 = vpack.c.b16 %v1246, %v1245
      %1263 = vmatprep.subr.bf16.mxu0 0
      %1264 = vmatpush1.bf16.msra.mxu0 %v1254
      %1265 = vmatprep.subr.bf16.mxu0 0
      %1266 = vmatpush1.bf16.msra.mxu0 %v1253
      %1267 = vmatprep.subr.bf16.mxu0 0
      %1268 = vmatpush1.bf16.msra.mxu0 %v1252
      %1269 = vmatprep.subr.bf16.mxu0 0
      %1270 = vmatpush1.bf16.msra.mxu0 %v1251
      %1271 = vmatprep.subr.bf16.mxu0 0
      %1272 = vmatpush1.bf16.msra.mxu0 %v1250
      %1273 = vmatprep.subr.bf16.mxu0 0
      %1274 = vmatpush1.bf16.msra.mxu0 %v1249
      %1275 = vmatprep.subr.bf16.mxu0 0
      %1276 = vmatpush1.bf16.msra.mxu0 %v1248
      %1277 = vmatprep.subr.bf16.mxu0 0
      %1278 = vmatpush1.bf16.msra.mxu0 %v1247
      %1279 = vmatprep.subr.bf16.mxu0 0
      %1280 = vmatpush2.bf16.msra.mxu0 0
      %1281 = vmatprep.subr.bf16.mxu0 0
      %1282 = vmatpush2.bf16.msra.mxu0 0
      %1283 = vmatprep.subr.bf16.mxu0 0
      %1284 = vmatpush2.bf16.msra.mxu0 0
      %1285 = vmatprep.subr.bf16.mxu0 0
      %1286 = vmatpush2.bf16.msra.mxu0 0
      %1287 = vmatprep.subr.bf16.mxu0 0
      %1288 = vmatpush2.bf16.msra.mxu0 0
      %1289 = vmatprep.subr.bf16.mxu0 0
      %1290 = vmatpush2.bf16.msra.mxu0 0
      %1291 = vmatprep.subr.bf16.mxu0 0
      %1292 = vmatpush2.bf16.msra.mxu0 0
      %1293 = vmatprep.subr.bf16.mxu0 0
      %1294 = vmatpush2.bf16.msra.mxu0 0
      %1295 = vmatprep.mubr.bf16.mxu0 0
      %1296 = vmatmul.mubr.bf16.gmra.mxu0 %v1180
      %v1297 = vpop.f32.mrf.mxu0
      %v1298 = vadd.f32 0.0, %v1297
      %v1299 = vpop.f32.mrf.mxu0
      %v1300 = vpop.f32.mrf.mxu0
      %v1301 = vadd.f32 0.0, %v1300
      %v1302 = vpop.f32.mrf.mxu0
      %1303 = vmatprep.mubr.bf16.mxu0 0
      %1304 = vmatmul.mubr.bf16.gmra.mxu0 %v1181
      %v1305 = vpop.f32.mrf.mxu0
      %v1306 = vadd.f32 0.0, %v1305
      %v1307 = vpop.f32.mrf.mxu0
      %v1308 = vpop.f32.mrf.mxu0
      %v1309 = vadd.f32 0.0, %v1308
      %v1310 = vpop.f32.mrf.mxu0
      %1311 = vmatprep.mubr.bf16.mxu0 0
      %1312 = vmatmul.mubr.bf16.gmra.mxu0 %v1182
      %v1313 = vpop.f32.mrf.mxu0
      %v1314 = vadd.f32 0.0, %v1313
      %v1315 = vpop.f32.mrf.mxu0
      %v1316 = vpop.f32.mrf.mxu0
      %v1317 = vadd.f32 0.0, %v1316
      %v1318 = vpop.f32.mrf.mxu0
      %1319 = vmatprep.mubr.bf16.mxu0 0
      %1320 = vmatmul.mubr.bf16.gmra.mxu0 %v1183
      %v1321 = vpop.f32.mrf.mxu0
      %v1322 = vadd.f32 0.0, %v1321
      %v1323 = vpop.f32.mrf.mxu0
      %v1324 = vpop.f32.mrf.mxu0
      %v1325 = vadd.f32 0.0, %v1324
      %v1326 = vpop.f32.mrf.mxu0
      %1327 = vmatprep.mubr.bf16.mxu0 0
      %1328 = vmatmul.mubr.bf16.gmra.mxu0 %v1184
      %v1329 = vpop.f32.mrf.mxu0
      %v1330 = vadd.f32 0.0, %v1329
      %v1331 = vpop.f32.mrf.mxu0
      %v1332 = vpop.f32.mrf.mxu0
      %v1333 = vadd.f32 0.0, %v1332
      %v1334 = vpop.f32.mrf.mxu0
      %1335 = vmatprep.mubr.bf16.mxu0 0
      %1336 = vmatmul.mubr.bf16.gmra.mxu0 %v1185
      %v1337 = vpop.f32.mrf.mxu0
      %v1338 = vadd.f32 0.0, %v1337
      %v1339 = vpop.f32.mrf.mxu0
      %v1340 = vpop.f32.mrf.mxu0
      %v1341 = vadd.f32 0.0, %v1340
      %v1342 = vpop.f32.mrf.mxu0
      %1343 = vmatprep.mubr.bf16.mxu0 0
      %1344 = vmatmul.mubr.bf16.gmra.mxu0 %v1186
      %v1345 = vpop.f32.mrf.mxu0
      %v1346 = vadd.f32 0.0, %v1345
      %v1347 = vpop.f32.mrf.mxu0
      %v1348 = vpop.f32.mrf.mxu0
      %v1349 = vadd.f32 0.0, %v1348
      %v1350 = vpop.f32.mrf.mxu0
      %1351 = vmatprep.mubr.bf16.mxu0 0
      %1352 = vmatmul.mubr.bf16.gmra.mxu0 %v1187
      %v1353 = vpop.f32.mrf.mxu0
      %v1354 = vadd.f32 0.0, %v1353
      %v1355 = vpop.f32.mrf.mxu0
      %v1356 = vpop.f32.mrf.mxu0
      %v1357 = vadd.f32 0.0, %v1356
      %v1358 = vpop.f32.mrf.mxu0
      %1359 = vmatprep.mubr.bf16.mxu0 0
      %1360 = vmatmul.mubr.bf16.gmra.mxu0 %v1188
      %v1361 = vpop.f32.mrf.mxu0
      %v1362 = vadd.f32 0.0, %v1361
      %v1363 = vpop.f32.mrf.mxu0
      %v1364 = vpop.f32.mrf.mxu0
      %v1365 = vadd.f32 0.0, %v1364
      %v1366 = vpop.f32.mrf.mxu0
      %1367 = vmatprep.mubr.bf16.mxu0 0
      %1368 = vmatmul.mubr.bf16.gmra.mxu0 %v1189
      %v1369 = vpop.f32.mrf.mxu0
      %v1370 = vadd.f32 0.0, %v1369
      %v1371 = vpop.f32.mrf.mxu0
      %v1372 = vpop.f32.mrf.mxu0
      %v1373 = vadd.f32 0.0, %v1372
      %v1374 = vpop.f32.mrf.mxu0
      %1375 = vmatprep.mubr.bf16.mxu0 0
      %1376 = vmatmul.mubr.bf16.gmra.mxu0 %v1190
      %v1377 = vpop.f32.mrf.mxu0
      %v1378 = vadd.f32 0.0, %v1377
      %v1379 = vpop.f32.mrf.mxu0
      %v1380 = vpop.f32.mrf.mxu0
      %v1381 = vadd.f32 0.0, %v1380
      %v1382 = vpop.f32.mrf.mxu0
      %1383 = vmatprep.mubr.bf16.mxu0 0
      %1384 = vmatmul.mubr.bf16.gmra.mxu0 %v1191
      %v1385 = vpop.f32.mrf.mxu0
      %v1386 = vadd.f32 0.0, %v1385
      %v1387 = vpop.f32.mrf.mxu0
      %v1388 = vpop.f32.mrf.mxu0
      %v1389 = vadd.f32 0.0, %v1388
      %v1390 = vpop.f32.mrf.mxu0
      %1391 = vmatprep.mubr.bf16.mxu0 0
      %1392 = vmatmul.mubr.bf16.gmra.mxu0 %v1192
      %v1393 = vpop.f32.mrf.mxu0
      %v1394 = vadd.f32 0.0, %v1393
      %v1395 = vpop.f32.mrf.mxu0
      %v1396 = vpop.f32.mrf.mxu0
      %v1397 = vadd.f32 0.0, %v1396
      %v1398 = vpop.f32.mrf.mxu0
      %1399 = vmatprep.mubr.bf16.mxu0 0
      %1400 = vmatmul.mubr.bf16.gmra.mxu0 %v1193
      %v1401 = vpop.f32.mrf.mxu0
      %v1402 = vadd.f32 0.0, %v1401
      %v1403 = vpop.f32.mrf.mxu0
      %v1404 = vpop.f32.mrf.mxu0
      %v1405 = vadd.f32 0.0, %v1404
      %v1406 = vpop.f32.mrf.mxu0
      %1407 = vmatprep.mubr.bf16.mxu0 0
      %1408 = vmatmul.mubr.bf16.gmra.mxu0 %v1194
      %v1409 = vpop.f32.mrf.mxu0
      %v1410 = vadd.f32 0.0, %v1409
      %v1411 = vpop.f32.mrf.mxu0
      %v1412 = vpop.f32.mrf.mxu0
      %v1413 = vadd.f32 0.0, %v1412
      %v1414 = vpop.f32.mrf.mxu0
      %1415 = vmatprep.mubr.bf16.mxu0 0
      %1416 = vmatmul.mubr.bf16.gmra.mxu0 %v1195
      %v1417 = vpop.f32.mrf.mxu0
      %v1418 = vadd.f32 0.0, %v1417
      %v1419 = vpop.f32.mrf.mxu0
      %v1420 = vpop.f32.mrf.mxu0
      %v1421 = vadd.f32 0.0, %v1420
      %v1422 = vpop.f32.mrf.mxu0
      %1423 = vmatprep.mubr.bf16.mxu0 0
      %1424 = vmatmul.mubr.bf16.gmra.mxu0 %v1196
      %v1425 = vpop.f32.mrf.mxu0
      %v1426 = vadd.f32 0.0, %v1425
      %v1427 = vpop.f32.mrf.mxu0
      %v1428 = vpop.f32.mrf.mxu0
      %v1429 = vadd.f32 0.0, %v1428
      %v1430 = vpop.f32.mrf.mxu0
      %1431 = vmatprep.mubr.bf16.mxu0 0
      %1432 = vmatmul.mubr.bf16.gmra.mxu0 %v1197
      %v1433 = vpop.f32.mrf.mxu0
      %v1434 = vadd.f32 0.0, %v1433
      %v1435 = vpop.f32.mrf.mxu0
      %v1436 = vpop.f32.mrf.mxu0
      %v1437 = vadd.f32 0.0, %v1436
      %v1438 = vpop.f32.mrf.mxu0
      %1439 = vdwg.mxu0
      %v1440 = vadd.f32 %v1108, %v1298
      %v1441 = vadd.f32 %v1109, %v1301
      %v1442 = vadd.f32 %v1110, %v1306
      %v1443 = vadd.f32 %v1111, %v1309
      %v1444 = vadd.f32 %v1112, %v1314
      %v1445 = vadd.f32 %v1113, %v1317
      %v1446 = vadd.f32 %v1114, %v1322
      %v1447 = vadd.f32 %v1115, %v1325
      %v1448 = vadd.f32 %v1116, %v1330
      %v1449 = vadd.f32 %v1117, %v1333
      %v1450 = vadd.f32 %v1118, %v1338
      %v1451 = vadd.f32 %v1119, %v1341
      %v1452 = vadd.f32 %v1120, %v1346
      %v1453 = vadd.f32 %v1121, %v1349
      %v1454 = vadd.f32 %v1122, %v1354
      %v1455 = vadd.f32 %v1123, %v1357
      %v1456 = vadd.f32 %v1124, %v1362
      %v1457 = vadd.f32 %v1125, %v1365
      %v1458 = vadd.f32 %v1126, %v1370
      %v1459 = vadd.f32 %v1127, %v1373
      %v1460 = vadd.f32 %v1128, %v1378
      %v1461 = vadd.f32 %v1129, %v1381
      %v1462 = vadd.f32 %v1130, %v1386
      %v1463 = vadd.f32 %v1131, %v1389
      %v1464 = vadd.f32 %v1132, %v1394
      %v1465 = vadd.f32 %v1133, %v1397
      %v1466 = vadd.f32 %v1134, %v1402
      %v1467 = vadd.f32 %v1135, %v1405
      %v1468 = vadd.f32 %v1136, %v1410
      %v1469 = vadd.f32 %v1137, %v1413
      %v1470 = vadd.f32 %v1138, %v1418
      %v1471 = vadd.f32 %v1139, %v1421
      %v1472 = vadd.f32 %v1140, %v1426
      %v1473 = vadd.f32 %v1141, %v1429
      %v1474 = vadd.f32 %v1142, %v1434
      %v1475 = vadd.f32 %v1143, %v1437
      %v1476 = vld [vmem:[%s214 + $0x13] sm:$0xff]
      %v1477 = vld [vmem:[%s214 + $0x1b] sm:$0xff]
      %v1478 = vld [vmem:[%s214 + $0x23] sm:$0xff]
      %v1479 = vld [vmem:[%s214 + $0x2b] sm:$0xff]
      %v1480 = vld [vmem:[%s214 + $0x33] sm:$0xff]
      %v1481 = vld [vmem:[%s214 + $0x3b] sm:$0xff]
      %v1482 = vld [vmem:[%s214 + $0x43] sm:$0xff]
      %v1483 = vld [vmem:[%s214 + $0x4b] sm:$0xff]
      %v1484 = vld [vmem:[%s214 + $0x53] sm:$0xff]
      %v1485 = vld [vmem:[%s214 + $0x5b] sm:$0xff]
      %v1486 = vld [vmem:[%s214 + $0x63] sm:$0xff]
      %v1487 = vld [vmem:[%s214 + $0x6b] sm:$0xff]
      %v1488 = vld [vmem:[%s214 + $0x73] sm:$0xff]
      %v1489 = vld [vmem:[%s214 + $0x7b] sm:$0xff]
      %v1490 = vld [vmem:[%s214 + $0x83] sm:$0xff]
      %v1491 = vld [vmem:[%s214 + $0x8b] sm:$0xff]
      %v1492 = vld [vmem:[%s214 + $0x93] sm:$0xff]
      %v1493 = vld [vmem:[%s214 + $0x9b] sm:$0xff]
      %v1494 = vld [vmem:[%s214 + $0xa3] sm:$0xff]
      %v1495 = vld [vmem:[%s214 + $0xab] sm:$0xff]
      %v1496 = vld [vmem:[%s214 + $0xb3] sm:$0xff]
      %v1497 = vld [vmem:[%s214 + $0xbb] sm:$0xff]
      %v1498 = vld [vmem:[%s214 + $0xc3] sm:$0xff]
      %v1499 = vld [vmem:[%s214 + $0xcb] sm:$0xff]
      %v1500 = vld [vmem:[%s214 + $0xd3] sm:$0xff]
      %v1501 = vld [vmem:[%s214 + $0xdb] sm:$0xff]
      %v1502 = vld [vmem:[%s214 + $0xe3] sm:$0xff]
      %v1503 = vld [vmem:[%s214 + $0xeb] sm:$0xff]
      %v1504 = vld [vmem:[%s214 + $0xf3] sm:$0xff]
      %v1505 = vld [vmem:[%s214 + $0xfb] sm:$0xff]
      %v1506 = vld [vmem:[%s214 + $0x103] sm:$0xff]
      %v1507 = vld [vmem:[%s214 + $0x10b] sm:$0xff]
      %v1508 = vld [vmem:[%s214 + $0x113] sm:$0xff]
      %v1509 = vld [vmem:[%s214 + $0x11b] sm:$0xff]
      %v1510 = vld [vmem:[%s214 + $0x123] sm:$0xff]
      %v1511 = vld [vmem:[%s214 + $0x12b] sm:$0xff]
      %v1512 = vpack.c.bf16 %v1477, %v1476
      %v1513 = vpack.c.bf16 %v1479, %v1478
      %v1514 = vpack.c.bf16 %v1481, %v1480
      %v1515 = vpack.c.bf16 %v1483, %v1482
      %v1516 = vpack.c.bf16 %v1485, %v1484
      %v1517 = vpack.c.bf16 %v1487, %v1486
      %v1518 = vpack.c.bf16 %v1489, %v1488
      %v1519 = vpack.c.bf16 %v1491, %v1490
      %v1520 = vpack.c.bf16 %v1493, %v1492
      %v1521 = vpack.c.bf16 %v1495, %v1494
      %v1522 = vpack.c.bf16 %v1497, %v1496
      %v1523 = vpack.c.bf16 %v1499, %v1498
      %v1524 = vpack.c.bf16 %v1501, %v1500
      %v1525 = vpack.c.bf16 %v1503, %v1502
      %v1526 = vpack.c.bf16 %v1505, %v1504
      %v1527 = vpack.c.bf16 %v1507, %v1506
      %v1528 = vpack.c.bf16 %v1509, %v1508
      %v1529 = vpack.c.bf16 %v1511, %v1510
      %s1530 = scalar_lea.vmem %s1, 256
      %v1531 = vld [vmem:[%s1530] sm:$0xf]
      %v1532 = vld [vmem:[%s1530 + $0x4] sm:$0xf]
      %v1533 = vld [vmem:[%s1530 + $0x8] sm:$0xf]
      %v1534 = vld [vmem:[%s1530 + $0xc] sm:$0xf]
      %v1535 = vld [vmem:[%s1530 + $0x10] sm:$0xf]
      %v1536 = vld [vmem:[%s1530 + $0x14] sm:$0xf]
      %v1537 = vld [vmem:[%s1530 + $0x18] sm:$0xf]
      %v1538 = vld [vmem:[%s1530 + $0x1c] sm:$0xf]
      %v1539 = vld [vmem:[%s1530 + $0x20] sm:$0xf]
      %v1540 = vld [vmem:[%s1530 + $0x24] sm:$0xf]
      %v1541 = vld [vmem:[%s1530 + $0x28] sm:$0xf]
      %v1542 = vld [vmem:[%s1530 + $0x2c] sm:$0xf]
      %v1543 = vld [vmem:[%s1530 + $0x30] sm:$0xf]
      %v1544 = vld [vmem:[%s1530 + $0x34] sm:$0xf]
      %v1545 = vld [vmem:[%s1530 + $0x38] sm:$0xf]
      %v1546 = vld [vmem:[%s1530 + $0x3c] sm:$0xf]
      %v1563 = vunpack.c.l.b16 %v1531
      %v1564 = vunpack.c.l.b16 %v1532
      %v1565 = vunpack.c.l.b16 %v1533
      %v1566 = vunpack.c.l.b16 %v1534
      %v1567 = vunpack.c.l.b16 %v1535
      %v1568 = vunpack.c.l.b16 %v1536
      %v1569 = vunpack.c.l.b16 %v1537
      %v1570 = vunpack.c.l.b16 %v1538
      %v1571 = vunpack.c.l.b16 %v1539
      %v1572 = vunpack.c.l.b16 %v1540
      %v1573 = vunpack.c.l.b16 %v1541
      %v1574 = vunpack.c.l.b16 %v1542
      %v1575 = vunpack.c.l.b16 %v1543
      %v1576 = vunpack.c.l.b16 %v1544
      %v1577 = vunpack.c.l.b16 %v1545
      %v1578 = vunpack.c.l.b16 %v1546
      %v1579 = vpack.c.b16 %v1564, %v1563
      %v1580 = vpack.c.b16 %v1566, %v1565
      %v1581 = vpack.c.b16 %v1568, %v1567
      %v1582 = vpack.c.b16 %v1570, %v1569
      %v1583 = vpack.c.b16 %v1572, %v1571
      %v1584 = vpack.c.b16 %v1574, %v1573
      %v1585 = vpack.c.b16 %v1576, %v1575
      %v1586 = vpack.c.b16 %v1578, %v1577
      %1595 = vmatprep.subr.bf16.mxu0 0
      %1596 = vmatpush1.bf16.msra.mxu0 %v1586
      %1597 = vmatprep.subr.bf16.mxu0 0
      %1598 = vmatpush1.bf16.msra.mxu0 %v1585
      %1599 = vmatprep.subr.bf16.mxu0 0
      %1600 = vmatpush1.bf16.msra.mxu0 %v1584
      %1601 = vmatprep.subr.bf16.mxu0 0
      %1602 = vmatpush1.bf16.msra.mxu0 %v1583
      %1603 = vmatprep.subr.bf16.mxu0 0
      %1604 = vmatpush1.bf16.msra.mxu0 %v1582
      %1605 = vmatprep.subr.bf16.mxu0 0
      %1606 = vmatpush1.bf16.msra.mxu0 %v1581
      %1607 = vmatprep.subr.bf16.mxu0 0
      %1608 = vmatpush1.bf16.msra.mxu0 %v1580
      %1609 = vmatprep.subr.bf16.mxu0 0
      %1610 = vmatpush1.bf16.msra.mxu0 %v1579
      %1611 = vmatprep.subr.bf16.mxu0 0
      %1612 = vmatpush2.bf16.msra.mxu0 0
      %1613 = vmatprep.subr.bf16.mxu0 0
      %1614 = vmatpush2.bf16.msra.mxu0 0
      %1615 = vmatprep.subr.bf16.mxu0 0
      %1616 = vmatpush2.bf16.msra.mxu0 0
      %1617 = vmatprep.subr.bf16.mxu0 0
      %1618 = vmatpush2.bf16.msra.mxu0 0
      %1619 = vmatprep.subr.bf16.mxu0 0
      %1620 = vmatpush2.bf16.msra.mxu0 0
      %1621 = vmatprep.subr.bf16.mxu0 0
      %1622 = vmatpush2.bf16.msra.mxu0 0
      %1623 = vmatprep.subr.bf16.mxu0 0
      %1624 = vmatpush2.bf16.msra.mxu0 0
      %1625 = vmatprep.subr.bf16.mxu0 0
      %1626 = vmatpush2.bf16.msra.mxu0 0
      %1627 = vmatprep.mubr.bf16.mxu0 0
      %1628 = vmatmul.mubr.bf16.gmra.mxu0 %v1512
      %v1629 = vpop.f32.mrf.mxu0
      %v1630 = vadd.f32 0.0, %v1629
      %v1631 = vpop.f32.mrf.mxu0
      %v1632 = vpop.f32.mrf.mxu0
      %v1633 = vadd.f32 0.0, %v1632
      %v1634 = vpop.f32.mrf.mxu0
      %1635 = vmatprep.mubr.bf16.mxu0 0
      %1636 = vmatmul.mubr.bf16.gmra.mxu0 %v1513
      %v1637 = vpop.f32.mrf.mxu0
      %v1638 = vadd.f32 0.0, %v1637
      %v1639 = vpop.f32.mrf.mxu0
      %v1640 = vpop.f32.mrf.mxu0
      %v1641 = vadd.f32 0.0, %v1640
      %v1642 = vpop.f32.mrf.mxu0
      %1643 = vmatprep.mubr.bf16.mxu0 0
      %1644 = vmatmul.mubr.bf16.gmra.mxu0 %v1514
      %v1645 = vpop.f32.mrf.mxu0
      %v1646 = vadd.f32 0.0, %v1645
      %v1647 = vpop.f32.mrf.mxu0
      %v1648 = vpop.f32.mrf.mxu0
      %v1649 = vadd.f32 0.0, %v1648
      %v1650 = vpop.f32.mrf.mxu0
      %1651 = vmatprep.mubr.bf16.mxu0 0
      %1652 = vmatmul.mubr.bf16.gmra.mxu0 %v1515
      %v1653 = vpop.f32.mrf.mxu0
      %v1654 = vadd.f32 0.0, %v1653
      %v1655 = vpop.f32.mrf.mxu0
      %v1656 = vpop.f32.mrf.mxu0
      %v1657 = vadd.f32 0.0, %v1656
      %v1658 = vpop.f32.mrf.mxu0
      %1659 = vmatprep.mubr.bf16.mxu0 0
      %1660 = vmatmul.mubr.bf16.gmra.mxu0 %v1516
      %v1661 = vpop.f32.mrf.mxu0
      %v1662 = vadd.f32 0.0, %v1661
      %v1663 = vpop.f32.mrf.mxu0
      %v1664 = vpop.f32.mrf.mxu0
      %v1665 = vadd.f32 0.0, %v1664
      %v1666 = vpop.f32.mrf.mxu0
      %1667 = vmatprep.mubr.bf16.mxu0 0
      %1668 = vmatmul.mubr.bf16.gmra.mxu0 %v1517
      %v1669 = vpop.f32.mrf.mxu0
      %v1670 = vadd.f32 0.0, %v1669
      %v1671 = vpop.f32.mrf.mxu0
      %v1672 = vpop.f32.mrf.mxu0
      %v1673 = vadd.f32 0.0, %v1672
      %v1674 = vpop.f32.mrf.mxu0
      %1675 = vmatprep.mubr.bf16.mxu0 0
      %1676 = vmatmul.mubr.bf16.gmra.mxu0 %v1518
      %v1677 = vpop.f32.mrf.mxu0
      %v1678 = vadd.f32 0.0, %v1677
      %v1679 = vpop.f32.mrf.mxu0
      %v1680 = vpop.f32.mrf.mxu0
      %v1681 = vadd.f32 0.0, %v1680
      %v1682 = vpop.f32.mrf.mxu0
      %1683 = vmatprep.mubr.bf16.mxu0 0
      %1684 = vmatmul.mubr.bf16.gmra.mxu0 %v1519
      %v1685 = vpop.f32.mrf.mxu0
      %v1686 = vadd.f32 0.0, %v1685
      %v1687 = vpop.f32.mrf.mxu0
      %v1688 = vpop.f32.mrf.mxu0
      %v1689 = vadd.f32 0.0, %v1688
      %v1690 = vpop.f32.mrf.mxu0
      %1691 = vmatprep.mubr.bf16.mxu0 0
      %1692 = vmatmul.mubr.bf16.gmra.mxu0 %v1520
      %v1693 = vpop.f32.mrf.mxu0
      %v1694 = vadd.f32 0.0, %v1693
      %v1695 = vpop.f32.mrf.mxu0
      %v1696 = vpop.f32.mrf.mxu0
      %v1697 = vadd.f32 0.0, %v1696
      %v1698 = vpop.f32.mrf.mxu0
      %1699 = vmatprep.mubr.bf16.mxu0 0
      %1700 = vmatmul.mubr.bf16.gmra.mxu0 %v1521
      %v1701 = vpop.f32.mrf.mxu0
      %v1702 = vadd.f32 0.0, %v1701
      %v1703 = vpop.f32.mrf.mxu0
      %v1704 = vpop.f32.mrf.mxu0
      %v1705 = vadd.f32 0.0, %v1704
      %v1706 = vpop.f32.mrf.mxu0
      %1707 = vmatprep.mubr.bf16.mxu0 0
      %1708 = vmatmul.mubr.bf16.gmra.mxu0 %v1522
      %v1709 = vpop.f32.mrf.mxu0
      %v1710 = vadd.f32 0.0, %v1709
      %v1711 = vpop.f32.mrf.mxu0
      %v1712 = vpop.f32.mrf.mxu0
      %v1713 = vadd.f32 0.0, %v1712
      %v1714 = vpop.f32.mrf.mxu0
      %1715 = vmatprep.mubr.bf16.mxu0 0
      %1716 = vmatmul.mubr.bf16.gmra.mxu0 %v1523
      %v1717 = vpop.f32.mrf.mxu0
      %v1718 = vadd.f32 0.0, %v1717
      %v1719 = vpop.f32.mrf.mxu0
      %v1720 = vpop.f32.mrf.mxu0
      %v1721 = vadd.f32 0.0, %v1720
      %v1722 = vpop.f32.mrf.mxu0
      %1723 = vmatprep.mubr.bf16.mxu0 0
      %1724 = vmatmul.mubr.bf16.gmra.mxu0 %v1524
      %v1725 = vpop.f32.mrf.mxu0
      %v1726 = vadd.f32 0.0, %v1725
      %v1727 = vpop.f32.mrf.mxu0
      %v1728 = vpop.f32.mrf.mxu0
      %v1729 = vadd.f32 0.0, %v1728
      %v1730 = vpop.f32.mrf.mxu0
      %1731 = vmatprep.mubr.bf16.mxu0 0
      %1732 = vmatmul.mubr.bf16.gmra.mxu0 %v1525
      %v1733 = vpop.f32.mrf.mxu0
      %v1734 = vadd.f32 0.0, %v1733
      %v1735 = vpop.f32.mrf.mxu0
      %v1736 = vpop.f32.mrf.mxu0
      %v1737 = vadd.f32 0.0, %v1736
      %v1738 = vpop.f32.mrf.mxu0
      %1739 = vmatprep.mubr.bf16.mxu0 0
      %1740 = vmatmul.mubr.bf16.gmra.mxu0 %v1526
      %v1741 = vpop.f32.mrf.mxu0
      %v1742 = vadd.f32 0.0, %v1741
      %v1743 = vpop.f32.mrf.mxu0
      %v1744 = vpop.f32.mrf.mxu0
      %v1745 = vadd.f32 0.0, %v1744
      %v1746 = vpop.f32.mrf.mxu0
      %1747 = vmatprep.mubr.bf16.mxu0 0
      %1748 = vmatmul.mubr.bf16.gmra.mxu0 %v1527
      %v1749 = vpop.f32.mrf.mxu0
      %v1750 = vadd.f32 0.0, %v1749
      %v1751 = vpop.f32.mrf.mxu0
      %v1752 = vpop.f32.mrf.mxu0
      %v1753 = vadd.f32 0.0, %v1752
      %v1754 = vpop.f32.mrf.mxu0
      %1755 = vmatprep.mubr.bf16.mxu0 0
      %1756 = vmatmul.mubr.bf16.gmra.mxu0 %v1528
      %v1757 = vpop.f32.mrf.mxu0
      %v1758 = vadd.f32 0.0, %v1757
      %v1759 = vpop.f32.mrf.mxu0
      %v1760 = vpop.f32.mrf.mxu0
      %v1761 = vadd.f32 0.0, %v1760
      %v1762 = vpop.f32.mrf.mxu0
      %1763 = vmatprep.mubr.bf16.mxu0 0
      %1764 = vmatmul.mubr.bf16.gmra.mxu0 %v1529
      %v1765 = vpop.f32.mrf.mxu0
      %v1766 = vadd.f32 0.0, %v1765
      %v1767 = vpop.f32.mrf.mxu0
      %v1768 = vpop.f32.mrf.mxu0
      %v1769 = vadd.f32 0.0, %v1768
      %v1770 = vpop.f32.mrf.mxu0
      %1771 = vdwg.mxu0
      %v1772 = vadd.f32 %v1440, %v1630
      %v1773 = vadd.f32 %v1441, %v1633
      %v1774 = vadd.f32 %v1442, %v1638
      %v1775 = vadd.f32 %v1443, %v1641
      %v1776 = vadd.f32 %v1444, %v1646
      %v1777 = vadd.f32 %v1445, %v1649
      %v1778 = vadd.f32 %v1446, %v1654
      %v1779 = vadd.f32 %v1447, %v1657
      %v1780 = vadd.f32 %v1448, %v1662
      %v1781 = vadd.f32 %v1449, %v1665
      %v1782 = vadd.f32 %v1450, %v1670
      %v1783 = vadd.f32 %v1451, %v1673
      %v1784 = vadd.f32 %v1452, %v1678
      %v1785 = vadd.f32 %v1453, %v1681
      %v1786 = vadd.f32 %v1454, %v1686
      %v1787 = vadd.f32 %v1455, %v1689
      %v1788 = vadd.f32 %v1456, %v1694
      %v1789 = vadd.f32 %v1457, %v1697
      %v1790 = vadd.f32 %v1458, %v1702
      %v1791 = vadd.f32 %v1459, %v1705
      %v1792 = vadd.f32 %v1460, %v1710
      %v1793 = vadd.f32 %v1461, %v1713
      %v1794 = vadd.f32 %v1462, %v1718
      %v1795 = vadd.f32 %v1463, %v1721
      %v1796 = vadd.f32 %v1464, %v1726
      %v1797 = vadd.f32 %v1465, %v1729
      %v1798 = vadd.f32 %v1466, %v1734
      %v1799 = vadd.f32 %v1467, %v1737
      %v1800 = vadd.f32 %v1468, %v1742
      %v1801 = vadd.f32 %v1469, %v1745
      %v1802 = vadd.f32 %v1470, %v1750
      %v1803 = vadd.f32 %v1471, %v1753
      %v1804 = vadd.f32 %v1472, %v1758
      %v1805 = vadd.f32 %v1473, %v1761
      %v1806 = vadd.f32 %v1474, %v1766
      %v1807 = vadd.f32 %v1475, %v1769
      %v1808 = vld [vmem:[%s214 + $0x14] sm:$0xff]
      %v1809 = vld [vmem:[%s214 + $0x1c] sm:$0xff]
      %v1810 = vld [vmem:[%s214 + $0x24] sm:$0xff]
      %v1811 = vld [vmem:[%s214 + $0x2c] sm:$0xff]
      %v1812 = vld [vmem:[%s214 + $0x34] sm:$0xff]
      %v1813 = vld [vmem:[%s214 + $0x3c] sm:$0xff]
      %v1814 = vld [vmem:[%s214 + $0x44] sm:$0xff]
      %v1815 = vld [vmem:[%s214 + $0x4c] sm:$0xff]
      %v1816 = vld [vmem:[%s214 + $0x54] sm:$0xff]
      %v1817 = vld [vmem:[%s214 + $0x5c] sm:$0xff]
      %v1818 = vld [vmem:[%s214 + $0x64] sm:$0xff]
      %v1819 = vld [vmem:[%s214 + $0x6c] sm:$0xff]
      %v1820 = vld [vmem:[%s214 + $0x74] sm:$0xff]
      %v1821 = vld [vmem:[%s214 + $0x7c] sm:$0xff]
      %v1822 = vld [vmem:[%s214 + $0x84] sm:$0xff]
      %v1823 = vld [vmem:[%s214 + $0x8c] sm:$0xff]
      %v1824 = vld [vmem:[%s214 + $0x94] sm:$0xff]
      %v1825 = vld [vmem:[%s214 + $0x9c] sm:$0xff]
      %v1826 = vld [vmem:[%s214 + $0xa4] sm:$0xff]
      %v1827 = vld [vmem:[%s214 + $0xac] sm:$0xff]
      %v1828 = vld [vmem:[%s214 + $0xb4] sm:$0xff]
      %v1829 = vld [vmem:[%s214 + $0xbc] sm:$0xff]
      %v1830 = vld [vmem:[%s214 + $0xc4] sm:$0xff]
      %v1831 = vld [vmem:[%s214 + $0xcc] sm:$0xff]
      %v1832 = vld [vmem:[%s214 + $0xd4] sm:$0xff]
      %v1833 = vld [vmem:[%s214 + $0xdc] sm:$0xff]
      %v1834 = vld [vmem:[%s214 + $0xe4] sm:$0xff]
      %v1835 = vld [vmem:[%s214 + $0xec] sm:$0xff]
      %v1836 = vld [vmem:[%s214 + $0xf4] sm:$0xff]
      %v1837 = vld [vmem:[%s214 + $0xfc] sm:$0xff]
      %v1838 = vld [vmem:[%s214 + $0x104] sm:$0xff]
      %v1839 = vld [vmem:[%s214 + $0x10c] sm:$0xff]
      %v1840 = vld [vmem:[%s214 + $0x114] sm:$0xff]
      %v1841 = vld [vmem:[%s214 + $0x11c] sm:$0xff]
      %v1842 = vld [vmem:[%s214 + $0x124] sm:$0xff]
      %v1843 = vld [vmem:[%s214 + $0x12c] sm:$0xff]
      %v1844 = vpack.c.bf16 %v1809, %v1808
      %v1845 = vpack.c.bf16 %v1811, %v1810
      %v1846 = vpack.c.bf16 %v1813, %v1812
      %v1847 = vpack.c.bf16 %v1815, %v1814
      %v1848 = vpack.c.bf16 %v1817, %v1816
      %v1849 = vpack.c.bf16 %v1819, %v1818
      %v1850 = vpack.c.bf16 %v1821, %v1820
      %v1851 = vpack.c.bf16 %v1823, %v1822
      %v1852 = vpack.c.bf16 %v1825, %v1824
      %v1853 = vpack.c.bf16 %v1827, %v1826
      %v1854 = vpack.c.bf16 %v1829, %v1828
      %v1855 = vpack.c.bf16 %v1831, %v1830
      %v1856 = vpack.c.bf16 %v1833, %v1832
      %v1857 = vpack.c.bf16 %v1835, %v1834
      %v1858 = vpack.c.bf16 %v1837, %v1836
      %v1859 = vpack.c.bf16 %v1839, %v1838
      %v1860 = vpack.c.bf16 %v1841, %v1840
      %v1861 = vpack.c.bf16 %v1843, %v1842
      %s1862 = scalar_lea.vmem %s1, 320
      %v1863 = vld [vmem:[%s1862] sm:$0xf]
      %v1864 = vld [vmem:[%s1862 + $0x4] sm:$0xf]
      %v1865 = vld [vmem:[%s1862 + $0x8] sm:$0xf]
      %v1866 = vld [vmem:[%s1862 + $0xc] sm:$0xf]
      %v1867 = vld [vmem:[%s1862 + $0x10] sm:$0xf]
      %v1868 = vld [vmem:[%s1862 + $0x14] sm:$0xf]
      %v1869 = vld [vmem:[%s1862 + $0x18] sm:$0xf]
      %v1870 = vld [vmem:[%s1862 + $0x1c] sm:$0xf]
      %v1871 = vld [vmem:[%s1862 + $0x20] sm:$0xf]
      %v1872 = vld [vmem:[%s1862 + $0x24] sm:$0xf]
      %v1873 = vld [vmem:[%s1862 + $0x28] sm:$0xf]
      %v1874 = vld [vmem:[%s1862 + $0x2c] sm:$0xf]
      %v1875 = vld [vmem:[%s1862 + $0x30] sm:$0xf]
      %v1876 = vld [vmem:[%s1862 + $0x34] sm:$0xf]
      %v1877 = vld [vmem:[%s1862 + $0x38] sm:$0xf]
      %v1878 = vld [vmem:[%s1862 + $0x3c] sm:$0xf]
      %v1895 = vunpack.c.l.b16 %v1863
      %v1896 = vunpack.c.l.b16 %v1864
      %v1897 = vunpack.c.l.b16 %v1865
      %v1898 = vunpack.c.l.b16 %v1866
      %v1899 = vunpack.c.l.b16 %v1867
      %v1900 = vunpack.c.l.b16 %v1868
      %v1901 = vunpack.c.l.b16 %v1869
      %v1902 = vunpack.c.l.b16 %v1870
      %v1903 = vunpack.c.l.b16 %v1871
      %v1904 = vunpack.c.l.b16 %v1872
      %v1905 = vunpack.c.l.b16 %v1873
      %v1906 = vunpack.c.l.b16 %v1874
      %v1907 = vunpack.c.l.b16 %v1875
      %v1908 = vunpack.c.l.b16 %v1876
      %v1909 = vunpack.c.l.b16 %v1877
      %v1910 = vunpack.c.l.b16 %v1878
      %v1911 = vpack.c.b16 %v1896, %v1895
      %v1912 = vpack.c.b16 %v1898, %v1897
      %v1913 = vpack.c.b16 %v1900, %v1899
      %v1914 = vpack.c.b16 %v1902, %v1901
      %v1915 = vpack.c.b16 %v1904, %v1903
      %v1916 = vpack.c.b16 %v1906, %v1905
      %v1917 = vpack.c.b16 %v1908, %v1907
      %v1918 = vpack.c.b16 %v1910, %v1909
      %1927 = vmatprep.subr.bf16.mxu0 0
      %1928 = vmatpush1.bf16.msra.mxu0 %v1918
      %1929 = vmatprep.subr.bf16.mxu0 0
      %1930 = vmatpush1.bf16.msra.mxu0 %v1917
      %1931 = vmatprep.subr.bf16.mxu0 0
      %1932 = vmatpush1.bf16.msra.mxu0 %v1916
      %1933 = vmatprep.subr.bf16.mxu0 0
      %1934 = vmatpush1.bf16.msra.mxu0 %v1915
      %1935 = vmatprep.subr.bf16.mxu0 0
      %1936 = vmatpush1.bf16.msra.mxu0 %v1914
      %1937 = vmatprep.subr.bf16.mxu0 0
      %1938 = vmatpush1.bf16.msra.mxu0 %v1913
      %1939 = vmatprep.subr.bf16.mxu0 0
      %1940 = vmatpush1.bf16.msra.mxu0 %v1912
      %1941 = vmatprep.subr.bf16.mxu0 0
      %1942 = vmatpush1.bf16.msra.mxu0 %v1911
      %1943 = vmatprep.subr.bf16.mxu0 0
      %1944 = vmatpush2.bf16.msra.mxu0 0
      %1945 = vmatprep.subr.bf16.mxu0 0
      %1946 = vmatpush2.bf16.msra.mxu0 0
      %1947 = vmatprep.subr.bf16.mxu0 0
      %1948 = vmatpush2.bf16.msra.mxu0 0
      %1949 = vmatprep.subr.bf16.mxu0 0
      %1950 = vmatpush2.bf16.msra.mxu0 0
      %1951 = vmatprep.subr.bf16.mxu0 0
      %1952 = vmatpush2.bf16.msra.mxu0 0
      %1953 = vmatprep.subr.bf16.mxu0 0
      %1954 = vmatpush2.bf16.msra.mxu0 0
      %1955 = vmatprep.subr.bf16.mxu0 0
      %1956 = vmatpush2.bf16.msra.mxu0 0
      %1957 = vmatprep.subr.bf16.mxu0 0
      %1958 = vmatpush2.bf16.msra.mxu0 0
      %1959 = vmatprep.mubr.bf16.mxu0 0
      %1960 = vmatmul.mubr.bf16.gmra.mxu0 %v1844
      %v1961 = vpop.f32.mrf.mxu0
      %v1962 = vadd.f32 0.0, %v1961
      %v1963 = vpop.f32.mrf.mxu0
      %v1964 = vpop.f32.mrf.mxu0
      %v1965 = vadd.f32 0.0, %v1964
      %v1966 = vpop.f32.mrf.mxu0
      %1967 = vmatprep.mubr.bf16.mxu0 0
      %1968 = vmatmul.mubr.bf16.gmra.mxu0 %v1845
      %v1969 = vpop.f32.mrf.mxu0
      %v1970 = vadd.f32 0.0, %v1969
      %v1971 = vpop.f32.mrf.mxu0
      %v1972 = vpop.f32.mrf.mxu0
      %v1973 = vadd.f32 0.0, %v1972
      %v1974 = vpop.f32.mrf.mxu0
      %1975 = vmatprep.mubr.bf16.mxu0 0
      %1976 = vmatmul.mubr.bf16.gmra.mxu0 %v1846
      %v1977 = vpop.f32.mrf.mxu0
      %v1978 = vadd.f32 0.0, %v1977
      %v1979 = vpop.f32.mrf.mxu0
      %v1980 = vpop.f32.mrf.mxu0
      %v1981 = vadd.f32 0.0, %v1980
      %v1982 = vpop.f32.mrf.mxu0
      %1983 = vmatprep.mubr.bf16.mxu0 0
      %1984 = vmatmul.mubr.bf16.gmra.mxu0 %v1847
      %v1985 = vpop.f32.mrf.mxu0
      %v1986 = vadd.f32 0.0, %v1985
      %v1987 = vpop.f32.mrf.mxu0
      %v1988 = vpop.f32.mrf.mxu0
      %v1989 = vadd.f32 0.0, %v1988
      %v1990 = vpop.f32.mrf.mxu0
      %1991 = vmatprep.mubr.bf16.mxu0 0
      %1992 = vmatmul.mubr.bf16.gmra.mxu0 %v1848
      %v1993 = vpop.f32.mrf.mxu0
      %v1994 = vadd.f32 0.0, %v1993
      %v1995 = vpop.f32.mrf.mxu0
      %v1996 = vpop.f32.mrf.mxu0
      %v1997 = vadd.f32 0.0, %v1996
      %v1998 = vpop.f32.mrf.mxu0
      %1999 = vmatprep.mubr.bf16.mxu0 0
      %2000 = vmatmul.mubr.bf16.gmra.mxu0 %v1849
      %v2001 = vpop.f32.mrf.mxu0
      %v2002 = vadd.f32 0.0, %v2001
      %v2003 = vpop.f32.mrf.mxu0
      %v2004 = vpop.f32.mrf.mxu0
      %v2005 = vadd.f32 0.0, %v2004
      %v2006 = vpop.f32.mrf.mxu0
      %2007 = vmatprep.mubr.bf16.mxu0 0
      %2008 = vmatmul.mubr.bf16.gmra.mxu0 %v1850
      %v2009 = vpop.f32.mrf.mxu0
      %v2010 = vadd.f32 0.0, %v2009
      %v2011 = vpop.f32.mrf.mxu0
      %v2012 = vpop.f32.mrf.mxu0
      %v2013 = vadd.f32 0.0, %v2012
      %v2014 = vpop.f32.mrf.mxu0
      %2015 = vmatprep.mubr.bf16.mxu0 0
      %2016 = vmatmul.mubr.bf16.gmra.mxu0 %v1851
      %v2017 = vpop.f32.mrf.mxu0
      %v2018 = vadd.f32 0.0, %v2017
      %v2019 = vpop.f32.mrf.mxu0
      %v2020 = vpop.f32.mrf.mxu0
      %v2021 = vadd.f32 0.0, %v2020
      %v2022 = vpop.f32.mrf.mxu0
      %2023 = vmatprep.mubr.bf16.mxu0 0
      %2024 = vmatmul.mubr.bf16.gmra.mxu0 %v1852
      %v2025 = vpop.f32.mrf.mxu0
      %v2026 = vadd.f32 0.0, %v2025
      %v2027 = vpop.f32.mrf.mxu0
      %v2028 = vpop.f32.mrf.mxu0
      %v2029 = vadd.f32 0.0, %v2028
      %v2030 = vpop.f32.mrf.mxu0
      %2031 = vmatprep.mubr.bf16.mxu0 0
      %2032 = vmatmul.mubr.bf16.gmra.mxu0 %v1853
      %v2033 = vpop.f32.mrf.mxu0
      %v2034 = vadd.f32 0.0, %v2033
      %v2035 = vpop.f32.mrf.mxu0
      %v2036 = vpop.f32.mrf.mxu0
      %v2037 = vadd.f32 0.0, %v2036
      %v2038 = vpop.f32.mrf.mxu0
      %2039 = vmatprep.mubr.bf16.mxu0 0
      %2040 = vmatmul.mubr.bf16.gmra.mxu0 %v1854
      %v2041 = vpop.f32.mrf.mxu0
      %v2042 = vadd.f32 0.0, %v2041
      %v2043 = vpop.f32.mrf.mxu0
      %v2044 = vpop.f32.mrf.mxu0
      %v2045 = vadd.f32 0.0, %v2044
      %v2046 = vpop.f32.mrf.mxu0
      %2047 = vmatprep.mubr.bf16.mxu0 0
      %2048 = vmatmul.mubr.bf16.gmra.mxu0 %v1855
      %v2049 = vpop.f32.mrf.mxu0
      %v2050 = vadd.f32 0.0, %v2049
      %v2051 = vpop.f32.mrf.mxu0
      %v2052 = vpop.f32.mrf.mxu0
      %v2053 = vadd.f32 0.0, %v2052
      %v2054 = vpop.f32.mrf.mxu0
      %2055 = vmatprep.mubr.bf16.mxu0 0
      %2056 = vmatmul.mubr.bf16.gmra.mxu0 %v1856
      %v2057 = vpop.f32.mrf.mxu0
      %v2058 = vadd.f32 0.0, %v2057
      %v2059 = vpop.f32.mrf.mxu0
      %v2060 = vpop.f32.mrf.mxu0
      %v2061 = vadd.f32 0.0, %v2060
      %v2062 = vpop.f32.mrf.mxu0
      %2063 = vmatprep.mubr.bf16.mxu0 0
      %2064 = vmatmul.mubr.bf16.gmra.mxu0 %v1857
      %v2065 = vpop.f32.mrf.mxu0
      %v2066 = vadd.f32 0.0, %v2065
      %v2067 = vpop.f32.mrf.mxu0
      %v2068 = vpop.f32.mrf.mxu0
      %v2069 = vadd.f32 0.0, %v2068
      %v2070 = vpop.f32.mrf.mxu0
      %2071 = vmatprep.mubr.bf16.mxu0 0
      %2072 = vmatmul.mubr.bf16.gmra.mxu0 %v1858
      %v2073 = vpop.f32.mrf.mxu0
      %v2074 = vadd.f32 0.0, %v2073
      %v2075 = vpop.f32.mrf.mxu0
      %v2076 = vpop.f32.mrf.mxu0
      %v2077 = vadd.f32 0.0, %v2076
      %v2078 = vpop.f32.mrf.mxu0
      %2079 = vmatprep.mubr.bf16.mxu0 0
      %2080 = vmatmul.mubr.bf16.gmra.mxu0 %v1859
      %v2081 = vpop.f32.mrf.mxu0
      %v2082 = vadd.f32 0.0, %v2081
      %v2083 = vpop.f32.mrf.mxu0
      %v2084 = vpop.f32.mrf.mxu0
      %v2085 = vadd.f32 0.0, %v2084
      %v2086 = vpop.f32.mrf.mxu0
      %2087 = vmatprep.mubr.bf16.mxu0 0
      %2088 = vmatmul.mubr.bf16.gmra.mxu0 %v1860
      %v2089 = vpop.f32.mrf.mxu0
      %v2090 = vadd.f32 0.0, %v2089
      %v2091 = vpop.f32.mrf.mxu0
      %v2092 = vpop.f32.mrf.mxu0
      %v2093 = vadd.f32 0.0, %v2092
      %v2094 = vpop.f32.mrf.mxu0
      %2095 = vmatprep.mubr.bf16.mxu0 0
      %2096 = vmatmul.mubr.bf16.gmra.mxu0 %v1861
      %v2097 = vpop.f32.mrf.mxu0
      %v2098 = vadd.f32 0.0, %v2097
      %v2099 = vpop.f32.mrf.mxu0
      %v2100 = vpop.f32.mrf.mxu0
      %v2101 = vadd.f32 0.0, %v2100
      %v2102 = vpop.f32.mrf.mxu0
      %2103 = vdwg.mxu0
      %v2104 = vadd.f32 %v1772, %v1962
      %v2105 = vadd.f32 %v1773, %v1965
      %v2106 = vadd.f32 %v1774, %v1970
      %v2107 = vadd.f32 %v1775, %v1973
      %v2108 = vadd.f32 %v1776, %v1978
      %v2109 = vadd.f32 %v1777, %v1981
      %v2110 = vadd.f32 %v1778, %v1986
      %v2111 = vadd.f32 %v1779, %v1989
      %v2112 = vadd.f32 %v1780, %v1994
      %v2113 = vadd.f32 %v1781, %v1997
      %v2114 = vadd.f32 %v1782, %v2002
      %v2115 = vadd.f32 %v1783, %v2005
      %v2116 = vadd.f32 %v1784, %v2010
      %v2117 = vadd.f32 %v1785, %v2013
      %v2118 = vadd.f32 %v1786, %v2018
      %v2119 = vadd.f32 %v1787, %v2021
      %v2120 = vadd.f32 %v1788, %v2026
      %v2121 = vadd.f32 %v1789, %v2029
      %v2122 = vadd.f32 %v1790, %v2034
      %v2123 = vadd.f32 %v1791, %v2037
      %v2124 = vadd.f32 %v1792, %v2042
      %v2125 = vadd.f32 %v1793, %v2045
      %v2126 = vadd.f32 %v1794, %v2050
      %v2127 = vadd.f32 %v1795, %v2053
      %v2128 = vadd.f32 %v1796, %v2058
      %v2129 = vadd.f32 %v1797, %v2061
      %v2130 = vadd.f32 %v1798, %v2066
      %v2131 = vadd.f32 %v1799, %v2069
      %v2132 = vadd.f32 %v1800, %v2074
      %v2133 = vadd.f32 %v1801, %v2077
      %v2134 = vadd.f32 %v1802, %v2082
      %v2135 = vadd.f32 %v1803, %v2085
      %v2136 = vadd.f32 %v1804, %v2090
      %v2137 = vadd.f32 %v1805, %v2093
      %v2138 = vadd.f32 %v1806, %v2098
      %v2139 = vadd.f32 %v1807, %v2101
      %v2140 = vld [vmem:[%s214 + $0x24] sm:$0xff]
      %v2141 = vld [vmem:[%s214 + $0x2c] sm:$0xff]
      %v2142 = vld [vmem:[%s214 + $0x34] sm:$0xff]
      %v2143 = vld [vmem:[%s214 + $0x3c] sm:$0xff]
      %v2144 = vld [vmem:[%s214 + $0x44] sm:$0xff]
      %v2145 = vld [vmem:[%s214 + $0x4c] sm:$0xff]
      %v2146 = vld [vmem:[%s214 + $0x54] sm:$0xff]
      %v2147 = vld [vmem:[%s214 + $0x5c] sm:$0xff]
      %v2148 = vld [vmem:[%s214 + $0x64] sm:$0xff]
      %v2149 = vld [vmem:[%s214 + $0x6c] sm:$0xff]
      %v2150 = vld [vmem:[%s214 + $0x74] sm:$0xff]
      %v2151 = vld [vmem:[%s214 + $0x7c] sm:$0xff]
      %v2152 = vld [vmem:[%s214 + $0x84] sm:$0xff]
      %v2153 = vld [vmem:[%s214 + $0x8c] sm:$0xff]
      %v2154 = vld [vmem:[%s214 + $0x94] sm:$0xff]
      %v2155 = vld [vmem:[%s214 + $0x9c] sm:$0xff]
      %v2156 = vld [vmem:[%s214 + $0xa4] sm:$0xff]
      %v2157 = vld [vmem:[%s214 + $0xac] sm:$0xff]
      %v2158 = vld [vmem:[%s214 + $0xb4] sm:$0xff]
      %v2159 = vld [vmem:[%s214 + $0xbc] sm:$0xff]
      %v2160 = vld [vmem:[%s214 + $0xc4] sm:$0xff]
      %v2161 = vld [vmem:[%s214 + $0xcc] sm:$0xff]
      %v2162 = vld [vmem:[%s214 + $0xd4] sm:$0xff]
      %v2163 = vld [vmem:[%s214 + $0xdc] sm:$0xff]
      %v2164 = vld [vmem:[%s214 + $0xe4] sm:$0xff]
      %v2165 = vld [vmem:[%s214 + $0xec] sm:$0xff]
      %v2166 = vld [vmem:[%s214 + $0xf4] sm:$0xff]
      %v2167 = vld [vmem:[%s214 + $0xfc] sm:$0xff]
      %v2168 = vld [vmem:[%s214 + $0x104] sm:$0xff]
      %v2169 = vld [vmem:[%s214 + $0x10c] sm:$0xff]
      %v2170 = vld [vmem:[%s214 + $0x114] sm:$0xff]
      %v2171 = vld [vmem:[%s214 + $0x11c] sm:$0xff]
      %v2172 = vld [vmem:[%s214 + $0x124] sm:$0xff]
      %v2173 = vld [vmem:[%s214 + $0x12c] sm:$0xff]
      %v2174 = vld [vmem:[%s214 + $0x134] sm:$0xff]
      %v2175 = vld [vmem:[%s214 + $0x13c] sm:$0xff]
      %v2176 = vpack.c.bf16 %v2141, %v2140
      %v2177 = vpack.c.bf16 %v2143, %v2142
      %v2178 = vpack.c.bf16 %v2145, %v2144
      %v2179 = vpack.c.bf16 %v2147, %v2146
      %v2180 = vpack.c.bf16 %v2149, %v2148
      %v2181 = vpack.c.bf16 %v2151, %v2150
      %v2182 = vpack.c.bf16 %v2153, %v2152
      %v2183 = vpack.c.bf16 %v2155, %v2154
      %v2184 = vpack.c.bf16 %v2157, %v2156
      %v2185 = vpack.c.bf16 %v2159, %v2158
      %v2186 = vpack.c.bf16 %v2161, %v2160
      %v2187 = vpack.c.bf16 %v2163, %v2162
      %v2188 = vpack.c.bf16 %v2165, %v2164
      %v2189 = vpack.c.bf16 %v2167, %v2166
      %v2190 = vpack.c.bf16 %v2169, %v2168
      %v2191 = vpack.c.bf16 %v2171, %v2170
      %v2192 = vpack.c.bf16 %v2173, %v2172
      %v2193 = vpack.c.bf16 %v2175, %v2174
      %s2194 = scalar_lea.vmem %s1, 384
      %v2195 = vld [vmem:[%s2194] sm:$0xf]
      %v2196 = vld [vmem:[%s2194 + $0x4] sm:$0xf]
      %v2197 = vld [vmem:[%s2194 + $0x8] sm:$0xf]
      %v2198 = vld [vmem:[%s2194 + $0xc] sm:$0xf]
      %v2199 = vld [vmem:[%s2194 + $0x10] sm:$0xf]
      %v2200 = vld [vmem:[%s2194 + $0x14] sm:$0xf]
      %v2201 = vld [vmem:[%s2194 + $0x18] sm:$0xf]
      %v2202 = vld [vmem:[%s2194 + $0x1c] sm:$0xf]
      %v2203 = vld [vmem:[%s2194 + $0x20] sm:$0xf]
      %v2204 = vld [vmem:[%s2194 + $0x24] sm:$0xf]
      %v2205 = vld [vmem:[%s2194 + $0x28] sm:$0xf]
      %v2206 = vld [vmem:[%s2194 + $0x2c] sm:$0xf]
      %v2207 = vld [vmem:[%s2194 + $0x30] sm:$0xf]
      %v2208 = vld [vmem:[%s2194 + $0x34] sm:$0xf]
      %v2209 = vld [vmem:[%s2194 + $0x38] sm:$0xf]
      %v2210 = vld [vmem:[%s2194 + $0x3c] sm:$0xf]
      %v2227 = vunpack.c.l.b16 %v2195
      %v2228 = vunpack.c.l.b16 %v2196
      %v2229 = vunpack.c.l.b16 %v2197
      %v2230 = vunpack.c.l.b16 %v2198
      %v2231 = vunpack.c.l.b16 %v2199
      %v2232 = vunpack.c.l.b16 %v2200
      %v2233 = vunpack.c.l.b16 %v2201
      %v2234 = vunpack.c.l.b16 %v2202
      %v2235 = vunpack.c.l.b16 %v2203
      %v2236 = vunpack.c.l.b16 %v2204
      %v2237 = vunpack.c.l.b16 %v2205
      %v2238 = vunpack.c.l.b16 %v2206
      %v2239 = vunpack.c.l.b16 %v2207
      %v2240 = vunpack.c.l.b16 %v2208
      %v2241 = vunpack.c.l.b16 %v2209
      %v2242 = vunpack.c.l.b16 %v2210
      %v2243 = vpack.c.b16 %v2228, %v2227
      %v2244 = vpack.c.b16 %v2230, %v2229
      %v2245 = vpack.c.b16 %v2232, %v2231
      %v2246 = vpack.c.b16 %v2234, %v2233
      %v2247 = vpack.c.b16 %v2236, %v2235
      %v2248 = vpack.c.b16 %v2238, %v2237
      %v2249 = vpack.c.b16 %v2240, %v2239
      %v2250 = vpack.c.b16 %v2242, %v2241
      %2259 = vmatprep.subr.bf16.mxu0 0
      %2260 = vmatpush1.bf16.msra.mxu0 %v2250
      %2261 = vmatprep.subr.bf16.mxu0 0
      %2262 = vmatpush1.bf16.msra.mxu0 %v2249
      %2263 = vmatprep.subr.bf16.mxu0 0
      %2264 = vmatpush1.bf16.msra.mxu0 %v2248
      %2265 = vmatprep.subr.bf16.mxu0 0
      %2266 = vmatpush1.bf16.msra.mxu0 %v2247
      %2267 = vmatprep.subr.bf16.mxu0 0
      %2268 = vmatpush1.bf16.msra.mxu0 %v2246
      %2269 = vmatprep.subr.bf16.mxu0 0
      %2270 = vmatpush1.bf16.msra.mxu0 %v2245
      %2271 = vmatprep.subr.bf16.mxu0 0
      %2272 = vmatpush1.bf16.msra.mxu0 %v2244
      %2273 = vmatprep.subr.bf16.mxu0 0
      %2274 = vmatpush1.bf16.msra.mxu0 %v2243
      %2275 = vmatprep.subr.bf16.mxu0 0
      %2276 = vmatpush2.bf16.msra.mxu0 0
      %2277 = vmatprep.subr.bf16.mxu0 0
      %2278 = vmatpush2.bf16.msra.mxu0 0
      %2279 = vmatprep.subr.bf16.mxu0 0
      %2280 = vmatpush2.bf16.msra.mxu0 0
      %2281 = vmatprep.subr.bf16.mxu0 0
      %2282 = vmatpush2.bf16.msra.mxu0 0
      %2283 = vmatprep.subr.bf16.mxu0 0
      %2284 = vmatpush2.bf16.msra.mxu0 0
      %2285 = vmatprep.subr.bf16.mxu0 0
      %2286 = vmatpush2.bf16.msra.mxu0 0
      %2287 = vmatprep.subr.bf16.mxu0 0
      %2288 = vmatpush2.bf16.msra.mxu0 0
      %2289 = vmatprep.subr.bf16.mxu0 0
      %2290 = vmatpush2.bf16.msra.mxu0 0
      %2291 = vmatprep.mubr.bf16.mxu0 0
      %2292 = vmatmul.mubr.bf16.gmra.mxu0 %v2176
      %v2293 = vpop.f32.mrf.mxu0
      %v2294 = vadd.f32 0.0, %v2293
      %v2295 = vpop.f32.mrf.mxu0
      %v2296 = vpop.f32.mrf.mxu0
      %v2297 = vadd.f32 0.0, %v2296
      %v2298 = vpop.f32.mrf.mxu0
      %2299 = vmatprep.mubr.bf16.mxu0 0
      %2300 = vmatmul.mubr.bf16.gmra.mxu0 %v2177
      %v2301 = vpop.f32.mrf.mxu0
      %v2302 = vadd.f32 0.0, %v2301
      %v2303 = vpop.f32.mrf.mxu0
      %v2304 = vpop.f32.mrf.mxu0
      %v2305 = vadd.f32 0.0, %v2304
      %v2306 = vpop.f32.mrf.mxu0
      %2307 = vmatprep.mubr.bf16.mxu0 0
      %2308 = vmatmul.mubr.bf16.gmra.mxu0 %v2178
      %v2309 = vpop.f32.mrf.mxu0
      %v2310 = vadd.f32 0.0, %v2309
      %v2311 = vpop.f32.mrf.mxu0
      %v2312 = vpop.f32.mrf.mxu0
      %v2313 = vadd.f32 0.0, %v2312
      %v2314 = vpop.f32.mrf.mxu0
      %2315 = vmatprep.mubr.bf16.mxu0 0
      %2316 = vmatmul.mubr.bf16.gmra.mxu0 %v2179
      %v2317 = vpop.f32.mrf.mxu0
      %v2318 = vadd.f32 0.0, %v2317
      %v2319 = vpop.f32.mrf.mxu0
      %v2320 = vpop.f32.mrf.mxu0
      %v2321 = vadd.f32 0.0, %v2320
      %v2322 = vpop.f32.mrf.mxu0
      %2323 = vmatprep.mubr.bf16.mxu0 0
      %2324 = vmatmul.mubr.bf16.gmra.mxu0 %v2180
      %v2325 = vpop.f32.mrf.mxu0
      %v2326 = vadd.f32 0.0, %v2325
      %v2327 = vpop.f32.mrf.mxu0
      %v2328 = vpop.f32.mrf.mxu0
      %v2329 = vadd.f32 0.0, %v2328
      %v2330 = vpop.f32.mrf.mxu0
      %2331 = vmatprep.mubr.bf16.mxu0 0
      %2332 = vmatmul.mubr.bf16.gmra.mxu0 %v2181
      %v2333 = vpop.f32.mrf.mxu0
      %v2334 = vadd.f32 0.0, %v2333
      %v2335 = vpop.f32.mrf.mxu0
      %v2336 = vpop.f32.mrf.mxu0
      %v2337 = vadd.f32 0.0, %v2336
      %v2338 = vpop.f32.mrf.mxu0
      %2339 = vmatprep.mubr.bf16.mxu0 0
      %2340 = vmatmul.mubr.bf16.gmra.mxu0 %v2182
      %v2341 = vpop.f32.mrf.mxu0
      %v2342 = vadd.f32 0.0, %v2341
      %v2343 = vpop.f32.mrf.mxu0
      %v2344 = vpop.f32.mrf.mxu0
      %v2345 = vadd.f32 0.0, %v2344
      %v2346 = vpop.f32.mrf.mxu0
      %2347 = vmatprep.mubr.bf16.mxu0 0
      %2348 = vmatmul.mubr.bf16.gmra.mxu0 %v2183
      %v2349 = vpop.f32.mrf.mxu0
      %v2350 = vadd.f32 0.0, %v2349
      %v2351 = vpop.f32.mrf.mxu0
      %v2352 = vpop.f32.mrf.mxu0
      %v2353 = vadd.f32 0.0, %v2352
      %v2354 = vpop.f32.mrf.mxu0
      %2355 = vmatprep.mubr.bf16.mxu0 0
      %2356 = vmatmul.mubr.bf16.gmra.mxu0 %v2184
      %v2357 = vpop.f32.mrf.mxu0
      %v2358 = vadd.f32 0.0, %v2357
      %v2359 = vpop.f32.mrf.mxu0
      %v2360 = vpop.f32.mrf.mxu0
      %v2361 = vadd.f32 0.0, %v2360
      %v2362 = vpop.f32.mrf.mxu0
      %2363 = vmatprep.mubr.bf16.mxu0 0
      %2364 = vmatmul.mubr.bf16.gmra.mxu0 %v2185
      %v2365 = vpop.f32.mrf.mxu0
      %v2366 = vadd.f32 0.0, %v2365
      %v2367 = vpop.f32.mrf.mxu0
      %v2368 = vpop.f32.mrf.mxu0
      %v2369 = vadd.f32 0.0, %v2368
      %v2370 = vpop.f32.mrf.mxu0
      %2371 = vmatprep.mubr.bf16.mxu0 0
      %2372 = vmatmul.mubr.bf16.gmra.mxu0 %v2186
      %v2373 = vpop.f32.mrf.mxu0
      %v2374 = vadd.f32 0.0, %v2373
      %v2375 = vpop.f32.mrf.mxu0
      %v2376 = vpop.f32.mrf.mxu0
      %v2377 = vadd.f32 0.0, %v2376
      %v2378 = vpop.f32.mrf.mxu0
      %2379 = vmatprep.mubr.bf16.mxu0 0
      %2380 = vmatmul.mubr.bf16.gmra.mxu0 %v2187
      %v2381 = vpop.f32.mrf.mxu0
      %v2382 = vadd.f32 0.0, %v2381
      %v2383 = vpop.f32.mrf.mxu0
      %v2384 = vpop.f32.mrf.mxu0
      %v2385 = vadd.f32 0.0, %v2384
      %v2386 = vpop.f32.mrf.mxu0
      %2387 = vmatprep.mubr.bf16.mxu0 0
      %2388 = vmatmul.mubr.bf16.gmra.mxu0 %v2188
      %v2389 = vpop.f32.mrf.mxu0
      %v2390 = vadd.f32 0.0, %v2389
      %v2391 = vpop.f32.mrf.mxu0
      %v2392 = vpop.f32.mrf.mxu0
      %v2393 = vadd.f32 0.0, %v2392
      %v2394 = vpop.f32.mrf.mxu0
      %2395 = vmatprep.mubr.bf16.mxu0 0
      %2396 = vmatmul.mubr.bf16.gmra.mxu0 %v2189
      %v2397 = vpop.f32.mrf.mxu0
      %v2398 = vadd.f32 0.0, %v2397
      %v2399 = vpop.f32.mrf.mxu0
      %v2400 = vpop.f32.mrf.mxu0
      %v2401 = vadd.f32 0.0, %v2400
      %v2402 = vpop.f32.mrf.mxu0
      %2403 = vmatprep.mubr.bf16.mxu0 0
      %2404 = vmatmul.mubr.bf16.gmra.mxu0 %v2190
      %v2405 = vpop.f32.mrf.mxu0
      %v2406 = vadd.f32 0.0, %v2405
      %v2407 = vpop.f32.mrf.mxu0
      %v2408 = vpop.f32.mrf.mxu0
      %v2409 = vadd.f32 0.0, %v2408
      %v2410 = vpop.f32.mrf.mxu0
      %2411 = vmatprep.mubr.bf16.mxu0 0
      %2412 = vmatmul.mubr.bf16.gmra.mxu0 %v2191
      %v2413 = vpop.f32.mrf.mxu0
      %v2414 = vadd.f32 0.0, %v2413
      %v2415 = vpop.f32.mrf.mxu0
      %v2416 = vpop.f32.mrf.mxu0
      %v2417 = vadd.f32 0.0, %v2416
      %v2418 = vpop.f32.mrf.mxu0
      %2419 = vmatprep.mubr.bf16.mxu0 0
      %2420 = vmatmul.mubr.bf16.gmra.mxu0 %v2192
      %v2421 = vpop.f32.mrf.mxu0
      %v2422 = vadd.f32 0.0, %v2421
      %v2423 = vpop.f32.mrf.mxu0
      %v2424 = vpop.f32.mrf.mxu0
      %v2425 = vadd.f32 0.0, %v2424
      %v2426 = vpop.f32.mrf.mxu0
      %2427 = vmatprep.mubr.bf16.mxu0 0
      %2428 = vmatmul.mubr.bf16.gmra.mxu0 %v2193
      %v2429 = vpop.f32.mrf.mxu0
      %v2430 = vadd.f32 0.0, %v2429
      %v2431 = vpop.f32.mrf.mxu0
      %v2432 = vpop.f32.mrf.mxu0
      %v2433 = vadd.f32 0.0, %v2432
      %v2434 = vpop.f32.mrf.mxu0
      %2435 = vdwg.mxu0
      %v2436 = vadd.f32 %v2104, %v2294
      %v2437 = vadd.f32 %v2105, %v2297
      %v2438 = vadd.f32 %v2106, %v2302
      %v2439 = vadd.f32 %v2107, %v2305
      %v2440 = vadd.f32 %v2108, %v2310
      %v2441 = vadd.f32 %v2109, %v2313
      %v2442 = vadd.f32 %v2110, %v2318
      %v2443 = vadd.f32 %v2111, %v2321
      %v2444 = vadd.f32 %v2112, %v2326
      %v2445 = vadd.f32 %v2113, %v2329
      %v2446 = vadd.f32 %v2114, %v2334
      %v2447 = vadd.f32 %v2115, %v2337
      %v2448 = vadd.f32 %v2116, %v2342
      %v2449 = vadd.f32 %v2117, %v2345
      %v2450 = vadd.f32 %v2118, %v2350
      %v2451 = vadd.f32 %v2119, %v2353
      %v2452 = vadd.f32 %v2120, %v2358
      %v2453 = vadd.f32 %v2121, %v2361
      %v2454 = vadd.f32 %v2122, %v2366
      %v2455 = vadd.f32 %v2123, %v2369
      %v2456 = vadd.f32 %v2124, %v2374
      %v2457 = vadd.f32 %v2125, %v2377
      %v2458 = vadd.f32 %v2126, %v2382
      %v2459 = vadd.f32 %v2127, %v2385
      %v2460 = vadd.f32 %v2128, %v2390
      %v2461 = vadd.f32 %v2129, %v2393
      %v2462 = vadd.f32 %v2130, %v2398
      %v2463 = vadd.f32 %v2131, %v2401
      %v2464 = vadd.f32 %v2132, %v2406
      %v2465 = vadd.f32 %v2133, %v2409
      %v2466 = vadd.f32 %v2134, %v2414
      %v2467 = vadd.f32 %v2135, %v2417
      %v2468 = vadd.f32 %v2136, %v2422
      %v2469 = vadd.f32 %v2137, %v2425
      %v2470 = vadd.f32 %v2138, %v2430
      %v2471 = vadd.f32 %v2139, %v2433
      %v2472 = vld [vmem:[%s214 + $0x25] sm:$0xff]
      %v2473 = vld [vmem:[%s214 + $0x2d] sm:$0xff]
      %v2474 = vld [vmem:[%s214 + $0x35] sm:$0xff]
      %v2475 = vld [vmem:[%s214 + $0x3d] sm:$0xff]
      %v2476 = vld [vmem:[%s214 + $0x45] sm:$0xff]
      %v2477 = vld [vmem:[%s214 + $0x4d] sm:$0xff]
      %v2478 = vld [vmem:[%s214 + $0x55] sm:$0xff]
      %v2479 = vld [vmem:[%s214 + $0x5d] sm:$0xff]
      %v2480 = vld [vmem:[%s214 + $0x65] sm:$0xff]
      %v2481 = vld [vmem:[%s214 + $0x6d] sm:$0xff]
      %v2482 = vld [vmem:[%s214 + $0x75] sm:$0xff]
      %v2483 = vld [vmem:[%s214 + $0x7d] sm:$0xff]
      %v2484 = vld [vmem:[%s214 + $0x85] sm:$0xff]
      %v2485 = vld [vmem:[%s214 + $0x8d] sm:$0xff]
      %v2486 = vld [vmem:[%s214 + $0x95] sm:$0xff]
      %v2487 = vld [vmem:[%s214 + $0x9d] sm:$0xff]
      %v2488 = vld [vmem:[%s214 + $0xa5] sm:$0xff]
      %v2489 = vld [vmem:[%s214 + $0xad] sm:$0xff]
      %v2490 = vld [vmem:[%s214 + $0xb5] sm:$0xff]
      %v2491 = vld [vmem:[%s214 + $0xbd] sm:$0xff]
      %v2492 = vld [vmem:[%s214 + $0xc5] sm:$0xff]
      %v2493 = vld [vmem:[%s214 + $0xcd] sm:$0xff]
      %v2494 = vld [vmem:[%s214 + $0xd5] sm:$0xff]
      %v2495 = vld [vmem:[%s214 + $0xdd] sm:$0xff]
      %v2496 = vld [vmem:[%s214 + $0xe5] sm:$0xff]
      %v2497 = vld [vmem:[%s214 + $0xed] sm:$0xff]
      %v2498 = vld [vmem:[%s214 + $0xf5] sm:$0xff]
      %v2499 = vld [vmem:[%s214 + $0xfd] sm:$0xff]
      %v2500 = vld [vmem:[%s214 + $0x105] sm:$0xff]
      %v2501 = vld [vmem:[%s214 + $0x10d] sm:$0xff]
      %v2502 = vld [vmem:[%s214 + $0x115] sm:$0xff]
      %v2503 = vld [vmem:[%s214 + $0x11d] sm:$0xff]
      %v2504 = vld [vmem:[%s214 + $0x125] sm:$0xff]
      %v2505 = vld [vmem:[%s214 + $0x12d] sm:$0xff]
      %v2506 = vld [vmem:[%s214 + $0x135] sm:$0xff]
      %v2507 = vld [vmem:[%s214 + $0x13d] sm:$0xff]
      %v2508 = vpack.c.bf16 %v2473, %v2472
      %v2509 = vpack.c.bf16 %v2475, %v2474
      %v2510 = vpack.c.bf16 %v2477, %v2476
      %v2511 = vpack.c.bf16 %v2479, %v2478
      %v2512 = vpack.c.bf16 %v2481, %v2480
      %v2513 = vpack.c.bf16 %v2483, %v2482
      %v2514 = vpack.c.bf16 %v2485, %v2484
      %v2515 = vpack.c.bf16 %v2487, %v2486
      %v2516 = vpack.c.bf16 %v2489, %v2488
      %v2517 = vpack.c.bf16 %v2491, %v2490
      %v2518 = vpack.c.bf16 %v2493, %v2492
      %v2519 = vpack.c.bf16 %v2495, %v2494
      %v2520 = vpack.c.bf16 %v2497, %v2496
      %v2521 = vpack.c.bf16 %v2499, %v2498
      %v2522 = vpack.c.bf16 %v2501, %v2500
      %v2523 = vpack.c.bf16 %v2503, %v2502
      %v2524 = vpack.c.bf16 %v2505, %v2504
      %v2525 = vpack.c.bf16 %v2507, %v2506
      %s2526 = scalar_lea.vmem %s1, 448
      %v2527 = vld [vmem:[%s2526] sm:$0xf]
      %v2528 = vld [vmem:[%s2526 + $0x4] sm:$0xf]
      %v2529 = vld [vmem:[%s2526 + $0x8] sm:$0xf]
      %v2530 = vld [vmem:[%s2526 + $0xc] sm:$0xf]
      %v2531 = vld [vmem:[%s2526 + $0x10] sm:$0xf]
      %v2532 = vld [vmem:[%s2526 + $0x14] sm:$0xf]
      %v2533 = vld [vmem:[%s2526 + $0x18] sm:$0xf]
      %v2534 = vld [vmem:[%s2526 + $0x1c] sm:$0xf]
      %v2535 = vld [vmem:[%s2526 + $0x20] sm:$0xf]
      %v2536 = vld [vmem:[%s2526 + $0x24] sm:$0xf]
      %v2537 = vld [vmem:[%s2526 + $0x28] sm:$0xf]
      %v2538 = vld [vmem:[%s2526 + $0x2c] sm:$0xf]
      %v2539 = vld [vmem:[%s2526 + $0x30] sm:$0xf]
      %v2540 = vld [vmem:[%s2526 + $0x34] sm:$0xf]
      %v2541 = vld [vmem:[%s2526 + $0x38] sm:$0xf]
      %v2542 = vld [vmem:[%s2526 + $0x3c] sm:$0xf]
      %v2559 = vunpack.c.l.b16 %v2527
      %v2560 = vunpack.c.l.b16 %v2528
      %v2561 = vunpack.c.l.b16 %v2529
      %v2562 = vunpack.c.l.b16 %v2530
      %v2563 = vunpack.c.l.b16 %v2531
      %v2564 = vunpack.c.l.b16 %v2532
      %v2565 = vunpack.c.l.b16 %v2533
      %v2566 = vunpack.c.l.b16 %v2534
      %v2567 = vunpack.c.l.b16 %v2535
      %v2568 = vunpack.c.l.b16 %v2536
      %v2569 = vunpack.c.l.b16 %v2537
      %v2570 = vunpack.c.l.b16 %v2538
      %v2571 = vunpack.c.l.b16 %v2539
      %v2572 = vunpack.c.l.b16 %v2540
      %v2573 = vunpack.c.l.b16 %v2541
      %v2574 = vunpack.c.l.b16 %v2542
      %v2575 = vpack.c.b16 %v2560, %v2559
      %v2576 = vpack.c.b16 %v2562, %v2561
      %v2577 = vpack.c.b16 %v2564, %v2563
      %v2578 = vpack.c.b16 %v2566, %v2565
      %v2579 = vpack.c.b16 %v2568, %v2567
      %v2580 = vpack.c.b16 %v2570, %v2569
      %v2581 = vpack.c.b16 %v2572, %v2571
      %v2582 = vpack.c.b16 %v2574, %v2573
      %2591 = vmatprep.subr.bf16.mxu0 0
      %2592 = vmatpush1.bf16.msra.mxu0 %v2582
      %2593 = vmatprep.subr.bf16.mxu0 0
      %2594 = vmatpush1.bf16.msra.mxu0 %v2581
      %2595 = vmatprep.subr.bf16.mxu0 0
      %2596 = vmatpush1.bf16.msra.mxu0 %v2580
      %2597 = vmatprep.subr.bf16.mxu0 0
      %2598 = vmatpush1.bf16.msra.mxu0 %v2579
      %2599 = vmatprep.subr.bf16.mxu0 0
      %2600 = vmatpush1.bf16.msra.mxu0 %v2578
      %2601 = vmatprep.subr.bf16.mxu0 0
      %2602 = vmatpush1.bf16.msra.mxu0 %v2577
      %2603 = vmatprep.subr.bf16.mxu0 0
      %2604 = vmatpush1.bf16.msra.mxu0 %v2576
      %2605 = vmatprep.subr.bf16.mxu0 0
      %2606 = vmatpush1.bf16.msra.mxu0 %v2575
      %2607 = vmatprep.subr.bf16.mxu0 0
      %2608 = vmatpush2.bf16.msra.mxu0 0
      %2609 = vmatprep.subr.bf16.mxu0 0
      %2610 = vmatpush2.bf16.msra.mxu0 0
      %2611 = vmatprep.subr.bf16.mxu0 0
      %2612 = vmatpush2.bf16.msra.mxu0 0
      %2613 = vmatprep.subr.bf16.mxu0 0
      %2614 = vmatpush2.bf16.msra.mxu0 0
      %2615 = vmatprep.subr.bf16.mxu0 0
      %2616 = vmatpush2.bf16.msra.mxu0 0
      %2617 = vmatprep.subr.bf16.mxu0 0
      %2618 = vmatpush2.bf16.msra.mxu0 0
      %2619 = vmatprep.subr.bf16.mxu0 0
      %2620 = vmatpush2.bf16.msra.mxu0 0
      %2621 = vmatprep.subr.bf16.mxu0 0
      %2622 = vmatpush2.bf16.msra.mxu0 0
      %2623 = vmatprep.mubr.bf16.mxu0 0
      %2624 = vmatmul.mubr.bf16.gmra.mxu0 %v2508
      %v2625 = vpop.f32.mrf.mxu0
      %v2626 = vadd.f32 0.0, %v2625
      %v2627 = vpop.f32.mrf.mxu0
      %v2628 = vpop.f32.mrf.mxu0
      %v2629 = vadd.f32 0.0, %v2628
      %v2630 = vpop.f32.mrf.mxu0
      %2631 = vmatprep.mubr.bf16.mxu0 0
      %2632 = vmatmul.mubr.bf16.gmra.mxu0 %v2509
      %v2633 = vpop.f32.mrf.mxu0
      %v2634 = vadd.f32 0.0, %v2633
      %v2635 = vpop.f32.mrf.mxu0
      %v2636 = vpop.f32.mrf.mxu0
      %v2637 = vadd.f32 0.0, %v2636
      %v2638 = vpop.f32.mrf.mxu0
      %2639 = vmatprep.mubr.bf16.mxu0 0
      %2640 = vmatmul.mubr.bf16.gmra.mxu0 %v2510
      %v2641 = vpop.f32.mrf.mxu0
      %v2642 = vadd.f32 0.0, %v2641
      %v2643 = vpop.f32.mrf.mxu0
      %v2644 = vpop.f32.mrf.mxu0
      %v2645 = vadd.f32 0.0, %v2644
      %v2646 = vpop.f32.mrf.mxu0
      %2647 = vmatprep.mubr.bf16.mxu0 0
      %2648 = vmatmul.mubr.bf16.gmra.mxu0 %v2511
      %v2649 = vpop.f32.mrf.mxu0
      %v2650 = vadd.f32 0.0, %v2649
      %v2651 = vpop.f32.mrf.mxu0
      %v2652 = vpop.f32.mrf.mxu0
      %v2653 = vadd.f32 0.0, %v2652
      %v2654 = vpop.f32.mrf.mxu0
      %2655 = vmatprep.mubr.bf16.mxu0 0
      %2656 = vmatmul.mubr.bf16.gmra.mxu0 %v2512
      %v2657 = vpop.f32.mrf.mxu0
      %v2658 = vadd.f32 0.0, %v2657
      %v2659 = vpop.f32.mrf.mxu0
      %v2660 = vpop.f32.mrf.mxu0
      %v2661 = vadd.f32 0.0, %v2660
      %v2662 = vpop.f32.mrf.mxu0
      %2663 = vmatprep.mubr.bf16.mxu0 0
      %2664 = vmatmul.mubr.bf16.gmra.mxu0 %v2513
      %v2665 = vpop.f32.mrf.mxu0
      %v2666 = vadd.f32 0.0, %v2665
      %v2667 = vpop.f32.mrf.mxu0
      %v2668 = vpop.f32.mrf.mxu0
      %v2669 = vadd.f32 0.0, %v2668
      %v2670 = vpop.f32.mrf.mxu0
      %2671 = vmatprep.mubr.bf16.mxu0 0
      %2672 = vmatmul.mubr.bf16.gmra.mxu0 %v2514
      %v2673 = vpop.f32.mrf.mxu0
      %v2674 = vadd.f32 0.0, %v2673
      %v2675 = vpop.f32.mrf.mxu0
      %v2676 = vpop.f32.mrf.mxu0
      %v2677 = vadd.f32 0.0, %v2676
      %v2678 = vpop.f32.mrf.mxu0
      %2679 = vmatprep.mubr.bf16.mxu0 0
      %2680 = vmatmul.mubr.bf16.gmra.mxu0 %v2515
      %v2681 = vpop.f32.mrf.mxu0
      %v2682 = vadd.f32 0.0, %v2681
      %v2683 = vpop.f32.mrf.mxu0
      %v2684 = vpop.f32.mrf.mxu0
      %v2685 = vadd.f32 0.0, %v2684
      %v2686 = vpop.f32.mrf.mxu0
      %2687 = vmatprep.mubr.bf16.mxu0 0
      %2688 = vmatmul.mubr.bf16.gmra.mxu0 %v2516
      %v2689 = vpop.f32.mrf.mxu0
      %v2690 = vadd.f32 0.0, %v2689
      %v2691 = vpop.f32.mrf.mxu0
      %v2692 = vpop.f32.mrf.mxu0
      %v2693 = vadd.f32 0.0, %v2692
      %v2694 = vpop.f32.mrf.mxu0
      %2695 = vmatprep.mubr.bf16.mxu0 0
      %2696 = vmatmul.mubr.bf16.gmra.mxu0 %v2517
      %v2697 = vpop.f32.mrf.mxu0
      %v2698 = vadd.f32 0.0, %v2697
      %v2699 = vpop.f32.mrf.mxu0
      %v2700 = vpop.f32.mrf.mxu0
      %v2701 = vadd.f32 0.0, %v2700
      %v2702 = vpop.f32.mrf.mxu0
      %2703 = vmatprep.mubr.bf16.mxu0 0
      %2704 = vmatmul.mubr.bf16.gmra.mxu0 %v2518
      %v2705 = vpop.f32.mrf.mxu0
      %v2706 = vadd.f32 0.0, %v2705
      %v2707 = vpop.f32.mrf.mxu0
      %v2708 = vpop.f32.mrf.mxu0
      %v2709 = vadd.f32 0.0, %v2708
      %v2710 = vpop.f32.mrf.mxu0
      %2711 = vmatprep.mubr.bf16.mxu0 0
      %2712 = vmatmul.mubr.bf16.gmra.mxu0 %v2519
      %v2713 = vpop.f32.mrf.mxu0
      %v2714 = vadd.f32 0.0, %v2713
      %v2715 = vpop.f32.mrf.mxu0
      %v2716 = vpop.f32.mrf.mxu0
      %v2717 = vadd.f32 0.0, %v2716
      %v2718 = vpop.f32.mrf.mxu0
      %2719 = vmatprep.mubr.bf16.mxu0 0
      %2720 = vmatmul.mubr.bf16.gmra.mxu0 %v2520
      %v2721 = vpop.f32.mrf.mxu0
      %v2722 = vadd.f32 0.0, %v2721
      %v2723 = vpop.f32.mrf.mxu0
      %v2724 = vpop.f32.mrf.mxu0
      %v2725 = vadd.f32 0.0, %v2724
      %v2726 = vpop.f32.mrf.mxu0
      %2727 = vmatprep.mubr.bf16.mxu0 0
      %2728 = vmatmul.mubr.bf16.gmra.mxu0 %v2521
      %v2729 = vpop.f32.mrf.mxu0
      %v2730 = vadd.f32 0.0, %v2729
      %v2731 = vpop.f32.mrf.mxu0
      %v2732 = vpop.f32.mrf.mxu0
      %v2733 = vadd.f32 0.0, %v2732
      %v2734 = vpop.f32.mrf.mxu0
      %2735 = vmatprep.mubr.bf16.mxu0 0
      %2736 = vmatmul.mubr.bf16.gmra.mxu0 %v2522
      %v2737 = vpop.f32.mrf.mxu0
      %v2738 = vadd.f32 0.0, %v2737
      %v2739 = vpop.f32.mrf.mxu0
      %v2740 = vpop.f32.mrf.mxu0
      %v2741 = vadd.f32 0.0, %v2740
      %v2742 = vpop.f32.mrf.mxu0
      %2743 = vmatprep.mubr.bf16.mxu0 0
      %2744 = vmatmul.mubr.bf16.gmra.mxu0 %v2523
      %v2745 = vpop.f32.mrf.mxu0
      %v2746 = vadd.f32 0.0, %v2745
      %v2747 = vpop.f32.mrf.mxu0
      %v2748 = vpop.f32.mrf.mxu0
      %v2749 = vadd.f32 0.0, %v2748
      %v2750 = vpop.f32.mrf.mxu0
      %2751 = vmatprep.mubr.bf16.mxu0 0
      %2752 = vmatmul.mubr.bf16.gmra.mxu0 %v2524
      %v2753 = vpop.f32.mrf.mxu0
      %v2754 = vadd.f32 0.0, %v2753
      %v2755 = vpop.f32.mrf.mxu0
      %v2756 = vpop.f32.mrf.mxu0
      %v2757 = vadd.f32 0.0, %v2756
      %v2758 = vpop.f32.mrf.mxu0
      %2759 = vmatprep.mubr.bf16.mxu0 0
      %2760 = vmatmul.mubr.bf16.gmra.mxu0 %v2525
      %v2761 = vpop.f32.mrf.mxu0
      %v2762 = vadd.f32 0.0, %v2761
      %v2763 = vpop.f32.mrf.mxu0
      %v2764 = vpop.f32.mrf.mxu0
      %v2765 = vadd.f32 0.0, %v2764
      %v2766 = vpop.f32.mrf.mxu0
      %2767 = vdwg.mxu0
      %v2768 = vadd.f32 %v2436, %v2626
      %v2769 = vadd.f32 %v2437, %v2629
      %v2770 = vadd.f32 %v2438, %v2634
      %v2771 = vadd.f32 %v2439, %v2637
      %v2772 = vadd.f32 %v2440, %v2642
      %v2773 = vadd.f32 %v2441, %v2645
      %v2774 = vadd.f32 %v2442, %v2650
      %v2775 = vadd.f32 %v2443, %v2653
      %v2776 = vadd.f32 %v2444, %v2658
      %v2777 = vadd.f32 %v2445, %v2661
      %v2778 = vadd.f32 %v2446, %v2666
      %v2779 = vadd.f32 %v2447, %v2669
      %v2780 = vadd.f32 %v2448, %v2674
      %v2781 = vadd.f32 %v2449, %v2677
      %v2782 = vadd.f32 %v2450, %v2682
      %v2783 = vadd.f32 %v2451, %v2685
      %v2784 = vadd.f32 %v2452, %v2690
      %v2785 = vadd.f32 %v2453, %v2693
      %v2786 = vadd.f32 %v2454, %v2698
      %v2787 = vadd.f32 %v2455, %v2701
      %v2788 = vadd.f32 %v2456, %v2706
      %v2789 = vadd.f32 %v2457, %v2709
      %v2790 = vadd.f32 %v2458, %v2714
      %v2791 = vadd.f32 %v2459, %v2717
      %v2792 = vadd.f32 %v2460, %v2722
      %v2793 = vadd.f32 %v2461, %v2725
      %v2794 = vadd.f32 %v2462, %v2730
      %v2795 = vadd.f32 %v2463, %v2733
      %v2796 = vadd.f32 %v2464, %v2738
      %v2797 = vadd.f32 %v2465, %v2741
      %v2798 = vadd.f32 %v2466, %v2746
      %v2799 = vadd.f32 %v2467, %v2749
      %v2800 = vadd.f32 %v2468, %v2754
      %v2801 = vadd.f32 %v2469, %v2757
      %v2802 = vadd.f32 %v2470, %v2762
      %v2803 = vadd.f32 %v2471, %v2765
      %v2804 = vld [vmem:[%s214 + $0x26] sm:$0xff]
      %v2805 = vld [vmem:[%s214 + $0x2e] sm:$0xff]
      %v2806 = vld [vmem:[%s214 + $0x36] sm:$0xff]
      %v2807 = vld [vmem:[%s214 + $0x3e] sm:$0xff]
      %v2808 = vld [vmem:[%s214 + $0x46] sm:$0xff]
      %v2809 = vld [vmem:[%s214 + $0x4e] sm:$0xff]
      %v2810 = vld [vmem:[%s214 + $0x56] sm:$0xff]
      %v2811 = vld [vmem:[%s214 + $0x5e] sm:$0xff]
      %v2812 = vld [vmem:[%s214 + $0x66] sm:$0xff]
      %v2813 = vld [vmem:[%s214 + $0x6e] sm:$0xff]
      %v2814 = vld [vmem:[%s214 + $0x76] sm:$0xff]
      %v2815 = vld [vmem:[%s214 + $0x7e] sm:$0xff]
      %v2816 = vld [vmem:[%s214 + $0x86] sm:$0xff]
      %v2817 = vld [vmem:[%s214 + $0x8e] sm:$0xff]
      %v2818 = vld [vmem:[%s214 + $0x96] sm:$0xff]
      %v2819 = vld [vmem:[%s214 + $0x9e] sm:$0xff]
      %v2820 = vld [vmem:[%s214 + $0xa6] sm:$0xff]
      %v2821 = vld [vmem:[%s214 + $0xae] sm:$0xff]
      %v2822 = vld [vmem:[%s214 + $0xb6] sm:$0xff]
      %v2823 = vld [vmem:[%s214 + $0xbe] sm:$0xff]
      %v2824 = vld [vmem:[%s214 + $0xc6] sm:$0xff]
      %v2825 = vld [vmem:[%s214 + $0xce] sm:$0xff]
      %v2826 = vld [vmem:[%s214 + $0xd6] sm:$0xff]
      %v2827 = vld [vmem:[%s214 + $0xde] sm:$0xff]
      %v2828 = vld [vmem:[%s214 + $0xe6] sm:$0xff]
      %v2829 = vld [vmem:[%s214 + $0xee] sm:$0xff]
      %v2830 = vld [vmem:[%s214 + $0xf6] sm:$0xff]
      %v2831 = vld [vmem:[%s214 + $0xfe] sm:$0xff]
      %v2832 = vld [vmem:[%s214 + $0x106] sm:$0xff]
      %v2833 = vld [vmem:[%s214 + $0x10e] sm:$0xff]
      %v2834 = vld [vmem:[%s214 + $0x116] sm:$0xff]
      %v2835 = vld [vmem:[%s214 + $0x11e] sm:$0xff]
      %v2836 = vld [vmem:[%s214 + $0x126] sm:$0xff]
      %v2837 = vld [vmem:[%s214 + $0x12e] sm:$0xff]
      %v2838 = vld [vmem:[%s214 + $0x136] sm:$0xff]
      %v2839 = vld [vmem:[%s214 + $0x13e] sm:$0xff]
      %v2840 = vpack.c.bf16 %v2805, %v2804
      %v2841 = vpack.c.bf16 %v2807, %v2806
      %v2842 = vpack.c.bf16 %v2809, %v2808
      %v2843 = vpack.c.bf16 %v2811, %v2810
      %v2844 = vpack.c.bf16 %v2813, %v2812
      %v2845 = vpack.c.bf16 %v2815, %v2814
      %v2846 = vpack.c.bf16 %v2817, %v2816
      %v2847 = vpack.c.bf16 %v2819, %v2818
      %v2848 = vpack.c.bf16 %v2821, %v2820
      %v2849 = vpack.c.bf16 %v2823, %v2822
      %v2850 = vpack.c.bf16 %v2825, %v2824
      %v2851 = vpack.c.bf16 %v2827, %v2826
      %v2852 = vpack.c.bf16 %v2829, %v2828
      %v2853 = vpack.c.bf16 %v2831, %v2830
      %v2854 = vpack.c.bf16 %v2833, %v2832
      %v2855 = vpack.c.bf16 %v2835, %v2834
      %v2856 = vpack.c.bf16 %v2837, %v2836
      %v2857 = vpack.c.bf16 %v2839, %v2838
      %s2858 = scalar_lea.vmem %s1, 512
      %v2859 = vld [vmem:[%s2858] sm:$0xf]
      %v2860 = vld [vmem:[%s2858 + $0x4] sm:$0xf]
      %v2861 = vld [vmem:[%s2858 + $0x8] sm:$0xf]
      %v2862 = vld [vmem:[%s2858 + $0xc] sm:$0xf]
      %v2863 = vld [vmem:[%s2858 + $0x10] sm:$0xf]
      %v2864 = vld [vmem:[%s2858 + $0x14] sm:$0xf]
      %v2865 = vld [vmem:[%s2858 + $0x18] sm:$0xf]
      %v2866 = vld [vmem:[%s2858 + $0x1c] sm:$0xf]
      %v2867 = vld [vmem:[%s2858 + $0x20] sm:$0xf]
      %v2868 = vld [vmem:[%s2858 + $0x24] sm:$0xf]
      %v2869 = vld [vmem:[%s2858 + $0x28] sm:$0xf]
      %v2870 = vld [vmem:[%s2858 + $0x2c] sm:$0xf]
      %v2871 = vld [vmem:[%s2858 + $0x30] sm:$0xf]
      %v2872 = vld [vmem:[%s2858 + $0x34] sm:$0xf]
      %v2873 = vld [vmem:[%s2858 + $0x38] sm:$0xf]
      %v2874 = vld [vmem:[%s2858 + $0x3c] sm:$0xf]
      %v2891 = vunpack.c.l.b16 %v2859
      %v2892 = vunpack.c.l.b16 %v2860
      %v2893 = vunpack.c.l.b16 %v2861
      %v2894 = vunpack.c.l.b16 %v2862
      %v2895 = vunpack.c.l.b16 %v2863
      %v2896 = vunpack.c.l.b16 %v2864
      %v2897 = vunpack.c.l.b16 %v2865
      %v2898 = vunpack.c.l.b16 %v2866
      %v2899 = vunpack.c.l.b16 %v2867
      %v2900 = vunpack.c.l.b16 %v2868
      %v2901 = vunpack.c.l.b16 %v2869
      %v2902 = vunpack.c.l.b16 %v2870
      %v2903 = vunpack.c.l.b16 %v2871
      %v2904 = vunpack.c.l.b16 %v2872
      %v2905 = vunpack.c.l.b16 %v2873
      %v2906 = vunpack.c.l.b16 %v2874
      %v2907 = vpack.c.b16 %v2892, %v2891
      %v2908 = vpack.c.b16 %v2894, %v2893
      %v2909 = vpack.c.b16 %v2896, %v2895
      %v2910 = vpack.c.b16 %v2898, %v2897
      %v2911 = vpack.c.b16 %v2900, %v2899
      %v2912 = vpack.c.b16 %v2902, %v2901
      %v2913 = vpack.c.b16 %v2904, %v2903
      %v2914 = vpack.c.b16 %v2906, %v2905
      %2923 = vmatprep.subr.bf16.mxu0 0
      %2924 = vmatpush1.bf16.msra.mxu0 %v2914
      %2925 = vmatprep.subr.bf16.mxu0 0
      %2926 = vmatpush1.bf16.msra.mxu0 %v2913
      %2927 = vmatprep.subr.bf16.mxu0 0
      %2928 = vmatpush1.bf16.msra.mxu0 %v2912
      %2929 = vmatprep.subr.bf16.mxu0 0
      %2930 = vmatpush1.bf16.msra.mxu0 %v2911
      %2931 = vmatprep.subr.bf16.mxu0 0
      %2932 = vmatpush1.bf16.msra.mxu0 %v2910
      %2933 = vmatprep.subr.bf16.mxu0 0
      %2934 = vmatpush1.bf16.msra.mxu0 %v2909
      %2935 = vmatprep.subr.bf16.mxu0 0
      %2936 = vmatpush1.bf16.msra.mxu0 %v2908
      %2937 = vmatprep.subr.bf16.mxu0 0
      %2938 = vmatpush1.bf16.msra.mxu0 %v2907
      %2939 = vmatprep.subr.bf16.mxu0 0
      %2940 = vmatpush2.bf16.msra.mxu0 0
      %2941 = vmatprep.subr.bf16.mxu0 0
      %2942 = vmatpush2.bf16.msra.mxu0 0
      %2943 = vmatprep.subr.bf16.mxu0 0
      %2944 = vmatpush2.bf16.msra.mxu0 0
      %2945 = vmatprep.subr.bf16.mxu0 0
      %2946 = vmatpush2.bf16.msra.mxu0 0
      %2947 = vmatprep.subr.bf16.mxu0 0
      %2948 = vmatpush2.bf16.msra.mxu0 0
      %2949 = vmatprep.subr.bf16.mxu0 0
      %2950 = vmatpush2.bf16.msra.mxu0 0
      %2951 = vmatprep.subr.bf16.mxu0 0
      %2952 = vmatpush2.bf16.msra.mxu0 0
      %2953 = vmatprep.subr.bf16.mxu0 0
      %2954 = vmatpush2.bf16.msra.mxu0 0
      %2955 = vmatprep.mubr.bf16.mxu0 0
      %2956 = vmatmul.mubr.bf16.gmra.mxu0 %v2840
      %v2957 = vpop.f32.mrf.mxu0
      %v2958 = vadd.f32 0.0, %v2957
      %v2959 = vpop.f32.mrf.mxu0
      %v2960 = vpop.f32.mrf.mxu0
      %v2961 = vadd.f32 0.0, %v2960
      %v2962 = vpop.f32.mrf.mxu0
      %2963 = vmatprep.mubr.bf16.mxu0 0
      %2964 = vmatmul.mubr.bf16.gmra.mxu0 %v2841
      %v2965 = vpop.f32.mrf.mxu0
      %v2966 = vadd.f32 0.0, %v2965
      %v2967 = vpop.f32.mrf.mxu0
      %v2968 = vpop.f32.mrf.mxu0
      %v2969 = vadd.f32 0.0, %v2968
      %v2970 = vpop.f32.mrf.mxu0
      %2971 = vmatprep.mubr.bf16.mxu0 0
      %2972 = vmatmul.mubr.bf16.gmra.mxu0 %v2842
      %v2973 = vpop.f32.mrf.mxu0
      %v2974 = vadd.f32 0.0, %v2973
      %v2975 = vpop.f32.mrf.mxu0
      %v2976 = vpop.f32.mrf.mxu0
      %v2977 = vadd.f32 0.0, %v2976
      %v2978 = vpop.f32.mrf.mxu0
      %2979 = vmatprep.mubr.bf16.mxu0 0
      %2980 = vmatmul.mubr.bf16.gmra.mxu0 %v2843
      %v2981 = vpop.f32.mrf.mxu0
      %v2982 = vadd.f32 0.0, %v2981
      %v2983 = vpop.f32.mrf.mxu0
      %v2984 = vpop.f32.mrf.mxu0
      %v2985 = vadd.f32 0.0, %v2984
      %v2986 = vpop.f32.mrf.mxu0
      %2987 = vmatprep.mubr.bf16.mxu0 0
      %2988 = vmatmul.mubr.bf16.gmra.mxu0 %v2844
      %v2989 = vpop.f32.mrf.mxu0
      %v2990 = vadd.f32 0.0, %v2989
      %v2991 = vpop.f32.mrf.mxu0
      %v2992 = vpop.f32.mrf.mxu0
      %v2993 = vadd.f32 0.0, %v2992
      %v2994 = vpop.f32.mrf.mxu0
      %2995 = vmatprep.mubr.bf16.mxu0 0
      %2996 = vmatmul.mubr.bf16.gmra.mxu0 %v2845
      %v2997 = vpop.f32.mrf.mxu0
      %v2998 = vadd.f32 0.0, %v2997
      %v2999 = vpop.f32.mrf.mxu0
      %v3000 = vpop.f32.mrf.mxu0
      %v3001 = vadd.f32 0.0, %v3000
      %v3002 = vpop.f32.mrf.mxu0
      %3003 = vmatprep.mubr.bf16.mxu0 0
      %3004 = vmatmul.mubr.bf16.gmra.mxu0 %v2846
      %v3005 = vpop.f32.mrf.mxu0
      %v3006 = vadd.f32 0.0, %v3005
      %v3007 = vpop.f32.mrf.mxu0
      %v3008 = vpop.f32.mrf.mxu0
      %v3009 = vadd.f32 0.0, %v3008
      %v3010 = vpop.f32.mrf.mxu0
      %3011 = vmatprep.mubr.bf16.mxu0 0
      %3012 = vmatmul.mubr.bf16.gmra.mxu0 %v2847
      %v3013 = vpop.f32.mrf.mxu0
      %v3014 = vadd.f32 0.0, %v3013
      %v3015 = vpop.f32.mrf.mxu0
      %v3016 = vpop.f32.mrf.mxu0
      %v3017 = vadd.f32 0.0, %v3016
      %v3018 = vpop.f32.mrf.mxu0
      %3019 = vmatprep.mubr.bf16.mxu0 0
      %3020 = vmatmul.mubr.bf16.gmra.mxu0 %v2848
      %v3021 = vpop.f32.mrf.mxu0
      %v3022 = vadd.f32 0.0, %v3021
      %v3023 = vpop.f32.mrf.mxu0
      %v3024 = vpop.f32.mrf.mxu0
      %v3025 = vadd.f32 0.0, %v3024
      %v3026 = vpop.f32.mrf.mxu0
      %3027 = vmatprep.mubr.bf16.mxu0 0
      %3028 = vmatmul.mubr.bf16.gmra.mxu0 %v2849
      %v3029 = vpop.f32.mrf.mxu0
      %v3030 = vadd.f32 0.0, %v3029
      %v3031 = vpop.f32.mrf.mxu0
      %v3032 = vpop.f32.mrf.mxu0
      %v3033 = vadd.f32 0.0, %v3032
      %v3034 = vpop.f32.mrf.mxu0
      %3035 = vmatprep.mubr.bf16.mxu0 0
      %3036 = vmatmul.mubr.bf16.gmra.mxu0 %v2850
      %v3037 = vpop.f32.mrf.mxu0
      %v3038 = vadd.f32 0.0, %v3037
      %v3039 = vpop.f32.mrf.mxu0
      %v3040 = vpop.f32.mrf.mxu0
      %v3041 = vadd.f32 0.0, %v3040
      %v3042 = vpop.f32.mrf.mxu0
      %3043 = vmatprep.mubr.bf16.mxu0 0
      %3044 = vmatmul.mubr.bf16.gmra.mxu0 %v2851
      %v3045 = vpop.f32.mrf.mxu0
      %v3046 = vadd.f32 0.0, %v3045
      %v3047 = vpop.f32.mrf.mxu0
      %v3048 = vpop.f32.mrf.mxu0
      %v3049 = vadd.f32 0.0, %v3048
      %v3050 = vpop.f32.mrf.mxu0
      %3051 = vmatprep.mubr.bf16.mxu0 0
      %3052 = vmatmul.mubr.bf16.gmra.mxu0 %v2852
      %v3053 = vpop.f32.mrf.mxu0
      %v3054 = vadd.f32 0.0, %v3053
      %v3055 = vpop.f32.mrf.mxu0
      %v3056 = vpop.f32.mrf.mxu0
      %v3057 = vadd.f32 0.0, %v3056
      %v3058 = vpop.f32.mrf.mxu0
      %3059 = vmatprep.mubr.bf16.mxu0 0
      %3060 = vmatmul.mubr.bf16.gmra.mxu0 %v2853
      %v3061 = vpop.f32.mrf.mxu0
      %v3062 = vadd.f32 0.0, %v3061
      %v3063 = vpop.f32.mrf.mxu0
      %v3064 = vpop.f32.mrf.mxu0
      %v3065 = vadd.f32 0.0, %v3064
      %v3066 = vpop.f32.mrf.mxu0
      %3067 = vmatprep.mubr.bf16.mxu0 0
      %3068 = vmatmul.mubr.bf16.gmra.mxu0 %v2854
      %v3069 = vpop.f32.mrf.mxu0
      %v3070 = vadd.f32 0.0, %v3069
      %v3071 = vpop.f32.mrf.mxu0
      %v3072 = vpop.f32.mrf.mxu0
      %v3073 = vadd.f32 0.0, %v3072
      %v3074 = vpop.f32.mrf.mxu0
      %3075 = vmatprep.mubr.bf16.mxu0 0
      %3076 = vmatmul.mubr.bf16.gmra.mxu0 %v2855
      %v3077 = vpop.f32.mrf.mxu0
      %v3078 = vadd.f32 0.0, %v3077
      %v3079 = vpop.f32.mrf.mxu0
      %v3080 = vpop.f32.mrf.mxu0
      %v3081 = vadd.f32 0.0, %v3080
      %v3082 = vpop.f32.mrf.mxu0
      %3083 = vmatprep.mubr.bf16.mxu0 0
      %3084 = vmatmul.mubr.bf16.gmra.mxu0 %v2856
      %v3085 = vpop.f32.mrf.mxu0
      %v3086 = vadd.f32 0.0, %v3085
      %v3087 = vpop.f32.mrf.mxu0
      %v3088 = vpop.f32.mrf.mxu0
      %v3089 = vadd.f32 0.0, %v3088
      %v3090 = vpop.f32.mrf.mxu0
      %3091 = vmatprep.mubr.bf16.mxu0 0
      %3092 = vmatmul.mubr.bf16.gmra.mxu0 %v2857
      %v3093 = vpop.f32.mrf.mxu0
      %v3094 = vadd.f32 0.0, %v3093
      %v3095 = vpop.f32.mrf.mxu0
      %v3096 = vpop.f32.mrf.mxu0
      %v3097 = vadd.f32 0.0, %v3096
      %v3098 = vpop.f32.mrf.mxu0
      %3099 = vdwg.mxu0
      %v3100 = vadd.f32 %v2768, %v2958
      %v3101 = vadd.f32 %v2769, %v2961
      %v3102 = vadd.f32 %v2770, %v2966
      %v3103 = vadd.f32 %v2771, %v2969
      %v3104 = vadd.f32 %v2772, %v2974
      %v3105 = vadd.f32 %v2773, %v2977
      %v3106 = vadd.f32 %v2774, %v2982
      %v3107 = vadd.f32 %v2775, %v2985
      %v3108 = vadd.f32 %v2776, %v2990
      %v3109 = vadd.f32 %v2777, %v2993
      %v3110 = vadd.f32 %v2778, %v2998
      %v3111 = vadd.f32 %v2779, %v3001
      %v3112 = vadd.f32 %v2780, %v3006
      %v3113 = vadd.f32 %v2781, %v3009
      %v3114 = vadd.f32 %v2782, %v3014
      %v3115 = vadd.f32 %v2783, %v3017
      %v3116 = vadd.f32 %v2784, %v3022
      %v3117 = vadd.f32 %v2785, %v3025
      %v3118 = vadd.f32 %v2786, %v3030
      %v3119 = vadd.f32 %v2787, %v3033
      %v3120 = vadd.f32 %v2788, %v3038
      %v3121 = vadd.f32 %v2789, %v3041
      %v3122 = vadd.f32 %v2790, %v3046
      %v3123 = vadd.f32 %v2791, %v3049
      %v3124 = vadd.f32 %v2792, %v3054
      %v3125 = vadd.f32 %v2793, %v3057
      %v3126 = vadd.f32 %v2794, %v3062
      %v3127 = vadd.f32 %v2795, %v3065
      %v3128 = vadd.f32 %v2796, %v3070
      %v3129 = vadd.f32 %v2797, %v3073
      %v3130 = vadd.f32 %v2798, %v3078
      %v3131 = vadd.f32 %v2799, %v3081
      %v3132 = vadd.f32 %v2800, %v3086
      %v3133 = vadd.f32 %v2801, %v3089
      %v3134 = vadd.f32 %v2802, %v3094
      %v3135 = vadd.f32 %v2803, %v3097
      %3136 = vst [vmem:[%s219] sm:$0xff] %v3100
      %3137 = vst [vmem:[%s219 + $0x8] sm:$0xff] %v3101
      %3138 = vst [vmem:[%s219 + $0x10] sm:$0xff] %v3102
      %3139 = vst [vmem:[%s219 + $0x18] sm:$0xff] %v3103
      %3140 = vst [vmem:[%s219 + $0x20] sm:$0xff] %v3104
      %3141 = vst [vmem:[%s219 + $0x28] sm:$0xff] %v3105
      %3142 = vst [vmem:[%s219 + $0x30] sm:$0xff] %v3106
      %3143 = vst [vmem:[%s219 + $0x38] sm:$0xff] %v3107
      %3144 = vst [vmem:[%s219 + $0x40] sm:$0xff] %v3108
      %3145 = vst [vmem:[%s219 + $0x48] sm:$0xff] %v3109
      %3146 = vst [vmem:[%s219 + $0x50] sm:$0xff] %v3110
      %3147 = vst [vmem:[%s219 + $0x58] sm:$0xff] %v3111
      %3148 = vst [vmem:[%s219 + $0x60] sm:$0xff] %v3112
      %3149 = vst [vmem:[%s219 + $0x68] sm:$0xff] %v3113
      %3150 = vst [vmem:[%s219 + $0x70] sm:$0xff] %v3114
      %3151 = vst [vmem:[%s219 + $0x78] sm:$0xff] %v3115
      %3152 = vst [vmem:[%s219 + $0x80] sm:$0xff] %v3116
      %3153 = vst [vmem:[%s219 + $0x88] sm:$0xff] %v3117
      %3154 = vst [vmem:[%s219 + $0x90] sm:$0xff] %v3118
      %3155 = vst [vmem:[%s219 + $0x98] sm:$0xff] %v3119
      %3156 = vst [vmem:[%s219 + $0xa0] sm:$0xff] %v3120
      %3157 = vst [vmem:[%s219 + $0xa8] sm:$0xff] %v3121
      %3158 = vst [vmem:[%s219 + $0xb0] sm:$0xff] %v3122
      %3159 = vst [vmem:[%s219 + $0xb8] sm:$0xff] %v3123
      %3160 = vst [vmem:[%s219 + $0xc0] sm:$0xff] %v3124
      %3161 = vst [vmem:[%s219 + $0xc8] sm:$0xff] %v3125
      %3162 = vst [vmem:[%s219 + $0xd0] sm:$0xff] %v3126
      %3163 = vst [vmem:[%s219 + $0xd8] sm:$0xff] %v3127
      %3164 = vst [vmem:[%s219 + $0xe0] sm:$0xff] %v3128
      %3165 = vst [vmem:[%s219 + $0xe8] sm:$0xff] %v3129
      %3166 = vst [vmem:[%s219 + $0xf0] sm:$0xff] %v3130
      %3167 = vst [vmem:[%s219 + $0xf8] sm:$0xff] %v3131
      %3168 = vst [vmem:[%s219 + $0x100] sm:$0xff] %v3132
      %3169 = vst [vmem:[%s219 + $0x108] sm:$0xff] %v3133
      %3170 = vst [vmem:[%s219 + $0x110] sm:$0xff] %v3134
      %3171 = vst [vmem:[%s219 + $0x118] sm:$0xff] %v3135
      %v3172 = vld [vmem:[%s2] sm:$0xff]
      %v3173 = vld [vmem:[%s2 + $0x8] sm:$0xff]
      %v3174 = vld [vmem:[%s2 + $0x10] sm:$0xff]
      %v3175 = vld [vmem:[%s2 + $0x18] sm:$0xff]
      %v3176 = vld [vmem:[%s2 + $0x20] sm:$0xff]
      %v3177 = vld [vmem:[%s2 + $0x28] sm:$0xff]
      %v3178 = vld [vmem:[%s2 + $0x30] sm:$0xff]
      %v3179 = vld [vmem:[%s2 + $0x38] sm:$0xff]
      %v3180 = vld [vmem:[%s2 + $0x40] sm:$0xff]
      %v3181 = vld [vmem:[%s2 + $0x48] sm:$0xff]
      %v3182 = vld [vmem:[%s2 + $0x50] sm:$0xff]
      %v3183 = vld [vmem:[%s2 + $0x58] sm:$0xff]
      %v3184 = vld [vmem:[%s2 + $0x60] sm:$0xff]
      %v3185 = vld [vmem:[%s2 + $0x68] sm:$0xff]
      %v3186 = vld [vmem:[%s2 + $0x70] sm:$0xff]
      %v3187 = vld [vmem:[%s2 + $0x78] sm:$0xff]
      %v3188 = vld [vmem:[%s2 + $0x80] sm:$0xff]
      %v3189 = vld [vmem:[%s2 + $0x88] sm:$0xff]
      %v3190 = vld [vmem:[%s2 + $0x90] sm:$0xff]
      %v3191 = vld [vmem:[%s2 + $0x98] sm:$0xff]
      %v3192 = vld [vmem:[%s2 + $0xa0] sm:$0xff]
      %v3193 = vld [vmem:[%s2 + $0xa8] sm:$0xff]
      %v3194 = vld [vmem:[%s2 + $0xb0] sm:$0xff]
      %v3195 = vld [vmem:[%s2 + $0xb8] sm:$0xff]
      %v3196 = vld [vmem:[%s2 + $0xc0] sm:$0xff]
      %v3197 = vld [vmem:[%s2 + $0xc8] sm:$0xff]
      %v3198 = vld [vmem:[%s2 + $0xd0] sm:$0xff]
      %v3199 = vld [vmem:[%s2 + $0xd8] sm:$0xff]
      %v3200 = vld [vmem:[%s2 + $0xe0] sm:$0xff]
      %v3201 = vld [vmem:[%s2 + $0xe8] sm:$0xff]
      %v3202 = vld [vmem:[%s2 + $0xf0] sm:$0xff]
      %v3203 = vld [vmem:[%s2 + $0xf8] sm:$0xff]
      %v3204 = vld [vmem:[%s2 + $0x100] sm:$0xff]
      %v3205 = vld [vmem:[%s2 + $0x108] sm:$0xff]
      %v3206 = vld [vmem:[%s2 + $0x110] sm:$0xff]
      %v3207 = vld [vmem:[%s2 + $0x118] sm:$0xff]
      %v3208 = vmul.f32 %v3100, %v3172
      %v3209 = vmul.f32 %v3101, %v3173
      %v3210 = vmul.f32 %v3102, %v3174
      %v3211 = vmul.f32 %v3103, %v3175
      %v3212 = vmul.f32 %v3104, %v3176
      %v3213 = vmul.f32 %v3105, %v3177
      %v3214 = vmul.f32 %v3106, %v3178
      %v3215 = vmul.f32 %v3107, %v3179
      %v3216 = vmul.f32 %v3108, %v3180
      %v3217 = vmul.f32 %v3109, %v3181
      %v3218 = vmul.f32 %v3110, %v3182
      %v3219 = vmul.f32 %v3111, %v3183
      %v3220 = vmul.f32 %v3112, %v3184
      %v3221 = vmul.f32 %v3113, %v3185
      %v3222 = vmul.f32 %v3114, %v3186
      %v3223 = vmul.f32 %v3115, %v3187
      %v3224 = vmul.f32 %v3116, %v3188
      %v3225 = vmul.f32 %v3117, %v3189
      %v3226 = vmul.f32 %v3118, %v3190
      %v3227 = vmul.f32 %v3119, %v3191
      %v3228 = vmul.f32 %v3120, %v3192
      %v3229 = vmul.f32 %v3121, %v3193
      %v3230 = vmul.f32 %v3122, %v3194
      %v3231 = vmul.f32 %v3123, %v3195
      %v3232 = vmul.f32 %v3124, %v3196
      %v3233 = vmul.f32 %v3125, %v3197
      %v3234 = vmul.f32 %v3126, %v3198
      %v3235 = vmul.f32 %v3127, %v3199
      %v3236 = vmul.f32 %v3128, %v3200
      %v3237 = vmul.f32 %v3129, %v3201
      %v3238 = vmul.f32 %v3130, %v3202
      %v3239 = vmul.f32 %v3131, %v3203
      %v3240 = vmul.f32 %v3132, %v3204
      %v3241 = vmul.f32 %v3133, %v3205
      %v3242 = vmul.f32 %v3134, %v3206
      %v3243 = vmul.f32 %v3135, %v3207
      %p3244 = scmp.eq.s32.totalorder %s17, 0
      // Predicated region
      $region33: #{res_block_forward.3} parent=31 // pred_check
        %p3245 = pneg %p3244
      $region34: #{res_block_forward.3} parent=31 // pred_check_branch
        %3247 = sbr.rel (%p3245) target = $region36
      $region35: #{res_block_forward.3} parent=31 // pred_region
        %3248 = vst [vmem:[%s4] sm:$0x1] 0.0
        %3249 = vst [vmem:[%s5] sm:$0x1] 0.0
      $region36: #{res_block_forward.3} parent=31 // pred_fallthru
        _
      %v3250 = vld [vmem:[%s4] sm:$0x1]
      %v3251 = vadd.f32 %v3208, %v3209
      %v3252 = vadd.f32 %v3251, %v3210
      %v3253 = vadd.f32 %v3252, %v3211
      %v3254 = vadd.f32 %v3253, %v3212
      %v3255 = vadd.f32 %v3254, %v3213
      %v3256 = vadd.f32 %v3255, %v3214
      %v3257 = vadd.f32 %v3256, %v3215
      %v3258 = vadd.f32 %v3257, %v3216
      %v3259 = vadd.f32 %v3258, %v3217
      %v3260 = vadd.f32 %v3259, %v3218
      %v3261 = vadd.f32 %v3260, %v3219
      %v3262 = vadd.f32 %v3261, %v3220
      %v3263 = vadd.f32 %v3262, %v3221
      %v3264 = vadd.f32 %v3263, %v3222
      %v3265 = vadd.f32 %v3264, %v3223
      %v3266 = vadd.f32 %v3265, %v3224
      %v3267 = vadd.f32 %v3266, %v3225
      %v3268 = vadd.f32 %v3267, %v3226
      %v3269 = vadd.f32 %v3268, %v3227
      %v3270 = vadd.f32 %v3269, %v3228
      %v3271 = vadd.f32 %v3270, %v3229
      %v3272 = vadd.f32 %v3271, %v3230
      %v3273 = vadd.f32 %v3272, %v3231
      %v3274 = vadd.f32 %v3273, %v3232
      %v3275 = vadd.f32 %v3274, %v3233
      %v3276 = vadd.f32 %v3275, %v3234
      %v3277 = vadd.f32 %v3276, %v3235
      %v3278 = vadd.f32 %v3277, %v3236
      %v3279 = vadd.f32 %v3278, %v3237
      %v3280 = vadd.f32 %v3279, %v3238
      %v3281 = vadd.f32 %v3280, %v3239
      %v3282 = vadd.f32 %v3281, %v3240
      %v3283 = vadd.f32 %v3282, %v3241
      %v3284 = vadd.f32 %v3283, %v3242
      %v3285 = vadd.f32 %v3284, %v3243
      %v3286 = vrot.slane %v3285, 4
      %v3287 = vadd.f32 %v3285, %v3286
      %v3288 = vrot.slane %v3287, 2
      %v3289 = vadd.f32 %v3287, %v3288
      %v3290 = vrot.slane %v3289, 1
      %v3291 = vadd.f32 %v3289, %v3290
      %v3292 = vadd.f32 %v3250, %v3291
      %3293 = vst [vmem:[%s4] sm:$0x1] %v3292
      %v3294 = vld [vmem:[%s5] sm:$0x1]
      %v3295 = vmul.f32 %v3208, %v3208
      %v3296 = vmul.f32 %v3209, %v3209
      %v3297 = vmul.f32 %v3210, %v3210
      %v3298 = vmul.f32 %v3211, %v3211
      %v3299 = vmul.f32 %v3212, %v3212
      %v3300 = vmul.f32 %v3213, %v3213
      %v3301 = vmul.f32 %v3214, %v3214
      %v3302 = vmul.f32 %v3215, %v3215
      %v3303 = vmul.f32 %v3216, %v3216
      %v3304 = vmul.f32 %v3217, %v3217
      %v3305 = vmul.f32 %v3218, %v3218
      %v3306 = vmul.f32 %v3219, %v3219
      %v3307 = vmul.f32 %v3220, %v3220
      %v3308 = vmul.f32 %v3221, %v3221
      %v3309 = vmul.f32 %v3222, %v3222
      %v3310 = vmul.f32 %v3223, %v3223
      %v3311 = vmul.f32 %v3224, %v3224
      %v3312 = vmul.f32 %v3225, %v3225
      %v3313 = vmul.f32 %v3226, %v3226
      %v3314 = vmul.f32 %v3227, %v3227
      %v3315 = vmul.f32 %v3228, %v3228
      %v3316 = vmul.f32 %v3229, %v3229
      %v3317 = vmul.f32 %v3230, %v3230
      %v3318 = vmul.f32 %v3231, %v3231
      %v3319 = vmul.f32 %v3232, %v3232
      %v3320 = vmul.f32 %v3233, %v3233
      %v3321 = vmul.f32 %v3234, %v3234
      %v3322 = vmul.f32 %v3235, %v3235
      %v3323 = vmul.f32 %v3236, %v3236
      %v3324 = vmul.f32 %v3237, %v3237
      %v3325 = vmul.f32 %v3238, %v3238
      %v3326 = vmul.f32 %v3239, %v3239
      %v3327 = vmul.f32 %v3240, %v3240
      %v3328 = vmul.f32 %v3241, %v3241
      %v3329 = vmul.f32 %v3242, %v3242
      %v3330 = vmul.f32 %v3243, %v3243
      %v3331 = vadd.f32 %v3295, %v3296
      %v3332 = vadd.f32 %v3331, %v3297
      %v3333 = vadd.f32 %v3332, %v3298
      %v3334 = vadd.f32 %v3333, %v3299
      %v3335 = vadd.f32 %v3334, %v3300
      %v3336 = vadd.f32 %v3335, %v3301
      %v3337 = vadd.f32 %v3336, %v3302
      %v3338 = vadd.f32 %v3337, %v3303
      %v3339 = vadd.f32 %v3338, %v3304
      %v3340 = vadd.f32 %v3339, %v3305
      %v3341 = vadd.f32 %v3340, %v3306
      %v3342 = vadd.f32 %v3341, %v3307
      %v3343 = vadd.f32 %v3342, %v3308
      %v3344 = vadd.f32 %v3343, %v3309
      %v3345 = vadd.f32 %v3344, %v3310
      %v3346 = vadd.f32 %v3345, %v3311
      %v3347 = vadd.f32 %v3346, %v3312
      %v3348 = vadd.f32 %v3347, %v3313
      %v3349 = vadd.f32 %v3348, %v3314
      %v3350 = vadd.f32 %v3349, %v3315
      %v3351 = vadd.f32 %v3350, %v3316
      %v3352 = vadd.f32 %v3351, %v3317
      %v3353 = vadd.f32 %v3352, %v3318
      %v3354 = vadd.f32 %v3353, %v3319
      %v3355 = vadd.f32 %v3354, %v3320
      %v3356 = vadd.f32 %v3355, %v3321
      %v3357 = vadd.f32 %v3356, %v3322
      %v3358 = vadd.f32 %v3357, %v3323
      %v3359 = vadd.f32 %v3358, %v3324
      %v3360 = vadd.f32 %v3359, %v3325
      %v3361 = vadd.f32 %v3360, %v3326
      %v3362 = vadd.f32 %v3361, %v3327
      %v3363 = vadd.f32 %v3362, %v3328
      %v3364 = vadd.f32 %v3363, %v3329
      %v3365 = vadd.f32 %v3364, %v3330
      %v3366 = vrot.slane %v3365, 4
      %v3367 = vadd.f32 %v3365, %v3366
      %v3368 = vrot.slane %v3367, 2
      %v3369 = vadd.f32 %v3367, %v3368
      %v3370 = vrot.slane %v3369, 1
      %v3371 = vadd.f32 %v3369, %v3370
      %v3372 = vadd.f32 %v3294, %v3371
      %3373 = vst [vmem:[%s5] sm:$0x1] %v3372
      %p3374 = scmp.lt.s32.totalorder %s17, 1
      %s3375 = scalar_select %p3374, %s17, 1
      %s3376 = smul.addr %s3375, 36
      %s3377 = smul.addr %s3376, 8
      %s3378 = scalar_lea.vmem %s3, %s3377
      // Predicated region
      $region37: #{res_block_forward.3} parent=31 // pred_check
        %p3379 = pneg %p103
      $region38: #{res_block_forward.3} parent=31 // pred_check_branch
        %3381 = sbr.rel (%p3379) target = $region40
      $region39: #{res_block_forward.3} parent=31 // pred_region
        _
      $region40: #{res_block_forward.3} parent=31 // pred_fallthru
        _
      // Predicated region
      $region41: #{res_block_forward.3} parent=31 // pred_check
        %p3382 = pneg %p124
      $region42: #{res_block_forward.3} parent=31 // pred_check_branch
        %3384 = sbr.rel (%p3382) target = $region44
      $region43: #{res_block_forward.3} parent=31 // pred_region
        _
      $region44: #{res_block_forward.3} parent=31 // pred_fallthru
        _
      // Predicated region
      $region45: #{res_block_forward.3} parent=31 // pred_check
        %p3385 = pneg %p145
      $region46: #{res_block_forward.3} parent=31 // pred_check_branch
        %3387 = sbr.rel (%p3385) target = $region48
      $region47: #{res_block_forward.3} parent=31 // pred_region
        _
      $region48: #{res_block_forward.3} parent=31 // pred_fallthru
        _
      // Predicated region
      $region49: #{res_block_forward.3} parent=31 // pred_check
        %p3388 = pneg %p124
      $region50: #{res_block_forward.3} parent=31 // pred_check_branch
        %3390 = sbr.rel (%p3388) target = $region52
      $region51: #{res_block_forward.3} parent=31 // pred_region
        _
      $region52: #{res_block_forward.3} parent=31 // pred_fallthru
        _
      // Predicated region
      $region53: #{res_block_forward.3} parent=31 // pred_check
        %p3391 = pneg %p145
      $region54: #{res_block_forward.3} parent=31 // pred_check_branch
        %3393 = sbr.rel (%p3391) target = $region56
      $region55: #{res_block_forward.3} parent=31 // pred_region
        _
      $region56: #{res_block_forward.3} parent=31 // pred_fallthru
        _
    $region32: #{res_block_forward.3} parent=5 // pred_fallthru
      _
    %p3394 = scmp.le.s32.totalorder 2, %s12
    // Predicated region
    $region57: #{res_block_forward.3} parent=5 // pred_check
      %p3395 = pneg %p3394
    $region58: #{res_block_forward.3} parent=5 // pred_check_branch
      %3397 = sbr.rel (%p3395) target = $region60
    $region59: #{res_block_forward.3} parent=5 // pred_region
      %s3398 = ssub.s32 %s12, 2
      // Predicated region
      $region61: #{res_block_forward.3} parent=59 // pred_check
        %p3399 = pneg %p109
      $region62: #{res_block_forward.3} parent=59 // pred_check_branch
        %3401 = sbr.rel (%p3399) target = $region64
      $region63: #{res_block_forward.3} parent=59 // pred_region
        %p3402 = scmp.lt.s32.totalorder %s18, 1
        %s3403 = scalar_select %p3402, %s18, 1
        %s3404 = smul.addr %s3403, 36
        %s3405 = smul.addr %s3404, 8
        %s3406 = scalar_lea.vmem %s3, %s3405
      $region64: #{res_block_forward.3} parent=59 // pred_fallthru
        _
    $region60: #{res_block_forward.3} parent=5 // pred_fallthru
      _
  $region6: #{res_block_forward.3} parent=0 // loop_footer
    %s16 = sadd.s32 1, %s12
  $region7: #{res_block_forward.3} parent=0 // loop_footer_branch
    %11 = sbr.rel target = $region3
  $region8: #{res_block_forward.3} parent=0 // loop_exit
    _

// kernel: res_block_forward.5
$region0: #{res_block_forward.5}
  #allocation0 [shape = 'u32[]', space=smem, size = 0x4, offset = 0x4, fixed_abs, tag = 'smem constant byte address 0x4 - core index']
  #allocation1 [shape = 'u32[144,128]{1,0:T(1,128)}', space=vmem, size = 0x12000, scoped, tag = 'internal scratch']
  %s0 = inlined_call_operand.vmem [shape: f32[576,128], index: 0, kind: input, shape index: {}]
  %s1 = inlined_call_operand.vmem [shape: f32[576,128], index: 1, kind: input, shape index: {}]
  %s2 = inlined_call_operand.vmem [shape: f32[1,128], index: 2, kind: input, shape index: {}]
  %s3 = inlined_call_operand.vmem [shape: f32[1,128], index: 3, kind: input, shape index: {}]
  %s4 = inlined_call_operand.vmem [shape: f32[576,128], index: 4, kind: output, shape index: {}]
  %s5 = sld [smem:[#allocation0]]
  $region49: #{res_block_forward.5} parent=0
    _
  %s7 = ssub.s32 1, %s5
  %s8 = scalar_select 0, %s7, %s5
  loop: start=0, step=1, limit=4
  $region2: #{res_block_forward.5} parent=0 // loop_pre_header
    _
  $region3: #{res_block_forward.5} parent=0 // loop_header
    %s10 = sphi 0, %s14
    %p11 = scmp.ge.s32.totalorder %s10, 4
    %s20 = sphi 0, %s22
    %s23 = sphi 0, %s20
    %s24 = sphi 0, %s23
    %s40 = sphi 0, %s24
    %s46 = sphi 0, %s48
    %s49 = sphi 0, %s46
    %s50 = sphi 0, %s49
    %s66 = sphi 0, %s50
    %s70 = sphi 0, %s70
    %s72 = sphi 0, %s70
    %s73 = sphi 0, %s72
    %s87 = sphi 0, %s73
    %s91 = sphi 0, %s91
    %s93 = sphi 0, %s91
    %s94 = sphi 0, %s93
    %s108 = sphi 0, %s94
    %s114 = sphi 0, %s116
    %s117 = sphi 0, %s114
    %s118 = sphi 0, %s117
    %s134 = sphi 0, %s118
  $region4: #{res_block_forward.5} parent=0 // loop_header_branch
    %13 = sbr.rel (%p11) target = $region8
  $region5: #{res_block_forward.5} parent=0 // loop_body
    %s15 = ssub.s32 %s10, 1
    %s16 = ssub.s32 %s10, 2
    %s17 = sadd.s32 %s10, 1
    %s18 = ssub.s32 %s10, %s17
    %p19 = scmp.eq.s32.totalorder %s18, 0
    %s21 = sadd.s32 %s20, 1
    %s22 = scalar_select %p19, %s20, %s21
    %p25 = pneg %p19
    %p26 = scmp.eq.s32.totalorder %s10, 1
    %p27 = por %p25, %p26
    %p28 = scmp.ne.s32.totalorder %s20, %s23
    %p29 = scmp.eq.s32.totalorder %s10, 0
    %p30 = por %p28, %p29
    %p31 = scmp.ne.s32.totalorder %s20, %s23
    %p32 = scmp.eq.s32.totalorder %s15, 1
    %p33 = por %p31, %p32
    %p34 = scmp.ne.s32.totalorder %s23, %s24
    %p35 = scmp.eq.s32.totalorder %s15, 0
    %p36 = por %p34, %p35
    %p37 = scmp.ne.s32.totalorder %s23, %s24
    %p38 = scmp.eq.s32.totalorder %s16, 1
    %p39 = por %p37, %p38
    %p41 = scmp.ne.s32.totalorder %s24, %s40
    %p42 = scmp.eq.s32.totalorder %s16, 0
    %p43 = por %p41, %p42
    %s44 = ssub.s32 %s10, %s17
    %p45 = scmp.eq.s32.totalorder %s44, 0
    %s47 = sadd.s32 %s46, 1
    %s48 = scalar_select %p45, %s46, %s47
    %p51 = pneg %p45
    %p52 = scmp.eq.s32.totalorder %s10, 1
    %p53 = por %p51, %p52
    %p54 = scmp.ne.s32.totalorder %s46, %s49
    %p55 = scmp.eq.s32.totalorder %s10, 0
    %p56 = por %p54, %p55
    %p57 = scmp.ne.s32.totalorder %s46, %s49
    %p58 = scmp.eq.s32.totalorder %s15, 1
    %p59 = por %p57, %p58
    %p60 = scmp.ne.s32.totalorder %s49, %s50
    %p61 = scmp.eq.s32.totalorder %s15, 0
    %p62 = por %p60, %p61
    %p63 = scmp.ne.s32.totalorder %s49, %s50
    %p64 = scmp.eq.s32.totalorder %s16, 1
    %p65 = por %p63, %p64
    %p67 = scmp.ne.s32.totalorder %s50, %s66
    %p68 = scmp.eq.s32.totalorder %s16, 0
    %p69 = por %p67, %p68
    %s71 = sadd.s32 %s70, 1
    %p74 = scmp.eq.s32.totalorder %s10, 1
    %p75 = scmp.ne.s32.totalorder %s70, %s72
    %p76 = scmp.eq.s32.totalorder %s10, 0
    %p77 = por %p75, %p76
    %p78 = scmp.ne.s32.totalorder %s70, %s72
    %p79 = scmp.eq.s32.totalorder %s15, 1
    %p80 = por %p78, %p79
    %p81 = scmp.ne.s32.totalorder %s72, %s73
    %p82 = scmp.eq.s32.totalorder %s15, 0
    %p83 = por %p81, %p82
    %p84 = scmp.ne.s32.totalorder %s72, %s73
    %p85 = scmp.eq.s32.totalorder %s16, 1
    %p86 = por %p84, %p85
    %p88 = scmp.ne.s32.totalorder %s73, %s87
    %p89 = scmp.eq.s32.totalorder %s16, 0
    %p90 = por %p88, %p89
    %s92 = sadd.s32 %s91, 1
    %p95 = scmp.eq.s32.totalorder %s10, 1
    %p96 = scmp.ne.s32.totalorder %s91, %s93
    %p97 = scmp.eq.s32.totalorder %s10, 0
    %p98 = por %p96, %p97
    %p99 = scmp.ne.s32.totalorder %s91, %s93
    %p100 = scmp.eq.s32.totalorder %s15, 1
    %p101 = por %p99, %p100
    %p102 = scmp.ne.s32.totalorder %s93, %s94
    %p103 = scmp.eq.s32.totalorder %s15, 0
    %p104 = por %p102, %p103
    %p105 = scmp.ne.s32.totalorder %s93, %s94
    %p106 = scmp.eq.s32.totalorder %s16, 1
    %p107 = por %p105, %p106
    %p109 = scmp.ne.s32.totalorder %s94, %s108
    %p110 = scmp.eq.s32.totalorder %s16, 0
    %p111 = por %p109, %p110
    %s112 = ssub.s32 %s10, %s17
    %p113 = scmp.eq.s32.totalorder %s112, 0
    %s115 = sadd.s32 %s114, 1
    %s116 = scalar_select %p113, %s114, %s115
    %p119 = pneg %p113
    %p120 = scmp.eq.s32.totalorder %s10, 1
    %p121 = por %p119, %p120
    %p122 = scmp.ne.s32.totalorder %s114, %s117
    %p123 = scmp.eq.s32.totalorder %s10, 0
    %p124 = por %p122, %p123
    %p125 = scmp.ne.s32.totalorder %s114, %s117
    %p126 = scmp.eq.s32.totalorder %s15, 1
    %p127 = por %p125, %p126
    %p128 = scmp.ne.s32.totalorder %s117, %s118
    %p129 = scmp.eq.s32.totalorder %s15, 0
    %p130 = por %p128, %p129
    %p131 = scmp.ne.s32.totalorder %s117, %s118
    %p132 = scmp.eq.s32.totalorder %s16, 1
    %p133 = por %p131, %p132
    %p135 = scmp.ne.s32.totalorder %s118, %s134
    %p136 = scmp.eq.s32.totalorder %s16, 0
    %p137 = por %p135, %p136
    %p138 = scmp.le.s32.totalorder 1, %s10
    %p139 = scmp.lt.s32.totalorder %s10, 3
    %p140 = pnand %p138, %p139
    %p141 = pneg %p140
    // Predicated region
    $region9: #{res_block_forward.5} parent=5 // pred_check
      _
    $region10: #{res_block_forward.5} parent=5 // pred_check_branch
      %143 = sbr.rel (%p140) target = $region12
    $region11: #{res_block_forward.5} parent=5 // pred_region
      %s144 = ssub.s32 %s10, 1
      // Predicated region
      $region13: #{res_block_forward.5} parent=11 // pred_check
        %p145 = pneg %p83
      $region14: #{res_block_forward.5} parent=11 // pred_check_branch
        %147 = sbr.rel (%p145) target = $region16
      $region15: #{res_block_forward.5} parent=11 // pred_region
        _
      $region16: #{res_block_forward.5} parent=11 // pred_fallthru
        _
      // Predicated region
      $region17: #{res_block_forward.5} parent=11 // pred_check
        %p148 = pneg %p104
      $region18: #{res_block_forward.5} parent=11 // pred_check_branch
        %150 = sbr.rel (%p148) target = $region20
      $region19: #{res_block_forward.5} parent=11 // pred_region
        _
      $region20: #{res_block_forward.5} parent=11 // pred_fallthru
        _
    $region12: #{res_block_forward.5} parent=5 // pred_fallthru
      _
    %p151 = scmp.lt.s32.totalorder %s10, 2
    // Predicated region
    $region21: #{res_block_forward.5} parent=5 // pred_check
      %p152 = pneg %p151
    $region22: #{res_block_forward.5} parent=5 // pred_check_branch
      %154 = sbr.rel (%p152) target = $region24
    $region23: #{res_block_forward.5} parent=5 // pred_region
      // Predicated region
      $region25: #{res_block_forward.5} parent=23 // pred_check
        %p155 = pneg %p30
      $region26: #{res_block_forward.5} parent=23 // pred_check_branch
        %157 = sbr.rel (%p155) target = $region28
      $region27: #{res_block_forward.5} parent=23 // pred_region
        %s158 = smul.u32 36, %s10
        %p159 = scmp.lt.s32.totalorder %s158, 71
        %s160 = scalar_select %p159, %s158, 71
        %s161 = smul.addr %s160, 8
        %s162 = scalar_lea.vmem %s0, %s161
        %s163 = smul.u32 36, %s10
      $region28: #{res_block_forward.5} parent=23 // pred_fallthru
        _
      // Predicated region
      $region29: #{res_block_forward.5} parent=23 // pred_check
        %p164 = pneg %p56
      $region30: #{res_block_forward.5} parent=23 // pred_check_branch
        %166 = sbr.rel (%p164) target = $region32
      $region31: #{res_block_forward.5} parent=23 // pred_region
        %s167 = smul.u32 36, %s10
        %p168 = scmp.lt.s32.totalorder %s167, 71
        %s169 = scalar_select %p168, %s167, 71
        %s170 = smul.addr %s169, 8
        %s171 = scalar_lea.vmem %s1, %s170
        %s172 = smul.u32 36, %s10
      $region32: #{res_block_forward.5} parent=23 // pred_fallthru
        _
    $region24: #{res_block_forward.5} parent=5 // pred_fallthru
      _
    %p173 = scmp.le.s32.totalorder 1, %s10
    %p174 = scmp.lt.s32.totalorder %s10, 3
    %p175 = pnand %p173, %p174
    %p176 = pneg %p175
    // Predicated region
    $region33: #{res_block_forward.5} parent=5 // pred_check
      _
    $region34: #{res_block_forward.5} parent=5 // pred_check_branch
      %178 = sbr.rel (%p175) target = $region36
    $region35: #{res_block_forward.5} parent=5 // pred_region
      %s179 = ssub.s32 %s10, 1
      %s180 = smul.u32 36, %s15
      %p181 = scmp.lt.s32.totalorder %s180, 71
      %s182 = scalar_select %p181, %s180, 71
      %s183 = smul.addr %s182, 8
      %s184 = scalar_lea.vmem %s0, %s183
      %p185 = pneg %p36
      %p186 = pneg %p33
      %s187 = smul.u32 36, %s15
      %p188 = scmp.lt.s32.totalorder %s187, 71
      %s189 = scalar_select %p188, %s187, 71
      %s190 = smul.addr %s189, 8
      %s191 = scalar_lea.vmem %s1, %s190
      %p192 = pneg %p62
      %p193 = pneg %p59
      %p194 = pneg %p83
      %p195 = pneg %p80
      %p196 = pneg %p104
      %p197 = pneg %p101
      %p198 = pneg %p130
      %p199 = pneg %p127
      %s200 = smul.u32 36, %s15
      %p201 = scmp.lt.s32.totalorder %s200, 71
      %s202 = scalar_select %p201, %s200, 71
      %s203 = smul.addr %s202, 8
      %s204 = scalar_lea.vmem %s4, %s203
      %s205 = smul.u32 36, %s15
      %p206 = scmp.lt.s32.totalorder %s205, 71
      %s207 = scalar_select %p206, %s205, 71
      %s208 = smul.addr %s207, 8
      %s209 = scalar_lea.vmem %s0, %s208
      %s210 = smul.u32 36, %s15
      %s211 = smul.u32 36, %s15
      %p212 = scmp.lt.s32.totalorder %s211, 71
      %s213 = scalar_select %p212, %s211, 71
      %s214 = smul.addr %s213, 8
      %s215 = scalar_lea.vmem %s1, %s214
      %s216 = smul.u32 36, %s15
      %s217 = smul.u32 36, %s15
      %p218 = scmp.lt.s32.totalorder %s217, 71
      %s219 = scalar_select %p218, %s217, 71
      %s220 = smul.addr %s219, 8
      %s221 = scalar_lea.vmem %s4, %s220
      %s222 = smul.u32 36, %s15
      %v223 = vld [vmem:[%s209] sm:$0xff]
      %v224 = vld [vmem:[%s209 + $0x8] sm:$0xff]
      %v225 = vld [vmem:[%s209 + $0x10] sm:$0xff]
      %v226 = vld [vmem:[%s209 + $0x18] sm:$0xff]
      %v227 = vld [vmem:[%s209 + $0x20] sm:$0xff]
      %v228 = vld [vmem:[%s209 + $0x28] sm:$0xff]
      %v229 = vld [vmem:[%s209 + $0x30] sm:$0xff]
      %v230 = vld [vmem:[%s209 + $0x38] sm:$0xff]
      %v231 = vld [vmem:[%s209 + $0x40] sm:$0xff]
      %v232 = vld [vmem:[%s209 + $0x48] sm:$0xff]
      %v233 = vld [vmem:[%s209 + $0x50] sm:$0xff]
      %v234 = vld [vmem:[%s209 + $0x58] sm:$0xff]
      %v235 = vld [vmem:[%s209 + $0x60] sm:$0xff]
      %v236 = vld [vmem:[%s209 + $0x68] sm:$0xff]
      %v237 = vld [vmem:[%s209 + $0x70] sm:$0xff]
      %v238 = vld [vmem:[%s209 + $0x78] sm:$0xff]
      %v239 = vld [vmem:[%s209 + $0x80] sm:$0xff]
      %v240 = vld [vmem:[%s209 + $0x88] sm:$0xff]
      %v241 = vld [vmem:[%s209 + $0x90] sm:$0xff]
      %v242 = vld [vmem:[%s209 + $0x98] sm:$0xff]
      %v243 = vld [vmem:[%s209 + $0xa0] sm:$0xff]
      %v244 = vld [vmem:[%s209 + $0xa8] sm:$0xff]
      %v245 = vld [vmem:[%s209 + $0xb0] sm:$0xff]
      %v246 = vld [vmem:[%s209 + $0xb8] sm:$0xff]
      %v247 = vld [vmem:[%s209 + $0xc0] sm:$0xff]
      %v248 = vld [vmem:[%s209 + $0xc8] sm:$0xff]
      %v249 = vld [vmem:[%s209 + $0xd0] sm:$0xff]
      %v250 = vld [vmem:[%s209 + $0xd8] sm:$0xff]
      %v251 = vld [vmem:[%s209 + $0xe0] sm:$0xff]
      %v252 = vld [vmem:[%s209 + $0xe8] sm:$0xff]
      %v253 = vld [vmem:[%s209 + $0xf0] sm:$0xff]
      %v254 = vld [vmem:[%s209 + $0xf8] sm:$0xff]
      %v255 = vld [vmem:[%s209 + $0x100] sm:$0xff]
      %v256 = vld [vmem:[%s209 + $0x108] sm:$0xff]
      %v257 = vld [vmem:[%s209 + $0x110] sm:$0xff]
      %v258 = vld [vmem:[%s209 + $0x118] sm:$0xff]
      %v259 = vld [vmem:[%s2] sm:$0x1]
      %v261 = vlaneseq
      %v262 = vshrl.u32 %v261, 7
      %v263 = vsub.s32 0, %v262
      %v264 = vrot.slane %v259, %v263
      %v266 = vmul.f32 %v223, %v264
      %v267 = vmul.f32 %v224, %v264
      %v268 = vmul.f32 %v225, %v264
      %v269 = vmul.f32 %v226, %v264
      %v270 = vmul.f32 %v227, %v264
      %v271 = vmul.f32 %v228, %v264
      %v272 = vmul.f32 %v229, %v264
      %v273 = vmul.f32 %v230, %v264
      %v274 = vmul.f32 %v231, %v264
      %v275 = vmul.f32 %v232, %v264
      %v276 = vmul.f32 %v233, %v264
      %v277 = vmul.f32 %v234, %v264
      %v278 = vmul.f32 %v235, %v264
      %v279 = vmul.f32 %v236, %v264
      %v280 = vmul.f32 %v237, %v264
      %v281 = vmul.f32 %v238, %v264
      %v282 = vmul.f32 %v239, %v264
      %v283 = vmul.f32 %v240, %v264
      %v284 = vmul.f32 %v241, %v264
      %v285 = vmul.f32 %v242, %v264
      %v286 = vmul.f32 %v243, %v264
      %v287 = vmul.f32 %v244, %v264
      %v288 = vmul.f32 %v245, %v264
      %v289 = vmul.f32 %v246, %v264
      %v290 = vmul.f32 %v247, %v264
      %v291 = vmul.f32 %v248, %v264
      %v292 = vmul.f32 %v249, %v264
      %v293 = vmul.f32 %v250, %v264
      %v294 = vmul.f32 %v251, %v264
      %v295 = vmul.f32 %v252, %v264
      %v296 = vmul.f32 %v253, %v264
      %v297 = vmul.f32 %v254, %v264
      %v298 = vmul.f32 %v255, %v264
      %v299 = vmul.f32 %v256, %v264
      %v300 = vmul.f32 %v257, %v264
      %v301 = vmul.f32 %v258, %v264
      %v302 = vld [vmem:[%s3] sm:$0x1]
      %v304 = vlaneseq
      %v305 = vshrl.u32 %v304, 7
      %v306 = vsub.s32 0, %v305
      %v307 = vrot.slane %v302, %v306
      %v309 = vadd.f32 %v266, %v307
      %v310 = vadd.f32 %v267, %v307
      %v311 = vadd.f32 %v268, %v307
      %v312 = vadd.f32 %v269, %v307
      %v313 = vadd.f32 %v270, %v307
      %v314 = vadd.f32 %v271, %v307
      %v315 = vadd.f32 %v272, %v307
      %v316 = vadd.f32 %v273, %v307
      %v317 = vadd.f32 %v274, %v307
      %v318 = vadd.f32 %v275, %v307
      %v319 = vadd.f32 %v276, %v307
      %v320 = vadd.f32 %v277, %v307
      %v321 = vadd.f32 %v278, %v307
      %v322 = vadd.f32 %v279, %v307
      %v323 = vadd.f32 %v280, %v307
      %v324 = vadd.f32 %v281, %v307
      %v325 = vadd.f32 %v282, %v307
      %v326 = vadd.f32 %v283, %v307
      %v327 = vadd.f32 %v284, %v307
      %v328 = vadd.f32 %v285, %v307
      %v329 = vadd.f32 %v286, %v307
      %v330 = vadd.f32 %v287, %v307
      %v331 = vadd.f32 %v288, %v307
      %v332 = vadd.f32 %v289, %v307
      %v333 = vadd.f32 %v290, %v307
      %v334 = vadd.f32 %v291, %v307
      %v335 = vadd.f32 %v292, %v307
      %v336 = vadd.f32 %v293, %v307
      %v337 = vadd.f32 %v294, %v307
      %v338 = vadd.f32 %v295, %v307
      %v339 = vadd.f32 %v296, %v307
      %v340 = vadd.f32 %v297, %v307
      %v341 = vadd.f32 %v298, %v307
      %v342 = vadd.f32 %v299, %v307
      %v343 = vadd.f32 %v300, %v307
      %v344 = vadd.f32 %v301, %v307
      %v345 = vld [vmem:[%s215] sm:$0xff]
      %v346 = vld [vmem:[%s215 + $0x8] sm:$0xff]
      %v347 = vld [vmem:[%s215 + $0x10] sm:$0xff]
      %v348 = vld [vmem:[%s215 + $0x18] sm:$0xff]
      %v349 = vld [vmem:[%s215 + $0x20] sm:$0xff]
      %v350 = vld [vmem:[%s215 + $0x28] sm:$0xff]
      %v351 = vld [vmem:[%s215 + $0x30] sm:$0xff]
      %v352 = vld [vmem:[%s215 + $0x38] sm:$0xff]
      %v353 = vld [vmem:[%s215 + $0x40] sm:$0xff]
      %v354 = vld [vmem:[%s215 + $0x48] sm:$0xff]
      %v355 = vld [vmem:[%s215 + $0x50] sm:$0xff]
      %v356 = vld [vmem:[%s215 + $0x58] sm:$0xff]
      %v357 = vld [vmem:[%s215 + $0x60] sm:$0xff]
      %v358 = vld [vmem:[%s215 + $0x68] sm:$0xff]
      %v359 = vld [vmem:[%s215 + $0x70] sm:$0xff]
      %v360 = vld [vmem:[%s215 + $0x78] sm:$0xff]
      %v361 = vld [vmem:[%s215 + $0x80] sm:$0xff]
      %v362 = vld [vmem:[%s215 + $0x88] sm:$0xff]
      %v363 = vld [vmem:[%s215 + $0x90] sm:$0xff]
      %v364 = vld [vmem:[%s215 + $0x98] sm:$0xff]
      %v365 = vld [vmem:[%s215 + $0xa0] sm:$0xff]
      %v366 = vld [vmem:[%s215 + $0xa8] sm:$0xff]
      %v367 = vld [vmem:[%s215 + $0xb0] sm:$0xff]
      %v368 = vld [vmem:[%s215 + $0xb8] sm:$0xff]
      %v369 = vld [vmem:[%s215 + $0xc0] sm:$0xff]
      %v370 = vld [vmem:[%s215 + $0xc8] sm:$0xff]
      %v371 = vld [vmem:[%s215 + $0xd0] sm:$0xff]
      %v372 = vld [vmem:[%s215 + $0xd8] sm:$0xff]
      %v373 = vld [vmem:[%s215 + $0xe0] sm:$0xff]
      %v374 = vld [vmem:[%s215 + $0xe8] sm:$0xff]
      %v375 = vld [vmem:[%s215 + $0xf0] sm:$0xff]
      %v376 = vld [vmem:[%s215 + $0xf8] sm:$0xff]
      %v377 = vld [vmem:[%s215 + $0x100] sm:$0xff]
      %v378 = vld [vmem:[%s215 + $0x108] sm:$0xff]
      %v379 = vld [vmem:[%s215 + $0x110] sm:$0xff]
      %v380 = vld [vmem:[%s215 + $0x118] sm:$0xff]
      %v381 = vadd.f32 %v309, %v345
      %v382 = vadd.f32 %v310, %v346
      %v383 = vadd.f32 %v311, %v347
      %v384 = vadd.f32 %v312, %v348
      %v385 = vadd.f32 %v313, %v349
      %v386 = vadd.f32 %v314, %v350
      %v387 = vadd.f32 %v315, %v351
      %v388 = vadd.f32 %v316, %v352
      %v389 = vadd.f32 %v317, %v353
      %v390 = vadd.f32 %v318, %v354
      %v391 = vadd.f32 %v319, %v355
      %v392 = vadd.f32 %v320, %v356
      %v393 = vadd.f32 %v321, %v357
      %v394 = vadd.f32 %v322, %v358
      %v395 = vadd.f32 %v323, %v359
      %v396 = vadd.f32 %v324, %v360
      %v397 = vadd.f32 %v325, %v361
      %v398 = vadd.f32 %v326, %v362
      %v399 = vadd.f32 %v327, %v363
      %v400 = vadd.f32 %v328, %v364
      %v401 = vadd.f32 %v329, %v365
      %v402 = vadd.f32 %v330, %v366
      %v403 = vadd.f32 %v331, %v367
      %v404 = vadd.f32 %v332, %v368
      %v405 = vadd.f32 %v333, %v369
      %v406 = vadd.f32 %v334, %v370
      %v407 = vadd.f32 %v335, %v371
      %v408 = vadd.f32 %v336, %v372
      %v409 = vadd.f32 %v337, %v373
      %v410 = vadd.f32 %v338, %v374
      %v411 = vadd.f32 %v339, %v375
      %v412 = vadd.f32 %v340, %v376
      %v413 = vadd.f32 %v341, %v377
      %v414 = vadd.f32 %v342, %v378
      %v415 = vadd.f32 %v343, %v379
      %v416 = vadd.f32 %v344, %v380
      %v417 = vmax.f32 %v381, 0.0
      %v418 = vmax.f32 %v382, 0.0
      %v419 = vmax.f32 %v383, 0.0
      %v420 = vmax.f32 %v384, 0.0
      %v421 = vmax.f32 %v385, 0.0
      %v422 = vmax.f32 %v386, 0.0
      %v423 = vmax.f32 %v387, 0.0
      %v424 = vmax.f32 %v388, 0.0
      %v425 = vmax.f32 %v389, 0.0
      %v426 = vmax.f32 %v390, 0.0
      %v427 = vmax.f32 %v391, 0.0
      %v428 = vmax.f32 %v392, 0.0
      %v429 = vmax.f32 %v393, 0.0
      %v430 = vmax.f32 %v394, 0.0
      %v431 = vmax.f32 %v395, 0.0
      %v432 = vmax.f32 %v396, 0.0
      %v433 = vmax.f32 %v397, 0.0
      %v434 = vmax.f32 %v398, 0.0
      %v435 = vmax.f32 %v399, 0.0
      %v436 = vmax.f32 %v400, 0.0
      %v437 = vmax.f32 %v401, 0.0
      %v438 = vmax.f32 %v402, 0.0
      %v439 = vmax.f32 %v403, 0.0
      %v440 = vmax.f32 %v404, 0.0
      %v441 = vmax.f32 %v405, 0.0
      %v442 = vmax.f32 %v406, 0.0
      %v443 = vmax.f32 %v407, 0.0
      %v444 = vmax.f32 %v408, 0.0
      %v445 = vmax.f32 %v409, 0.0
      %v446 = vmax.f32 %v410, 0.0
      %v447 = vmax.f32 %v411, 0.0
      %v448 = vmax.f32 %v412, 0.0
      %v449 = vmax.f32 %v413, 0.0
      %v450 = vmax.f32 %v414, 0.0
      %v451 = vmax.f32 %v415, 0.0
      %v452 = vmax.f32 %v416, 0.0
      %453 = vst [vmem:[%s221] sm:$0xff] %v417
      %454 = vst [vmem:[%s221 + $0x8] sm:$0xff] %v418
      %455 = vst [vmem:[%s221 + $0x10] sm:$0xff] %v419
      %456 = vst [vmem:[%s221 + $0x18] sm:$0xff] %v420
      %457 = vst [vmem:[%s221 + $0x20] sm:$0xff] %v421
      %458 = vst [vmem:[%s221 + $0x28] sm:$0xff] %v422
      %459 = vst [vmem:[%s221 + $0x30] sm:$0xff] %v423
      %460 = vst [vmem:[%s221 + $0x38] sm:$0xff] %v424
      %461 = vst [vmem:[%s221 + $0x40] sm:$0xff] %v425
      %462 = vst [vmem:[%s221 + $0x48] sm:$0xff] %v426
      %463 = vst [vmem:[%s221 + $0x50] sm:$0xff] %v427
      %464 = vst [vmem:[%s221 + $0x58] sm:$0xff] %v428
      %465 = vst [vmem:[%s221 + $0x60] sm:$0xff] %v429
      %466 = vst [vmem:[%s221 + $0x68] sm:$0xff] %v430
      %467 = vst [vmem:[%s221 + $0x70] sm:$0xff] %v431
      %468 = vst [vmem:[%s221 + $0x78] sm:$0xff] %v432
      %469 = vst [vmem:[%s221 + $0x80] sm:$0xff] %v433
      %470 = vst [vmem:[%s221 + $0x88] sm:$0xff] %v434
      %471 = vst [vmem:[%s221 + $0x90] sm:$0xff] %v435
      %472 = vst [vmem:[%s221 + $0x98] sm:$0xff] %v436
      %473 = vst [vmem:[%s221 + $0xa0] sm:$0xff] %v437
      %474 = vst [vmem:[%s221 + $0xa8] sm:$0xff] %v438
      %475 = vst [vmem:[%s221 + $0xb0] sm:$0xff] %v439
      %476 = vst [vmem:[%s221 + $0xb8] sm:$0xff] %v440
      %477 = vst [vmem:[%s221 + $0xc0] sm:$0xff] %v441
      %478 = vst [vmem:[%s221 + $0xc8] sm:$0xff] %v442
      %479 = vst [vmem:[%s221 + $0xd0] sm:$0xff] %v443
      %480 = vst [vmem:[%s221 + $0xd8] sm:$0xff] %v444
      %481 = vst [vmem:[%s221 + $0xe0] sm:$0xff] %v445
      %482 = vst [vmem:[%s221 + $0xe8] sm:$0xff] %v446
      %483 = vst [vmem:[%s221 + $0xf0] sm:$0xff] %v447
      %484 = vst [vmem:[%s221 + $0xf8] sm:$0xff] %v448
      %485 = vst [vmem:[%s221 + $0x100] sm:$0xff] %v449
      %486 = vst [vmem:[%s221 + $0x108] sm:$0xff] %v450
      %487 = vst [vmem:[%s221 + $0x110] sm:$0xff] %v451
      %488 = vst [vmem:[%s221 + $0x118] sm:$0xff] %v452
      %s489 = smul.u32 36, %s15
      %p490 = scmp.lt.s32.totalorder %s489, 71
      %s491 = scalar_select %p490, %s489, 71
      %s492 = smul.addr %s491, 8
      %s493 = scalar_lea.vmem %s4, %s492
      // Predicated region
      $region37: #{res_block_forward.5} parent=35 // pred_check
        %p494 = pneg %p127
      $region38: #{res_block_forward.5} parent=35 // pred_check_branch
        %496 = sbr.rel (%p494) target = $region40
      $region39: #{res_block_forward.5} parent=35 // pred_region
        %s497 = smul.u32 36, %s15
      $region40: #{res_block_forward.5} parent=35 // pred_fallthru
        _
    $region36: #{res_block_forward.5} parent=5 // pred_fallthru
      _
    %p498 = scmp.le.s32.totalorder 2, %s10
    // Predicated region
    $region41: #{res_block_forward.5} parent=5 // pred_check
      %p499 = pneg %p498
    $region42: #{res_block_forward.5} parent=5 // pred_check_branch
      %501 = sbr.rel (%p499) target = $region44
    $region43: #{res_block_forward.5} parent=5 // pred_region
      %s502 = ssub.s32 %s10, 2
      // Predicated region
      $region45: #{res_block_forward.5} parent=43 // pred_check
        %p503 = pneg %p133
      $region46: #{res_block_forward.5} parent=43 // pred_check_branch
        %505 = sbr.rel (%p503) target = $region48
      $region47: #{res_block_forward.5} parent=43 // pred_region
        %s506 = smul.u32 36, %s16
        %p507 = scmp.lt.s32.totalorder %s506, 71
        %s508 = scalar_select %p507, %s506, 71
        %s509 = smul.addr %s508, 8
        %s510 = scalar_lea.vmem %s4, %s509
      $region48: #{res_block_forward.5} parent=43 // pred_fallthru
        _
    $region44: #{res_block_forward.5} parent=5 // pred_fallthru
      _
  $region6: #{res_block_forward.5} parent=0 // loop_footer
    %s14 = sadd.s32 1, %s10
  $region7: #{res_block_forward.5} parent=0 // loop_footer_branch
    %9 = sbr.rel target = $region3
  $region8: #{res_block_forward.5} parent=0 // loop_exit
    _

</llo_original>
